<compile_context>
chip_gen: v5e
topology: v5e:2x2
jax: 0.10.0
libtpu: 0.0.40
codegen_flags: <defaults>
</compile_context>

<pallas_src>
import functools

import jax
import jax.numpy as jnp
import numpy as np
from jax.experimental import pallas as pl
from jax.experimental.pallas import tpu as pltpu


_CONV_NAMES = (
    'branch1x1',
    'branch7x7_1', 'branch7x7_2', 'branch7x7_3',
    'branch7x7dbl_1', 'branch7x7dbl_2', 'branch7x7dbl_3',
    'branch7x7dbl_4', 'branch7x7dbl_5',
    'branch_pool',
)

_PADW_OFF = 8     # sublane-aligned interior offset in the W-padded tap scratch


# --------------------------------------------------------------------------
# In-kernel helpers (traced inline; no HBM traffic)
# --------------------------------------------------------------------------
def _bn_relu(acc_f32, s_ref, b_ref):
    return jnp.maximum(acc_f32 * s_ref[...] + b_ref[...], 0.0)


def _conv1x1(act_bf16, wsb):
    w_ref, s_ref, b_ref = wsb
    acc = jnp.dot(act_bf16, w_ref[0], preferred_element_type=jnp.float32)
    return _bn_relu(acc, s_ref, b_ref)


def _conv7(act_mc, wsb, pad_ref, along_w, H, W):
    """7-tap conv ((1,7) if along_w else (7,1)), stride 1, pad 3, + BN + ReLU.

    act_mc: (H*W, Cin) f32 activation.  Taps come from slicing a zero-padded
    VMEM scratch; each tap feeds one bf16 MXU matmul accumulated in f32.
    """
    w_ref, s_ref, b_ref = wsb
    cin, cout = w_ref.shape[1], w_ref.shape[2]
    a3 = act_mc.reshape(H, W, cin)

    pad_ref[...] = jnp.zeros(pad_ref.shape, pad_ref.dtype)
    if along_w:
        pad_ref[:, _PADW_OFF:_PADW_OFF + W, :] = a3
    else:
        pad_ref[3:3 + H, :, :] = a3

    acc = jnp.zeros((H * W, cout), jnp.float32)
    for t in range(7):                      # static unroll over the 7 taps
        if along_w:
            lo = _PADW_OFF - 3 + t
            tap = pad_ref[:, lo:lo + W, :]
        else:
            tap = pad_ref[t:t + H, :, :]
        acc = acc + jnp.dot(tap.reshape(H * W, cin).astype(jnp.bfloat16),
                            w_ref[t], preferred_element_type=jnp.float32)
    return _bn_relu(acc, s_ref, b_ref)


# --------------------------------------------------------------------------
# Fused InceptionC kernel: one grid step == one image
# --------------------------------------------------------------------------
def _inception_c_kernel(H, W, *refs):
    n_conv = len(_CONV_NAMES)
    xp_ref = refs[0]
    wsb = {name: refs[1 + 3 * i: 4 + 3 * i]
           for i, name in enumerate(_CONV_NAMES)}
    o1_ref, o7_ref, od_ref, op_ref = refs[1 + 3 * n_conv: 5 + 3 * n_conv]
    padw_ref, padh_ref = refs[5 + 3 * n_conv: 7 + 3 * n_conv]

    M = H * W
    Ci = xp_ref.shape[-1]

    # x itself (centre of the pool-padded tile) -- read once from VMEM.
    xc = xp_ref[0, 1:1 + H, 1:1 + W, :].reshape(M, Ci).astype(jnp.bfloat16)

    # ---- the three 1x1 convs that consume x --------------------------------
    b1 = _conv1x1(xc, wsb['branch1x1'])
    b7 = _conv1x1(xc, wsb['branch7x7_1'])
    db = _conv1x1(xc, wsb['branch7x7dbl_1'])

    # ---- pool branch: 3x3 avg (count_include_pad) as 9 VPU adds + 1x1 matmul
    psum = jnp.zeros((H, W, Ci), jnp.float32)
    for dh in range(3):
        for dw in range(3):
            psum = psum + xp_ref[0, dh:dh + H, dw:dw + W, :]
    # the 1/9 factor is folded into the pool-branch weight host-side.
    bp = _conv1x1(psum.reshape(M, Ci).astype(jnp.bfloat16), wsb['branch_pool'])

    # ---- 7x7 branch: (1,7) then (7,1) ---------------------------------------
    b7 = _conv7(b7, wsb['branch7x7_2'], padw_ref, True, H, W)
    b7 = _conv7(b7, wsb['branch7x7_3'], padh_ref, False, H, W)

    # ---- 7x7dbl branch: (7,1),(1,7),(7,1),(1,7) -----------------------------
    db = _conv7(db, wsb['branch7x7dbl_2'], padh_ref, False, H, W)
    db = _conv7(db, wsb['branch7x7dbl_3'], padw_ref, True, H, W)
    db = _conv7(db, wsb['branch7x7dbl_4'], padh_ref, False, H, W)
    db = _conv7(db, wsb['branch7x7dbl_5'], padw_ref, True, H, W)

    # ---- full-block output writes (torch.cat order fixed by the wrapper) ----
    o1_ref[0] = b1.reshape(H, W, -1).astype(o1_ref.dtype)
    o7_ref[0] = b7.reshape(H, W, -1).astype(o7_ref.dtype)
    od_ref[0] = db.reshape(H, W, -1).astype(od_ref.dtype)
    op_ref[0] = bp.reshape(H, W, -1).astype(op_ref.dtype)


# --------------------------------------------------------------------------
# Wrapper: NCHW <-> NHWC plumbing + pallas_call
# --------------------------------------------------------------------------
def inception_c_forward(x_nchw, params):
    x = jnp.transpose(x_nchw, (0, 2, 3, 1)).astype(jnp.float32)   # NCHW->NHWC
    N, H, W, Ci = x.shape
    c7 = params['branch7x7_1']['w_hwio'].shape[-1]

    # One-pixel halo for the 3x3 average pool; no other host-side im2col.
    xp = jnp.pad(x, ((0, 0), (1, 1), (1, 1), (0, 0)))

    inputs = [xp]
    in_specs = [pl.BlockSpec((1, H + 2, W + 2, Ci), lambda n: (n, 0, 0, 0))]
    for name in _CONV_NAMES:
        p = params[name]
        w = p['w_hwio']
        if name == 'branch_pool':
            w = w / 9.0                      # fold avg-pool 1/9 into the 1x1
        kh, kw, cin, cout = w.shape
        inputs += [w.reshape(kh * kw, cin, cout).astype(jnp.bfloat16),
                   p['scale'].reshape(1, cout).astype(jnp.float32),
                   p['bias'].reshape(1, cout).astype(jnp.float32)]
        in_specs += [pl.BlockSpec((kh * kw, cin, cout), lambda n: (0, 0, 0)),
                     pl.BlockSpec((1, cout), lambda n: (0, 0)),
                     pl.BlockSpec((1, cout), lambda n: (0, 0))]

    out_shape = tuple(jax.ShapeDtypeStruct((N, H, W, 192), jnp.float32)
                      for _ in range(4))
    out_specs = tuple(pl.BlockSpec((1, H, W, 192), lambda n: (n, 0, 0, 0))
                      for _ in range(4))

    flops = 2 * N * H * W * (Ci * (192 + 2 * c7 + 192)
                             + 4 * 7 * c7 * c7 + 2 * 7 * c7 * 192)
    bytes_in = sum(int(np.prod(a.shape)) * a.dtype.itemsize for a in inputs)
    bytes_out = 4 * N * H * W * 192 * 4

    out4 = pl.pallas_call(
        functools.partial(_inception_c_kernel, H, W),
        out_shape=out_shape,
        grid=(N,),
        in_specs=in_specs,
        out_specs=out_specs,
        scratch_shapes=[
            pltpu.VMEM((H, W + _PADW_OFF + 8, c7), jnp.float32),  # (1,7) taps
            pltpu.VMEM((H + 6, W, c7), jnp.float32),              # (7,1) taps
        ],
        compiler_params=pltpu.CompilerParams(
            dimension_semantics=("parallel",),
            vmem_limit_bytes=48 * 1024 * 1024),
        cost_estimate=pl.CostEstimate(flops=int(flops), transcendentals=0,
                                      bytes_accessed=int(bytes_in + bytes_out)),
    )(*inputs)

    out = jnp.concatenate(out4, axis=-1)                  # (N,H,W,768)
    return jnp.transpose(out, (0, 3, 1, 2))               # NHWC -> NCHW


# --------------------------------------------------------------------------
# Deterministic synthetic parameters (shapes per BasicConv2d in __init__)
# --------------------------------------------------------------------------
def make_basic_conv_params(key, cin, cout, kh, kw, eps=1e-3):
    k1, k2, k3, k4, k5 = jax.random.split(key, 5)
    w = 0.1 * jax.random.normal(k1, (kh, kw, cin, cout), jnp.float32)  # HWIO
    gamma = 1.0 + 0.1 * jax.random.normal(k2, (cout,), jnp.float32)
    beta = 0.1 * jax.random.normal(k3, (cout,), jnp.float32)
    mean = 0.1 * jax.random.normal(k4, (cout,), jnp.float32)
    var = jax.random.uniform(k5, (cout,), jnp.float32, minval=0.5, maxval=1.5)
    scale = gamma / jnp.sqrt(var + eps)
    bias = beta - mean * scale
    return dict(w_hwio=w, scale=scale, bias=bias)


# --------------------------------------------------------------------------
# Pure-JAX reference (eval-mode InceptionC, f32) for correctness check
# --------------------------------------------------------------------------
def _ref_conv_bn_relu(x, w_hwio, scale, bias, padding):
    out = jax.lax.conv_general_dilated(
        x, w_hwio, window_strides=(1, 1),
        padding=((padding[0], padding[0]), (padding[1], padding[1])),
        dimension_numbers=('NHWC', 'HWIO', 'NHWC'),
        precision=jax.lax.Precision.HIGHEST)
    return jnp.maximum(out * scale + bias, 0.0)


def ref_forward(x_nchw, params):
    x = jnp.transpose(x_nchw, (0, 2, 3, 1))
    p = params
    b1 = _ref_conv_bn_relu(x, **p['branch1x1'], padding=(0, 0))
    b7 = _ref_conv_bn_relu(x, **p['branch7x7_1'], padding=(0, 0))
    b7 = _ref_conv_bn_relu(b7, **p['branch7x7_2'], padding=(0, 3))
    b7 = _ref_conv_bn_relu(b7, **p['branch7x7_3'], padding=(3, 0))
    d = _ref_conv_bn_relu(x, **p['branch7x7dbl_1'], padding=(0, 0))
    d = _ref_conv_bn_relu(d, **p['branch7x7dbl_2'], padding=(3, 0))
    d = _ref_conv_bn_relu(d, **p['branch7x7dbl_3'], padding=(0, 3))
    d = _ref_conv_bn_relu(d, **p['branch7x7dbl_4'], padding=(3, 0))
    d = _ref_conv_bn_relu(d, **p['branch7x7dbl_5'], padding=(0, 3))
    pooled = jax.lax.reduce_window(
        x, 0.0, jax.lax.add, (1, 3, 3, 1), (1, 1, 1, 1),
        [(0, 0), (1, 1), (1, 1), (0, 0)]) / 9.0
    bp = _ref_conv_bn_relu(pooled, **p['branch_pool'], padding=(0, 0))
    out = jnp.concatenate([b1, b7, d, bp], axis=-1)
    return jnp.transpose(out, (0, 3, 1, 2))


# --------------------------------------------------------------------------
if __name__ == "__main__":
    key = jax.random.PRNGKey(0)
    N, Cin, H, W = 2, 16, 8, 8          # small shapes; module fixes Cout=192/branch
    c7 = 8                              # channels_7x7
    keys = jax.random.split(key, 11)

    x = jax.random.normal(keys[0], (N, Cin, H, W), jnp.float32)   # NCHW input

    params = {
        'branch1x1':      make_basic_conv_params(keys[1], Cin, 192, 1, 1),
        'branch7x7_1':    make_basic_conv_params(keys[2], Cin, c7, 1, 1),
        'branch7x7_2':    make_basic_conv_params(keys[3], c7, c7, 1, 7),
        'branch7x7_3':    make_basic_conv_params(keys[4], c7, 192, 7, 1),
        'branch7x7dbl_1': make_basic_conv_params(keys[5], Cin, c7, 1, 1),
        'branch7x7dbl_2': make_basic_conv_params(keys[6], c7, c7, 7, 1),
        'branch7x7dbl_3': make_basic_conv_params(keys[7], c7, c7, 1, 7),
        'branch7x7dbl_4': make_basic_conv_params(keys[8], c7, c7, 7, 1),
        'branch7x7dbl_5': make_basic_conv_params(keys[9], c7, 192, 1, 7),
        'branch_pool':    make_basic_conv_params(keys[10], Cin, 192, 1, 1),
    }

    out = jax.jit(inception_c_forward)(x, params)
    jax.block_until_ready(out)
    assert out.shape == (N, 4 * 192, H, W), out.shape

    ref = ref_forward(x, params)
    # bf16 MXU inputs -> slightly loosened tolerance vs the f32 reference.
    np.testing.assert_allclose(np.asarray(out), np.asarray(ref),
                               rtol=2e-2, atol=2e-2)

    print("KERNEL_OK")
</pallas_src>

<mosaic_0001>
module attributes {stable_mosaic.version = 11 : i64} {
  func.func @_inception_c_kernel(%arg0: i32, %arg1: memref<1x10x10x16xf32, #tpu.memory_space<vmem>>, %arg2: memref<1x16x192xbf16, #tpu.memory_space<vmem>>, %arg3: memref<1x192xf32, #tpu.memory_space<vmem>>, %arg4: memref<1x192xf32, #tpu.memory_space<vmem>>, %arg5: memref<1x16x8xbf16, #tpu.memory_space<vmem>>, %arg6: memref<1x8xf32, #tpu.memory_space<vmem>>, %arg7: memref<1x8xf32, #tpu.memory_space<vmem>>, %arg8: memref<7x8x8xbf16, #tpu.memory_space<vmem>>, %arg9: memref<1x8xf32, #tpu.memory_space<vmem>>, %arg10: memref<1x8xf32, #tpu.memory_space<vmem>>, %arg11: memref<7x8x192xbf16, #tpu.memory_space<vmem>>, %arg12: memref<1x192xf32, #tpu.memory_space<vmem>>, %arg13: memref<1x192xf32, #tpu.memory_space<vmem>>, %arg14: memref<1x16x8xbf16, #tpu.memory_space<vmem>>, %arg15: memref<1x8xf32, #tpu.memory_space<vmem>>, %arg16: memref<1x8xf32, #tpu.memory_space<vmem>>, %arg17: memref<7x8x8xbf16, #tpu.memory_space<vmem>>, %arg18: memref<1x8xf32, #tpu.memory_space<vmem>>, %arg19: memref<1x8xf32, #tpu.memory_space<vmem>>, %arg20: memref<7x8x8xbf16, #tpu.memory_space<vmem>>, %arg21: memref<1x8xf32, #tpu.memory_space<vmem>>, %arg22: memref<1x8xf32, #tpu.memory_space<vmem>>, %arg23: memref<7x8x8xbf16, #tpu.memory_space<vmem>>, %arg24: memref<1x8xf32, #tpu.memory_space<vmem>>, %arg25: memref<1x8xf32, #tpu.memory_space<vmem>>, %arg26: memref<7x8x192xbf16, #tpu.memory_space<vmem>>, %arg27: memref<1x192xf32, #tpu.memory_space<vmem>>, %arg28: memref<1x192xf32, #tpu.memory_space<vmem>>, %arg29: memref<1x16x192xbf16, #tpu.memory_space<vmem>>, %arg30: memref<1x192xf32, #tpu.memory_space<vmem>>, %arg31: memref<1x192xf32, #tpu.memory_space<vmem>>, %arg32: memref<1x8x8x192xf32, #tpu.memory_space<vmem>>, %arg33: memref<1x8x8x192xf32, #tpu.memory_space<vmem>>, %arg34: memref<1x8x8x192xf32, #tpu.memory_space<vmem>>, %arg35: memref<1x8x8x192xf32, #tpu.memory_space<vmem>>, %arg36: memref<8x24x8xf32, #tpu.memory_space<vmem>>, %arg37: memref<14x8x8xf32, #tpu.memory_space<vmem>>) attributes {dimension_semantics = [#tpu.dimension_semantics<parallel>], iteration_bounds = array<i64: 2>, scalar_prefetch = 0 : i64, scratch_operands = 2 : i64, tpu.core_type = #tpu.core_type<tc>, window_params = [{transform_indices = @transform_0, window_bounds = array<i64: 1, 10, 10, 16>}, {pipeline_mode = #tpu.pipeline_mode<synchronous>, transform_indices = @transform_1, window_bounds = array<i64: 1, 16, 192>}, {pipeline_mode = #tpu.pipeline_mode<synchronous>, transform_indices = @transform_2, window_bounds = array<i64: 1, 192>}, {pipeline_mode = #tpu.pipeline_mode<synchronous>, transform_indices = @transform_3, window_bounds = array<i64: 1, 192>}, {pipeline_mode = #tpu.pipeline_mode<synchronous>, transform_indices = @transform_4, window_bounds = array<i64: 1, 16, 8>}, {pipeline_mode = #tpu.pipeline_mode<synchronous>, transform_indices = @transform_5, window_bounds = array<i64: 1, 8>}, {pipeline_mode = #tpu.pipeline_mode<synchronous>, transform_indices = @transform_6, window_bounds = array<i64: 1, 8>}, {pipeline_mode = #tpu.pipeline_mode<synchronous>, transform_indices = @transform_7, window_bounds = array<i64: 7, 8, 8>}, {pipeline_mode = #tpu.pipeline_mode<synchronous>, transform_indices = @transform_8, window_bounds = array<i64: 1, 8>}, {pipeline_mode = #tpu.pipeline_mode<synchronous>, transform_indices = @transform_9, window_bounds = array<i64: 1, 8>}, {pipeline_mode = #tpu.pipeline_mode<synchronous>, transform_indices = @transform_10, window_bounds = array<i64: 7, 8, 192>}, {pipeline_mode = #tpu.pipeline_mode<synchronous>, transform_indices = @transform_11, window_bounds = array<i64: 1, 192>}, {pipeline_mode = #tpu.pipeline_mode<synchronous>, transform_indices = @transform_12, window_bounds = array<i64: 1, 192>}, {pipeline_mode = #tpu.pipeline_mode<synchronous>, transform_indices = @transform_13, window_bounds = array<i64: 1, 16, 8>}, {pipeline_mode = #tpu.pipeline_mode<synchronous>, transform_indices = @transform_14, window_bounds = array<i64: 1, 8>}, {pipeline_mode = #tpu.pipeline_mode<synchronous>, transform_indices = @transform_15, window_bounds = array<i64: 1, 8>}, {pipeline_mode = #tpu.pipeline_mode<synchronous>, transform_indices = @transform_16, window_bounds = array<i64: 7, 8, 8>}, {pipeline_mode = #tpu.pipeline_mode<synchronous>, transform_indices = @transform_17, window_bounds = array<i64: 1, 8>}, {pipeline_mode = #tpu.pipeline_mode<synchronous>, transform_indices = @transform_18, window_bounds = array<i64: 1, 8>}, {pipeline_mode = #tpu.pipeline_mode<synchronous>, transform_indices = @transform_19, window_bounds = array<i64: 7, 8, 8>}, {pipeline_mode = #tpu.pipeline_mode<synchronous>, transform_indices = @transform_20, window_bounds = array<i64: 1, 8>}, {pipeline_mode = #tpu.pipeline_mode<synchronous>, transform_indices = @transform_21, window_bounds = array<i64: 1, 8>}, {pipeline_mode = #tpu.pipeline_mode<synchronous>, transform_indices = @transform_22, window_bounds = array<i64: 7, 8, 8>}, {pipeline_mode = #tpu.pipeline_mode<synchronous>, transform_indices = @transform_23, window_bounds = array<i64: 1, 8>}, {pipeline_mode = #tpu.pipeline_mode<synchronous>, transform_indices = @transform_24, window_bounds = array<i64: 1, 8>}, {pipeline_mode = #tpu.pipeline_mode<synchronous>, transform_indices = @transform_25, window_bounds = array<i64: 7, 8, 192>}, {pipeline_mode = #tpu.pipeline_mode<synchronous>, transform_indices = @transform_26, window_bounds = array<i64: 1, 192>}, {pipeline_mode = #tpu.pipeline_mode<synchronous>, transform_indices = @transform_27, window_bounds = array<i64: 1, 192>}, {pipeline_mode = #tpu.pipeline_mode<synchronous>, transform_indices = @transform_28, window_bounds = array<i64: 1, 16, 192>}, {pipeline_mode = #tpu.pipeline_mode<synchronous>, transform_indices = @transform_29, window_bounds = array<i64: 1, 192>}, {pipeline_mode = #tpu.pipeline_mode<synchronous>, transform_indices = @transform_30, window_bounds = array<i64: 1, 192>}, {transform_indices = @transform_31, window_bounds = array<i64: 1, 8, 8, 192>}, {transform_indices = @transform_32, window_bounds = array<i64: 1, 8, 8, 192>}, {transform_indices = @transform_33, window_bounds = array<i64: 1, 8, 8, 192>}, {transform_indices = @transform_34, window_bounds = array<i64: 1, 8, 8, 192>}]} {
    %c0 = arith.constant 0 : index
    %c1 = arith.constant 1 : index
    %c1_0 = arith.constant 1 : index
    %c0_1 = arith.constant 0 : index
    %0 = vector.load %arg1[%c0, %c1, %c1_0, %c0_1] : memref<1x10x10x16xf32, #tpu.memory_space<vmem>>, vector<1x8x8x16xf32>
    %1 = vector.shape_cast %0 : vector<1x8x8x16xf32> to vector<8x8x16xf32>
    %2 = vector.shape_cast %1 : vector<8x8x16xf32> to vector<64x16xf32>
    %3 = arith.truncf %2 : vector<64x16xf32> to vector<64x16xbf16>
    %c0_2 = arith.constant 0 : index
    %c0_3 = arith.constant 0 : index
    %c0_4 = arith.constant 0 : index
    %4 = vector.load %arg2[%c0_2, %c0_3, %c0_4] : memref<1x16x192xbf16, #tpu.memory_space<vmem>>, vector<1x16x192xbf16>
    %5 = vector.shape_cast %4 : vector<1x16x192xbf16> to vector<16x192xbf16>
    %cst = arith.constant dense<0.000000e+00> : vector<64x192xf32>
    %6 = tpu.matmul %3, %5, %cst {dimension_numbers = #tpu.dot_dimension_numbers<[1], [0], [0], [1], [0, 0, 1, 1], [], []>} : vector<64x16xbf16>, vector<16x192xbf16>, vector<64x192xf32> -> vector<64x192xf32>
    %c0_5 = arith.constant 0 : index
    %c0_6 = arith.constant 0 : index
    %7 = vector.load %arg3[%c0_5, %c0_6] : memref<1x192xf32, #tpu.memory_space<vmem>>, vector<1x192xf32>
    %8 = vector.broadcast %7 : vector<1x192xf32> to vector<64x192xf32>
    %9 = arith.mulf %6, %8 : vector<64x192xf32>
    %c0_7 = arith.constant 0 : index
    %c0_8 = arith.constant 0 : index
    %10 = vector.load %arg4[%c0_7, %c0_8] : memref<1x192xf32, #tpu.memory_space<vmem>>, vector<1x192xf32>
    %11 = vector.broadcast %10 : vector<1x192xf32> to vector<64x192xf32>
    %12 = arith.addf %9, %11 : vector<64x192xf32>
    %cst_9 = arith.constant 0.000000e+00 : f32
    %13 = vector.broadcast %cst_9 : f32 to vector<64x192xf32>
    %14 = arith.maximumf %12, %13 : vector<64x192xf32>
    %c0_10 = arith.constant 0 : index
    %c0_11 = arith.constant 0 : index
    %c0_12 = arith.constant 0 : index
    %15 = vector.load %arg5[%c0_10, %c0_11, %c0_12] : memref<1x16x8xbf16, #tpu.memory_space<vmem>>, vector<1x16x8xbf16>
    %16 = vector.shape_cast %15 : vector<1x16x8xbf16> to vector<16x8xbf16>
    %cst_13 = arith.constant dense<0.000000e+00> : vector<64x8xf32>
    %17 = tpu.matmul %3, %16, %cst_13 {dimension_numbers = #tpu.dot_dimension_numbers<[1], [0], [0], [1], [0, 0, 1, 1], [], []>} : vector<64x16xbf16>, vector<16x8xbf16>, vector<64x8xf32> -> vector<64x8xf32>
    %c0_14 = arith.constant 0 : index
    %c0_15 = arith.constant 0 : index
    %18 = vector.load %arg6[%c0_14, %c0_15] : memref<1x8xf32, #tpu.memory_space<vmem>>, vector<1x8xf32>
    %19 = vector.broadcast %18 : vector<1x8xf32> to vector<64x8xf32>
    %20 = arith.mulf %17, %19 : vector<64x8xf32>
    %c0_16 = arith.constant 0 : index
    %c0_17 = arith.constant 0 : index
    %21 = vector.load %arg7[%c0_16, %c0_17] : memref<1x8xf32, #tpu.memory_space<vmem>>, vector<1x8xf32>
    %22 = vector.broadcast %21 : vector<1x8xf32> to vector<64x8xf32>
    %23 = arith.addf %20, %22 : vector<64x8xf32>
    %cst_18 = arith.constant 0.000000e+00 : f32
    %24 = vector.broadcast %cst_18 : f32 to vector<64x8xf32>
    %25 = arith.maximumf %23, %24 : vector<64x8xf32>
    %c0_19 = arith.constant 0 : index
    %c0_20 = arith.constant 0 : index
    %c0_21 = arith.constant 0 : index
    %26 = vector.load %arg14[%c0_19, %c0_20, %c0_21] : memref<1x16x8xbf16, #tpu.memory_space<vmem>>, vector<1x16x8xbf16>
    %27 = vector.shape_cast %26 : vector<1x16x8xbf16> to vector<16x8xbf16>
    %cst_22 = arith.constant dense<0.000000e+00> : vector<64x8xf32>
    %28 = tpu.matmul %3, %27, %cst_22 {dimension_numbers = #tpu.dot_dimension_numbers<[1], [0], [0], [1], [0, 0, 1, 1], [], []>} : vector<64x16xbf16>, vector<16x8xbf16>, vector<64x8xf32> -> vector<64x8xf32>
    %c0_23 = arith.constant 0 : index
    %c0_24 = arith.constant 0 : index
    %29 = vector.load %arg15[%c0_23, %c0_24] : memref<1x8xf32, #tpu.memory_space<vmem>>, vector<1x8xf32>
    %30 = vector.broadcast %29 : vector<1x8xf32> to vector<64x8xf32>
    %31 = arith.mulf %28, %30 : vector<64x8xf32>
    %c0_25 = arith.constant 0 : index
    %c0_26 = arith.constant 0 : index
    %32 = vector.load %arg16[%c0_25, %c0_26] : memref<1x8xf32, #tpu.memory_space<vmem>>, vector<1x8xf32>
    %33 = vector.broadcast %32 : vector<1x8xf32> to vector<64x8xf32>
    %34 = arith.addf %31, %33 : vector<64x8xf32>
    %cst_27 = arith.constant 0.000000e+00 : f32
    %35 = vector.broadcast %cst_27 : f32 to vector<64x8xf32>
    %36 = arith.maximumf %34, %35 : vector<64x8xf32>
    %cst_28 = arith.constant 0.000000e+00 : f32
    %37 = vector.broadcast %cst_28 : f32 to vector<8x8x16xf32>
    %c0_29 = arith.constant 0 : index
    %c0_30 = arith.constant 0 : index
    %c0_31 = arith.constant 0 : index
    %c0_32 = arith.constant 0 : index
    %38 = vector.load %arg1[%c0_29, %c0_30, %c0_31, %c0_32] : memref<1x10x10x16xf32, #tpu.memory_space<vmem>>, vector<1x8x8x16xf32>
    %39 = vector.shape_cast %38 : vector<1x8x8x16xf32> to vector<8x8x16xf32>
    %40 = arith.addf %37, %39 : vector<8x8x16xf32>
    %c0_33 = arith.constant 0 : index
    %c0_34 = arith.constant 0 : index
    %c1_35 = arith.constant 1 : index
    %c0_36 = arith.constant 0 : index
    %41 = vector.load %arg1[%c0_33, %c0_34, %c1_35, %c0_36] : memref<1x10x10x16xf32, #tpu.memory_space<vmem>>, vector<1x8x8x16xf32>
    %42 = vector.shape_cast %41 : vector<1x8x8x16xf32> to vector<8x8x16xf32>
    %43 = arith.addf %40, %42 : vector<8x8x16xf32>
    %c0_37 = arith.constant 0 : index
    %c0_38 = arith.constant 0 : index
    %c2 = arith.constant 2 : index
    %c0_39 = arith.constant 0 : index
    %44 = vector.load %arg1[%c0_37, %c0_38, %c2, %c0_39] : memref<1x10x10x16xf32, #tpu.memory_space<vmem>>, vector<1x8x8x16xf32>
    %45 = vector.shape_cast %44 : vector<1x8x8x16xf32> to vector<8x8x16xf32>
    %46 = arith.addf %43, %45 : vector<8x8x16xf32>
    %c0_40 = arith.constant 0 : index
    %c1_41 = arith.constant 1 : index
    %c0_42 = arith.constant 0 : index
    %c0_43 = arith.constant 0 : index
    %47 = vector.load %arg1[%c0_40, %c1_41, %c0_42, %c0_43] : memref<1x10x10x16xf32, #tpu.memory_space<vmem>>, vector<1x8x8x16xf32>
    %48 = vector.shape_cast %47 : vector<1x8x8x16xf32> to vector<8x8x16xf32>
    %49 = arith.addf %46, %48 : vector<8x8x16xf32>
    %c0_44 = arith.constant 0 : index
    %c1_45 = arith.constant 1 : index
    %c1_46 = arith.constant 1 : index
    %c0_47 = arith.constant 0 : index
    %50 = vector.load %arg1[%c0_44, %c1_45, %c1_46, %c0_47] : memref<1x10x10x16xf32, #tpu.memory_space<vmem>>, vector<1x8x8x16xf32>
    %51 = vector.shape_cast %50 : vector<1x8x8x16xf32> to vector<8x8x16xf32>
    %52 = arith.addf %49, %51 : vector<8x8x16xf32>
    %c0_48 = arith.constant 0 : index
    %c1_49 = arith.constant 1 : index
    %c2_50 = arith.constant 2 : index
    %c0_51 = arith.constant 0 : index
    %53 = vector.load %arg1[%c0_48, %c1_49, %c2_50, %c0_51] : memref<1x10x10x16xf32, #tpu.memory_space<vmem>>, vector<1x8x8x16xf32>
    %54 = vector.shape_cast %53 : vector<1x8x8x16xf32> to vector<8x8x16xf32>
    %55 = arith.addf %52, %54 : vector<8x8x16xf32>
    %c0_52 = arith.constant 0 : index
    %c2_53 = arith.constant 2 : index
    %c0_54 = arith.constant 0 : index
    %c0_55 = arith.constant 0 : index
    %56 = vector.load %arg1[%c0_52, %c2_53, %c0_54, %c0_55] : memref<1x10x10x16xf32, #tpu.memory_space<vmem>>, vector<1x8x8x16xf32>
    %57 = vector.shape_cast %56 : vector<1x8x8x16xf32> to vector<8x8x16xf32>
    %58 = arith.addf %55, %57 : vector<8x8x16xf32>
    %c0_56 = arith.constant 0 : index
    %c2_57 = arith.constant 2 : index
    %c1_58 = arith.constant 1 : index
    %c0_59 = arith.constant 0 : index
    %59 = vector.load %arg1[%c0_56, %c2_57, %c1_58, %c0_59] : memref<1x10x10x16xf32, #tpu.memory_space<vmem>>, vector<1x8x8x16xf32>
    %60 = vector.shape_cast %59 : vector<1x8x8x16xf32> to vector<8x8x16xf32>
    %61 = arith.addf %58, %60 : vector<8x8x16xf32>
    %c0_60 = arith.constant 0 : index
    %c2_61 = arith.constant 2 : index
    %c2_62 = arith.constant 2 : index
    %c0_63 = arith.constant 0 : index
    %62 = vector.load %arg1[%c0_60, %c2_61, %c2_62, %c0_63] : memref<1x10x10x16xf32, #tpu.memory_space<vmem>>, vector<1x8x8x16xf32>
    %63 = vector.shape_cast %62 : vector<1x8x8x16xf32> to vector<8x8x16xf32>
    %64 = arith.addf %61, %63 : vector<8x8x16xf32>
    %65 = vector.shape_cast %64 : vector<8x8x16xf32> to vector<64x16xf32>
    %66 = arith.truncf %65 : vector<64x16xf32> to vector<64x16xbf16>
    %c0_64 = arith.constant 0 : index
    %c0_65 = arith.constant 0 : index
    %c0_66 = arith.constant 0 : index
    %67 = vector.load %arg29[%c0_64, %c0_65, %c0_66] : memref<1x16x192xbf16, #tpu.memory_space<vmem>>, vector<1x16x192xbf16>
    %68 = vector.shape_cast %67 : vector<1x16x192xbf16> to vector<16x192xbf16>
    %cst_67 = arith.constant dense<0.000000e+00> : vector<64x192xf32>
    %69 = tpu.matmul %66, %68, %cst_67 {dimension_numbers = #tpu.dot_dimension_numbers<[1], [0], [0], [1], [0, 0, 1, 1], [], []>} : vector<64x16xbf16>, vector<16x192xbf16>, vector<64x192xf32> -> vector<64x192xf32>
    %c0_68 = arith.constant 0 : index
    %c0_69 = arith.constant 0 : index
    %70 = vector.load %arg30[%c0_68, %c0_69] : memref<1x192xf32, #tpu.memory_space<vmem>>, vector<1x192xf32>
    %71 = vector.broadcast %70 : vector<1x192xf32> to vector<64x192xf32>
    %72 = arith.mulf %69, %71 : vector<64x192xf32>
    %c0_70 = arith.constant 0 : index
    %c0_71 = arith.constant 0 : index
    %73 = vector.load %arg31[%c0_70, %c0_71] : memref<1x192xf32, #tpu.memory_space<vmem>>, vector<1x192xf32>
    %74 = vector.broadcast %73 : vector<1x192xf32> to vector<64x192xf32>
    %75 = arith.addf %72, %74 : vector<64x192xf32>
    %cst_72 = arith.constant 0.000000e+00 : f32
    %76 = vector.broadcast %cst_72 : f32 to vector<64x192xf32>
    %77 = arith.maximumf %75, %76 : vector<64x192xf32>
    %78 = vector.shape_cast %25 : vector<64x8xf32> to vector<8x8x8xf32>
    %cst_73 = arith.constant 0.000000e+00 : f32
    %79 = vector.broadcast %cst_73 : f32 to vector<8x24x8xf32>
    %c0_74 = arith.constant 0 : index
    %c0_75 = arith.constant 0 : index
    %c0_76 = arith.constant 0 : index
    %80 = vector.load %arg36[%c0_74, %c0_75, %c0_76] : memref<8x24x8xf32, #tpu.memory_space<vmem>>, vector<8x24x8xf32>
    tpu.vector_store %arg36[%c0_74, %c0_75, %c0_76], %79 {strides = array<i32>} : memref<8x24x8xf32, #tpu.memory_space<vmem>>, vector<8x24x8xf32>,
    %c0_77 = arith.constant 0 : index
    %c8 = arith.constant 8 : index
    %c0_78 = arith.constant 0 : index
    %81 = vector.load %arg36[%c0_77, %c8, %c0_78] : memref<8x24x8xf32, #tpu.memory_space<vmem>>, vector<8x8x8xf32>
    tpu.vector_store %arg36[%c0_77, %c8, %c0_78], %78 {strides = array<i32>} : memref<8x24x8xf32, #tpu.memory_space<vmem>>, vector<8x8x8xf32>,
    %cst_79 = arith.constant 0.000000e+00 : f32
    %82 = vector.broadcast %cst_79 : f32 to vector<64x8xf32>
    %c0_80 = arith.constant 0 : index
    %c5 = arith.constant 5 : index
    %c0_81 = arith.constant 0 : index
    %83 = vector.load %arg36[%c0_80, %c5, %c0_81] : memref<8x24x8xf32, #tpu.memory_space<vmem>>, vector<8x8x8xf32>
    %84 = vector.shape_cast %83 : vector<8x8x8xf32> to vector<64x8xf32>
    %85 = arith.truncf %84 : vector<64x8xf32> to vector<64x8xbf16>
    %c0_82 = arith.constant 0 : index
    %c0_83 = arith.constant 0 : index
    %c0_84 = arith.constant 0 : index
    %86 = vector.load %arg8[%c0_82, %c0_83, %c0_84] : memref<7x8x8xbf16, #tpu.memory_space<vmem>>, vector<1x8x8xbf16>
    %87 = vector.shape_cast %86 : vector<1x8x8xbf16> to vector<8x8xbf16>
    %cst_85 = arith.constant dense<0.000000e+00> : vector<64x8xf32>
    %88 = tpu.matmul %85, %87, %cst_85 {dimension_numbers = #tpu.dot_dimension_numbers<[1], [0], [0], [1], [0, 0, 1, 1], [], []>} : vector<64x8xbf16>, vector<8x8xbf16>, vector<64x8xf32> -> vector<64x8xf32>
    %89 = arith.addf %82, %88 : vector<64x8xf32>
    %c0_86 = arith.constant 0 : index
    %c6 = arith.constant 6 : index
    %c0_87 = arith.constant 0 : index
    %90 = vector.load %arg36[%c0_86, %c6, %c0_87] : memref<8x24x8xf32, #tpu.memory_space<vmem>>, vector<8x8x8xf32>
    %91 = vector.shape_cast %90 : vector<8x8x8xf32> to vector<64x8xf32>
    %92 = arith.truncf %91 : vector<64x8xf32> to vector<64x8xbf16>
    %c1_88 = arith.constant 1 : index
    %c0_89 = arith.constant 0 : index
    %c0_90 = arith.constant 0 : index
    %93 = vector.load %arg8[%c1_88, %c0_89, %c0_90] : memref<7x8x8xbf16, #tpu.memory_space<vmem>>, vector<1x8x8xbf16>
    %94 = vector.shape_cast %93 : vector<1x8x8xbf16> to vector<8x8xbf16>
    %cst_91 = arith.constant dense<0.000000e+00> : vector<64x8xf32>
    %95 = tpu.matmul %92, %94, %cst_91 {dimension_numbers = #tpu.dot_dimension_numbers<[1], [0], [0], [1], [0, 0, 1, 1], [], []>} : vector<64x8xbf16>, vector<8x8xbf16>, vector<64x8xf32> -> vector<64x8xf32>
    %96 = arith.addf %89, %95 : vector<64x8xf32>
    %c0_92 = arith.constant 0 : index
    %c7 = arith.constant 7 : index
    %c0_93 = arith.constant 0 : index
    %97 = vector.load %arg36[%c0_92, %c7, %c0_93] : memref<8x24x8xf32, #tpu.memory_space<vmem>>, vector<8x8x8xf32>
    %98 = vector.shape_cast %97 : vector<8x8x8xf32> to vector<64x8xf32>
    %99 = arith.truncf %98 : vector<64x8xf32> to vector<64x8xbf16>
    %c2_94 = arith.constant 2 : index
    %c0_95 = arith.constant 0 : index
    %c0_96 = arith.constant 0 : index
    %100 = vector.load %arg8[%c2_94, %c0_95, %c0_96] : memref<7x8x8xbf16, #tpu.memory_space<vmem>>, vector<1x8x8xbf16>
    %101 = vector.shape_cast %100 : vector<1x8x8xbf16> to vector<8x8xbf16>
    %cst_97 = arith.constant dense<0.000000e+00> : vector<64x8xf32>
    %102 = tpu.matmul %99, %101, %cst_97 {dimension_numbers = #tpu.dot_dimension_numbers<[1], [0], [0], [1], [0, 0, 1, 1], [], []>} : vector<64x8xbf16>, vector<8x8xbf16>, vector<64x8xf32> -> vector<64x8xf32>
    %103 = arith.addf %96, %102 : vector<64x8xf32>
    %c0_98 = arith.constant 0 : index
    %c8_99 = arith.constant 8 : index
    %c0_100 = arith.constant 0 : index
    %104 = vector.load %arg36[%c0_98, %c8_99, %c0_100] : memref<8x24x8xf32, #tpu.memory_space<vmem>>, vector<8x8x8xf32>
    %105 = vector.shape_cast %104 : vector<8x8x8xf32> to vector<64x8xf32>
    %106 = arith.truncf %105 : vector<64x8xf32> to vector<64x8xbf16>
    %c3 = arith.constant 3 : index
    %c0_101 = arith.constant 0 : index
    %c0_102 = arith.constant 0 : index
    %107 = vector.load %arg8[%c3, %c0_101, %c0_102] : memref<7x8x8xbf16, #tpu.memory_space<vmem>>, vector<1x8x8xbf16>
    %108 = vector.shape_cast %107 : vector<1x8x8xbf16> to vector<8x8xbf16>
    %cst_103 = arith.constant dense<0.000000e+00> : vector<64x8xf32>
    %109 = tpu.matmul %106, %108, %cst_103 {dimension_numbers = #tpu.dot_dimension_numbers<[1], [0], [0], [1], [0, 0, 1, 1], [], []>} : vector<64x8xbf16>, vector<8x8xbf16>, vector<64x8xf32> -> vector<64x8xf32>
    %110 = arith.addf %103, %109 : vector<64x8xf32>
    %c0_104 = arith.constant 0 : index
    %c9 = arith.constant 9 : index
    %c0_105 = arith.constant 0 : index
    %111 = vector.load %arg36[%c0_104, %c9, %c0_105] : memref<8x24x8xf32, #tpu.memory_space<vmem>>, vector<8x8x8xf32>
    %112 = vector.shape_cast %111 : vector<8x8x8xf32> to vector<64x8xf32>
    %113 = arith.truncf %112 : vector<64x8xf32> to vector<64x8xbf16>
    %c4 = arith.constant 4 : index
    %c0_106 = arith.constant 0 : index
    %c0_107 = arith.constant 0 : index
    %114 = vector.load %arg8[%c4, %c0_106, %c0_107] : memref<7x8x8xbf16, #tpu.memory_space<vmem>>, vector<1x8x8xbf16>
    %115 = vector.shape_cast %114 : vector<1x8x8xbf16> to vector<8x8xbf16>
    %cst_108 = arith.constant dense<0.000000e+00> : vector<64x8xf32>
    %116 = tpu.matmul %113, %115, %cst_108 {dimension_numbers = #tpu.dot_dimension_numbers<[1], [0], [0], [1], [0, 0, 1, 1], [], []>} : vector<64x8xbf16>, vector<8x8xbf16>, vector<64x8xf32> -> vector<64x8xf32>
    %117 = arith.addf %110, %116 : vector<64x8xf32>
    %c0_109 = arith.constant 0 : index
    %c10 = arith.constant 10 : index
    %c0_110 = arith.constant 0 : index
    %118 = vector.load %arg36[%c0_109, %c10, %c0_110] : memref<8x24x8xf32, #tpu.memory_space<vmem>>, vector<8x8x8xf32>
    %119 = vector.shape_cast %118 : vector<8x8x8xf32> to vector<64x8xf32>
    %120 = arith.truncf %119 : vector<64x8xf32> to vector<64x8xbf16>
    %c5_111 = arith.constant 5 : index
    %c0_112 = arith.constant 0 : index
    %c0_113 = arith.constant 0 : index
    %121 = vector.load %arg8[%c5_111, %c0_112, %c0_113] : memref<7x8x8xbf16, #tpu.memory_space<vmem>>, vector<1x8x8xbf16>
    %122 = vector.shape_cast %121 : vector<1x8x8xbf16> to vector<8x8xbf16>
    %cst_114 = arith.constant dense<0.000000e+00> : vector<64x8xf32>
    %123 = tpu.matmul %120, %122, %cst_114 {dimension_numbers = #tpu.dot_dimension_numbers<[1], [0], [0], [1], [0, 0, 1, 1], [], []>} : vector<64x8xbf16>, vector<8x8xbf16>, vector<64x8xf32> -> vector<64x8xf32>
    %124 = arith.addf %117, %123 : vector<64x8xf32>
    %c0_115 = arith.constant 0 : index
    %c11 = arith.constant 11 : index
    %c0_116 = arith.constant 0 : index
    %125 = vector.load %arg36[%c0_115, %c11, %c0_116] : memref<8x24x8xf32, #tpu.memory_space<vmem>>, vector<8x8x8xf32>
    %126 = vector.shape_cast %125 : vector<8x8x8xf32> to vector<64x8xf32>
    %127 = arith.truncf %126 : vector<64x8xf32> to vector<64x8xbf16>
    %c6_117 = arith.constant 6 : index
    %c0_118 = arith.constant 0 : index
    %c0_119 = arith.constant 0 : index
    %128 = vector.load %arg8[%c6_117, %c0_118, %c0_119] : memref<7x8x8xbf16, #tpu.memory_space<vmem>>, vector<1x8x8xbf16>
    %129 = vector.shape_cast %128 : vector<1x8x8xbf16> to vector<8x8xbf16>
    %cst_120 = arith.constant dense<0.000000e+00> : vector<64x8xf32>
    %130 = tpu.matmul %127, %129, %cst_120 {dimension_numbers = #tpu.dot_dimension_numbers<[1], [0], [0], [1], [0, 0, 1, 1], [], []>} : vector<64x8xbf16>, vector<8x8xbf16>, vector<64x8xf32> -> vector<64x8xf32>
    %131 = arith.addf %124, %130 : vector<64x8xf32>
    %c0_121 = arith.constant 0 : index
    %c0_122 = arith.constant 0 : index
    %132 = vector.load %arg9[%c0_121, %c0_122] : memref<1x8xf32, #tpu.memory_space<vmem>>, vector<1x8xf32>
    %133 = vector.broadcast %132 : vector<1x8xf32> to vector<64x8xf32>
    %134 = arith.mulf %131, %133 : vector<64x8xf32>
    %c0_123 = arith.constant 0 : index
    %c0_124 = arith.constant 0 : index
    %135 = vector.load %arg10[%c0_123, %c0_124] : memref<1x8xf32, #tpu.memory_space<vmem>>, vector<1x8xf32>
    %136 = vector.broadcast %135 : vector<1x8xf32> to vector<64x8xf32>
    %137 = arith.addf %134, %136 : vector<64x8xf32>
    %cst_125 = arith.constant 0.000000e+00 : f32
    %138 = vector.broadcast %cst_125 : f32 to vector<64x8xf32>
    %139 = arith.maximumf %137, %138 : vector<64x8xf32>
    %140 = vector.shape_cast %139 : vector<64x8xf32> to vector<8x8x8xf32>
    %cst_126 = arith.constant 0.000000e+00 : f32
    %141 = vector.broadcast %cst_126 : f32 to vector<14x8x8xf32>
    %c0_127 = arith.constant 0 : index
    %c0_128 = arith.constant 0 : index
    %c0_129 = arith.constant 0 : index
    %142 = vector.load %arg37[%c0_127, %c0_128, %c0_129] : memref<14x8x8xf32, #tpu.memory_space<vmem>>, vector<14x8x8xf32>
    tpu.vector_store %arg37[%c0_127, %c0_128, %c0_129], %141 {strides = array<i32>} : memref<14x8x8xf32, #tpu.memory_space<vmem>>, vector<14x8x8xf32>,
    %c3_130 = arith.constant 3 : index
    %c0_131 = arith.constant 0 : index
    %c0_132 = arith.constant 0 : index
    %143 = vector.load %arg37[%c3_130, %c0_131, %c0_132] : memref<14x8x8xf32, #tpu.memory_space<vmem>>, vector<8x8x8xf32>
    tpu.vector_store %arg37[%c3_130, %c0_131, %c0_132], %140 {strides = array<i32>} : memref<14x8x8xf32, #tpu.memory_space<vmem>>, vector<8x8x8xf32>,
    %cst_133 = arith.constant 0.000000e+00 : f32
    %144 = vector.broadcast %cst_133 : f32 to vector<64x192xf32>
    %c0_134 = arith.constant 0 : index
    %c0_135 = arith.constant 0 : index
    %c0_136 = arith.constant 0 : index
    %145 = vector.load %arg37[%c0_134, %c0_135, %c0_136] : memref<14x8x8xf32, #tpu.memory_space<vmem>>, vector<8x8x8xf32>
    %146 = vector.shape_cast %145 : vector<8x8x8xf32> to vector<64x8xf32>
    %147 = arith.truncf %146 : vector<64x8xf32> to vector<64x8xbf16>
    %c0_137 = arith.constant 0 : index
    %c0_138 = arith.constant 0 : index
    %c0_139 = arith.constant 0 : index
    %148 = vector.load %arg11[%c0_137, %c0_138, %c0_139] : memref<7x8x192xbf16, #tpu.memory_space<vmem>>, vector<1x8x192xbf16>
    %149 = vector.shape_cast %148 : vector<1x8x192xbf16> to vector<8x192xbf16>
    %cst_140 = arith.constant dense<0.000000e+00> : vector<64x192xf32>
    %150 = tpu.matmul %147, %149, %cst_140 {dimension_numbers = #tpu.dot_dimension_numbers<[1], [0], [0], [1], [0, 0, 1, 1], [], []>} : vector<64x8xbf16>, vector<8x192xbf16>, vector<64x192xf32> -> vector<64x192xf32>
    %151 = arith.addf %144, %150 : vector<64x192xf32>
    %c1_141 = arith.constant 1 : index
    %c0_142 = arith.constant 0 : index
    %c0_143 = arith.constant 0 : index
    %152 = vector.load %arg37[%c1_141, %c0_142, %c0_143] : memref<14x8x8xf32, #tpu.memory_space<vmem>>, vector<8x8x8xf32>
    %153 = vector.shape_cast %152 : vector<8x8x8xf32> to vector<64x8xf32>
    %154 = arith.truncf %153 : vector<64x8xf32> to vector<64x8xbf16>
    %c1_144 = arith.constant 1 : index
    %c0_145 = arith.constant 0 : index
    %c0_146 = arith.constant 0 : index
    %155 = vector.load %arg11[%c1_144, %c0_145, %c0_146] : memref<7x8x192xbf16, #tpu.memory_space<vmem>>, vector<1x8x192xbf16>
    %156 = vector.shape_cast %155 : vector<1x8x192xbf16> to vector<8x192xbf16>
    %cst_147 = arith.constant dense<0.000000e+00> : vector<64x192xf32>
    %157 = tpu.matmul %154, %156, %cst_147 {dimension_numbers = #tpu.dot_dimension_numbers<[1], [0], [0], [1], [0, 0, 1, 1], [], []>} : vector<64x8xbf16>, vector<8x192xbf16>, vector<64x192xf32> -> vector<64x192xf32>
    %158 = arith.addf %151, %157 : vector<64x192xf32>
    %c2_148 = arith.constant 2 : index
    %c0_149 = arith.constant 0 : index
    %c0_150 = arith.constant 0 : index
    %159 = vector.load %arg37[%c2_148, %c0_149, %c0_150] : memref<14x8x8xf32, #tpu.memory_space<vmem>>, vector<8x8x8xf32>
    %160 = vector.shape_cast %159 : vector<8x8x8xf32> to vector<64x8xf32>
    %161 = arith.truncf %160 : vector<64x8xf32> to vector<64x8xbf16>
    %c2_151 = arith.constant 2 : index
    %c0_152 = arith.constant 0 : index
    %c0_153 = arith.constant 0 : index
    %162 = vector.load %arg11[%c2_151, %c0_152, %c0_153] : memref<7x8x192xbf16, #tpu.memory_space<vmem>>, vector<1x8x192xbf16>
    %163 = vector.shape_cast %162 : vector<1x8x192xbf16> to vector<8x192xbf16>
    %cst_154 = arith.constant dense<0.000000e+00> : vector<64x192xf32>
    %164 = tpu.matmul %161, %163, %cst_154 {dimension_numbers = #tpu.dot_dimension_numbers<[1], [0], [0], [1], [0, 0, 1, 1], [], []>} : vector<64x8xbf16>, vector<8x192xbf16>, vector<64x192xf32> -> vector<64x192xf32>
    %165 = arith.addf %158, %164 : vector<64x192xf32>
    %c3_155 = arith.constant 3 : index
    %c0_156 = arith.constant 0 : index
    %c0_157 = arith.constant 0 : index
    %166 = vector.load %arg37[%c3_155, %c0_156, %c0_157] : memref<14x8x8xf32, #tpu.memory_space<vmem>>, vector<8x8x8xf32>
    %167 = vector.shape_cast %166 : vector<8x8x8xf32> to vector<64x8xf32>
    %168 = arith.truncf %167 : vector<64x8xf32> to vector<64x8xbf16>
    %c3_158 = arith.constant 3 : index
    %c0_159 = arith.constant 0 : index
    %c0_160 = arith.constant 0 : index
    %169 = vector.load %arg11[%c3_158, %c0_159, %c0_160] : memref<7x8x192xbf16, #tpu.memory_space<vmem>>, vector<1x8x192xbf16>
    %170 = vector.shape_cast %169 : vector<1x8x192xbf16> to vector<8x192xbf16>
    %cst_161 = arith.constant dense<0.000000e+00> : vector<64x192xf32>
    %171 = tpu.matmul %168, %170, %cst_161 {dimension_numbers = #tpu.dot_dimension_numbers<[1], [0], [0], [1], [0, 0, 1, 1], [], []>} : vector<64x8xbf16>, vector<8x192xbf16>, vector<64x192xf32> -> vector<64x192xf32>
    %172 = arith.addf %165, %171 : vector<64x192xf32>
    %c4_162 = arith.constant 4 : index
    %c0_163 = arith.constant 0 : index
    %c0_164 = arith.constant 0 : index
    %173 = vector.load %arg37[%c4_162, %c0_163, %c0_164] : memref<14x8x8xf32, #tpu.memory_space<vmem>>, vector<8x8x8xf32>
    %174 = vector.shape_cast %173 : vector<8x8x8xf32> to vector<64x8xf32>
    %175 = arith.truncf %174 : vector<64x8xf32> to vector<64x8xbf16>
    %c4_165 = arith.constant 4 : index
    %c0_166 = arith.constant 0 : index
    %c0_167 = arith.constant 0 : index
    %176 = vector.load %arg11[%c4_165, %c0_166, %c0_167] : memref<7x8x192xbf16, #tpu.memory_space<vmem>>, vector<1x8x192xbf16>
    %177 = vector.shape_cast %176 : vector<1x8x192xbf16> to vector<8x192xbf16>
    %cst_168 = arith.constant dense<0.000000e+00> : vector<64x192xf32>
    %178 = tpu.matmul %175, %177, %cst_168 {dimension_numbers = #tpu.dot_dimension_numbers<[1], [0], [0], [1], [0, 0, 1, 1], [], []>} : vector<64x8xbf16>, vector<8x192xbf16>, vector<64x192xf32> -> vector<64x192xf32>
    %179 = arith.addf %172, %178 : vector<64x192xf32>
    %c5_169 = arith.constant 5 : index
    %c0_170 = arith.constant 0 : index
    %c0_171 = arith.constant 0 : index
    %180 = vector.load %arg37[%c5_169, %c0_170, %c0_171] : memref<14x8x8xf32, #tpu.memory_space<vmem>>, vector<8x8x8xf32>
    %181 = vector.shape_cast %180 : vector<8x8x8xf32> to vector<64x8xf32>
    %182 = arith.truncf %181 : vector<64x8xf32> to vector<64x8xbf16>
    %c5_172 = arith.constant 5 : index
    %c0_173 = arith.constant 0 : index
    %c0_174 = arith.constant 0 : index
    %183 = vector.load %arg11[%c5_172, %c0_173, %c0_174] : memref<7x8x192xbf16, #tpu.memory_space<vmem>>, vector<1x8x192xbf16>
    %184 = vector.shape_cast %183 : vector<1x8x192xbf16> to vector<8x192xbf16>
    %cst_175 = arith.constant dense<0.000000e+00> : vector<64x192xf32>
    %185 = tpu.matmul %182, %184, %cst_175 {dimension_numbers = #tpu.dot_dimension_numbers<[1], [0], [0], [1], [0, 0, 1, 1], [], []>} : vector<64x8xbf16>, vector<8x192xbf16>, vector<64x192xf32> -> vector<64x192xf32>
    %186 = arith.addf %179, %185 : vector<64x192xf32>
    %c6_176 = arith.constant 6 : index
    %c0_177 = arith.constant 0 : index
    %c0_178 = arith.constant 0 : index
    %187 = vector.load %arg37[%c6_176, %c0_177, %c0_178] : memref<14x8x8xf32, #tpu.memory_space<vmem>>, vector<8x8x8xf32>
    %188 = vector.shape_cast %187 : vector<8x8x8xf32> to vector<64x8xf32>
    %189 = arith.truncf %188 : vector<64x8xf32> to vector<64x8xbf16>
    %c6_179 = arith.constant 6 : index
    %c0_180 = arith.constant 0 : index
    %c0_181 = arith.constant 0 : index
    %190 = vector.load %arg11[%c6_179, %c0_180, %c0_181] : memref<7x8x192xbf16, #tpu.memory_space<vmem>>, vector<1x8x192xbf16>
    %191 = vector.shape_cast %190 : vector<1x8x192xbf16> to vector<8x192xbf16>
    %cst_182 = arith.constant dense<0.000000e+00> : vector<64x192xf32>
    %192 = tpu.matmul %189, %191, %cst_182 {dimension_numbers = #tpu.dot_dimension_numbers<[1], [0], [0], [1], [0, 0, 1, 1], [], []>} : vector<64x8xbf16>, vector<8x192xbf16>, vector<64x192xf32> -> vector<64x192xf32>
    %193 = arith.addf %186, %192 : vector<64x192xf32>
    %c0_183 = arith.constant 0 : index
    %c0_184 = arith.constant 0 : index
    %194 = vector.load %arg12[%c0_183, %c0_184] : memref<1x192xf32, #tpu.memory_space<vmem>>, vector<1x192xf32>
    %195 = vector.broadcast %194 : vector<1x192xf32> to vector<64x192xf32>
    %196 = arith.mulf %193, %195 : vector<64x192xf32>
    %c0_185 = arith.constant 0 : index
    %c0_186 = arith.constant 0 : index
    %197 = vector.load %arg13[%c0_185, %c0_186] : memref<1x192xf32, #tpu.memory_space<vmem>>, vector<1x192xf32>
    %198 = vector.broadcast %197 : vector<1x192xf32> to vector<64x192xf32>
    %199 = arith.addf %196, %198 : vector<64x192xf32>
    %cst_187 = arith.constant 0.000000e+00 : f32
    %200 = vector.broadcast %cst_187 : f32 to vector<64x192xf32>
    %201 = arith.maximumf %199, %200 : vector<64x192xf32>
    %202 = vector.shape_cast %36 : vector<64x8xf32> to vector<8x8x8xf32>
    %cst_188 = arith.constant 0.000000e+00 : f32
    %203 = vector.broadcast %cst_188 : f32 to vector<14x8x8xf32>
    %c0_189 = arith.constant 0 : index
    %c0_190 = arith.constant 0 : index
    %c0_191 = arith.constant 0 : index
    %204 = vector.load %arg37[%c0_189, %c0_190, %c0_191] : memref<14x8x8xf32, #tpu.memory_space<vmem>>, vector<14x8x8xf32>
    tpu.vector_store %arg37[%c0_189, %c0_190, %c0_191], %203 {strides = array<i32>} : memref<14x8x8xf32, #tpu.memory_space<vmem>>, vector<14x8x8xf32>,
    %c3_192 = arith.constant 3 : index
    %c0_193 = arith.constant 0 : index
    %c0_194 = arith.constant 0 : index
    %205 = vector.load %arg37[%c3_192, %c0_193, %c0_194] : memref<14x8x8xf32, #tpu.memory_space<vmem>>, vector<8x8x8xf32>
    tpu.vector_store %arg37[%c3_192, %c0_193, %c0_194], %202 {strides = array<i32>} : memref<14x8x8xf32, #tpu.memory_space<vmem>>, vector<8x8x8xf32>,
    %cst_195 = arith.constant 0.000000e+00 : f32
    %206 = vector.broadcast %cst_195 : f32 to vector<64x8xf32>
    %c0_196 = arith.constant 0 : index
    %c0_197 = arith.constant 0 : index
    %c0_198 = arith.constant 0 : index
    %207 = vector.load %arg37[%c0_196, %c0_197, %c0_198] : memref<14x8x8xf32, #tpu.memory_space<vmem>>, vector<8x8x8xf32>
    %208 = vector.shape_cast %207 : vector<8x8x8xf32> to vector<64x8xf32>
    %209 = arith.truncf %208 : vector<64x8xf32> to vector<64x8xbf16>
    %c0_199 = arith.constant 0 : index
    %c0_200 = arith.constant 0 : index
    %c0_201 = arith.constant 0 : index
    %210 = vector.load %arg17[%c0_199, %c0_200, %c0_201] : memref<7x8x8xbf16, #tpu.memory_space<vmem>>, vector<1x8x8xbf16>
    %211 = vector.shape_cast %210 : vector<1x8x8xbf16> to vector<8x8xbf16>
    %cst_202 = arith.constant dense<0.000000e+00> : vector<64x8xf32>
    %212 = tpu.matmul %209, %211, %cst_202 {dimension_numbers = #tpu.dot_dimension_numbers<[1], [0], [0], [1], [0, 0, 1, 1], [], []>} : vector<64x8xbf16>, vector<8x8xbf16>, vector<64x8xf32> -> vector<64x8xf32>
    %213 = arith.addf %206, %212 : vector<64x8xf32>
    %c1_203 = arith.constant 1 : index
    %c0_204 = arith.constant 0 : index
    %c0_205 = arith.constant 0 : index
    %214 = vector.load %arg37[%c1_203, %c0_204, %c0_205] : memref<14x8x8xf32, #tpu.memory_space<vmem>>, vector<8x8x8xf32>
    %215 = vector.shape_cast %214 : vector<8x8x8xf32> to vector<64x8xf32>
    %216 = arith.truncf %215 : vector<64x8xf32> to vector<64x8xbf16>
    %c1_206 = arith.constant 1 : index
    %c0_207 = arith.constant 0 : index
    %c0_208 = arith.constant 0 : index
    %217 = vector.load %arg17[%c1_206, %c0_207, %c0_208] : memref<7x8x8xbf16, #tpu.memory_space<vmem>>, vector<1x8x8xbf16>
    %218 = vector.shape_cast %217 : vector<1x8x8xbf16> to vector<8x8xbf16>
    %cst_209 = arith.constant dense<0.000000e+00> : vector<64x8xf32>
    %219 = tpu.matmul %216, %218, %cst_209 {dimension_numbers = #tpu.dot_dimension_numbers<[1], [0], [0], [1], [0, 0, 1, 1], [], []>} : vector<64x8xbf16>, vector<8x8xbf16>, vector<64x8xf32> -> vector<64x8xf32>
    %220 = arith.addf %213, %219 : vector<64x8xf32>
    %c2_210 = arith.constant 2 : index
    %c0_211 = arith.constant 0 : index
    %c0_212 = arith.constant 0 : index
    %221 = vector.load %arg37[%c2_210, %c0_211, %c0_212] : memref<14x8x8xf32, #tpu.memory_space<vmem>>, vector<8x8x8xf32>
    %222 = vector.shape_cast %221 : vector<8x8x8xf32> to vector<64x8xf32>
    %223 = arith.truncf %222 : vector<64x8xf32> to vector<64x8xbf16>
    %c2_213 = arith.constant 2 : index
    %c0_214 = arith.constant 0 : index
    %c0_215 = arith.constant 0 : index
    %224 = vector.load %arg17[%c2_213, %c0_214, %c0_215] : memref<7x8x8xbf16, #tpu.memory_space<vmem>>, vector<1x8x8xbf16>
    %225 = vector.shape_cast %224 : vector<1x8x8xbf16> to vector<8x8xbf16>
    %cst_216 = arith.constant dense<0.000000e+00> : vector<64x8xf32>
    %226 = tpu.matmul %223, %225, %cst_216 {dimension_numbers = #tpu.dot_dimension_numbers<[1], [0], [0], [1], [0, 0, 1, 1], [], []>} : vector<64x8xbf16>, vector<8x8xbf16>, vector<64x8xf32> -> vector<64x8xf32>
    %227 = arith.addf %220, %226 : vector<64x8xf32>
    %c3_217 = arith.constant 3 : index
    %c0_218 = arith.constant 0 : index
    %c0_219 = arith.constant 0 : index
    %228 = vector.load %arg37[%c3_217, %c0_218, %c0_219] : memref<14x8x8xf32, #tpu.memory_space<vmem>>, vector<8x8x8xf32>
    %229 = vector.shape_cast %228 : vector<8x8x8xf32> to vector<64x8xf32>
    %230 = arith.truncf %229 : vector<64x8xf32> to vector<64x8xbf16>
    %c3_220 = arith.constant 3 : index
    %c0_221 = arith.constant 0 : index
    %c0_222 = arith.constant 0 : index
    %231 = vector.load %arg17[%c3_220, %c0_221, %c0_222] : memref<7x8x8xbf16, #tpu.memory_space<vmem>>, vector<1x8x8xbf16>
    %232 = vector.shape_cast %231 : vector<1x8x8xbf16> to vector<8x8xbf16>
    %cst_223 = arith.constant dense<0.000000e+00> : vector<64x8xf32>
    %233 = tpu.matmul %230, %232, %cst_223 {dimension_numbers = #tpu.dot_dimension_numbers<[1], [0], [0], [1], [0, 0, 1, 1], [], []>} : vector<64x8xbf16>, vector<8x8xbf16>, vector<64x8xf32> -> vector<64x8xf32>
    %234 = arith.addf %227, %233 : vector<64x8xf32>
    %c4_224 = arith.constant 4 : index
    %c0_225 = arith.constant 0 : index
    %c0_226 = arith.constant 0 : index
    %235 = vector.load %arg37[%c4_224, %c0_225, %c0_226] : memref<14x8x8xf32, #tpu.memory_space<vmem>>, vector<8x8x8xf32>
    %236 = vector.shape_cast %235 : vector<8x8x8xf32> to vector<64x8xf32>
    %237 = arith.truncf %236 : vector<64x8xf32> to vector<64x8xbf16>
    %c4_227 = arith.constant 4 : index
    %c0_228 = arith.constant 0 : index
    %c0_229 = arith.constant 0 : index
    %238 = vector.load %arg17[%c4_227, %c0_228, %c0_229] : memref<7x8x8xbf16, #tpu.memory_space<vmem>>, vector<1x8x8xbf16>
    %239 = vector.shape_cast %238 : vector<1x8x8xbf16> to vector<8x8xbf16>
    %cst_230 = arith.constant dense<0.000000e+00> : vector<64x8xf32>
    %240 = tpu.matmul %237, %239, %cst_230 {dimension_numbers = #tpu.dot_dimension_numbers<[1], [0], [0], [1], [0, 0, 1, 1], [], []>} : vector<64x8xbf16>, vector<8x8xbf16>, vector<64x8xf32> -> vector<64x8xf32>
    %241 = arith.addf %234, %240 : vector<64x8xf32>
    %c5_231 = arith.constant 5 : index
    %c0_232 = arith.constant 0 : index
    %c0_233 = arith.constant 0 : index
    %242 = vector.load %arg37[%c5_231, %c0_232, %c0_233] : memref<14x8x8xf32, #tpu.memory_space<vmem>>, vector<8x8x8xf32>
    %243 = vector.shape_cast %242 : vector<8x8x8xf32> to vector<64x8xf32>
    %244 = arith.truncf %243 : vector<64x8xf32> to vector<64x8xbf16>
    %c5_234 = arith.constant 5 : index
    %c0_235 = arith.constant 0 : index
    %c0_236 = arith.constant 0 : index
    %245 = vector.load %arg17[%c5_234, %c0_235, %c0_236] : memref<7x8x8xbf16, #tpu.memory_space<vmem>>, vector<1x8x8xbf16>
    %246 = vector.shape_cast %245 : vector<1x8x8xbf16> to vector<8x8xbf16>
    %cst_237 = arith.constant dense<0.000000e+00> : vector<64x8xf32>
    %247 = tpu.matmul %244, %246, %cst_237 {dimension_numbers = #tpu.dot_dimension_numbers<[1], [0], [0], [1], [0, 0, 1, 1], [], []>} : vector<64x8xbf16>, vector<8x8xbf16>, vector<64x8xf32> -> vector<64x8xf32>
    %248 = arith.addf %241, %247 : vector<64x8xf32>
    %c6_238 = arith.constant 6 : index
    %c0_239 = arith.constant 0 : index
    %c0_240 = arith.constant 0 : index
    %249 = vector.load %arg37[%c6_238, %c0_239, %c0_240] : memref<14x8x8xf32, #tpu.memory_space<vmem>>, vector<8x8x8xf32>
    %250 = vector.shape_cast %249 : vector<8x8x8xf32> to vector<64x8xf32>
    %251 = arith.truncf %250 : vector<64x8xf32> to vector<64x8xbf16>
    %c6_241 = arith.constant 6 : index
    %c0_242 = arith.constant 0 : index
    %c0_243 = arith.constant 0 : index
    %252 = vector.load %arg17[%c6_241, %c0_242, %c0_243] : memref<7x8x8xbf16, #tpu.memory_space<vmem>>, vector<1x8x8xbf16>
    %253 = vector.shape_cast %252 : vector<1x8x8xbf16> to vector<8x8xbf16>
    %cst_244 = arith.constant dense<0.000000e+00> : vector<64x8xf32>
    %254 = tpu.matmul %251, %253, %cst_244 {dimension_numbers = #tpu.dot_dimension_numbers<[1], [0], [0], [1], [0, 0, 1, 1], [], []>} : vector<64x8xbf16>, vector<8x8xbf16>, vector<64x8xf32> -> vector<64x8xf32>
    %255 = arith.addf %248, %254 : vector<64x8xf32>
    %c0_245 = arith.constant 0 : index
    %c0_246 = arith.constant 0 : index
    %256 = vector.load %arg18[%c0_245, %c0_246] : memref<1x8xf32, #tpu.memory_space<vmem>>, vector<1x8xf32>
    %257 = vector.broadcast %256 : vector<1x8xf32> to vector<64x8xf32>
    %258 = arith.mulf %255, %257 : vector<64x8xf32>
    %c0_247 = arith.constant 0 : index
    %c0_248 = arith.constant 0 : index
    %259 = vector.load %arg19[%c0_247, %c0_248] : memref<1x8xf32, #tpu.memory_space<vmem>>, vector<1x8xf32>
    %260 = vector.broadcast %259 : vector<1x8xf32> to vector<64x8xf32>
    %261 = arith.addf %258, %260 : vector<64x8xf32>
    %cst_249 = arith.constant 0.000000e+00 : f32
    %262 = vector.broadcast %cst_249 : f32 to vector<64x8xf32>
    %263 = arith.maximumf %261, %262 : vector<64x8xf32>
    %264 = vector.shape_cast %263 : vector<64x8xf32> to vector<8x8x8xf32>
    %cst_250 = arith.constant 0.000000e+00 : f32
    %265 = vector.broadcast %cst_250 : f32 to vector<8x24x8xf32>
    %c0_251 = arith.constant 0 : index
    %c0_252 = arith.constant 0 : index
    %c0_253 = arith.constant 0 : index
    %266 = vector.load %arg36[%c0_251, %c0_252, %c0_253] : memref<8x24x8xf32, #tpu.memory_space<vmem>>, vector<8x24x8xf32>
    tpu.vector_store %arg36[%c0_251, %c0_252, %c0_253], %265 {strides = array<i32>} : memref<8x24x8xf32, #tpu.memory_space<vmem>>, vector<8x24x8xf32>,
    %c0_254 = arith.constant 0 : index
    %c8_255 = arith.constant 8 : index
    %c0_256 = arith.constant 0 : index
    %267 = vector.load %arg36[%c0_254, %c8_255, %c0_256] : memref<8x24x8xf32, #tpu.memory_space<vmem>>, vector<8x8x8xf32>
    tpu.vector_store %arg36[%c0_254, %c8_255, %c0_256], %264 {strides = array<i32>} : memref<8x24x8xf32, #tpu.memory_space<vmem>>, vector<8x8x8xf32>,
    %cst_257 = arith.constant 0.000000e+00 : f32
    %268 = vector.broadcast %cst_257 : f32 to vector<64x8xf32>
    %c0_258 = arith.constant 0 : index
    %c5_259 = arith.constant 5 : index
    %c0_260 = arith.constant 0 : index
    %269 = vector.load %arg36[%c0_258, %c5_259, %c0_260] : memref<8x24x8xf32, #tpu.memory_space<vmem>>, vector<8x8x8xf32>
    %270 = vector.shape_cast %269 : vector<8x8x8xf32> to vector<64x8xf32>
    %271 = arith.truncf %270 : vector<64x8xf32> to vector<64x8xbf16>
    %c0_261 = arith.constant 0 : index
    %c0_262 = arith.constant 0 : index
    %c0_263 = arith.constant 0 : index
    %272 = vector.load %arg20[%c0_261, %c0_262, %c0_263] : memref<7x8x8xbf16, #tpu.memory_space<vmem>>, vector<1x8x8xbf16>
    %273 = vector.shape_cast %272 : vector<1x8x8xbf16> to vector<8x8xbf16>
    %cst_264 = arith.constant dense<0.000000e+00> : vector<64x8xf32>
    %274 = tpu.matmul %271, %273, %cst_264 {dimension_numbers = #tpu.dot_dimension_numbers<[1], [0], [0], [1], [0, 0, 1, 1], [], []>} : vector<64x8xbf16>, vector<8x8xbf16>, vector<64x8xf32> -> vector<64x8xf32>
    %275 = arith.addf %268, %274 : vector<64x8xf32>
    %c0_265 = arith.constant 0 : index
    %c6_266 = arith.constant 6 : index
    %c0_267 = arith.constant 0 : index
    %276 = vector.load %arg36[%c0_265, %c6_266, %c0_267] : memref<8x24x8xf32, #tpu.memory_space<vmem>>, vector<8x8x8xf32>
    %277 = vector.shape_cast %276 : vector<8x8x8xf32> to vector<64x8xf32>
    %278 = arith.truncf %277 : vector<64x8xf32> to vector<64x8xbf16>
    %c1_268 = arith.constant 1 : index
    %c0_269 = arith.constant 0 : index
    %c0_270 = arith.constant 0 : index
    %279 = vector.load %arg20[%c1_268, %c0_269, %c0_270] : memref<7x8x8xbf16, #tpu.memory_space<vmem>>, vector<1x8x8xbf16>
    %280 = vector.shape_cast %279 : vector<1x8x8xbf16> to vector<8x8xbf16>
    %cst_271 = arith.constant dense<0.000000e+00> : vector<64x8xf32>
    %281 = tpu.matmul %278, %280, %cst_271 {dimension_numbers = #tpu.dot_dimension_numbers<[1], [0], [0], [1], [0, 0, 1, 1], [], []>} : vector<64x8xbf16>, vector<8x8xbf16>, vector<64x8xf32> -> vector<64x8xf32>
    %282 = arith.addf %275, %281 : vector<64x8xf32>
    %c0_272 = arith.constant 0 : index
    %c7_273 = arith.constant 7 : index
    %c0_274 = arith.constant 0 : index
    %283 = vector.load %arg36[%c0_272, %c7_273, %c0_274] : memref<8x24x8xf32, #tpu.memory_space<vmem>>, vector<8x8x8xf32>
    %284 = vector.shape_cast %283 : vector<8x8x8xf32> to vector<64x8xf32>
    %285 = arith.truncf %284 : vector<64x8xf32> to vector<64x8xbf16>
    %c2_275 = arith.constant 2 : index
    %c0_276 = arith.constant 0 : index
    %c0_277 = arith.constant 0 : index
    %286 = vector.load %arg20[%c2_275, %c0_276, %c0_277] : memref<7x8x8xbf16, #tpu.memory_space<vmem>>, vector<1x8x8xbf16>
    %287 = vector.shape_cast %286 : vector<1x8x8xbf16> to vector<8x8xbf16>
    %cst_278 = arith.constant dense<0.000000e+00> : vector<64x8xf32>
    %288 = tpu.matmul %285, %287, %cst_278 {dimension_numbers = #tpu.dot_dimension_numbers<[1], [0], [0], [1], [0, 0, 1, 1], [], []>} : vector<64x8xbf16>, vector<8x8xbf16>, vector<64x8xf32> -> vector<64x8xf32>
    %289 = arith.addf %282, %288 : vector<64x8xf32>
    %c0_279 = arith.constant 0 : index
    %c8_280 = arith.constant 8 : index
    %c0_281 = arith.constant 0 : index
    %290 = vector.load %arg36[%c0_279, %c8_280, %c0_281] : memref<8x24x8xf32, #tpu.memory_space<vmem>>, vector<8x8x8xf32>
    %291 = vector.shape_cast %290 : vector<8x8x8xf32> to vector<64x8xf32>
    %292 = arith.truncf %291 : vector<64x8xf32> to vector<64x8xbf16>
    %c3_282 = arith.constant 3 : index
    %c0_283 = arith.constant 0 : index
    %c0_284 = arith.constant 0 : index
    %293 = vector.load %arg20[%c3_282, %c0_283, %c0_284] : memref<7x8x8xbf16, #tpu.memory_space<vmem>>, vector<1x8x8xbf16>
    %294 = vector.shape_cast %293 : vector<1x8x8xbf16> to vector<8x8xbf16>
    %cst_285 = arith.constant dense<0.000000e+00> : vector<64x8xf32>
    %295 = tpu.matmul %292, %294, %cst_285 {dimension_numbers = #tpu.dot_dimension_numbers<[1], [0], [0], [1], [0, 0, 1, 1], [], []>} : vector<64x8xbf16>, vector<8x8xbf16>, vector<64x8xf32> -> vector<64x8xf32>
    %296 = arith.addf %289, %295 : vector<64x8xf32>
    %c0_286 = arith.constant 0 : index
    %c9_287 = arith.constant 9 : index
    %c0_288 = arith.constant 0 : index
    %297 = vector.load %arg36[%c0_286, %c9_287, %c0_288] : memref<8x24x8xf32, #tpu.memory_space<vmem>>, vector<8x8x8xf32>
    %298 = vector.shape_cast %297 : vector<8x8x8xf32> to vector<64x8xf32>
    %299 = arith.truncf %298 : vector<64x8xf32> to vector<64x8xbf16>
    %c4_289 = arith.constant 4 : index
    %c0_290 = arith.constant 0 : index
    %c0_291 = arith.constant 0 : index
    %300 = vector.load %arg20[%c4_289, %c0_290, %c0_291] : memref<7x8x8xbf16, #tpu.memory_space<vmem>>, vector<1x8x8xbf16>
    %301 = vector.shape_cast %300 : vector<1x8x8xbf16> to vector<8x8xbf16>
    %cst_292 = arith.constant dense<0.000000e+00> : vector<64x8xf32>
    %302 = tpu.matmul %299, %301, %cst_292 {dimension_numbers = #tpu.dot_dimension_numbers<[1], [0], [0], [1], [0, 0, 1, 1], [], []>} : vector<64x8xbf16>, vector<8x8xbf16>, vector<64x8xf32> -> vector<64x8xf32>
    %303 = arith.addf %296, %302 : vector<64x8xf32>
    %c0_293 = arith.constant 0 : index
    %c10_294 = arith.constant 10 : index
    %c0_295 = arith.constant 0 : index
    %304 = vector.load %arg36[%c0_293, %c10_294, %c0_295] : memref<8x24x8xf32, #tpu.memory_space<vmem>>, vector<8x8x8xf32>
    %305 = vector.shape_cast %304 : vector<8x8x8xf32> to vector<64x8xf32>
    %306 = arith.truncf %305 : vector<64x8xf32> to vector<64x8xbf16>
    %c5_296 = arith.constant 5 : index
    %c0_297 = arith.constant 0 : index
    %c0_298 = arith.constant 0 : index
    %307 = vector.load %arg20[%c5_296, %c0_297, %c0_298] : memref<7x8x8xbf16, #tpu.memory_space<vmem>>, vector<1x8x8xbf16>
    %308 = vector.shape_cast %307 : vector<1x8x8xbf16> to vector<8x8xbf16>
    %cst_299 = arith.constant dense<0.000000e+00> : vector<64x8xf32>
    %309 = tpu.matmul %306, %308, %cst_299 {dimension_numbers = #tpu.dot_dimension_numbers<[1], [0], [0], [1], [0, 0, 1, 1], [], []>} : vector<64x8xbf16>, vector<8x8xbf16>, vector<64x8xf32> -> vector<64x8xf32>
    %310 = arith.addf %303, %309 : vector<64x8xf32>
    %c0_300 = arith.constant 0 : index
    %c11_301 = arith.constant 11 : index
    %c0_302 = arith.constant 0 : index
    %311 = vector.load %arg36[%c0_300, %c11_301, %c0_302] : memref<8x24x8xf32, #tpu.memory_space<vmem>>, vector<8x8x8xf32>
    %312 = vector.shape_cast %311 : vector<8x8x8xf32> to vector<64x8xf32>
    %313 = arith.truncf %312 : vector<64x8xf32> to vector<64x8xbf16>
    %c6_303 = arith.constant 6 : index
    %c0_304 = arith.constant 0 : index
    %c0_305 = arith.constant 0 : index
    %314 = vector.load %arg20[%c6_303, %c0_304, %c0_305] : memref<7x8x8xbf16, #tpu.memory_space<vmem>>, vector<1x8x8xbf16>
    %315 = vector.shape_cast %314 : vector<1x8x8xbf16> to vector<8x8xbf16>
    %cst_306 = arith.constant dense<0.000000e+00> : vector<64x8xf32>
    %316 = tpu.matmul %313, %315, %cst_306 {dimension_numbers = #tpu.dot_dimension_numbers<[1], [0], [0], [1], [0, 0, 1, 1], [], []>} : vector<64x8xbf16>, vector<8x8xbf16>, vector<64x8xf32> -> vector<64x8xf32>
    %317 = arith.addf %310, %316 : vector<64x8xf32>
    %c0_307 = arith.constant 0 : index
    %c0_308 = arith.constant 0 : index
    %318 = vector.load %arg21[%c0_307, %c0_308] : memref<1x8xf32, #tpu.memory_space<vmem>>, vector<1x8xf32>
    %319 = vector.broadcast %318 : vector<1x8xf32> to vector<64x8xf32>
    %320 = arith.mulf %317, %319 : vector<64x8xf32>
    %c0_309 = arith.constant 0 : index
    %c0_310 = arith.constant 0 : index
    %321 = vector.load %arg22[%c0_309, %c0_310] : memref<1x8xf32, #tpu.memory_space<vmem>>, vector<1x8xf32>
    %322 = vector.broadcast %321 : vector<1x8xf32> to vector<64x8xf32>
    %323 = arith.addf %320, %322 : vector<64x8xf32>
    %cst_311 = arith.constant 0.000000e+00 : f32
    %324 = vector.broadcast %cst_311 : f32 to vector<64x8xf32>
    %325 = arith.maximumf %323, %324 : vector<64x8xf32>
    %326 = vector.shape_cast %325 : vector<64x8xf32> to vector<8x8x8xf32>
    %cst_312 = arith.constant 0.000000e+00 : f32
    %327 = vector.broadcast %cst_312 : f32 to vector<14x8x8xf32>
    %c0_313 = arith.constant 0 : index
    %c0_314 = arith.constant 0 : index
    %c0_315 = arith.constant 0 : index
    %328 = vector.load %arg37[%c0_313, %c0_314, %c0_315] : memref<14x8x8xf32, #tpu.memory_space<vmem>>, vector<14x8x8xf32>
    tpu.vector_store %arg37[%c0_313, %c0_314, %c0_315], %327 {strides = array<i32>} : memref<14x8x8xf32, #tpu.memory_space<vmem>>, vector<14x8x8xf32>,
    %c3_316 = arith.constant 3 : index
    %c0_317 = arith.constant 0 : index
    %c0_318 = arith.constant 0 : index
    %329 = vector.load %arg37[%c3_316, %c0_317, %c0_318] : memref<14x8x8xf32, #tpu.memory_space<vmem>>, vector<8x8x8xf32>
    tpu.vector_store %arg37[%c3_316, %c0_317, %c0_318], %326 {strides = array<i32>} : memref<14x8x8xf32, #tpu.memory_space<vmem>>, vector<8x8x8xf32>,
    %cst_319 = arith.constant 0.000000e+00 : f32
    %330 = vector.broadcast %cst_319 : f32 to vector<64x8xf32>
    %c0_320 = arith.constant 0 : index
    %c0_321 = arith.constant 0 : index
    %c0_322 = arith.constant 0 : index
    %331 = vector.load %arg37[%c0_320, %c0_321, %c0_322] : memref<14x8x8xf32, #tpu.memory_space<vmem>>, vector<8x8x8xf32>
    %332 = vector.shape_cast %331 : vector<8x8x8xf32> to vector<64x8xf32>
    %333 = arith.truncf %332 : vector<64x8xf32> to vector<64x8xbf16>
    %c0_323 = arith.constant 0 : index
    %c0_324 = arith.constant 0 : index
    %c0_325 = arith.constant 0 : index
    %334 = vector.load %arg23[%c0_323, %c0_324, %c0_325] : memref<7x8x8xbf16, #tpu.memory_space<vmem>>, vector<1x8x8xbf16>
    %335 = vector.shape_cast %334 : vector<1x8x8xbf16> to vector<8x8xbf16>
    %cst_326 = arith.constant dense<0.000000e+00> : vector<64x8xf32>
    %336 = tpu.matmul %333, %335, %cst_326 {dimension_numbers = #tpu.dot_dimension_numbers<[1], [0], [0], [1], [0, 0, 1, 1], [], []>} : vector<64x8xbf16>, vector<8x8xbf16>, vector<64x8xf32> -> vector<64x8xf32>
    %337 = arith.addf %330, %336 : vector<64x8xf32>
    %c1_327 = arith.constant 1 : index
    %c0_328 = arith.constant 0 : index
    %c0_329 = arith.constant 0 : index
    %338 = vector.load %arg37[%c1_327, %c0_328, %c0_329] : memref<14x8x8xf32, #tpu.memory_space<vmem>>, vector<8x8x8xf32>
    %339 = vector.shape_cast %338 : vector<8x8x8xf32> to vector<64x8xf32>
    %340 = arith.truncf %339 : vector<64x8xf32> to vector<64x8xbf16>
    %c1_330 = arith.constant 1 : index
    %c0_331 = arith.constant 0 : index
    %c0_332 = arith.constant 0 : index
    %341 = vector.load %arg23[%c1_330, %c0_331, %c0_332] : memref<7x8x8xbf16, #tpu.memory_space<vmem>>, vector<1x8x8xbf16>
    %342 = vector.shape_cast %341 : vector<1x8x8xbf16> to vector<8x8xbf16>
    %cst_333 = arith.constant dense<0.000000e+00> : vector<64x8xf32>
    %343 = tpu.matmul %340, %342, %cst_333 {dimension_numbers = #tpu.dot_dimension_numbers<[1], [0], [0], [1], [0, 0, 1, 1], [], []>} : vector<64x8xbf16>, vector<8x8xbf16>, vector<64x8xf32> -> vector<64x8xf32>
    %344 = arith.addf %337, %343 : vector<64x8xf32>
    %c2_334 = arith.constant 2 : index
    %c0_335 = arith.constant 0 : index
    %c0_336 = arith.constant 0 : index
    %345 = vector.load %arg37[%c2_334, %c0_335, %c0_336] : memref<14x8x8xf32, #tpu.memory_space<vmem>>, vector<8x8x8xf32>
    %346 = vector.shape_cast %345 : vector<8x8x8xf32> to vector<64x8xf32>
    %347 = arith.truncf %346 : vector<64x8xf32> to vector<64x8xbf16>
    %c2_337 = arith.constant 2 : index
    %c0_338 = arith.constant 0 : index
    %c0_339 = arith.constant 0 : index
    %348 = vector.load %arg23[%c2_337, %c0_338, %c0_339] : memref<7x8x8xbf16, #tpu.memory_space<vmem>>, vector<1x8x8xbf16>
    %349 = vector.shape_cast %348 : vector<1x8x8xbf16> to vector<8x8xbf16>
    %cst_340 = arith.constant dense<0.000000e+00> : vector<64x8xf32>
    %350 = tpu.matmul %347, %349, %cst_340 {dimension_numbers = #tpu.dot_dimension_numbers<[1], [0], [0], [1], [0, 0, 1, 1], [], []>} : vector<64x8xbf16>, vector<8x8xbf16>, vector<64x8xf32> -> vector<64x8xf32>
    %351 = arith.addf %344, %350 : vector<64x8xf32>
    %c3_341 = arith.constant 3 : index
    %c0_342 = arith.constant 0 : index
    %c0_343 = arith.constant 0 : index
    %352 = vector.load %arg37[%c3_341, %c0_342, %c0_343] : memref<14x8x8xf32, #tpu.memory_space<vmem>>, vector<8x8x8xf32>
    %353 = vector.shape_cast %352 : vector<8x8x8xf32> to vector<64x8xf32>
    %354 = arith.truncf %353 : vector<64x8xf32> to vector<64x8xbf16>
    %c3_344 = arith.constant 3 : index
    %c0_345 = arith.constant 0 : index
    %c0_346 = arith.constant 0 : index
    %355 = vector.load %arg23[%c3_344, %c0_345, %c0_346] : memref<7x8x8xbf16, #tpu.memory_space<vmem>>, vector<1x8x8xbf16>
    %356 = vector.shape_cast %355 : vector<1x8x8xbf16> to vector<8x8xbf16>
    %cst_347 = arith.constant dense<0.000000e+00> : vector<64x8xf32>
    %357 = tpu.matmul %354, %356, %cst_347 {dimension_numbers = #tpu.dot_dimension_numbers<[1], [0], [0], [1], [0, 0, 1, 1], [], []>} : vector<64x8xbf16>, vector<8x8xbf16>, vector<64x8xf32> -> vector<64x8xf32>
    %358 = arith.addf %351, %357 : vector<64x8xf32>
    %c4_348 = arith.constant 4 : index
    %c0_349 = arith.constant 0 : index
    %c0_350 = arith.constant 0 : index
    %359 = vector.load %arg37[%c4_348, %c0_349, %c0_350] : memref<14x8x8xf32, #tpu.memory_space<vmem>>, vector<8x8x8xf32>
    %360 = vector.shape_cast %359 : vector<8x8x8xf32> to vector<64x8xf32>
    %361 = arith.truncf %360 : vector<64x8xf32> to vector<64x8xbf16>
    %c4_351 = arith.constant 4 : index
    %c0_352 = arith.constant 0 : index
    %c0_353 = arith.constant 0 : index
    %362 = vector.load %arg23[%c4_351, %c0_352, %c0_353] : memref<7x8x8xbf16, #tpu.memory_space<vmem>>, vector<1x8x8xbf16>
    %363 = vector.shape_cast %362 : vector<1x8x8xbf16> to vector<8x8xbf16>
    %cst_354 = arith.constant dense<0.000000e+00> : vector<64x8xf32>
    %364 = tpu.matmul %361, %363, %cst_354 {dimension_numbers = #tpu.dot_dimension_numbers<[1], [0], [0], [1], [0, 0, 1, 1], [], []>} : vector<64x8xbf16>, vector<8x8xbf16>, vector<64x8xf32> -> vector<64x8xf32>
    %365 = arith.addf %358, %364 : vector<64x8xf32>
    %c5_355 = arith.constant 5 : index
    %c0_356 = arith.constant 0 : index
    %c0_357 = arith.constant 0 : index
    %366 = vector.load %arg37[%c5_355, %c0_356, %c0_357] : memref<14x8x8xf32, #tpu.memory_space<vmem>>, vector<8x8x8xf32>
    %367 = vector.shape_cast %366 : vector<8x8x8xf32> to vector<64x8xf32>
    %368 = arith.truncf %367 : vector<64x8xf32> to vector<64x8xbf16>
    %c5_358 = arith.constant 5 : index
    %c0_359 = arith.constant 0 : index
    %c0_360 = arith.constant 0 : index
    %369 = vector.load %arg23[%c5_358, %c0_359, %c0_360] : memref<7x8x8xbf16, #tpu.memory_space<vmem>>, vector<1x8x8xbf16>
    %370 = vector.shape_cast %369 : vector<1x8x8xbf16> to vector<8x8xbf16>
    %cst_361 = arith.constant dense<0.000000e+00> : vector<64x8xf32>
    %371 = tpu.matmul %368, %370, %cst_361 {dimension_numbers = #tpu.dot_dimension_numbers<[1], [0], [0], [1], [0, 0, 1, 1], [], []>} : vector<64x8xbf16>, vector<8x8xbf16>, vector<64x8xf32> -> vector<64x8xf32>
    %372 = arith.addf %365, %371 : vector<64x8xf32>
    %c6_362 = arith.constant 6 : index
    %c0_363 = arith.constant 0 : index
    %c0_364 = arith.constant 0 : index
    %373 = vector.load %arg37[%c6_362, %c0_363, %c0_364] : memref<14x8x8xf32, #tpu.memory_space<vmem>>, vector<8x8x8xf32>
    %374 = vector.shape_cast %373 : vector<8x8x8xf32> to vector<64x8xf32>
    %375 = arith.truncf %374 : vector<64x8xf32> to vector<64x8xbf16>
    %c6_365 = arith.constant 6 : index
    %c0_366 = arith.constant 0 : index
    %c0_367 = arith.constant 0 : index
    %376 = vector.load %arg23[%c6_365, %c0_366, %c0_367] : memref<7x8x8xbf16, #tpu.memory_space<vmem>>, vector<1x8x8xbf16>
    %377 = vector.shape_cast %376 : vector<1x8x8xbf16> to vector<8x8xbf16>
    %cst_368 = arith.constant dense<0.000000e+00> : vector<64x8xf32>
    %378 = tpu.matmul %375, %377, %cst_368 {dimension_numbers = #tpu.dot_dimension_numbers<[1], [0], [0], [1], [0, 0, 1, 1], [], []>} : vector<64x8xbf16>, vector<8x8xbf16>, vector<64x8xf32> -> vector<64x8xf32>
    %379 = arith.addf %372, %378 : vector<64x8xf32>
    %c0_369 = arith.constant 0 : index
    %c0_370 = arith.constant 0 : index
    %380 = vector.load %arg24[%c0_369, %c0_370] : memref<1x8xf32, #tpu.memory_space<vmem>>, vector<1x8xf32>
    %381 = vector.broadcast %380 : vector<1x8xf32> to vector<64x8xf32>
    %382 = arith.mulf %379, %381 : vector<64x8xf32>
    %c0_371 = arith.constant 0 : index
    %c0_372 = arith.constant 0 : index
    %383 = vector.load %arg25[%c0_371, %c0_372] : memref<1x8xf32, #tpu.memory_space<vmem>>, vector<1x8xf32>
    %384 = vector.broadcast %383 : vector<1x8xf32> to vector<64x8xf32>
    %385 = arith.addf %382, %384 : vector<64x8xf32>
    %cst_373 = arith.constant 0.000000e+00 : f32
    %386 = vector.broadcast %cst_373 : f32 to vector<64x8xf32>
    %387 = arith.maximumf %385, %386 : vector<64x8xf32>
    %388 = vector.shape_cast %387 : vector<64x8xf32> to vector<8x8x8xf32>
    %cst_374 = arith.constant 0.000000e+00 : f32
    %389 = vector.broadcast %cst_374 : f32 to vector<8x24x8xf32>
    %c0_375 = arith.constant 0 : index
    %c0_376 = arith.constant 0 : index
    %c0_377 = arith.constant 0 : index
    %390 = vector.load %arg36[%c0_375, %c0_376, %c0_377] : memref<8x24x8xf32, #tpu.memory_space<vmem>>, vector<8x24x8xf32>
    tpu.vector_store %arg36[%c0_375, %c0_376, %c0_377], %389 {strides = array<i32>} : memref<8x24x8xf32, #tpu.memory_space<vmem>>, vector<8x24x8xf32>,
    %c0_378 = arith.constant 0 : index
    %c8_379 = arith.constant 8 : index
    %c0_380 = arith.constant 0 : index
    %391 = vector.load %arg36[%c0_378, %c8_379, %c0_380] : memref<8x24x8xf32, #tpu.memory_space<vmem>>, vector<8x8x8xf32>
    tpu.vector_store %arg36[%c0_378, %c8_379, %c0_380], %388 {strides = array<i32>} : memref<8x24x8xf32, #tpu.memory_space<vmem>>, vector<8x8x8xf32>,
    %cst_381 = arith.constant 0.000000e+00 : f32
    %392 = vector.broadcast %cst_381 : f32 to vector<64x192xf32>
    %c0_382 = arith.constant 0 : index
    %c5_383 = arith.constant 5 : index
    %c0_384 = arith.constant 0 : index
    %393 = vector.load %arg36[%c0_382, %c5_383, %c0_384] : memref<8x24x8xf32, #tpu.memory_space<vmem>>, vector<8x8x8xf32>
    %394 = vector.shape_cast %393 : vector<8x8x8xf32> to vector<64x8xf32>
    %395 = arith.truncf %394 : vector<64x8xf32> to vector<64x8xbf16>
    %c0_385 = arith.constant 0 : index
    %c0_386 = arith.constant 0 : index
    %c0_387 = arith.constant 0 : index
    %396 = vector.load %arg26[%c0_385, %c0_386, %c0_387] : memref<7x8x192xbf16, #tpu.memory_space<vmem>>, vector<1x8x192xbf16>
    %397 = vector.shape_cast %396 : vector<1x8x192xbf16> to vector<8x192xbf16>
    %cst_388 = arith.constant dense<0.000000e+00> : vector<64x192xf32>
    %398 = tpu.matmul %395, %397, %cst_388 {dimension_numbers = #tpu.dot_dimension_numbers<[1], [0], [0], [1], [0, 0, 1, 1], [], []>} : vector<64x8xbf16>, vector<8x192xbf16>, vector<64x192xf32> -> vector<64x192xf32>
    %399 = arith.addf %392, %398 : vector<64x192xf32>
    %c0_389 = arith.constant 0 : index
    %c6_390 = arith.constant 6 : index
    %c0_391 = arith.constant 0 : index
    %400 = vector.load %arg36[%c0_389, %c6_390, %c0_391] : memref<8x24x8xf32, #tpu.memory_space<vmem>>, vector<8x8x8xf32>
    %401 = vector.shape_cast %400 : vector<8x8x8xf32> to vector<64x8xf32>
    %402 = arith.truncf %401 : vector<64x8xf32> to vector<64x8xbf16>
    %c1_392 = arith.constant 1 : index
    %c0_393 = arith.constant 0 : index
    %c0_394 = arith.constant 0 : index
    %403 = vector.load %arg26[%c1_392, %c0_393, %c0_394] : memref<7x8x192xbf16, #tpu.memory_space<vmem>>, vector<1x8x192xbf16>
    %404 = vector.shape_cast %403 : vector<1x8x192xbf16> to vector<8x192xbf16>
    %cst_395 = arith.constant dense<0.000000e+00> : vector<64x192xf32>
    %405 = tpu.matmul %402, %404, %cst_395 {dimension_numbers = #tpu.dot_dimension_numbers<[1], [0], [0], [1], [0, 0, 1, 1], [], []>} : vector<64x8xbf16>, vector<8x192xbf16>, vector<64x192xf32> -> vector<64x192xf32>
    %406 = arith.addf %399, %405 : vector<64x192xf32>
    %c0_396 = arith.constant 0 : index
    %c7_397 = arith.constant 7 : index
    %c0_398 = arith.constant 0 : index
    %407 = vector.load %arg36[%c0_396, %c7_397, %c0_398] : memref<8x24x8xf32, #tpu.memory_space<vmem>>, vector<8x8x8xf32>
    %408 = vector.shape_cast %407 : vector<8x8x8xf32> to vector<64x8xf32>
    %409 = arith.truncf %408 : vector<64x8xf32> to vector<64x8xbf16>
    %c2_399 = arith.constant 2 : index
    %c0_400 = arith.constant 0 : index
    %c0_401 = arith.constant 0 : index
    %410 = vector.load %arg26[%c2_399, %c0_400, %c0_401] : memref<7x8x192xbf16, #tpu.memory_space<vmem>>, vector<1x8x192xbf16>
    %411 = vector.shape_cast %410 : vector<1x8x192xbf16> to vector<8x192xbf16>
    %cst_402 = arith.constant dense<0.000000e+00> : vector<64x192xf32>
    %412 = tpu.matmul %409, %411, %cst_402 {dimension_numbers = #tpu.dot_dimension_numbers<[1], [0], [0], [1], [0, 0, 1, 1], [], []>} : vector<64x8xbf16>, vector<8x192xbf16>, vector<64x192xf32> -> vector<64x192xf32>
    %413 = arith.addf %406, %412 : vector<64x192xf32>
    %c0_403 = arith.constant 0 : index
    %c8_404 = arith.constant 8 : index
    %c0_405 = arith.constant 0 : index
    %414 = vector.load %arg36[%c0_403, %c8_404, %c0_405] : memref<8x24x8xf32, #tpu.memory_space<vmem>>, vector<8x8x8xf32>
    %415 = vector.shape_cast %414 : vector<8x8x8xf32> to vector<64x8xf32>
    %416 = arith.truncf %415 : vector<64x8xf32> to vector<64x8xbf16>
    %c3_406 = arith.constant 3 : index
    %c0_407 = arith.constant 0 : index
    %c0_408 = arith.constant 0 : index
    %417 = vector.load %arg26[%c3_406, %c0_407, %c0_408] : memref<7x8x192xbf16, #tpu.memory_space<vmem>>, vector<1x8x192xbf16>
    %418 = vector.shape_cast %417 : vector<1x8x192xbf16> to vector<8x192xbf16>
    %cst_409 = arith.constant dense<0.000000e+00> : vector<64x192xf32>
    %419 = tpu.matmul %416, %418, %cst_409 {dimension_numbers = #tpu.dot_dimension_numbers<[1], [0], [0], [1], [0, 0, 1, 1], [], []>} : vector<64x8xbf16>, vector<8x192xbf16>, vector<64x192xf32> -> vector<64x192xf32>
    %420 = arith.addf %413, %419 : vector<64x192xf32>
    %c0_410 = arith.constant 0 : index
    %c9_411 = arith.constant 9 : index
    %c0_412 = arith.constant 0 : index
    %421 = vector.load %arg36[%c0_410, %c9_411, %c0_412] : memref<8x24x8xf32, #tpu.memory_space<vmem>>, vector<8x8x8xf32>
    %422 = vector.shape_cast %421 : vector<8x8x8xf32> to vector<64x8xf32>
    %423 = arith.truncf %422 : vector<64x8xf32> to vector<64x8xbf16>
    %c4_413 = arith.constant 4 : index
    %c0_414 = arith.constant 0 : index
    %c0_415 = arith.constant 0 : index
    %424 = vector.load %arg26[%c4_413, %c0_414, %c0_415] : memref<7x8x192xbf16, #tpu.memory_space<vmem>>, vector<1x8x192xbf16>
    %425 = vector.shape_cast %424 : vector<1x8x192xbf16> to vector<8x192xbf16>
    %cst_416 = arith.constant dense<0.000000e+00> : vector<64x192xf32>
    %426 = tpu.matmul %423, %425, %cst_416 {dimension_numbers = #tpu.dot_dimension_numbers<[1], [0], [0], [1], [0, 0, 1, 1], [], []>} : vector<64x8xbf16>, vector<8x192xbf16>, vector<64x192xf32> -> vector<64x192xf32>
    %427 = arith.addf %420, %426 : vector<64x192xf32>
    %c0_417 = arith.constant 0 : index
    %c10_418 = arith.constant 10 : index
    %c0_419 = arith.constant 0 : index
    %428 = vector.load %arg36[%c0_417, %c10_418, %c0_419] : memref<8x24x8xf32, #tpu.memory_space<vmem>>, vector<8x8x8xf32>
    %429 = vector.shape_cast %428 : vector<8x8x8xf32> to vector<64x8xf32>
    %430 = arith.truncf %429 : vector<64x8xf32> to vector<64x8xbf16>
    %c5_420 = arith.constant 5 : index
    %c0_421 = arith.constant 0 : index
    %c0_422 = arith.constant 0 : index
    %431 = vector.load %arg26[%c5_420, %c0_421, %c0_422] : memref<7x8x192xbf16, #tpu.memory_space<vmem>>, vector<1x8x192xbf16>
    %432 = vector.shape_cast %431 : vector<1x8x192xbf16> to vector<8x192xbf16>
    %cst_423 = arith.constant dense<0.000000e+00> : vector<64x192xf32>
    %433 = tpu.matmul %430, %432, %cst_423 {dimension_numbers = #tpu.dot_dimension_numbers<[1], [0], [0], [1], [0, 0, 1, 1], [], []>} : vector<64x8xbf16>, vector<8x192xbf16>, vector<64x192xf32> -> vector<64x192xf32>
    %434 = arith.addf %427, %433 : vector<64x192xf32>
    %c0_424 = arith.constant 0 : index
    %c11_425 = arith.constant 11 : index
    %c0_426 = arith.constant 0 : index
    %435 = vector.load %arg36[%c0_424, %c11_425, %c0_426] : memref<8x24x8xf32, #tpu.memory_space<vmem>>, vector<8x8x8xf32>
    %436 = vector.shape_cast %435 : vector<8x8x8xf32> to vector<64x8xf32>
    %437 = arith.truncf %436 : vector<64x8xf32> to vector<64x8xbf16>
    %c6_427 = arith.constant 6 : index
    %c0_428 = arith.constant 0 : index
    %c0_429 = arith.constant 0 : index
    %438 = vector.load %arg26[%c6_427, %c0_428, %c0_429] : memref<7x8x192xbf16, #tpu.memory_space<vmem>>, vector<1x8x192xbf16>
    %439 = vector.shape_cast %438 : vector<1x8x192xbf16> to vector<8x192xbf16>
    %cst_430 = arith.constant dense<0.000000e+00> : vector<64x192xf32>
    %440 = tpu.matmul %437, %439, %cst_430 {dimension_numbers = #tpu.dot_dimension_numbers<[1], [0], [0], [1], [0, 0, 1, 1], [], []>} : vector<64x8xbf16>, vector<8x192xbf16>, vector<64x192xf32> -> vector<64x192xf32>
    %441 = arith.addf %434, %440 : vector<64x192xf32>
    %c0_431 = arith.constant 0 : index
    %c0_432 = arith.constant 0 : index
    %442 = vector.load %arg27[%c0_431, %c0_432] : memref<1x192xf32, #tpu.memory_space<vmem>>, vector<1x192xf32>
    %443 = vector.broadcast %442 : vector<1x192xf32> to vector<64x192xf32>
    %444 = arith.mulf %441, %443 : vector<64x192xf32>
    %c0_433 = arith.constant 0 : index
    %c0_434 = arith.constant 0 : index
    %445 = vector.load %arg28[%c0_433, %c0_434] : memref<1x192xf32, #tpu.memory_space<vmem>>, vector<1x192xf32>
    %446 = vector.broadcast %445 : vector<1x192xf32> to vector<64x192xf32>
    %447 = arith.addf %444, %446 : vector<64x192xf32>
    %cst_435 = arith.constant 0.000000e+00 : f32
    %448 = vector.broadcast %cst_435 : f32 to vector<64x192xf32>
    %449 = arith.maximumf %447, %448 : vector<64x192xf32>
    %450 = vector.shape_cast %14 : vector<64x192xf32> to vector<8x8x192xf32>
    %c0_436 = arith.constant 0 : index
    %c0_437 = arith.constant 0 : index
    %c0_438 = arith.constant 0 : index
    %c0_439 = arith.constant 0 : index
    %451 = vector.load %arg32[%c0_436, %c0_437, %c0_438, %c0_439] : memref<1x8x8x192xf32, #tpu.memory_space<vmem>>, vector<1x8x8x192xf32>
    %452 = vector.shape_cast %451 : vector<1x8x8x192xf32> to vector<8x8x192xf32>
    %453 = vector.shape_cast %450 : vector<8x8x192xf32> to vector<1x8x8x192xf32>
    tpu.vector_store %arg32[%c0_436, %c0_437, %c0_438, %c0_439], %453 {strides = array<i32>} : memref<1x8x8x192xf32, #tpu.memory_space<vmem>>, vector<1x8x8x192xf32>,
    %454 = vector.shape_cast %201 : vector<64x192xf32> to vector<8x8x192xf32>
    %c0_440 = arith.constant 0 : index
    %c0_441 = arith.constant 0 : index
    %c0_442 = arith.constant 0 : index
    %c0_443 = arith.constant 0 : index
    %455 = vector.load %arg33[%c0_440, %c0_441, %c0_442, %c0_443] : memref<1x8x8x192xf32, #tpu.memory_space<vmem>>, vector<1x8x8x192xf32>
    %456 = vector.shape_cast %455 : vector<1x8x8x192xf32> to vector<8x8x192xf32>
    %457 = vector.shape_cast %454 : vector<8x8x192xf32> to vector<1x8x8x192xf32>
    tpu.vector_store %arg33[%c0_440, %c0_441, %c0_442, %c0_443], %457 {strides = array<i32>} : memref<1x8x8x192xf32, #tpu.memory_space<vmem>>, vector<1x8x8x192xf32>,
    %458 = vector.shape_cast %449 : vector<64x192xf32> to vector<8x8x192xf32>
    %c0_444 = arith.constant 0 : index
    %c0_445 = arith.constant 0 : index
    %c0_446 = arith.constant 0 : index
    %c0_447 = arith.constant 0 : index
    %459 = vector.load %arg34[%c0_444, %c0_445, %c0_446, %c0_447] : memref<1x8x8x192xf32, #tpu.memory_space<vmem>>, vector<1x8x8x192xf32>
    %460 = vector.shape_cast %459 : vector<1x8x8x192xf32> to vector<8x8x192xf32>
    %461 = vector.shape_cast %458 : vector<8x8x192xf32> to vector<1x8x8x192xf32>
    tpu.vector_store %arg34[%c0_444, %c0_445, %c0_446, %c0_447], %461 {strides = array<i32>} : memref<1x8x8x192xf32, #tpu.memory_space<vmem>>, vector<1x8x8x192xf32>,
    %462 = vector.shape_cast %77 : vector<64x192xf32> to vector<8x8x192xf32>
    %c0_448 = arith.constant 0 : index
    %c0_449 = arith.constant 0 : index
    %c0_450 = arith.constant 0 : index
    %c0_451 = arith.constant 0 : index
    %463 = vector.load %arg35[%c0_448, %c0_449, %c0_450, %c0_451] : memref<1x8x8x192xf32, #tpu.memory_space<vmem>>, vector<1x8x8x192xf32>
    %464 = vector.shape_cast %463 : vector<1x8x8x192xf32> to vector<8x8x192xf32>
    %465 = vector.shape_cast %462 : vector<8x8x192xf32> to vector<1x8x8x192xf32>
    tpu.vector_store %arg35[%c0_448, %c0_449, %c0_450, %c0_451], %465 {strides = array<i32>} : memref<1x8x8x192xf32, #tpu.memory_space<vmem>>, vector<1x8x8x192xf32>,
    return
  }
  func.func @transform_0(%arg0: i32) -> (i32, i32, i32, i32) {
    %c0_i32 = arith.constant 0 : i32
    %c0_i32_0 = arith.constant 0 : i32
    %c0_i32_1 = arith.constant 0 : i32
    %c0_i32_2 = arith.constant 0 : i32
    return %arg0, %c0_i32, %c0_i32_0, %c0_i32_1 : i32, i32, i32, i32
  }
  func.func @transform_1(%arg0: i32) -> (i32, i32, i32) {
    %c0_i32 = arith.constant 0 : i32
    %c0_i32_0 = arith.constant 0 : i32
    %c0_i32_1 = arith.constant 0 : i32
    %c0_i32_2 = arith.constant 0 : i32
    return %c0_i32, %c0_i32_0, %c0_i32_1 : i32, i32, i32
  }
  func.func @transform_2(%arg0: i32) -> (i32, i32) {
    %c0_i32 = arith.constant 0 : i32
    %c0_i32_0 = arith.constant 0 : i32
    %c0_i32_1 = arith.constant 0 : i32
    return %c0_i32, %c0_i32_0 : i32, i32
  }
  func.func @transform_3(%arg0: i32) -> (i32, i32) {
    %c0_i32 = arith.constant 0 : i32
    %c0_i32_0 = arith.constant 0 : i32
    %c0_i32_1 = arith.constant 0 : i32
    return %c0_i32, %c0_i32_0 : i32, i32
  }
  func.func @transform_4(%arg0: i32) -> (i32, i32, i32) {
    %c0_i32 = arith.constant 0 : i32
    %c0_i32_0 = arith.constant 0 : i32
    %c0_i32_1 = arith.constant 0 : i32
    %c0_i32_2 = arith.constant 0 : i32
    return %c0_i32, %c0_i32_0, %c0_i32_1 : i32, i32, i32
  }
  func.func @transform_5(%arg0: i32) -> (i32, i32) {
    %c0_i32 = arith.constant 0 : i32
    %c0_i32_0 = arith.constant 0 : i32
    %c0_i32_1 = arith.constant 0 : i32
    return %c0_i32, %c0_i32_0 : i32, i32
  }
  func.func @transform_6(%arg0: i32) -> (i32, i32) {
    %c0_i32 = arith.constant 0 : i32
    %c0_i32_0 = arith.constant 0 : i32
    %c0_i32_1 = arith.constant 0 : i32
    return %c0_i32, %c0_i32_0 : i32, i32
  }
  func.func @transform_7(%arg0: i32) -> (i32, i32, i32) {
    %c0_i32 = arith.constant 0 : i32
    %c0_i32_0 = arith.constant 0 : i32
    %c0_i32_1 = arith.constant 0 : i32
    %c0_i32_2 = arith.constant 0 : i32
    return %c0_i32, %c0_i32_0, %c0_i32_1 : i32, i32, i32
  }
  func.func @transform_8(%arg0: i32) -> (i32, i32) {
    %c0_i32 = arith.constant 0 : i32
    %c0_i32_0 = arith.constant 0 : i32
    %c0_i32_1 = arith.constant 0 : i32
    return %c0_i32, %c0_i32_0 : i32, i32
  }
  func.func @transform_9(%arg0: i32) -> (i32, i32) {
    %c0_i32 = arith.constant 0 : i32
    %c0_i32_0 = arith.constant 0 : i32
    %c0_i32_1 = arith.constant 0 : i32
    return %c0_i32, %c0_i32_0 : i32, i32
  }
  func.func @transform_10(%arg0: i32) -> (i32, i32, i32) {
    %c0_i32 = arith.constant 0 : i32
    %c0_i32_0 = arith.constant 0 : i32
    %c0_i32_1 = arith.constant 0 : i32
    %c0_i32_2 = arith.constant 0 : i32
    return %c0_i32, %c0_i32_0, %c0_i32_1 : i32, i32, i32
  }
  func.func @transform_11(%arg0: i32) -> (i32, i32) {
    %c0_i32 = arith.constant 0 : i32
    %c0_i32_0 = arith.constant 0 : i32
    %c0_i32_1 = arith.constant 0 : i32
    return %c0_i32, %c0_i32_0 : i32, i32
  }
  func.func @transform_12(%arg0: i32) -> (i32, i32) {
    %c0_i32 = arith.constant 0 : i32
    %c0_i32_0 = arith.constant 0 : i32
    %c0_i32_1 = arith.constant 0 : i32
    return %c0_i32, %c0_i32_0 : i32, i32
  }
  func.func @transform_13(%arg0: i32) -> (i32, i32, i32) {
    %c0_i32 = arith.constant 0 : i32
    %c0_i32_0 = arith.constant 0 : i32
    %c0_i32_1 = arith.constant 0 : i32
    %c0_i32_2 = arith.constant 0 : i32
    return %c0_i32, %c0_i32_0, %c0_i32_1 : i32, i32, i32
  }
  func.func @transform_14(%arg0: i32) -> (i32, i32) {
    %c0_i32 = arith.constant 0 : i32
    %c0_i32_0 = arith.constant 0 : i32
    %c0_i32_1 = arith.constant 0 : i32
    return %c0_i32, %c0_i32_0 : i32, i32
  }
  func.func @transform_15(%arg0: i32) -> (i32, i32) {
    %c0_i32 = arith.constant 0 : i32
    %c0_i32_0 = arith.constant 0 : i32
    %c0_i32_1 = arith.constant 0 : i32
    return %c0_i32, %c0_i32_0 : i32, i32
  }
  func.func @transform_16(%arg0: i32) -> (i32, i32, i32) {
    %c0_i32 = arith.constant 0 : i32
    %c0_i32_0 = arith.constant 0 : i32
    %c0_i32_1 = arith.constant 0 : i32
    %c0_i32_2 = arith.constant 0 : i32
    return %c0_i32, %c0_i32_0, %c0_i32_1 : i32, i32, i32
  }
  func.func @transform_17(%arg0: i32) -> (i32, i32) {
    %c0_i32 = arith.constant 0 : i32
    %c0_i32_0 = arith.constant 0 : i32
    %c0_i32_1 = arith.constant 0 : i32
    return %c0_i32, %c0_i32_0 : i32, i32
  }
  func.func @transform_18(%arg0: i32) -> (i32, i32) {
    %c0_i32 = arith.constant 0 : i32
    %c0_i32_0 = arith.constant 0 : i32
    %c0_i32_1 = arith.constant 0 : i32
    return %c0_i32, %c0_i32_0 : i32, i32
  }
  func.func @transform_19(%arg0: i32) -> (i32, i32, i32) {
    %c0_i32 = arith.constant 0 : i32
    %c0_i32_0 = arith.constant 0 : i32
    %c0_i32_1 = arith.constant 0 : i32
    %c0_i32_2 = arith.constant 0 : i32
    return %c0_i32, %c0_i32_0, %c0_i32_1 : i32, i32, i32
  }
  func.func @transform_20(%arg0: i32) -> (i32, i32) {
    %c0_i32 = arith.constant 0 : i32
    %c0_i32_0 = arith.constant 0 : i32
    %c0_i32_1 = arith.constant 0 : i32
    return %c0_i32, %c0_i32_0 : i32, i32
  }
  func.func @transform_21(%arg0: i32) -> (i32, i32) {
    %c0_i32 = arith.constant 0 : i32
    %c0_i32_0 = arith.constant 0 : i32
    %c0_i32_1 = arith.constant 0 : i32
    return %c0_i32, %c0_i32_0 : i32, i32
  }
  func.func @transform_22(%arg0: i32) -> (i32, i32, i32) {
    %c0_i32 = arith.constant 0 : i32
    %c0_i32_0 = arith.constant 0 : i32
    %c0_i32_1 = arith.constant 0 : i32
    %c0_i32_2 = arith.constant 0 : i32
    return %c0_i32, %c0_i32_0, %c0_i32_1 : i32, i32, i32
  }
  func.func @transform_23(%arg0: i32) -> (i32, i32) {
    %c0_i32 = arith.constant 0 : i32
    %c0_i32_0 = arith.constant 0 : i32
    %c0_i32_1 = arith.constant 0 : i32
    return %c0_i32, %c0_i32_0 : i32, i32
  }
  func.func @transform_24(%arg0: i32) -> (i32, i32) {
    %c0_i32 = arith.constant 0 : i32
    %c0_i32_0 = arith.constant 0 : i32
    %c0_i32_1 = arith.constant 0 : i32
    return %c0_i32, %c0_i32_0 : i32, i32
  }
  func.func @transform_25(%arg0: i32) -> (i32, i32, i32) {
    %c0_i32 = arith.constant 0 : i32
    %c0_i32_0 = arith.constant 0 : i32
    %c0_i32_1 = arith.constant 0 : i32
    %c0_i32_2 = arith.constant 0 : i32
    return %c0_i32, %c0_i32_0, %c0_i32_1 : i32, i32, i32
  }
  func.func @transform_26(%arg0: i32) -> (i32, i32) {
    %c0_i32 = arith.constant 0 : i32
    %c0_i32_0 = arith.constant 0 : i32
    %c0_i32_1 = arith.constant 0 : i32
    return %c0_i32, %c0_i32_0 : i32, i32
  }
  func.func @transform_27(%arg0: i32) -> (i32, i32) {
    %c0_i32 = arith.constant 0 : i32
    %c0_i32_0 = arith.constant 0 : i32
    %c0_i32_1 = arith.constant 0 : i32
    return %c0_i32, %c0_i32_0 : i32, i32
  }
  func.func @transform_28(%arg0: i32) -> (i32, i32, i32) {
    %c0_i32 = arith.constant 0 : i32
    %c0_i32_0 = arith.constant 0 : i32
    %c0_i32_1 = arith.constant 0 : i32
    %c0_i32_2 = arith.constant 0 : i32
    return %c0_i32, %c0_i32_0, %c0_i32_1 : i32, i32, i32
  }
  func.func @transform_29(%arg0: i32) -> (i32, i32) {
    %c0_i32 = arith.constant 0 : i32
    %c0_i32_0 = arith.constant 0 : i32
    %c0_i32_1 = arith.constant 0 : i32
    return %c0_i32, %c0_i32_0 : i32, i32
  }
  func.func @transform_30(%arg0: i32) -> (i32, i32) {
    %c0_i32 = arith.constant 0 : i32
    %c0_i32_0 = arith.constant 0 : i32
    %c0_i32_1 = arith.constant 0 : i32
    return %c0_i32, %c0_i32_0 : i32, i32
  }
  func.func @transform_31(%arg0: i32) -> (i32, i32, i32, i32) {
    %c0_i32 = arith.constant 0 : i32
    %c0_i32_0 = arith.constant 0 : i32
    %c0_i32_1 = arith.constant 0 : i32
    %c0_i32_2 = arith.constant 0 : i32
    return %arg0, %c0_i32, %c0_i32_0, %c0_i32_1 : i32, i32, i32, i32
  }
  func.func @transform_32(%arg0: i32) -> (i32, i32, i32, i32) {
    %c0_i32 = arith.constant 0 : i32
    %c0_i32_0 = arith.constant 0 : i32
    %c0_i32_1 = arith.constant 0 : i32
    %c0_i32_2 = arith.constant 0 : i32
    return %arg0, %c0_i32, %c0_i32_0, %c0_i32_1 : i32, i32, i32, i32
  }
  func.func @transform_33(%arg0: i32) -> (i32, i32, i32, i32) {
    %c0_i32 = arith.constant 0 : i32
    %c0_i32_0 = arith.constant 0 : i32
    %c0_i32_1 = arith.constant 0 : i32
    %c0_i32_2 = arith.constant 0 : i32
    return %arg0, %c0_i32, %c0_i32_0, %c0_i32_1 : i32, i32, i32, i32
  }
  func.func @transform_34(%arg0: i32) -> (i32, i32, i32, i32) {
    %c0_i32 = arith.constant 0 : i32
    %c0_i32_0 = arith.constant 0 : i32
    %c0_i32_1 = arith.constant 0 : i32
    %c0_i32_2 = arith.constant 0 : i32
    return %arg0, %c0_i32, %c0_i32_0, %c0_i32_1 : i32, i32, i32, i32
  }
}

</mosaic_0001>

<llo_original>
// kernel: inception_c_forward.1
$region0: #{inception_c_forward.1}
  #allocation0 [shape = 'u32[]', space=smem, size = 0x4, offset = 0x4, fixed_abs, tag = 'smem constant byte address 0x4 - core index']
  #allocation1 [shape = 'u32[72,128]{1,0:T(1,128)}', space=vmem, size = 0x9000, scoped, tag = 'internal scratch']
  #allocation2 [shape = 'f32[8,24,8]{2,1,0:T(8,128)}', space=vmem, size = 0x18000, scoped, tag = 'scratch operand']
  #allocation3 [shape = 'f32[14,8,8]{2,1,0:T(8,128)}', space=vmem, size = 0xe000, scoped, tag = 'scratch operand']
  %s0 = inlined_call_operand.smem [shape: u32[35], index: -1, kind: input, shape index: {}]
  %s1 = sld [smem:[%s0]]
  %s2 = scalar_lea.smem %s0, 1
  %s3 = sld [smem:[%s2]]
  %s4 = scalar_lea.smem %s0, 2
  %s5 = sld [smem:[%s4]]
  %s6 = scalar_lea.smem %s0, 3
  %s7 = sld [smem:[%s6]]
  %s8 = scalar_lea.smem %s0, 4
  %s9 = sld [smem:[%s8]]
  %s10 = scalar_lea.smem %s0, 5
  %s11 = sld [smem:[%s10]]
  %s12 = scalar_lea.smem %s0, 6
  %s13 = sld [smem:[%s12]]
  %s14 = scalar_lea.smem %s0, 7
  %s15 = sld [smem:[%s14]]
  %s16 = scalar_lea.smem %s0, 8
  %s17 = sld [smem:[%s16]]
  %s18 = scalar_lea.smem %s0, 9
  %s19 = sld [smem:[%s18]]
  %s20 = scalar_lea.smem %s0, 10
  %s21 = sld [smem:[%s20]]
  %s22 = scalar_lea.smem %s0, 11
  %s23 = sld [smem:[%s22]]
  %s24 = scalar_lea.smem %s0, 12
  %s25 = sld [smem:[%s24]]
  %s26 = scalar_lea.smem %s0, 13
  %s27 = sld [smem:[%s26]]
  %s28 = scalar_lea.smem %s0, 14
  %s29 = sld [smem:[%s28]]
  %s30 = scalar_lea.smem %s0, 15
  %s31 = sld [smem:[%s30]]
  %s32 = scalar_lea.smem %s0, 16
  %s33 = sld [smem:[%s32]]
  %s34 = scalar_lea.smem %s0, 17
  %s35 = sld [smem:[%s34]]
  %s36 = scalar_lea.smem %s0, 18
  %s37 = sld [smem:[%s36]]
  %s38 = scalar_lea.smem %s0, 19
  %s39 = sld [smem:[%s38]]
  %s40 = scalar_lea.smem %s0, 20
  %s41 = sld [smem:[%s40]]
  %s42 = scalar_lea.smem %s0, 21
  %s43 = sld [smem:[%s42]]
  %s44 = scalar_lea.smem %s0, 22
  %s45 = sld [smem:[%s44]]
  %s46 = scalar_lea.smem %s0, 23
  %s47 = sld [smem:[%s46]]
  %s48 = scalar_lea.smem %s0, 24
  %s49 = sld [smem:[%s48]]
  %s50 = scalar_lea.smem %s0, 25
  %s51 = sld [smem:[%s50]]
  %s52 = scalar_lea.smem %s0, 26
  %s53 = sld [smem:[%s52]]
  %s54 = scalar_lea.smem %s0, 27
  %s55 = sld [smem:[%s54]]
  %s56 = scalar_lea.smem %s0, 28
  %s57 = sld [smem:[%s56]]
  %s58 = scalar_lea.smem %s0, 29
  %s59 = sld [smem:[%s58]]
  %s60 = scalar_lea.smem %s0, 30
  %s61 = sld [smem:[%s60]]
  %s62 = scalar_lea.smem %s0, 31
  %s63 = sld [smem:[%s62]]
  %s64 = scalar_lea.smem %s0, 32
  %s65 = sld [smem:[%s64]]
  %s66 = scalar_lea.smem %s0, 33
  %s67 = sld [smem:[%s66]]
  %s68 = scalar_lea.smem %s0, 34
  %s69 = sld [smem:[%s68]]
  %70 = xla_tuple %s63, %s65, %s67, %s69
  %s71 = sld [smem:[#allocation0]]
  $region181: #{inception_c_forward.1} parent=0
    _
  %s73 = ssub.s32 1, %s71
  %s74 = scalar_select 0, %s73, %s71
  loop: start=0, step=1, limit=4
  $region2: #{inception_c_forward.1} parent=0 // loop_pre_header
    _
  $region3: #{inception_c_forward.1} parent=0 // loop_header
    %s76 = sphi 0, %s80
    %p77 = scmp.ge.s32.totalorder %s76, 4
    %s86 = sphi 0, %s88
    %s89 = sphi 0, %s86
    %s90 = sphi 0, %s89
    %s106 = sphi 0, %s90
    %s110 = sphi 0, %s110
    %s112 = sphi 0, %s110
    %s113 = sphi 0, %s112
    %s127 = sphi 0, %s113
    %s131 = sphi 0, %s131
    %s133 = sphi 0, %s131
    %s134 = sphi 0, %s133
    %s148 = sphi 0, %s134
    %s152 = sphi 0, %s152
    %s154 = sphi 0, %s152
    %s155 = sphi 0, %s154
    %s169 = sphi 0, %s155
    %s173 = sphi 0, %s173
    %s175 = sphi 0, %s173
    %s176 = sphi 0, %s175
    %s190 = sphi 0, %s176
    %s194 = sphi 0, %s194
    %s196 = sphi 0, %s194
    %s197 = sphi 0, %s196
    %s211 = sphi 0, %s197
    %s215 = sphi 0, %s215
    %s217 = sphi 0, %s215
    %s218 = sphi 0, %s217
    %s232 = sphi 0, %s218
    %s236 = sphi 0, %s236
    %s238 = sphi 0, %s236
    %s239 = sphi 0, %s238
    %s253 = sphi 0, %s239
    %s257 = sphi 0, %s257
    %s259 = sphi 0, %s257
    %s260 = sphi 0, %s259
    %s274 = sphi 0, %s260
    %s278 = sphi 0, %s278
    %s280 = sphi 0, %s278
    %s281 = sphi 0, %s280
    %s295 = sphi 0, %s281
    %s299 = sphi 0, %s299
    %s301 = sphi 0, %s299
    %s302 = sphi 0, %s301
    %s316 = sphi 0, %s302
    %s320 = sphi 0, %s320
    %s322 = sphi 0, %s320
    %s323 = sphi 0, %s322
    %s337 = sphi 0, %s323
    %s341 = sphi 0, %s341
    %s343 = sphi 0, %s341
    %s344 = sphi 0, %s343
    %s358 = sphi 0, %s344
    %s362 = sphi 0, %s362
    %s364 = sphi 0, %s362
    %s365 = sphi 0, %s364
    %s379 = sphi 0, %s365
    %s383 = sphi 0, %s383
    %s385 = sphi 0, %s383
    %s386 = sphi 0, %s385
    %s400 = sphi 0, %s386
    %s404 = sphi 0, %s404
    %s406 = sphi 0, %s404
    %s407 = sphi 0, %s406
    %s421 = sphi 0, %s407
    %s425 = sphi 0, %s425
    %s427 = sphi 0, %s425
    %s428 = sphi 0, %s427
    %s442 = sphi 0, %s428
    %s446 = sphi 0, %s446
    %s448 = sphi 0, %s446
    %s449 = sphi 0, %s448
    %s463 = sphi 0, %s449
    %s467 = sphi 0, %s467
    %s469 = sphi 0, %s467
    %s470 = sphi 0, %s469
    %s484 = sphi 0, %s470
    %s488 = sphi 0, %s488
    %s490 = sphi 0, %s488
    %s491 = sphi 0, %s490
    %s505 = sphi 0, %s491
    %s509 = sphi 0, %s509
    %s511 = sphi 0, %s509
    %s512 = sphi 0, %s511
    %s526 = sphi 0, %s512
    %s530 = sphi 0, %s530
    %s532 = sphi 0, %s530
    %s533 = sphi 0, %s532
    %s547 = sphi 0, %s533
    %s551 = sphi 0, %s551
    %s553 = sphi 0, %s551
    %s554 = sphi 0, %s553
    %s568 = sphi 0, %s554
    %s572 = sphi 0, %s572
    %s574 = sphi 0, %s572
    %s575 = sphi 0, %s574
    %s589 = sphi 0, %s575
    %s593 = sphi 0, %s593
    %s595 = sphi 0, %s593
    %s596 = sphi 0, %s595
    %s610 = sphi 0, %s596
    %s614 = sphi 0, %s614
    %s616 = sphi 0, %s614
    %s617 = sphi 0, %s616
    %s631 = sphi 0, %s617
    %s635 = sphi 0, %s635
    %s637 = sphi 0, %s635
    %s638 = sphi 0, %s637
    %s652 = sphi 0, %s638
    %s656 = sphi 0, %s656
    %s658 = sphi 0, %s656
    %s659 = sphi 0, %s658
    %s673 = sphi 0, %s659
    %s677 = sphi 0, %s677
    %s679 = sphi 0, %s677
    %s680 = sphi 0, %s679
    %s694 = sphi 0, %s680
    %s698 = sphi 0, %s698
    %s700 = sphi 0, %s698
    %s701 = sphi 0, %s700
    %s715 = sphi 0, %s701
    %s719 = sphi 0, %s719
    %s721 = sphi 0, %s719
    %s722 = sphi 0, %s721
    %s736 = sphi 0, %s722
    %s742 = sphi 0, %s744
    %s745 = sphi 0, %s742
    %s746 = sphi 0, %s745
    %s762 = sphi 0, %s746
    %s768 = sphi 0, %s770
    %s771 = sphi 0, %s768
    %s772 = sphi 0, %s771
    %s788 = sphi 0, %s772
    %s794 = sphi 0, %s796
    %s797 = sphi 0, %s794
    %s798 = sphi 0, %s797
    %s814 = sphi 0, %s798
    %s820 = sphi 0, %s822
    %s823 = sphi 0, %s820
    %s824 = sphi 0, %s823
    %s840 = sphi 0, %s824
  $region4: #{inception_c_forward.1} parent=0 // loop_header_branch
    %79 = sbr.rel (%p77) target = $region8
  $region5: #{inception_c_forward.1} parent=0 // loop_body
    %s81 = ssub.s32 %s76, 1
    %s82 = ssub.s32 %s76, 2
    %s83 = sadd.s32 %s76, 1
    %s84 = ssub.s32 %s76, %s83
    %p85 = scmp.eq.s32.totalorder %s84, 0
    %s87 = sadd.s32 %s86, 1
    %s88 = scalar_select %p85, %s86, %s87
    %p91 = pneg %p85
    %p92 = scmp.eq.s32.totalorder %s76, 1
    %p93 = por %p91, %p92
    %p94 = scmp.ne.s32.totalorder %s86, %s89
    %p95 = scmp.eq.s32.totalorder %s76, 0
    %p96 = por %p94, %p95
    %p97 = scmp.ne.s32.totalorder %s86, %s89
    %p98 = scmp.eq.s32.totalorder %s81, 1
    %p99 = por %p97, %p98
    %p100 = scmp.ne.s32.totalorder %s89, %s90
    %p101 = scmp.eq.s32.totalorder %s81, 0
    %p102 = por %p100, %p101
    %p103 = scmp.ne.s32.totalorder %s89, %s90
    %p104 = scmp.eq.s32.totalorder %s82, 1
    %p105 = por %p103, %p104
    %p107 = scmp.ne.s32.totalorder %s90, %s106
    %p108 = scmp.eq.s32.totalorder %s82, 0
    %p109 = por %p107, %p108
    %s111 = sadd.s32 %s110, 1
    %p114 = scmp.eq.s32.totalorder %s76, 1
    %p115 = scmp.ne.s32.totalorder %s110, %s112
    %p116 = scmp.eq.s32.totalorder %s76, 0
    %p117 = por %p115, %p116
    %p118 = scmp.ne.s32.totalorder %s110, %s112
    %p119 = scmp.eq.s32.totalorder %s81, 1
    %p120 = por %p118, %p119
    %p121 = scmp.ne.s32.totalorder %s112, %s113
    %p122 = scmp.eq.s32.totalorder %s81, 0
    %p123 = por %p121, %p122
    %p124 = scmp.ne.s32.totalorder %s112, %s113
    %p125 = scmp.eq.s32.totalorder %s82, 1
    %p126 = por %p124, %p125
    %p128 = scmp.ne.s32.totalorder %s113, %s127
    %p129 = scmp.eq.s32.totalorder %s82, 0
    %p130 = por %p128, %p129
    %s132 = sadd.s32 %s131, 1
    %p135 = scmp.eq.s32.totalorder %s76, 1
    %p136 = scmp.ne.s32.totalorder %s131, %s133
    %p137 = scmp.eq.s32.totalorder %s76, 0
    %p138 = por %p136, %p137
    %p139 = scmp.ne.s32.totalorder %s131, %s133
    %p140 = scmp.eq.s32.totalorder %s81, 1
    %p141 = por %p139, %p140
    %p142 = scmp.ne.s32.totalorder %s133, %s134
    %p143 = scmp.eq.s32.totalorder %s81, 0
    %p144 = por %p142, %p143
    %p145 = scmp.ne.s32.totalorder %s133, %s134
    %p146 = scmp.eq.s32.totalorder %s82, 1
    %p147 = por %p145, %p146
    %p149 = scmp.ne.s32.totalorder %s134, %s148
    %p150 = scmp.eq.s32.totalorder %s82, 0
    %p151 = por %p149, %p150
    %s153 = sadd.s32 %s152, 1
    %p156 = scmp.eq.s32.totalorder %s76, 1
    %p157 = scmp.ne.s32.totalorder %s152, %s154
    %p158 = scmp.eq.s32.totalorder %s76, 0
    %p159 = por %p157, %p158
    %p160 = scmp.ne.s32.totalorder %s152, %s154
    %p161 = scmp.eq.s32.totalorder %s81, 1
    %p162 = por %p160, %p161
    %p163 = scmp.ne.s32.totalorder %s154, %s155
    %p164 = scmp.eq.s32.totalorder %s81, 0
    %p165 = por %p163, %p164
    %p166 = scmp.ne.s32.totalorder %s154, %s155
    %p167 = scmp.eq.s32.totalorder %s82, 1
    %p168 = por %p166, %p167
    %p170 = scmp.ne.s32.totalorder %s155, %s169
    %p171 = scmp.eq.s32.totalorder %s82, 0
    %p172 = por %p170, %p171
    %s174 = sadd.s32 %s173, 1
    %p177 = scmp.eq.s32.totalorder %s76, 1
    %p178 = scmp.ne.s32.totalorder %s173, %s175
    %p179 = scmp.eq.s32.totalorder %s76, 0
    %p180 = por %p178, %p179
    %p181 = scmp.ne.s32.totalorder %s173, %s175
    %p182 = scmp.eq.s32.totalorder %s81, 1
    %p183 = por %p181, %p182
    %p184 = scmp.ne.s32.totalorder %s175, %s176
    %p185 = scmp.eq.s32.totalorder %s81, 0
    %p186 = por %p184, %p185
    %p187 = scmp.ne.s32.totalorder %s175, %s176
    %p188 = scmp.eq.s32.totalorder %s82, 1
    %p189 = por %p187, %p188
    %p191 = scmp.ne.s32.totalorder %s176, %s190
    %p192 = scmp.eq.s32.totalorder %s82, 0
    %p193 = por %p191, %p192
    %s195 = sadd.s32 %s194, 1
    %p198 = scmp.eq.s32.totalorder %s76, 1
    %p199 = scmp.ne.s32.totalorder %s194, %s196
    %p200 = scmp.eq.s32.totalorder %s76, 0
    %p201 = por %p199, %p200
    %p202 = scmp.ne.s32.totalorder %s194, %s196
    %p203 = scmp.eq.s32.totalorder %s81, 1
    %p204 = por %p202, %p203
    %p205 = scmp.ne.s32.totalorder %s196, %s197
    %p206 = scmp.eq.s32.totalorder %s81, 0
    %p207 = por %p205, %p206
    %p208 = scmp.ne.s32.totalorder %s196, %s197
    %p209 = scmp.eq.s32.totalorder %s82, 1
    %p210 = por %p208, %p209
    %p212 = scmp.ne.s32.totalorder %s197, %s211
    %p213 = scmp.eq.s32.totalorder %s82, 0
    %p214 = por %p212, %p213
    %s216 = sadd.s32 %s215, 1
    %p219 = scmp.eq.s32.totalorder %s76, 1
    %p220 = scmp.ne.s32.totalorder %s215, %s217
    %p221 = scmp.eq.s32.totalorder %s76, 0
    %p222 = por %p220, %p221
    %p223 = scmp.ne.s32.totalorder %s215, %s217
    %p224 = scmp.eq.s32.totalorder %s81, 1
    %p225 = por %p223, %p224
    %p226 = scmp.ne.s32.totalorder %s217, %s218
    %p227 = scmp.eq.s32.totalorder %s81, 0
    %p228 = por %p226, %p227
    %p229 = scmp.ne.s32.totalorder %s217, %s218
    %p230 = scmp.eq.s32.totalorder %s82, 1
    %p231 = por %p229, %p230
    %p233 = scmp.ne.s32.totalorder %s218, %s232
    %p234 = scmp.eq.s32.totalorder %s82, 0
    %p235 = por %p233, %p234
    %s237 = sadd.s32 %s236, 1
    %p240 = scmp.eq.s32.totalorder %s76, 1
    %p241 = scmp.ne.s32.totalorder %s236, %s238
    %p242 = scmp.eq.s32.totalorder %s76, 0
    %p243 = por %p241, %p242
    %p244 = scmp.ne.s32.totalorder %s236, %s238
    %p245 = scmp.eq.s32.totalorder %s81, 1
    %p246 = por %p244, %p245
    %p247 = scmp.ne.s32.totalorder %s238, %s239
    %p248 = scmp.eq.s32.totalorder %s81, 0
    %p249 = por %p247, %p248
    %p250 = scmp.ne.s32.totalorder %s238, %s239
    %p251 = scmp.eq.s32.totalorder %s82, 1
    %p252 = por %p250, %p251
    %p254 = scmp.ne.s32.totalorder %s239, %s253
    %p255 = scmp.eq.s32.totalorder %s82, 0
    %p256 = por %p254, %p255
    %s258 = sadd.s32 %s257, 1
    %p261 = scmp.eq.s32.totalorder %s76, 1
    %p262 = scmp.ne.s32.totalorder %s257, %s259
    %p263 = scmp.eq.s32.totalorder %s76, 0
    %p264 = por %p262, %p263
    %p265 = scmp.ne.s32.totalorder %s257, %s259
    %p266 = scmp.eq.s32.totalorder %s81, 1
    %p267 = por %p265, %p266
    %p268 = scmp.ne.s32.totalorder %s259, %s260
    %p269 = scmp.eq.s32.totalorder %s81, 0
    %p270 = por %p268, %p269
    %p271 = scmp.ne.s32.totalorder %s259, %s260
    %p272 = scmp.eq.s32.totalorder %s82, 1
    %p273 = por %p271, %p272
    %p275 = scmp.ne.s32.totalorder %s260, %s274
    %p276 = scmp.eq.s32.totalorder %s82, 0
    %p277 = por %p275, %p276
    %s279 = sadd.s32 %s278, 1
    %p282 = scmp.eq.s32.totalorder %s76, 1
    %p283 = scmp.ne.s32.totalorder %s278, %s280
    %p284 = scmp.eq.s32.totalorder %s76, 0
    %p285 = por %p283, %p284
    %p286 = scmp.ne.s32.totalorder %s278, %s280
    %p287 = scmp.eq.s32.totalorder %s81, 1
    %p288 = por %p286, %p287
    %p289 = scmp.ne.s32.totalorder %s280, %s281
    %p290 = scmp.eq.s32.totalorder %s81, 0
    %p291 = por %p289, %p290
    %p292 = scmp.ne.s32.totalorder %s280, %s281
    %p293 = scmp.eq.s32.totalorder %s82, 1
    %p294 = por %p292, %p293
    %p296 = scmp.ne.s32.totalorder %s281, %s295
    %p297 = scmp.eq.s32.totalorder %s82, 0
    %p298 = por %p296, %p297
    %s300 = sadd.s32 %s299, 1
    %p303 = scmp.eq.s32.totalorder %s76, 1
    %p304 = scmp.ne.s32.totalorder %s299, %s301
    %p305 = scmp.eq.s32.totalorder %s76, 0
    %p306 = por %p304, %p305
    %p307 = scmp.ne.s32.totalorder %s299, %s301
    %p308 = scmp.eq.s32.totalorder %s81, 1
    %p309 = por %p307, %p308
    %p310 = scmp.ne.s32.totalorder %s301, %s302
    %p311 = scmp.eq.s32.totalorder %s81, 0
    %p312 = por %p310, %p311
    %p313 = scmp.ne.s32.totalorder %s301, %s302
    %p314 = scmp.eq.s32.totalorder %s82, 1
    %p315 = por %p313, %p314
    %p317 = scmp.ne.s32.totalorder %s302, %s316
    %p318 = scmp.eq.s32.totalorder %s82, 0
    %p319 = por %p317, %p318
    %s321 = sadd.s32 %s320, 1
    %p324 = scmp.eq.s32.totalorder %s76, 1
    %p325 = scmp.ne.s32.totalorder %s320, %s322
    %p326 = scmp.eq.s32.totalorder %s76, 0
    %p327 = por %p325, %p326
    %p328 = scmp.ne.s32.totalorder %s320, %s322
    %p329 = scmp.eq.s32.totalorder %s81, 1
    %p330 = por %p328, %p329
    %p331 = scmp.ne.s32.totalorder %s322, %s323
    %p332 = scmp.eq.s32.totalorder %s81, 0
    %p333 = por %p331, %p332
    %p334 = scmp.ne.s32.totalorder %s322, %s323
    %p335 = scmp.eq.s32.totalorder %s82, 1
    %p336 = por %p334, %p335
    %p338 = scmp.ne.s32.totalorder %s323, %s337
    %p339 = scmp.eq.s32.totalorder %s82, 0
    %p340 = por %p338, %p339
    %s342 = sadd.s32 %s341, 1
    %p345 = scmp.eq.s32.totalorder %s76, 1
    %p346 = scmp.ne.s32.totalorder %s341, %s343
    %p347 = scmp.eq.s32.totalorder %s76, 0
    %p348 = por %p346, %p347
    %p349 = scmp.ne.s32.totalorder %s341, %s343
    %p350 = scmp.eq.s32.totalorder %s81, 1
    %p351 = por %p349, %p350
    %p352 = scmp.ne.s32.totalorder %s343, %s344
    %p353 = scmp.eq.s32.totalorder %s81, 0
    %p354 = por %p352, %p353
    %p355 = scmp.ne.s32.totalorder %s343, %s344
    %p356 = scmp.eq.s32.totalorder %s82, 1
    %p357 = por %p355, %p356
    %p359 = scmp.ne.s32.totalorder %s344, %s358
    %p360 = scmp.eq.s32.totalorder %s82, 0
    %p361 = por %p359, %p360
    %s363 = sadd.s32 %s362, 1
    %p366 = scmp.eq.s32.totalorder %s76, 1
    %p367 = scmp.ne.s32.totalorder %s362, %s364
    %p368 = scmp.eq.s32.totalorder %s76, 0
    %p369 = por %p367, %p368
    %p370 = scmp.ne.s32.totalorder %s362, %s364
    %p371 = scmp.eq.s32.totalorder %s81, 1
    %p372 = por %p370, %p371
    %p373 = scmp.ne.s32.totalorder %s364, %s365
    %p374 = scmp.eq.s32.totalorder %s81, 0
    %p375 = por %p373, %p374
    %p376 = scmp.ne.s32.totalorder %s364, %s365
    %p377 = scmp.eq.s32.totalorder %s82, 1
    %p378 = por %p376, %p377
    %p380 = scmp.ne.s32.totalorder %s365, %s379
    %p381 = scmp.eq.s32.totalorder %s82, 0
    %p382 = por %p380, %p381
    %s384 = sadd.s32 %s383, 1
    %p387 = scmp.eq.s32.totalorder %s76, 1
    %p388 = scmp.ne.s32.totalorder %s383, %s385
    %p389 = scmp.eq.s32.totalorder %s76, 0
    %p390 = por %p388, %p389
    %p391 = scmp.ne.s32.totalorder %s383, %s385
    %p392 = scmp.eq.s32.totalorder %s81, 1
    %p393 = por %p391, %p392
    %p394 = scmp.ne.s32.totalorder %s385, %s386
    %p395 = scmp.eq.s32.totalorder %s81, 0
    %p396 = por %p394, %p395
    %p397 = scmp.ne.s32.totalorder %s385, %s386
    %p398 = scmp.eq.s32.totalorder %s82, 1
    %p399 = por %p397, %p398
    %p401 = scmp.ne.s32.totalorder %s386, %s400
    %p402 = scmp.eq.s32.totalorder %s82, 0
    %p403 = por %p401, %p402
    %s405 = sadd.s32 %s404, 1
    %p408 = scmp.eq.s32.totalorder %s76, 1
    %p409 = scmp.ne.s32.totalorder %s404, %s406
    %p410 = scmp.eq.s32.totalorder %s76, 0
    %p411 = por %p409, %p410
    %p412 = scmp.ne.s32.totalorder %s404, %s406
    %p413 = scmp.eq.s32.totalorder %s81, 1
    %p414 = por %p412, %p413
    %p415 = scmp.ne.s32.totalorder %s406, %s407
    %p416 = scmp.eq.s32.totalorder %s81, 0
    %p417 = por %p415, %p416
    %p418 = scmp.ne.s32.totalorder %s406, %s407
    %p419 = scmp.eq.s32.totalorder %s82, 1
    %p420 = por %p418, %p419
    %p422 = scmp.ne.s32.totalorder %s407, %s421
    %p423 = scmp.eq.s32.totalorder %s82, 0
    %p424 = por %p422, %p423
    %s426 = sadd.s32 %s425, 1
    %p429 = scmp.eq.s32.totalorder %s76, 1
    %p430 = scmp.ne.s32.totalorder %s425, %s427
    %p431 = scmp.eq.s32.totalorder %s76, 0
    %p432 = por %p430, %p431
    %p433 = scmp.ne.s32.totalorder %s425, %s427
    %p434 = scmp.eq.s32.totalorder %s81, 1
    %p435 = por %p433, %p434
    %p436 = scmp.ne.s32.totalorder %s427, %s428
    %p437 = scmp.eq.s32.totalorder %s81, 0
    %p438 = por %p436, %p437
    %p439 = scmp.ne.s32.totalorder %s427, %s428
    %p440 = scmp.eq.s32.totalorder %s82, 1
    %p441 = por %p439, %p440
    %p443 = scmp.ne.s32.totalorder %s428, %s442
    %p444 = scmp.eq.s32.totalorder %s82, 0
    %p445 = por %p443, %p444
    %s447 = sadd.s32 %s446, 1
    %p450 = scmp.eq.s32.totalorder %s76, 1
    %p451 = scmp.ne.s32.totalorder %s446, %s448
    %p452 = scmp.eq.s32.totalorder %s76, 0
    %p453 = por %p451, %p452
    %p454 = scmp.ne.s32.totalorder %s446, %s448
    %p455 = scmp.eq.s32.totalorder %s81, 1
    %p456 = por %p454, %p455
    %p457 = scmp.ne.s32.totalorder %s448, %s449
    %p458 = scmp.eq.s32.totalorder %s81, 0
    %p459 = por %p457, %p458
    %p460 = scmp.ne.s32.totalorder %s448, %s449
    %p461 = scmp.eq.s32.totalorder %s82, 1
    %p462 = por %p460, %p461
    %p464 = scmp.ne.s32.totalorder %s449, %s463
    %p465 = scmp.eq.s32.totalorder %s82, 0
    %p466 = por %p464, %p465
    %s468 = sadd.s32 %s467, 1
    %p471 = scmp.eq.s32.totalorder %s76, 1
    %p472 = scmp.ne.s32.totalorder %s467, %s469
    %p473 = scmp.eq.s32.totalorder %s76, 0
    %p474 = por %p472, %p473
    %p475 = scmp.ne.s32.totalorder %s467, %s469
    %p476 = scmp.eq.s32.totalorder %s81, 1
    %p477 = por %p475, %p476
    %p478 = scmp.ne.s32.totalorder %s469, %s470
    %p479 = scmp.eq.s32.totalorder %s81, 0
    %p480 = por %p478, %p479
    %p481 = scmp.ne.s32.totalorder %s469, %s470
    %p482 = scmp.eq.s32.totalorder %s82, 1
    %p483 = por %p481, %p482
    %p485 = scmp.ne.s32.totalorder %s470, %s484
    %p486 = scmp.eq.s32.totalorder %s82, 0
    %p487 = por %p485, %p486
    %s489 = sadd.s32 %s488, 1
    %p492 = scmp.eq.s32.totalorder %s76, 1
    %p493 = scmp.ne.s32.totalorder %s488, %s490
    %p494 = scmp.eq.s32.totalorder %s76, 0
    %p495 = por %p493, %p494
    %p496 = scmp.ne.s32.totalorder %s488, %s490
    %p497 = scmp.eq.s32.totalorder %s81, 1
    %p498 = por %p496, %p497
    %p499 = scmp.ne.s32.totalorder %s490, %s491
    %p500 = scmp.eq.s32.totalorder %s81, 0
    %p501 = por %p499, %p500
    %p502 = scmp.ne.s32.totalorder %s490, %s491
    %p503 = scmp.eq.s32.totalorder %s82, 1
    %p504 = por %p502, %p503
    %p506 = scmp.ne.s32.totalorder %s491, %s505
    %p507 = scmp.eq.s32.totalorder %s82, 0
    %p508 = por %p506, %p507
    %s510 = sadd.s32 %s509, 1
    %p513 = scmp.eq.s32.totalorder %s76, 1
    %p514 = scmp.ne.s32.totalorder %s509, %s511
    %p515 = scmp.eq.s32.totalorder %s76, 0
    %p516 = por %p514, %p515
    %p517 = scmp.ne.s32.totalorder %s509, %s511
    %p518 = scmp.eq.s32.totalorder %s81, 1
    %p519 = por %p517, %p518
    %p520 = scmp.ne.s32.totalorder %s511, %s512
    %p521 = scmp.eq.s32.totalorder %s81, 0
    %p522 = por %p520, %p521
    %p523 = scmp.ne.s32.totalorder %s511, %s512
    %p524 = scmp.eq.s32.totalorder %s82, 1
    %p525 = por %p523, %p524
    %p527 = scmp.ne.s32.totalorder %s512, %s526
    %p528 = scmp.eq.s32.totalorder %s82, 0
    %p529 = por %p527, %p528
    %s531 = sadd.s32 %s530, 1
    %p534 = scmp.eq.s32.totalorder %s76, 1
    %p535 = scmp.ne.s32.totalorder %s530, %s532
    %p536 = scmp.eq.s32.totalorder %s76, 0
    %p537 = por %p535, %p536
    %p538 = scmp.ne.s32.totalorder %s530, %s532
    %p539 = scmp.eq.s32.totalorder %s81, 1
    %p540 = por %p538, %p539
    %p541 = scmp.ne.s32.totalorder %s532, %s533
    %p542 = scmp.eq.s32.totalorder %s81, 0
    %p543 = por %p541, %p542
    %p544 = scmp.ne.s32.totalorder %s532, %s533
    %p545 = scmp.eq.s32.totalorder %s82, 1
    %p546 = por %p544, %p545
    %p548 = scmp.ne.s32.totalorder %s533, %s547
    %p549 = scmp.eq.s32.totalorder %s82, 0
    %p550 = por %p548, %p549
    %s552 = sadd.s32 %s551, 1
    %p555 = scmp.eq.s32.totalorder %s76, 1
    %p556 = scmp.ne.s32.totalorder %s551, %s553
    %p557 = scmp.eq.s32.totalorder %s76, 0
    %p558 = por %p556, %p557
    %p559 = scmp.ne.s32.totalorder %s551, %s553
    %p560 = scmp.eq.s32.totalorder %s81, 1
    %p561 = por %p559, %p560
    %p562 = scmp.ne.s32.totalorder %s553, %s554
    %p563 = scmp.eq.s32.totalorder %s81, 0
    %p564 = por %p562, %p563
    %p565 = scmp.ne.s32.totalorder %s553, %s554
    %p566 = scmp.eq.s32.totalorder %s82, 1
    %p567 = por %p565, %p566
    %p569 = scmp.ne.s32.totalorder %s554, %s568
    %p570 = scmp.eq.s32.totalorder %s82, 0
    %p571 = por %p569, %p570
    %s573 = sadd.s32 %s572, 1
    %p576 = scmp.eq.s32.totalorder %s76, 1
    %p577 = scmp.ne.s32.totalorder %s572, %s574
    %p578 = scmp.eq.s32.totalorder %s76, 0
    %p579 = por %p577, %p578
    %p580 = scmp.ne.s32.totalorder %s572, %s574
    %p581 = scmp.eq.s32.totalorder %s81, 1
    %p582 = por %p580, %p581
    %p583 = scmp.ne.s32.totalorder %s574, %s575
    %p584 = scmp.eq.s32.totalorder %s81, 0
    %p585 = por %p583, %p584
    %p586 = scmp.ne.s32.totalorder %s574, %s575
    %p587 = scmp.eq.s32.totalorder %s82, 1
    %p588 = por %p586, %p587
    %p590 = scmp.ne.s32.totalorder %s575, %s589
    %p591 = scmp.eq.s32.totalorder %s82, 0
    %p592 = por %p590, %p591
    %s594 = sadd.s32 %s593, 1
    %p597 = scmp.eq.s32.totalorder %s76, 1
    %p598 = scmp.ne.s32.totalorder %s593, %s595
    %p599 = scmp.eq.s32.totalorder %s76, 0
    %p600 = por %p598, %p599
    %p601 = scmp.ne.s32.totalorder %s593, %s595
    %p602 = scmp.eq.s32.totalorder %s81, 1
    %p603 = por %p601, %p602
    %p604 = scmp.ne.s32.totalorder %s595, %s596
    %p605 = scmp.eq.s32.totalorder %s81, 0
    %p606 = por %p604, %p605
    %p607 = scmp.ne.s32.totalorder %s595, %s596
    %p608 = scmp.eq.s32.totalorder %s82, 1
    %p609 = por %p607, %p608
    %p611 = scmp.ne.s32.totalorder %s596, %s610
    %p612 = scmp.eq.s32.totalorder %s82, 0
    %p613 = por %p611, %p612
    %s615 = sadd.s32 %s614, 1
    %p618 = scmp.eq.s32.totalorder %s76, 1
    %p619 = scmp.ne.s32.totalorder %s614, %s616
    %p620 = scmp.eq.s32.totalorder %s76, 0
    %p621 = por %p619, %p620
    %p622 = scmp.ne.s32.totalorder %s614, %s616
    %p623 = scmp.eq.s32.totalorder %s81, 1
    %p624 = por %p622, %p623
    %p625 = scmp.ne.s32.totalorder %s616, %s617
    %p626 = scmp.eq.s32.totalorder %s81, 0
    %p627 = por %p625, %p626
    %p628 = scmp.ne.s32.totalorder %s616, %s617
    %p629 = scmp.eq.s32.totalorder %s82, 1
    %p630 = por %p628, %p629
    %p632 = scmp.ne.s32.totalorder %s617, %s631
    %p633 = scmp.eq.s32.totalorder %s82, 0
    %p634 = por %p632, %p633
    %s636 = sadd.s32 %s635, 1
    %p639 = scmp.eq.s32.totalorder %s76, 1
    %p640 = scmp.ne.s32.totalorder %s635, %s637
    %p641 = scmp.eq.s32.totalorder %s76, 0
    %p642 = por %p640, %p641
    %p643 = scmp.ne.s32.totalorder %s635, %s637
    %p644 = scmp.eq.s32.totalorder %s81, 1
    %p645 = por %p643, %p644
    %p646 = scmp.ne.s32.totalorder %s637, %s638
    %p647 = scmp.eq.s32.totalorder %s81, 0
    %p648 = por %p646, %p647
    %p649 = scmp.ne.s32.totalorder %s637, %s638
    %p650 = scmp.eq.s32.totalorder %s82, 1
    %p651 = por %p649, %p650
    %p653 = scmp.ne.s32.totalorder %s638, %s652
    %p654 = scmp.eq.s32.totalorder %s82, 0
    %p655 = por %p653, %p654
    %s657 = sadd.s32 %s656, 1
    %p660 = scmp.eq.s32.totalorder %s76, 1
    %p661 = scmp.ne.s32.totalorder %s656, %s658
    %p662 = scmp.eq.s32.totalorder %s76, 0
    %p663 = por %p661, %p662
    %p664 = scmp.ne.s32.totalorder %s656, %s658
    %p665 = scmp.eq.s32.totalorder %s81, 1
    %p666 = por %p664, %p665
    %p667 = scmp.ne.s32.totalorder %s658, %s659
    %p668 = scmp.eq.s32.totalorder %s81, 0
    %p669 = por %p667, %p668
    %p670 = scmp.ne.s32.totalorder %s658, %s659
    %p671 = scmp.eq.s32.totalorder %s82, 1
    %p672 = por %p670, %p671
    %p674 = scmp.ne.s32.totalorder %s659, %s673
    %p675 = scmp.eq.s32.totalorder %s82, 0
    %p676 = por %p674, %p675
    %s678 = sadd.s32 %s677, 1
    %p681 = scmp.eq.s32.totalorder %s76, 1
    %p682 = scmp.ne.s32.totalorder %s677, %s679
    %p683 = scmp.eq.s32.totalorder %s76, 0
    %p684 = por %p682, %p683
    %p685 = scmp.ne.s32.totalorder %s677, %s679
    %p686 = scmp.eq.s32.totalorder %s81, 1
    %p687 = por %p685, %p686
    %p688 = scmp.ne.s32.totalorder %s679, %s680
    %p689 = scmp.eq.s32.totalorder %s81, 0
    %p690 = por %p688, %p689
    %p691 = scmp.ne.s32.totalorder %s679, %s680
    %p692 = scmp.eq.s32.totalorder %s82, 1
    %p693 = por %p691, %p692
    %p695 = scmp.ne.s32.totalorder %s680, %s694
    %p696 = scmp.eq.s32.totalorder %s82, 0
    %p697 = por %p695, %p696
    %s699 = sadd.s32 %s698, 1
    %p702 = scmp.eq.s32.totalorder %s76, 1
    %p703 = scmp.ne.s32.totalorder %s698, %s700
    %p704 = scmp.eq.s32.totalorder %s76, 0
    %p705 = por %p703, %p704
    %p706 = scmp.ne.s32.totalorder %s698, %s700
    %p707 = scmp.eq.s32.totalorder %s81, 1
    %p708 = por %p706, %p707
    %p709 = scmp.ne.s32.totalorder %s700, %s701
    %p710 = scmp.eq.s32.totalorder %s81, 0
    %p711 = por %p709, %p710
    %p712 = scmp.ne.s32.totalorder %s700, %s701
    %p713 = scmp.eq.s32.totalorder %s82, 1
    %p714 = por %p712, %p713
    %p716 = scmp.ne.s32.totalorder %s701, %s715
    %p717 = scmp.eq.s32.totalorder %s82, 0
    %p718 = por %p716, %p717
    %s720 = sadd.s32 %s719, 1
    %p723 = scmp.eq.s32.totalorder %s76, 1
    %p724 = scmp.ne.s32.totalorder %s719, %s721
    %p725 = scmp.eq.s32.totalorder %s76, 0
    %p726 = por %p724, %p725
    %p727 = scmp.ne.s32.totalorder %s719, %s721
    %p728 = scmp.eq.s32.totalorder %s81, 1
    %p729 = por %p727, %p728
    %p730 = scmp.ne.s32.totalorder %s721, %s722
    %p731 = scmp.eq.s32.totalorder %s81, 0
    %p732 = por %p730, %p731
    %p733 = scmp.ne.s32.totalorder %s721, %s722
    %p734 = scmp.eq.s32.totalorder %s82, 1
    %p735 = por %p733, %p734
    %p737 = scmp.ne.s32.totalorder %s722, %s736
    %p738 = scmp.eq.s32.totalorder %s82, 0
    %p739 = por %p737, %p738
    %s740 = ssub.s32 %s76, %s83
    %p741 = scmp.eq.s32.totalorder %s740, 0
    %s743 = sadd.s32 %s742, 1
    %s744 = scalar_select %p741, %s742, %s743
    %p747 = pneg %p741
    %p748 = scmp.eq.s32.totalorder %s76, 1
    %p749 = por %p747, %p748
    %p750 = scmp.ne.s32.totalorder %s742, %s745
    %p751 = scmp.eq.s32.totalorder %s76, 0
    %p752 = por %p750, %p751
    %p753 = scmp.ne.s32.totalorder %s742, %s745
    %p754 = scmp.eq.s32.totalorder %s81, 1
    %p755 = por %p753, %p754
    %p756 = scmp.ne.s32.totalorder %s745, %s746
    %p757 = scmp.eq.s32.totalorder %s81, 0
    %p758 = por %p756, %p757
    %p759 = scmp.ne.s32.totalorder %s745, %s746
    %p760 = scmp.eq.s32.totalorder %s82, 1
    %p761 = por %p759, %p760
    %p763 = scmp.ne.s32.totalorder %s746, %s762
    %p764 = scmp.eq.s32.totalorder %s82, 0
    %p765 = por %p763, %p764
    %s766 = ssub.s32 %s76, %s83
    %p767 = scmp.eq.s32.totalorder %s766, 0
    %s769 = sadd.s32 %s768, 1
    %s770 = scalar_select %p767, %s768, %s769
    %p773 = pneg %p767
    %p774 = scmp.eq.s32.totalorder %s76, 1
    %p775 = por %p773, %p774
    %p776 = scmp.ne.s32.totalorder %s768, %s771
    %p777 = scmp.eq.s32.totalorder %s76, 0
    %p778 = por %p776, %p777
    %p779 = scmp.ne.s32.totalorder %s768, %s771
    %p780 = scmp.eq.s32.totalorder %s81, 1
    %p781 = por %p779, %p780
    %p782 = scmp.ne.s32.totalorder %s771, %s772
    %p783 = scmp.eq.s32.totalorder %s81, 0
    %p784 = por %p782, %p783
    %p785 = scmp.ne.s32.totalorder %s771, %s772
    %p786 = scmp.eq.s32.totalorder %s82, 1
    %p787 = por %p785, %p786
    %p789 = scmp.ne.s32.totalorder %s772, %s788
    %p790 = scmp.eq.s32.totalorder %s82, 0
    %p791 = por %p789, %p790
    %s792 = ssub.s32 %s76, %s83
    %p793 = scmp.eq.s32.totalorder %s792, 0
    %s795 = sadd.s32 %s794, 1
    %s796 = scalar_select %p793, %s794, %s795
    %p799 = pneg %p793
    %p800 = scmp.eq.s32.totalorder %s76, 1
    %p801 = por %p799, %p800
    %p802 = scmp.ne.s32.totalorder %s794, %s797
    %p803 = scmp.eq.s32.totalorder %s76, 0
    %p804 = por %p802, %p803
    %p805 = scmp.ne.s32.totalorder %s794, %s797
    %p806 = scmp.eq.s32.totalorder %s81, 1
    %p807 = por %p805, %p806
    %p808 = scmp.ne.s32.totalorder %s797, %s798
    %p809 = scmp.eq.s32.totalorder %s81, 0
    %p810 = por %p808, %p809
    %p811 = scmp.ne.s32.totalorder %s797, %s798
    %p812 = scmp.eq.s32.totalorder %s82, 1
    %p813 = por %p811, %p812
    %p815 = scmp.ne.s32.totalorder %s798, %s814
    %p816 = scmp.eq.s32.totalorder %s82, 0
    %p817 = por %p815, %p816
    %s818 = ssub.s32 %s76, %s83
    %p819 = scmp.eq.s32.totalorder %s818, 0
    %s821 = sadd.s32 %s820, 1
    %s822 = scalar_select %p819, %s820, %s821
    %p825 = pneg %p819
    %p826 = scmp.eq.s32.totalorder %s76, 1
    %p827 = por %p825, %p826
    %p828 = scmp.ne.s32.totalorder %s820, %s823
    %p829 = scmp.eq.s32.totalorder %s76, 0
    %p830 = por %p828, %p829
    %p831 = scmp.ne.s32.totalorder %s820, %s823
    %p832 = scmp.eq.s32.totalorder %s81, 1
    %p833 = por %p831, %p832
    %p834 = scmp.ne.s32.totalorder %s823, %s824
    %p835 = scmp.eq.s32.totalorder %s81, 0
    %p836 = por %p834, %p835
    %p837 = scmp.ne.s32.totalorder %s823, %s824
    %p838 = scmp.eq.s32.totalorder %s82, 1
    %p839 = por %p837, %p838
    %p841 = scmp.ne.s32.totalorder %s824, %s840
    %p842 = scmp.eq.s32.totalorder %s82, 0
    %p843 = por %p841, %p842
    %p844 = scmp.le.s32.totalorder 1, %s76
    %p845 = scmp.lt.s32.totalorder %s76, 3
    %p846 = pnand %p844, %p845
    %p847 = pneg %p846
    // Predicated region
    $region9: #{inception_c_forward.1} parent=5 // pred_check
      _
    $region10: #{inception_c_forward.1} parent=5 // pred_check_branch
      %849 = sbr.rel (%p846) target = $region12
    $region11: #{inception_c_forward.1} parent=5 // pred_region
      %s850 = ssub.s32 %s76, 1
      // Predicated region
      $region13: #{inception_c_forward.1} parent=11 // pred_check
        %p851 = pneg %p123
      $region14: #{inception_c_forward.1} parent=11 // pred_check_branch
        %853 = sbr.rel (%p851) target = $region16
      $region15: #{inception_c_forward.1} parent=11 // pred_region
        _
      $region16: #{inception_c_forward.1} parent=11 // pred_fallthru
        _
      // Predicated region
      $region17: #{inception_c_forward.1} parent=11 // pred_check
        %p854 = pneg %p144
      $region18: #{inception_c_forward.1} parent=11 // pred_check_branch
        %856 = sbr.rel (%p854) target = $region20
      $region19: #{inception_c_forward.1} parent=11 // pred_region
        _
      $region20: #{inception_c_forward.1} parent=11 // pred_fallthru
        _
      // Predicated region
      $region21: #{inception_c_forward.1} parent=11 // pred_check
        %p857 = pneg %p165
      $region22: #{inception_c_forward.1} parent=11 // pred_check_branch
        %859 = sbr.rel (%p857) target = $region24
      $region23: #{inception_c_forward.1} parent=11 // pred_region
        _
      $region24: #{inception_c_forward.1} parent=11 // pred_fallthru
        _
      // Predicated region
      $region25: #{inception_c_forward.1} parent=11 // pred_check
        %p860 = pneg %p186
      $region26: #{inception_c_forward.1} parent=11 // pred_check_branch
        %862 = sbr.rel (%p860) target = $region28
      $region27: #{inception_c_forward.1} parent=11 // pred_region
        _
      $region28: #{inception_c_forward.1} parent=11 // pred_fallthru
        _
      // Predicated region
      $region29: #{inception_c_forward.1} parent=11 // pred_check
        %p863 = pneg %p207
      $region30: #{inception_c_forward.1} parent=11 // pred_check_branch
        %865 = sbr.rel (%p863) target = $region32
      $region31: #{inception_c_forward.1} parent=11 // pred_region
        _
      $region32: #{inception_c_forward.1} parent=11 // pred_fallthru
        _
      // Predicated region
      $region33: #{inception_c_forward.1} parent=11 // pred_check
        %p866 = pneg %p228
      $region34: #{inception_c_forward.1} parent=11 // pred_check_branch
        %868 = sbr.rel (%p866) target = $region36
      $region35: #{inception_c_forward.1} parent=11 // pred_region
        _
      $region36: #{inception_c_forward.1} parent=11 // pred_fallthru
        _
      // Predicated region
      $region37: #{inception_c_forward.1} parent=11 // pred_check
        %p869 = pneg %p249
      $region38: #{inception_c_forward.1} parent=11 // pred_check_branch
        %871 = sbr.rel (%p869) target = $region40
      $region39: #{inception_c_forward.1} parent=11 // pred_region
        _
      $region40: #{inception_c_forward.1} parent=11 // pred_fallthru
        _
      // Predicated region
      $region41: #{inception_c_forward.1} parent=11 // pred_check
        %p872 = pneg %p270
      $region42: #{inception_c_forward.1} parent=11 // pred_check_branch
        %874 = sbr.rel (%p872) target = $region44
      $region43: #{inception_c_forward.1} parent=11 // pred_region
        _
      $region44: #{inception_c_forward.1} parent=11 // pred_fallthru
        _
      // Predicated region
      $region45: #{inception_c_forward.1} parent=11 // pred_check
        %p875 = pneg %p291
      $region46: #{inception_c_forward.1} parent=11 // pred_check_branch
        %877 = sbr.rel (%p875) target = $region48
      $region47: #{inception_c_forward.1} parent=11 // pred_region
        _
      $region48: #{inception_c_forward.1} parent=11 // pred_fallthru
        _
      // Predicated region
      $region49: #{inception_c_forward.1} parent=11 // pred_check
        %p878 = pneg %p312
      $region50: #{inception_c_forward.1} parent=11 // pred_check_branch
        %880 = sbr.rel (%p878) target = $region52
      $region51: #{inception_c_forward.1} parent=11 // pred_region
        _
      $region52: #{inception_c_forward.1} parent=11 // pred_fallthru
        _
      // Predicated region
      $region53: #{inception_c_forward.1} parent=11 // pred_check
        %p881 = pneg %p333
      $region54: #{inception_c_forward.1} parent=11 // pred_check_branch
        %883 = sbr.rel (%p881) target = $region56
      $region55: #{inception_c_forward.1} parent=11 // pred_region
        _
      $region56: #{inception_c_forward.1} parent=11 // pred_fallthru
        _
      // Predicated region
      $region57: #{inception_c_forward.1} parent=11 // pred_check
        %p884 = pneg %p354
      $region58: #{inception_c_forward.1} parent=11 // pred_check_branch
        %886 = sbr.rel (%p884) target = $region60
      $region59: #{inception_c_forward.1} parent=11 // pred_region
        _
      $region60: #{inception_c_forward.1} parent=11 // pred_fallthru
        _
      // Predicated region
      $region61: #{inception_c_forward.1} parent=11 // pred_check
        %p887 = pneg %p375
      $region62: #{inception_c_forward.1} parent=11 // pred_check_branch
        %889 = sbr.rel (%p887) target = $region64
      $region63: #{inception_c_forward.1} parent=11 // pred_region
        _
      $region64: #{inception_c_forward.1} parent=11 // pred_fallthru
        _
      // Predicated region
      $region65: #{inception_c_forward.1} parent=11 // pred_check
        %p890 = pneg %p396
      $region66: #{inception_c_forward.1} parent=11 // pred_check_branch
        %892 = sbr.rel (%p890) target = $region68
      $region67: #{inception_c_forward.1} parent=11 // pred_region
        _
      $region68: #{inception_c_forward.1} parent=11 // pred_fallthru
        _
      // Predicated region
      $region69: #{inception_c_forward.1} parent=11 // pred_check
        %p893 = pneg %p417
      $region70: #{inception_c_forward.1} parent=11 // pred_check_branch
        %895 = sbr.rel (%p893) target = $region72
      $region71: #{inception_c_forward.1} parent=11 // pred_region
        _
      $region72: #{inception_c_forward.1} parent=11 // pred_fallthru
        _
      // Predicated region
      $region73: #{inception_c_forward.1} parent=11 // pred_check
        %p896 = pneg %p438
      $region74: #{inception_c_forward.1} parent=11 // pred_check_branch
        %898 = sbr.rel (%p896) target = $region76
      $region75: #{inception_c_forward.1} parent=11 // pred_region
        _
      $region76: #{inception_c_forward.1} parent=11 // pred_fallthru
        _
      // Predicated region
      $region77: #{inception_c_forward.1} parent=11 // pred_check
        %p899 = pneg %p459
      $region78: #{inception_c_forward.1} parent=11 // pred_check_branch
        %901 = sbr.rel (%p899) target = $region80
      $region79: #{inception_c_forward.1} parent=11 // pred_region
        _
      $region80: #{inception_c_forward.1} parent=11 // pred_fallthru
        _
      // Predicated region
      $region81: #{inception_c_forward.1} parent=11 // pred_check
        %p902 = pneg %p480
      $region82: #{inception_c_forward.1} parent=11 // pred_check_branch
        %904 = sbr.rel (%p902) target = $region84
      $region83: #{inception_c_forward.1} parent=11 // pred_region
        _
      $region84: #{inception_c_forward.1} parent=11 // pred_fallthru
        _
      // Predicated region
      $region85: #{inception_c_forward.1} parent=11 // pred_check
        %p905 = pneg %p501
      $region86: #{inception_c_forward.1} parent=11 // pred_check_branch
        %907 = sbr.rel (%p905) target = $region88
      $region87: #{inception_c_forward.1} parent=11 // pred_region
        _
      $region88: #{inception_c_forward.1} parent=11 // pred_fallthru
        _
      // Predicated region
      $region89: #{inception_c_forward.1} parent=11 // pred_check
        %p908 = pneg %p522
      $region90: #{inception_c_forward.1} parent=11 // pred_check_branch
        %910 = sbr.rel (%p908) target = $region92
      $region91: #{inception_c_forward.1} parent=11 // pred_region
        _
      $region92: #{inception_c_forward.1} parent=11 // pred_fallthru
        _
      // Predicated region
      $region93: #{inception_c_forward.1} parent=11 // pred_check
        %p911 = pneg %p543
      $region94: #{inception_c_forward.1} parent=11 // pred_check_branch
        %913 = sbr.rel (%p911) target = $region96
      $region95: #{inception_c_forward.1} parent=11 // pred_region
        _
      $region96: #{inception_c_forward.1} parent=11 // pred_fallthru
        _
      // Predicated region
      $region97: #{inception_c_forward.1} parent=11 // pred_check
        %p914 = pneg %p564
      $region98: #{inception_c_forward.1} parent=11 // pred_check_branch
        %916 = sbr.rel (%p914) target = $region100
      $region99: #{inception_c_forward.1} parent=11 // pred_region
        _
      $region100: #{inception_c_forward.1} parent=11 // pred_fallthru
        _
      // Predicated region
      $region101: #{inception_c_forward.1} parent=11 // pred_check
        %p917 = pneg %p585
      $region102: #{inception_c_forward.1} parent=11 // pred_check_branch
        %919 = sbr.rel (%p917) target = $region104
      $region103: #{inception_c_forward.1} parent=11 // pred_region
        _
      $region104: #{inception_c_forward.1} parent=11 // pred_fallthru
        _
      // Predicated region
      $region105: #{inception_c_forward.1} parent=11 // pred_check
        %p920 = pneg %p606
      $region106: #{inception_c_forward.1} parent=11 // pred_check_branch
        %922 = sbr.rel (%p920) target = $region108
      $region107: #{inception_c_forward.1} parent=11 // pred_region
        _
      $region108: #{inception_c_forward.1} parent=11 // pred_fallthru
        _
      // Predicated region
      $region109: #{inception_c_forward.1} parent=11 // pred_check
        %p923 = pneg %p627
      $region110: #{inception_c_forward.1} parent=11 // pred_check_branch
        %925 = sbr.rel (%p923) target = $region112
      $region111: #{inception_c_forward.1} parent=11 // pred_region
        _
      $region112: #{inception_c_forward.1} parent=11 // pred_fallthru
        _
      // Predicated region
      $region113: #{inception_c_forward.1} parent=11 // pred_check
        %p926 = pneg %p648
      $region114: #{inception_c_forward.1} parent=11 // pred_check_branch
        %928 = sbr.rel (%p926) target = $region116
      $region115: #{inception_c_forward.1} parent=11 // pred_region
        _
      $region116: #{inception_c_forward.1} parent=11 // pred_fallthru
        _
      // Predicated region
      $region117: #{inception_c_forward.1} parent=11 // pred_check
        %p929 = pneg %p669
      $region118: #{inception_c_forward.1} parent=11 // pred_check_branch
        %931 = sbr.rel (%p929) target = $region120
      $region119: #{inception_c_forward.1} parent=11 // pred_region
        _
      $region120: #{inception_c_forward.1} parent=11 // pred_fallthru
        _
      // Predicated region
      $region121: #{inception_c_forward.1} parent=11 // pred_check
        %p932 = pneg %p690
      $region122: #{inception_c_forward.1} parent=11 // pred_check_branch
        %934 = sbr.rel (%p932) target = $region124
      $region123: #{inception_c_forward.1} parent=11 // pred_region
        _
      $region124: #{inception_c_forward.1} parent=11 // pred_fallthru
        _
      // Predicated region
      $region125: #{inception_c_forward.1} parent=11 // pred_check
        %p935 = pneg %p711
      $region126: #{inception_c_forward.1} parent=11 // pred_check_branch
        %937 = sbr.rel (%p935) target = $region128
      $region127: #{inception_c_forward.1} parent=11 // pred_region
        _
      $region128: #{inception_c_forward.1} parent=11 // pred_fallthru
        _
      // Predicated region
      $region129: #{inception_c_forward.1} parent=11 // pred_check
        %p938 = pneg %p732
      $region130: #{inception_c_forward.1} parent=11 // pred_check_branch
        %940 = sbr.rel (%p938) target = $region132
      $region131: #{inception_c_forward.1} parent=11 // pred_region
        _
      $region132: #{inception_c_forward.1} parent=11 // pred_fallthru
        _
    $region12: #{inception_c_forward.1} parent=5 // pred_fallthru
      _
    %p941 = scmp.lt.s32.totalorder %s76, 2
    // Predicated region
    $region133: #{inception_c_forward.1} parent=5 // pred_check
      %p942 = pneg %p941
    $region134: #{inception_c_forward.1} parent=5 // pred_check_branch
      %944 = sbr.rel (%p942) target = $region136
    $region135: #{inception_c_forward.1} parent=5 // pred_region
      // Predicated region
      $region137: #{inception_c_forward.1} parent=135 // pred_check
        %p945 = pneg %p96
      $region138: #{inception_c_forward.1} parent=135 // pred_check_branch
        %947 = sbr.rel (%p945) target = $region140
      $region139: #{inception_c_forward.1} parent=135 // pred_region
        %p948 = scmp.lt.s32.totalorder %s76, 1
        %s949 = scalar_select %p948, %s76, 1
        %s950 = smul.addr %s949, 20
        %s951 = smul.addr %s950, 8
        %s952 = scalar_lea.vmem %s1, %s951
      $region140: #{inception_c_forward.1} parent=135 // pred_fallthru
        _
    $region136: #{inception_c_forward.1} parent=5 // pred_fallthru
      _
    %p953 = scmp.le.s32.totalorder 1, %s76
    %p954 = scmp.lt.s32.totalorder %s76, 3
    %p955 = pnand %p953, %p954
    %p956 = pneg %p955
    // Predicated region
    $region141: #{inception_c_forward.1} parent=5 // pred_check
      _
    $region142: #{inception_c_forward.1} parent=5 // pred_check_branch
      %958 = sbr.rel (%p955) target = $region144
    $region143: #{inception_c_forward.1} parent=5 // pred_region
      %s959 = ssub.s32 %s76, 1
      %p960 = scmp.lt.s32.totalorder %s81, 1
      %s961 = scalar_select %p960, %s81, 1
      %s962 = smul.addr %s961, 20
      %s963 = smul.addr %s962, 8
      %s964 = scalar_lea.vmem %s1, %s963
      %p965 = pneg %p102
      %p966 = pneg %p99
      %p967 = pneg %p123
      %p968 = pneg %p120
      %p969 = pneg %p144
      %p970 = pneg %p141
      %p971 = pneg %p165
      %p972 = pneg %p162
      %p973 = pneg %p186
      %p974 = pneg %p183
      %p975 = pneg %p207
      %p976 = pneg %p204
      %p977 = pneg %p228
      %p978 = pneg %p225
      %p979 = pneg %p249
      %p980 = pneg %p246
      %p981 = pneg %p270
      %p982 = pneg %p267
      %p983 = pneg %p291
      %p984 = pneg %p288
      %p985 = pneg %p312
      %p986 = pneg %p309
      %p987 = pneg %p333
      %p988 = pneg %p330
      %p989 = pneg %p354
      %p990 = pneg %p351
      %p991 = pneg %p375
      %p992 = pneg %p372
      %p993 = pneg %p396
      %p994 = pneg %p393
      %p995 = pneg %p417
      %p996 = pneg %p414
      %p997 = pneg %p438
      %p998 = pneg %p435
      %p999 = pneg %p459
      %p1000 = pneg %p456
      %p1001 = pneg %p480
      %p1002 = pneg %p477
      %p1003 = pneg %p501
      %p1004 = pneg %p498
      %p1005 = pneg %p522
      %p1006 = pneg %p519
      %p1007 = pneg %p543
      %p1008 = pneg %p540
      %p1009 = pneg %p564
      %p1010 = pneg %p561
      %p1011 = pneg %p585
      %p1012 = pneg %p582
      %p1013 = pneg %p606
      %p1014 = pneg %p603
      %p1015 = pneg %p627
      %p1016 = pneg %p624
      %p1017 = pneg %p648
      %p1018 = pneg %p645
      %p1019 = pneg %p669
      %p1020 = pneg %p666
      %p1021 = pneg %p690
      %p1022 = pneg %p687
      %p1023 = pneg %p711
      %p1024 = pneg %p708
      %p1025 = pneg %p732
      %p1026 = pneg %p729
      %p1027 = pneg %p758
      %p1028 = pneg %p755
      %p1029 = scmp.lt.s32.totalorder %s81, 1
      %s1030 = scalar_select %p1029, %s81, 1
      %s1031 = smul.addr %s1030, 16
      %s1032 = smul.addr %s1031, 8
      %s1033 = scalar_lea.vmem %s63, %s1032
      %p1034 = pneg %p784
      %p1035 = pneg %p781
      %p1036 = scmp.lt.s32.totalorder %s81, 1
      %s1037 = scalar_select %p1036, %s81, 1
      %s1038 = smul.addr %s1037, 16
      %s1039 = smul.addr %s1038, 8
      %s1040 = scalar_lea.vmem %s65, %s1039
      %p1041 = pneg %p810
      %p1042 = pneg %p807
      %p1043 = scmp.lt.s32.totalorder %s81, 1
      %s1044 = scalar_select %p1043, %s81, 1
      %s1045 = smul.addr %s1044, 16
      %s1046 = smul.addr %s1045, 8
      %s1047 = scalar_lea.vmem %s67, %s1046
      %p1048 = pneg %p836
      %p1049 = pneg %p833
      %p1050 = scmp.lt.s32.totalorder %s81, 1
      %s1051 = scalar_select %p1050, %s81, 1
      %s1052 = smul.addr %s1051, 16
      %s1053 = smul.addr %s1052, 8
      %s1054 = scalar_lea.vmem %s69, %s1053
      %p1055 = scmp.lt.s32.totalorder %s81, 1
      %s1056 = scalar_select %p1055, %s81, 1
      %s1057 = smul.addr %s1056, 20
      %s1058 = smul.addr %s1057, 8
      %s1059 = scalar_lea.vmem %s1, %s1058
      %p1060 = scmp.lt.s32.totalorder %s81, 1
      %s1061 = scalar_select %p1060, %s81, 1
      %s1062 = smul.addr %s1061, 16
      %s1063 = smul.addr %s1062, 8
      %s1064 = scalar_lea.vmem %s63, %s1063
      %p1065 = scmp.lt.s32.totalorder %s81, 1
      %s1066 = scalar_select %p1065, %s81, 1
      %s1067 = smul.addr %s1066, 16
      %s1068 = smul.addr %s1067, 8
      %s1069 = scalar_lea.vmem %s65, %s1068
      %p1070 = scmp.lt.s32.totalorder %s81, 1
      %s1071 = scalar_select %p1070, %s81, 1
      %s1072 = smul.addr %s1071, 16
      %s1073 = smul.addr %s1072, 8
      %s1074 = scalar_lea.vmem %s67, %s1073
      %p1075 = scmp.lt.s32.totalorder %s81, 1
      %s1076 = scalar_select %p1075, %s81, 1
      %s1077 = smul.addr %s1076, 16
      %s1078 = smul.addr %s1077, 8
      %s1079 = scalar_lea.vmem %s69, %s1078
      %s1081 = scalar_lea.vmem %s1059, 16
      %v1082 = vld [vmem:[%s1081 + $0x1] sm:$0xff]
      %v1083 = vld [vmem:[%s1081 + $0x11] sm:$0xff]
      %v1084 = vld [vmem:[%s1081 + $0x21] sm:$0xff]
      %v1085 = vld [vmem:[%s1081 + $0x31] sm:$0xff]
      %v1086 = vld [vmem:[%s1081 + $0x41] sm:$0xff]
      %v1087 = vld [vmem:[%s1081 + $0x51] sm:$0xff]
      %v1088 = vld [vmem:[%s1081 + $0x61] sm:$0xff]
      %v1089 = vld [vmem:[%s1081 + $0x71] sm:$0xff]
      %v1090 = vpack.c.bf16 %v1083, %v1082
      %v1091 = vpack.c.bf16 %v1085, %v1084
      %v1092 = vpack.c.bf16 %v1087, %v1086
      %v1093 = vpack.c.bf16 %v1089, %v1088
      %v1094 = vld [vmem:[%s3] sm:$0xff]
      %v1095 = vld [vmem:[%s3 + $0x8] sm:$0xff]
      %v1098 = vunpack.c.l.b16 %v1094
      %v1099 = vunpack.c.h.b16 %v1094
      %v1100 = vunpack.c.l.b16 %v1095
      %v1101 = vunpack.c.h.b16 %v1095
      %v1102 = vpack.c.b16 %v1100, %v1098
      %v1103 = vpack.c.b16 %v1101, %v1099
      %vm1106 = vcmask 130048
      %v1108 = vsel %vm1106, %v1090, 0
      %v1111 = vsel %vm1106, %v1091, 0
      %v1114 = vsel %vm1106, %v1092, 0
      %v1117 = vsel %vm1106, %v1093, 0
      %1119 = vmatpush.bf16.msra.mxu0 0
      %1120 = vmatpush.bf16.msra.mxu0 0
      %1121 = vmatpush.bf16.msra.mxu0 0
      %1122 = vmatpush.bf16.msra.mxu0 0
      %1123 = vmatpush.bf16.msra.mxu0 0
      %1124 = vmatpush.bf16.msra.mxu0 0
      %1125 = vmatpush.bf16.msra.mxu0 0
      %1126 = vmatpush.bf16.msra.mxu0 %v1102
      %1127 = vmatmul.bf16.gmra.mxu0 %v1108
      %v1128 = vpop.f32.mrf.mxu0
      %v1129 = vadd.f32 0.0, %v1128
      %v1130 = vpop.f32.mrf.mxu0
      %v1131 = vadd.f32 0.0, %v1130
      %1132 = vmatmul.bf16.gmra.mxu0 %v1111
      %v1133 = vpop.f32.mrf.mxu0
      %v1134 = vadd.f32 0.0, %v1133
      %v1135 = vpop.f32.mrf.mxu0
      %v1136 = vadd.f32 0.0, %v1135
      %1137 = vmatmul.bf16.gmra.mxu0 %v1114
      %v1138 = vpop.f32.mrf.mxu0
      %v1139 = vadd.f32 0.0, %v1138
      %v1140 = vpop.f32.mrf.mxu0
      %v1141 = vadd.f32 0.0, %v1140
      %1142 = vmatmul.bf16.gmra.mxu0 %v1117
      %v1143 = vpop.f32.mrf.mxu0
      %v1144 = vadd.f32 0.0, %v1143
      %v1145 = vpop.f32.mrf.mxu0
      %v1146 = vadd.f32 0.0, %v1145
      %1147 = vdwg.mxu0
      %1148 = vmatpush.bf16.msra.mxu0 0
      %1149 = vmatpush.bf16.msra.mxu0 0
      %1150 = vmatpush.bf16.msra.mxu0 0
      %1151 = vmatpush.bf16.msra.mxu0 0
      %1152 = vmatpush.bf16.msra.mxu0 0
      %1153 = vmatpush.bf16.msra.mxu0 0
      %1154 = vmatpush.bf16.msra.mxu0 0
      %1155 = vmatpush.bf16.msra.mxu0 %v1103
      %1156 = vmatmul.bf16.gmra.mxu0 %v1108
      %v1157 = vpop.f32.mrf.mxu0
      %v1158 = vadd.f32 0.0, %v1157
      %v1159 = vpop.f32.mrf.mxu0
      %v1160 = vadd.f32 0.0, %v1159
      %1161 = vmatmul.bf16.gmra.mxu0 %v1111
      %v1162 = vpop.f32.mrf.mxu0
      %v1163 = vadd.f32 0.0, %v1162
      %v1164 = vpop.f32.mrf.mxu0
      %v1165 = vadd.f32 0.0, %v1164
      %1166 = vmatmul.bf16.gmra.mxu0 %v1114
      %v1167 = vpop.f32.mrf.mxu0
      %v1168 = vadd.f32 0.0, %v1167
      %v1169 = vpop.f32.mrf.mxu0
      %v1170 = vadd.f32 0.0, %v1169
      %1171 = vmatmul.bf16.gmra.mxu0 %v1117
      %v1172 = vpop.f32.mrf.mxu0
      %v1173 = vadd.f32 0.0, %v1172
      %v1174 = vpop.f32.mrf.mxu0
      %v1175 = vadd.f32 0.0, %v1174
      %1176 = vdwg.mxu0
      %v1177 = vld [vmem:[%s5] sm:$0x3]
      %v1179 = vperm.slane %v1177, 0
      %v1180 = vperm.slane %v1177, 1
      %v1183 = vmul.f32 %v1129, %v1179
      %v1184 = vmul.f32 %v1158, %v1180
      %v1185 = vmul.f32 %v1131, %v1179
      %v1186 = vmul.f32 %v1160, %v1180
      %v1187 = vmul.f32 %v1134, %v1179
      %v1188 = vmul.f32 %v1163, %v1180
      %v1189 = vmul.f32 %v1136, %v1179
      %v1190 = vmul.f32 %v1165, %v1180
      %v1191 = vmul.f32 %v1139, %v1179
      %v1192 = vmul.f32 %v1168, %v1180
      %v1193 = vmul.f32 %v1141, %v1179
      %v1194 = vmul.f32 %v1170, %v1180
      %v1195 = vmul.f32 %v1144, %v1179
      %v1196 = vmul.f32 %v1173, %v1180
      %v1197 = vmul.f32 %v1146, %v1179
      %v1198 = vmul.f32 %v1175, %v1180
      %v1199 = vld [vmem:[%s7] sm:$0x3]
      %v1201 = vperm.slane %v1199, 0
      %v1202 = vperm.slane %v1199, 1
      %v1205 = vadd.f32 %v1183, %v1201
      %v1206 = vadd.f32 %v1184, %v1202
      %v1207 = vadd.f32 %v1185, %v1201
      %v1208 = vadd.f32 %v1186, %v1202
      %v1209 = vadd.f32 %v1187, %v1201
      %v1210 = vadd.f32 %v1188, %v1202
      %v1211 = vadd.f32 %v1189, %v1201
      %v1212 = vadd.f32 %v1190, %v1202
      %v1213 = vadd.f32 %v1191, %v1201
      %v1214 = vadd.f32 %v1192, %v1202
      %v1215 = vadd.f32 %v1193, %v1201
      %v1216 = vadd.f32 %v1194, %v1202
      %v1217 = vadd.f32 %v1195, %v1201
      %v1218 = vadd.f32 %v1196, %v1202
      %v1219 = vadd.f32 %v1197, %v1201
      %v1220 = vadd.f32 %v1198, %v1202
      %v1221 = vmax.f32 %v1205, 0.0
      %v1222 = vmax.f32 %v1206, 0.0
      %v1223 = vmax.f32 %v1207, 0.0
      %v1224 = vmax.f32 %v1208, 0.0
      %v1225 = vmax.f32 %v1209, 0.0
      %v1226 = vmax.f32 %v1210, 0.0
      %v1227 = vmax.f32 %v1211, 0.0
      %v1228 = vmax.f32 %v1212, 0.0
      %v1229 = vmax.f32 %v1213, 0.0
      %v1230 = vmax.f32 %v1214, 0.0
      %v1231 = vmax.f32 %v1215, 0.0
      %v1232 = vmax.f32 %v1216, 0.0
      %v1233 = vmax.f32 %v1217, 0.0
      %v1234 = vmax.f32 %v1218, 0.0
      %v1235 = vmax.f32 %v1219, 0.0
      %v1236 = vmax.f32 %v1220, 0.0
      %v1237 = vld [vmem:[%s9] sm:$0xf]
      %v1238 = vld [vmem:[%s9 + $0x4] sm:$0xf]
      %v1241 = vunpack.c.l.b16 %v1237
      %v1242 = vunpack.c.l.b16 %v1238
      %v1243 = vpack.c.b16 %v1242, %v1241
      %1245 = vmatpush.bf16.msra.mxu0 0
      %1246 = vmatpush.bf16.msra.mxu0 0
      %1247 = vmatpush.bf16.msra.mxu0 0
      %1248 = vmatpush.bf16.msra.mxu0 0
      %1249 = vmatpush.bf16.msra.mxu0 0
      %1250 = vmatpush.bf16.msra.mxu0 0
      %1251 = vmatpush.bf16.msra.mxu0 0
      %1252 = vmatpush.bf16.msra.mxu0 %v1243
      %1253 = vmatmul.bf16.gmra.mxu0 %v1108
      %v1254 = vpop.f32.mrf.mxu0
      %v1255 = vadd.f32 0.0, %v1254
      %v1256 = vpop.f32.mrf.mxu0
      %v1257 = vadd.f32 0.0, %v1256
      %1258 = vmatmul.bf16.gmra.mxu0 %v1111
      %v1259 = vpop.f32.mrf.mxu0
      %v1260 = vadd.f32 0.0, %v1259
      %v1261 = vpop.f32.mrf.mxu0
      %v1262 = vadd.f32 0.0, %v1261
      %1263 = vmatmul.bf16.gmra.mxu0 %v1114
      %v1264 = vpop.f32.mrf.mxu0
      %v1265 = vadd.f32 0.0, %v1264
      %v1266 = vpop.f32.mrf.mxu0
      %v1267 = vadd.f32 0.0, %v1266
      %1268 = vmatmul.bf16.gmra.mxu0 %v1117
      %v1269 = vpop.f32.mrf.mxu0
      %v1270 = vadd.f32 0.0, %v1269
      %v1271 = vpop.f32.mrf.mxu0
      %v1272 = vadd.f32 0.0, %v1271
      %1273 = vdwg.mxu0
      %v1274 = vld [vmem:[%s11] sm:$0x1]
      %v1276 = vperm.slane %v1274, 0
      %v1278 = vmul.f32 %v1255, %v1276
      %v1279 = vmul.f32 %v1257, %v1276
      %v1280 = vmul.f32 %v1260, %v1276
      %v1281 = vmul.f32 %v1262, %v1276
      %v1282 = vmul.f32 %v1265, %v1276
      %v1283 = vmul.f32 %v1267, %v1276
      %v1284 = vmul.f32 %v1270, %v1276
      %v1285 = vmul.f32 %v1272, %v1276
      %v1286 = vld [vmem:[%s13] sm:$0x1]
      %v1288 = vperm.slane %v1286, 0
      %v1290 = vadd.f32 %v1278, %v1288
      %v1291 = vadd.f32 %v1279, %v1288
      %v1292 = vadd.f32 %v1280, %v1288
      %v1293 = vadd.f32 %v1281, %v1288
      %v1294 = vadd.f32 %v1282, %v1288
      %v1295 = vadd.f32 %v1283, %v1288
      %v1296 = vadd.f32 %v1284, %v1288
      %v1297 = vadd.f32 %v1285, %v1288
      %v1298 = vmax.f32 %v1290, 0.0
      %v1299 = vmax.f32 %v1291, 0.0
      %v1300 = vmax.f32 %v1292, 0.0
      %v1301 = vmax.f32 %v1293, 0.0
      %v1302 = vmax.f32 %v1294, 0.0
      %v1303 = vmax.f32 %v1295, 0.0
      %v1304 = vmax.f32 %v1296, 0.0
      %v1305 = vmax.f32 %v1297, 0.0
      %v1306 = vld [vmem:[%s27] sm:$0xf]
      %v1307 = vld [vmem:[%s27 + $0x4] sm:$0xf]
      %v1310 = vunpack.c.l.b16 %v1306
      %v1311 = vunpack.c.l.b16 %v1307
      %v1312 = vpack.c.b16 %v1311, %v1310
      %1314 = vmatpush.bf16.msra.mxu0 0
      %1315 = vmatpush.bf16.msra.mxu0 0
      %1316 = vmatpush.bf16.msra.mxu0 0
      %1317 = vmatpush.bf16.msra.mxu0 0
      %1318 = vmatpush.bf16.msra.mxu0 0
      %1319 = vmatpush.bf16.msra.mxu0 0
      %1320 = vmatpush.bf16.msra.mxu0 0
      %1321 = vmatpush.bf16.msra.mxu0 %v1312
      %1322 = vmatmul.bf16.gmra.mxu0 %v1108
      %v1323 = vpop.f32.mrf.mxu0
      %v1324 = vadd.f32 0.0, %v1323
      %v1325 = vpop.f32.mrf.mxu0
      %v1326 = vadd.f32 0.0, %v1325
      %1327 = vmatmul.bf16.gmra.mxu0 %v1111
      %v1328 = vpop.f32.mrf.mxu0
      %v1329 = vadd.f32 0.0, %v1328
      %v1330 = vpop.f32.mrf.mxu0
      %v1331 = vadd.f32 0.0, %v1330
      %1332 = vmatmul.bf16.gmra.mxu0 %v1114
      %v1333 = vpop.f32.mrf.mxu0
      %v1334 = vadd.f32 0.0, %v1333
      %v1335 = vpop.f32.mrf.mxu0
      %v1336 = vadd.f32 0.0, %v1335
      %1337 = vmatmul.bf16.gmra.mxu0 %v1117
      %v1338 = vpop.f32.mrf.mxu0
      %v1339 = vadd.f32 0.0, %v1338
      %v1340 = vpop.f32.mrf.mxu0
      %v1341 = vadd.f32 0.0, %v1340
      %1342 = vdwg.mxu0
      %v1343 = vld [vmem:[%s29] sm:$0x1]
      %v1345 = vperm.slane %v1343, 0
      %v1347 = vmul.f32 %v1324, %v1345
      %v1348 = vmul.f32 %v1326, %v1345
      %v1349 = vmul.f32 %v1329, %v1345
      %v1350 = vmul.f32 %v1331, %v1345
      %v1351 = vmul.f32 %v1334, %v1345
      %v1352 = vmul.f32 %v1336, %v1345
      %v1353 = vmul.f32 %v1339, %v1345
      %v1354 = vmul.f32 %v1341, %v1345
      %v1355 = vld [vmem:[%s31] sm:$0x1]
      %v1357 = vperm.slane %v1355, 0
      %v1359 = vadd.f32 %v1347, %v1357
      %v1360 = vadd.f32 %v1348, %v1357
      %v1361 = vadd.f32 %v1349, %v1357
      %v1362 = vadd.f32 %v1350, %v1357
      %v1363 = vadd.f32 %v1351, %v1357
      %v1364 = vadd.f32 %v1352, %v1357
      %v1365 = vadd.f32 %v1353, %v1357
      %v1366 = vadd.f32 %v1354, %v1357
      %v1367 = vmax.f32 %v1359, 0.0
      %v1368 = vmax.f32 %v1360, 0.0
      %v1369 = vmax.f32 %v1361, 0.0
      %v1370 = vmax.f32 %v1362, 0.0
      %v1371 = vmax.f32 %v1363, 0.0
      %v1372 = vmax.f32 %v1364, 0.0
      %v1373 = vmax.f32 %v1365, 0.0
      %v1374 = vmax.f32 %v1366, 0.0
      %v1375 = vld [vmem:[%s1059] sm:$0xff]
      %v1376 = vld [vmem:[%s1059 + $0x10] sm:$0xff]
      %v1377 = vld [vmem:[%s1059 + $0x20] sm:$0xff]
      %v1378 = vld [vmem:[%s1059 + $0x30] sm:$0xff]
      %v1379 = vld [vmem:[%s1059 + $0x40] sm:$0xff]
      %v1380 = vld [vmem:[%s1059 + $0x50] sm:$0xff]
      %v1381 = vld [vmem:[%s1059 + $0x60] sm:$0xff]
      %v1382 = vld [vmem:[%s1059 + $0x70] sm:$0xff]
      %v1383 = vadd.f32 %v1375, 0.0
      %v1384 = vadd.f32 %v1376, 0.0
      %v1385 = vadd.f32 %v1377, 0.0
      %v1386 = vadd.f32 %v1378, 0.0
      %v1387 = vadd.f32 %v1379, 0.0
      %v1388 = vadd.f32 %v1380, 0.0
      %v1389 = vadd.f32 %v1381, 0.0
      %v1390 = vadd.f32 %v1382, 0.0
      %v1391 = vld [vmem:[%s1059 + $0x1] sm:$0xff]
      %v1392 = vld [vmem:[%s1059 + $0x11] sm:$0xff]
      %v1393 = vld [vmem:[%s1059 + $0x21] sm:$0xff]
      %v1394 = vld [vmem:[%s1059 + $0x31] sm:$0xff]
      %v1395 = vld [vmem:[%s1059 + $0x41] sm:$0xff]
      %v1396 = vld [vmem:[%s1059 + $0x51] sm:$0xff]
      %v1397 = vld [vmem:[%s1059 + $0x61] sm:$0xff]
      %v1398 = vld [vmem:[%s1059 + $0x71] sm:$0xff]
      %v1399 = vadd.f32 %v1383, %v1391
      %v1400 = vadd.f32 %v1384, %v1392
      %v1401 = vadd.f32 %v1385, %v1393
      %v1402 = vadd.f32 %v1386, %v1394
      %v1403 = vadd.f32 %v1387, %v1395
      %v1404 = vadd.f32 %v1388, %v1396
      %v1405 = vadd.f32 %v1389, %v1397
      %v1406 = vadd.f32 %v1390, %v1398
      %v1407 = vld [vmem:[%s1059 + $0x2] sm:$0xff]
      %v1408 = vld [vmem:[%s1059 + $0x12] sm:$0xff]
      %v1409 = vld [vmem:[%s1059 + $0x22] sm:$0xff]
      %v1410 = vld [vmem:[%s1059 + $0x32] sm:$0xff]
      %v1411 = vld [vmem:[%s1059 + $0x42] sm:$0xff]
      %v1412 = vld [vmem:[%s1059 + $0x52] sm:$0xff]
      %v1413 = vld [vmem:[%s1059 + $0x62] sm:$0xff]
      %v1414 = vld [vmem:[%s1059 + $0x72] sm:$0xff]
      %v1415 = vadd.f32 %v1399, %v1407
      %v1416 = vadd.f32 %v1400, %v1408
      %v1417 = vadd.f32 %v1401, %v1409
      %v1418 = vadd.f32 %v1402, %v1410
      %v1419 = vadd.f32 %v1403, %v1411
      %v1420 = vadd.f32 %v1404, %v1412
      %v1421 = vadd.f32 %v1405, %v1413
      %v1422 = vadd.f32 %v1406, %v1414
      %v1423 = vld [vmem:[%s1081] sm:$0xff]
      %v1424 = vld [vmem:[%s1081 + $0x10] sm:$0xff]
      %v1425 = vld [vmem:[%s1081 + $0x20] sm:$0xff]
      %v1426 = vld [vmem:[%s1081 + $0x30] sm:$0xff]
      %v1427 = vld [vmem:[%s1081 + $0x40] sm:$0xff]
      %v1428 = vld [vmem:[%s1081 + $0x50] sm:$0xff]
      %v1429 = vld [vmem:[%s1081 + $0x60] sm:$0xff]
      %v1430 = vld [vmem:[%s1081 + $0x70] sm:$0xff]
      %v1431 = vadd.f32 %v1415, %v1423
      %v1432 = vadd.f32 %v1416, %v1424
      %v1433 = vadd.f32 %v1417, %v1425
      %v1434 = vadd.f32 %v1418, %v1426
      %v1435 = vadd.f32 %v1419, %v1427
      %v1436 = vadd.f32 %v1420, %v1428
      %v1437 = vadd.f32 %v1421, %v1429
      %v1438 = vadd.f32 %v1422, %v1430
      %v1439 = vadd.f32 %v1431, %v1082
      %v1440 = vadd.f32 %v1432, %v1083
      %v1441 = vadd.f32 %v1433, %v1084
      %v1442 = vadd.f32 %v1434, %v1085
      %v1443 = vadd.f32 %v1435, %v1086
      %v1444 = vadd.f32 %v1436, %v1087
      %v1445 = vadd.f32 %v1437, %v1088
      %v1446 = vadd.f32 %v1438, %v1089
      %v1447 = vld [vmem:[%s1081 + $0x2] sm:$0xff]
      %v1448 = vld [vmem:[%s1081 + $0x12] sm:$0xff]
      %v1449 = vld [vmem:[%s1081 + $0x22] sm:$0xff]
      %v1450 = vld [vmem:[%s1081 + $0x32] sm:$0xff]
      %v1451 = vld [vmem:[%s1081 + $0x42] sm:$0xff]
      %v1452 = vld [vmem:[%s1081 + $0x52] sm:$0xff]
      %v1453 = vld [vmem:[%s1081 + $0x62] sm:$0xff]
      %v1454 = vld [vmem:[%s1081 + $0x72] sm:$0xff]
      %v1455 = vadd.f32 %v1439, %v1447
      %v1456 = vadd.f32 %v1440, %v1448
      %v1457 = vadd.f32 %v1441, %v1449
      %v1458 = vadd.f32 %v1442, %v1450
      %v1459 = vadd.f32 %v1443, %v1451
      %v1460 = vadd.f32 %v1444, %v1452
      %v1461 = vadd.f32 %v1445, %v1453
      %v1462 = vadd.f32 %v1446, %v1454
      %s1463 = scalar_lea.vmem %s1059, 32
      %v1464 = vld [vmem:[%s1463] sm:$0xff]
      %v1465 = vld [vmem:[%s1463 + $0x10] sm:$0xff]
      %v1466 = vld [vmem:[%s1463 + $0x20] sm:$0xff]
      %v1467 = vld [vmem:[%s1463 + $0x30] sm:$0xff]
      %v1468 = vld [vmem:[%s1463 + $0x40] sm:$0xff]
      %v1469 = vld [vmem:[%s1463 + $0x50] sm:$0xff]
      %v1470 = vld [vmem:[%s1463 + $0x60] sm:$0xff]
      %v1471 = vld [vmem:[%s1463 + $0x70] sm:$0xff]
      %v1472 = vadd.f32 %v1455, %v1464
      %v1473 = vadd.f32 %v1456, %v1465
      %v1474 = vadd.f32 %v1457, %v1466
      %v1475 = vadd.f32 %v1458, %v1467
      %v1476 = vadd.f32 %v1459, %v1468
      %v1477 = vadd.f32 %v1460, %v1469
      %v1478 = vadd.f32 %v1461, %v1470
      %v1479 = vadd.f32 %v1462, %v1471
      %v1480 = vld [vmem:[%s1463 + $0x1] sm:$0xff]
      %v1481 = vld [vmem:[%s1463 + $0x11] sm:$0xff]
      %v1482 = vld [vmem:[%s1463 + $0x21] sm:$0xff]
      %v1483 = vld [vmem:[%s1463 + $0x31] sm:$0xff]
      %v1484 = vld [vmem:[%s1463 + $0x41] sm:$0xff]
      %v1485 = vld [vmem:[%s1463 + $0x51] sm:$0xff]
      %v1486 = vld [vmem:[%s1463 + $0x61] sm:$0xff]
      %v1487 = vld [vmem:[%s1463 + $0x71] sm:$0xff]
      %v1488 = vadd.f32 %v1472, %v1480
      %v1489 = vadd.f32 %v1473, %v1481
      %v1490 = vadd.f32 %v1474, %v1482
      %v1491 = vadd.f32 %v1475, %v1483
      %v1492 = vadd.f32 %v1476, %v1484
      %v1493 = vadd.f32 %v1477, %v1485
      %v1494 = vadd.f32 %v1478, %v1486
      %v1495 = vadd.f32 %v1479, %v1487
      %v1496 = vld [vmem:[%s1463 + $0x2] sm:$0xff]
      %v1497 = vld [vmem:[%s1463 + $0x12] sm:$0xff]
      %v1498 = vld [vmem:[%s1463 + $0x22] sm:$0xff]
      %v1499 = vld [vmem:[%s1463 + $0x32] sm:$0xff]
      %v1500 = vld [vmem:[%s1463 + $0x42] sm:$0xff]
      %v1501 = vld [vmem:[%s1463 + $0x52] sm:$0xff]
      %v1502 = vld [vmem:[%s1463 + $0x62] sm:$0xff]
      %v1503 = vld [vmem:[%s1463 + $0x72] sm:$0xff]
      %v1504 = vadd.f32 %v1488, %v1496
      %v1505 = vadd.f32 %v1489, %v1497
      %v1506 = vadd.f32 %v1490, %v1498
      %v1507 = vadd.f32 %v1491, %v1499
      %v1508 = vadd.f32 %v1492, %v1500
      %v1509 = vadd.f32 %v1493, %v1501
      %v1510 = vadd.f32 %v1494, %v1502
      %v1511 = vadd.f32 %v1495, %v1503
      %v1512 = vpack.c.bf16 %v1505, %v1504
      %v1513 = vpack.c.bf16 %v1507, %v1506
      %v1514 = vpack.c.bf16 %v1509, %v1508
      %v1515 = vpack.c.bf16 %v1511, %v1510
      %v1516 = vld [vmem:[%s57] sm:$0xff]
      %v1517 = vld [vmem:[%s57 + $0x8] sm:$0xff]
      %v1520 = vunpack.c.l.b16 %v1516
      %v1521 = vunpack.c.h.b16 %v1516
      %v1522 = vunpack.c.l.b16 %v1517
      %v1523 = vunpack.c.h.b16 %v1517
      %v1524 = vpack.c.b16 %v1522, %v1520
      %v1525 = vpack.c.b16 %v1523, %v1521
      %v1529 = vsel %vm1106, %v1512, 0
      %v1532 = vsel %vm1106, %v1513, 0
      %v1535 = vsel %vm1106, %v1514, 0
      %v1538 = vsel %vm1106, %v1515, 0
      %1540 = vmatpush.bf16.msra.mxu0 0
      %1541 = vmatpush.bf16.msra.mxu0 0
      %1542 = vmatpush.bf16.msra.mxu0 0
      %1543 = vmatpush.bf16.msra.mxu0 0
      %1544 = vmatpush.bf16.msra.mxu0 0
      %1545 = vmatpush.bf16.msra.mxu0 0
      %1546 = vmatpush.bf16.msra.mxu0 0
      %1547 = vmatpush.bf16.msra.mxu0 %v1524
      %1548 = vmatmul.bf16.gmra.mxu0 %v1529
      %v1549 = vpop.f32.mrf.mxu0
      %v1550 = vadd.f32 0.0, %v1549
      %v1551 = vpop.f32.mrf.mxu0
      %v1552 = vadd.f32 0.0, %v1551
      %1553 = vmatmul.bf16.gmra.mxu0 %v1532
      %v1554 = vpop.f32.mrf.mxu0
      %v1555 = vadd.f32 0.0, %v1554
      %v1556 = vpop.f32.mrf.mxu0
      %v1557 = vadd.f32 0.0, %v1556
      %1558 = vmatmul.bf16.gmra.mxu0 %v1535
      %v1559 = vpop.f32.mrf.mxu0
      %v1560 = vadd.f32 0.0, %v1559
      %v1561 = vpop.f32.mrf.mxu0
      %v1562 = vadd.f32 0.0, %v1561
      %1563 = vmatmul.bf16.gmra.mxu0 %v1538
      %v1564 = vpop.f32.mrf.mxu0
      %v1565 = vadd.f32 0.0, %v1564
      %v1566 = vpop.f32.mrf.mxu0
      %v1567 = vadd.f32 0.0, %v1566
      %1568 = vdwg.mxu0
      %1569 = vmatpush.bf16.msra.mxu0 0
      %1570 = vmatpush.bf16.msra.mxu0 0
      %1571 = vmatpush.bf16.msra.mxu0 0
      %1572 = vmatpush.bf16.msra.mxu0 0
      %1573 = vmatpush.bf16.msra.mxu0 0
      %1574 = vmatpush.bf16.msra.mxu0 0
      %1575 = vmatpush.bf16.msra.mxu0 0
      %1576 = vmatpush.bf16.msra.mxu0 %v1525
      %1577 = vmatmul.bf16.gmra.mxu0 %v1529
      %v1578 = vpop.f32.mrf.mxu0
      %v1579 = vadd.f32 0.0, %v1578
      %v1580 = vpop.f32.mrf.mxu0
      %v1581 = vadd.f32 0.0, %v1580
      %1582 = vmatmul.bf16.gmra.mxu0 %v1532
      %v1583 = vpop.f32.mrf.mxu0
      %v1584 = vadd.f32 0.0, %v1583
      %v1585 = vpop.f32.mrf.mxu0
      %v1586 = vadd.f32 0.0, %v1585
      %1587 = vmatmul.bf16.gmra.mxu0 %v1535
      %v1588 = vpop.f32.mrf.mxu0
      %v1589 = vadd.f32 0.0, %v1588
      %v1590 = vpop.f32.mrf.mxu0
      %v1591 = vadd.f32 0.0, %v1590
      %1592 = vmatmul.bf16.gmra.mxu0 %v1538
      %v1593 = vpop.f32.mrf.mxu0
      %v1594 = vadd.f32 0.0, %v1593
      %v1595 = vpop.f32.mrf.mxu0
      %v1596 = vadd.f32 0.0, %v1595
      %1597 = vdwg.mxu0
      %v1598 = vld [vmem:[%s59] sm:$0x3]
      %v1600 = vperm.slane %v1598, 0
      %v1601 = vperm.slane %v1598, 1
      %v1604 = vmul.f32 %v1550, %v1600
      %v1605 = vmul.f32 %v1579, %v1601
      %v1606 = vmul.f32 %v1552, %v1600
      %v1607 = vmul.f32 %v1581, %v1601
      %v1608 = vmul.f32 %v1555, %v1600
      %v1609 = vmul.f32 %v1584, %v1601
      %v1610 = vmul.f32 %v1557, %v1600
      %v1611 = vmul.f32 %v1586, %v1601
      %v1612 = vmul.f32 %v1560, %v1600
      %v1613 = vmul.f32 %v1589, %v1601
      %v1614 = vmul.f32 %v1562, %v1600
      %v1615 = vmul.f32 %v1591, %v1601
      %v1616 = vmul.f32 %v1565, %v1600
      %v1617 = vmul.f32 %v1594, %v1601
      %v1618 = vmul.f32 %v1567, %v1600
      %v1619 = vmul.f32 %v1596, %v1601
      %v1620 = vld [vmem:[%s61] sm:$0x3]
      %v1622 = vperm.slane %v1620, 0
      %v1623 = vperm.slane %v1620, 1
      %v1626 = vadd.f32 %v1604, %v1622
      %v1627 = vadd.f32 %v1605, %v1623
      %v1628 = vadd.f32 %v1606, %v1622
      %v1629 = vadd.f32 %v1607, %v1623
      %v1630 = vadd.f32 %v1608, %v1622
      %v1631 = vadd.f32 %v1609, %v1623
      %v1632 = vadd.f32 %v1610, %v1622
      %v1633 = vadd.f32 %v1611, %v1623
      %v1634 = vadd.f32 %v1612, %v1622
      %v1635 = vadd.f32 %v1613, %v1623
      %v1636 = vadd.f32 %v1614, %v1622
      %v1637 = vadd.f32 %v1615, %v1623
      %v1638 = vadd.f32 %v1616, %v1622
      %v1639 = vadd.f32 %v1617, %v1623
      %v1640 = vadd.f32 %v1618, %v1622
      %v1641 = vadd.f32 %v1619, %v1623
      %v1642 = vmax.f32 %v1626, 0.0
      %v1643 = vmax.f32 %v1627, 0.0
      %v1644 = vmax.f32 %v1628, 0.0
      %v1645 = vmax.f32 %v1629, 0.0
      %v1646 = vmax.f32 %v1630, 0.0
      %v1647 = vmax.f32 %v1631, 0.0
      %v1648 = vmax.f32 %v1632, 0.0
      %v1649 = vmax.f32 %v1633, 0.0
      %v1650 = vmax.f32 %v1634, 0.0
      %v1651 = vmax.f32 %v1635, 0.0
      %v1652 = vmax.f32 %v1636, 0.0
      %v1653 = vmax.f32 %v1637, 0.0
      %v1654 = vmax.f32 %v1638, 0.0
      %v1655 = vmax.f32 %v1639, 0.0
      %v1656 = vmax.f32 %v1640, 0.0
      %v1657 = vmax.f32 %v1641, 0.0
      %vm1658 = vcmask 64512
      %1659 = vst.msk [vmem:[#allocation2] sm:$0xff] %vm1658, 0.0
      %1660 = vst.msk [vmem:[#allocation2 + $0x8] sm:$0xff] %vm1658, 0.0
      %1661 = vst.msk [vmem:[#allocation2 + $0x10] sm:$0xff] %vm1658, 0.0
      %1662 = vst.msk [vmem:[#allocation2 + $0x18] sm:$0xff] %vm1658, 0.0
      %1663 = vst.msk [vmem:[#allocation2 + $0x20] sm:$0xff] %vm1658, 0.0
      %1664 = vst.msk [vmem:[#allocation2 + $0x28] sm:$0xff] %vm1658, 0.0
      %1665 = vst.msk [vmem:[#allocation2 + $0x30] sm:$0xff] %vm1658, 0.0
      %1666 = vst.msk [vmem:[#allocation2 + $0x38] sm:$0xff] %vm1658, 0.0
      %1667 = vst.msk [vmem:[#allocation2 + $0x40] sm:$0xff] %vm1658, 0.0
      %1668 = vst.msk [vmem:[#allocation2 + $0x48] sm:$0xff] %vm1658, 0.0
      %1669 = vst.msk [vmem:[#allocation2 + $0x50] sm:$0xff] %vm1658, 0.0
      %1670 = vst.msk [vmem:[#allocation2 + $0x58] sm:$0xff] %vm1658, 0.0
      %1671 = vst.msk [vmem:[#allocation2 + $0x60] sm:$0xff] %vm1658, 0.0
      %1672 = vst.msk [vmem:[#allocation2 + $0x68] sm:$0xff] %vm1658, 0.0
      %1673 = vst.msk [vmem:[#allocation2 + $0x70] sm:$0xff] %vm1658, 0.0
      %1674 = vst.msk [vmem:[#allocation2 + $0x78] sm:$0xff] %vm1658, 0.0
      %1675 = vst.msk [vmem:[#allocation2 + $0x80] sm:$0xff] %vm1658, 0.0
      %1676 = vst.msk [vmem:[#allocation2 + $0x88] sm:$0xff] %vm1658, 0.0
      %1677 = vst.msk [vmem:[#allocation2 + $0x90] sm:$0xff] %vm1658, 0.0
      %1678 = vst.msk [vmem:[#allocation2 + $0x98] sm:$0xff] %vm1658, 0.0
      %1679 = vst.msk [vmem:[#allocation2 + $0xa0] sm:$0xff] %vm1658, 0.0
      %1680 = vst.msk [vmem:[#allocation2 + $0xa8] sm:$0xff] %vm1658, 0.0
      %1681 = vst.msk [vmem:[#allocation2 + $0xb0] sm:$0xff] %vm1658, 0.0
      %1682 = vst.msk [vmem:[#allocation2 + $0xb8] sm:$0xff] %vm1658, 0.0
      %1683 = vst.msk [vmem:[#allocation2 + $0x8] sm:$0xff] %vm1658, %v1298
      %1684 = vst.msk [vmem:[#allocation2 + $0x20] sm:$0xff] %vm1658, %v1299
      %1685 = vst.msk [vmem:[#allocation2 + $0x38] sm:$0xff] %vm1658, %v1300
      %1686 = vst.msk [vmem:[#allocation2 + $0x50] sm:$0xff] %vm1658, %v1301
      %1687 = vst.msk [vmem:[#allocation2 + $0x68] sm:$0xff] %vm1658, %v1302
      %1688 = vst.msk [vmem:[#allocation2 + $0x80] sm:$0xff] %vm1658, %v1303
      %1689 = vst.msk [vmem:[#allocation2 + $0x98] sm:$0xff] %vm1658, %v1304
      %1690 = vst.msk [vmem:[#allocation2 + $0xb0] sm:$0xff] %vm1658, %v1305
      %v1691 = vld [vmem:[#allocation2 + $0x5] sm:$0xff]
      %v1692 = vld [vmem:[#allocation2 + $0x1d] sm:$0xff]
      %v1693 = vld [vmem:[#allocation2 + $0x35] sm:$0xff]
      %v1694 = vld [vmem:[#allocation2 + $0x4d] sm:$0xff]
      %v1695 = vld [vmem:[#allocation2 + $0x65] sm:$0xff]
      %v1696 = vld [vmem:[#allocation2 + $0x7d] sm:$0xff]
      %v1697 = vld [vmem:[#allocation2 + $0x95] sm:$0xff]
      %v1698 = vld [vmem:[#allocation2 + $0xad] sm:$0xff]
      %v1699 = vpack.c.bf16 %v1692, %v1691
      %v1700 = vpack.c.bf16 %v1694, %v1693
      %v1701 = vpack.c.bf16 %v1696, %v1695
      %v1702 = vpack.c.bf16 %v1698, %v1697
      %v1703 = vld [vmem:[%s15] sm:$0xf]
      %v1704 = vld [vmem:[#allocation2 + $0x6] sm:$0xff]
      %v1705 = vld [vmem:[#allocation2 + $0x1e] sm:$0xff]
      %v1706 = vld [vmem:[#allocation2 + $0x36] sm:$0xff]
      %v1707 = vld [vmem:[#allocation2 + $0x4e] sm:$0xff]
      %v1708 = vld [vmem:[#allocation2 + $0x66] sm:$0xff]
      %v1709 = vld [vmem:[#allocation2 + $0x7e] sm:$0xff]
      %v1710 = vld [vmem:[#allocation2 + $0x96] sm:$0xff]
      %v1711 = vld [vmem:[#allocation2 + $0xae] sm:$0xff]
      %v1712 = vpack.c.bf16 %v1705, %v1704
      %v1713 = vpack.c.bf16 %v1707, %v1706
      %v1714 = vpack.c.bf16 %v1709, %v1708
      %v1715 = vpack.c.bf16 %v1711, %v1710
      %s1716 = scalar_lea.vmem %s15, 4
      %v1717 = vld [vmem:[%s1716] sm:$0xf]
      %v1719 = vsel %vm1658, %v1712, 0
      %v1722 = vsel %vm1658, %v1713, 0
      %v1725 = vsel %vm1658, %v1714, 0
      %v1728 = vsel %vm1658, %v1715, 0
      %vm1730 = vcmask 1043456
      %v1732 = vsel %vm1730, %v1717, 0
      %1734 = vmatpush.bf16.msra.mxu0 0
      %1735 = vmatpush.bf16.msra.mxu0 0
      %1736 = vmatpush.bf16.msra.mxu0 0
      %1737 = vmatpush.bf16.msra.mxu0 0
      %1738 = vmatpush.bf16.msra.mxu0 0
      %1739 = vmatpush.bf16.msra.mxu0 0
      %1740 = vmatpush.bf16.msra.mxu0 0
      %1741 = vmatpush.bf16.msra.mxu0 %v1732
      %1742 = vmatmul.bf16.gmra.mxu0 %v1719
      %v1743 = vpop.f32.mrf.mxu0
      %v1744 = vadd.f32 0.0, %v1743
      %v1745 = vpop.f32.mrf.mxu0
      %v1746 = vadd.f32 0.0, %v1745
      %1747 = vmatmul.bf16.gmra.mxu0 %v1722
      %v1748 = vpop.f32.mrf.mxu0
      %v1749 = vadd.f32 0.0, %v1748
      %v1750 = vpop.f32.mrf.mxu0
      %v1751 = vadd.f32 0.0, %v1750
      %1752 = vmatmul.bf16.gmra.mxu0 %v1725
      %v1753 = vpop.f32.mrf.mxu0
      %v1754 = vadd.f32 0.0, %v1753
      %v1755 = vpop.f32.mrf.mxu0
      %v1756 = vadd.f32 0.0, %v1755
      %1757 = vmatmul.bf16.gmra.mxu0 %v1728
      %v1758 = vpop.f32.mrf.mxu0
      %v1759 = vadd.f32 0.0, %v1758
      %v1760 = vpop.f32.mrf.mxu0
      %v1761 = vadd.f32 0.0, %v1760
      %1762 = vdwg.mxu0
      %v1764 = vsel %vm1658, %v1699, 0
      %v1767 = vsel %vm1658, %v1700, 0
      %v1770 = vsel %vm1658, %v1701, 0
      %v1773 = vsel %vm1658, %v1702, 0
      %v1776 = vsel %vm1730, %v1703, 0
      %1778 = vmatpush.bf16.msra.mxu0 0
      %1779 = vmatpush.bf16.msra.mxu0 0
      %1780 = vmatpush.bf16.msra.mxu0 0
      %1781 = vmatpush.bf16.msra.mxu0 0
      %1782 = vmatpush.bf16.msra.mxu0 0
      %1783 = vmatpush.bf16.msra.mxu0 0
      %1784 = vmatpush.bf16.msra.mxu0 0
      %1785 = vmatpush.bf16.msra.mxu0 %v1776
      %1786 = vmatmul.bf16.gmra.mxu0 %v1764
      %v1787 = vpop.f32.mrf.mxu0
      %v1788 = vadd.f32 %v1744, %v1787
      %v1789 = vpop.f32.mrf.mxu0
      %v1790 = vadd.f32 %v1746, %v1789
      %1791 = vmatmul.bf16.gmra.mxu0 %v1767
      %v1792 = vpop.f32.mrf.mxu0
      %v1793 = vadd.f32 %v1749, %v1792
      %v1794 = vpop.f32.mrf.mxu0
      %v1795 = vadd.f32 %v1751, %v1794
      %1796 = vmatmul.bf16.gmra.mxu0 %v1770
      %v1797 = vpop.f32.mrf.mxu0
      %v1798 = vadd.f32 %v1754, %v1797
      %v1799 = vpop.f32.mrf.mxu0
      %v1800 = vadd.f32 %v1756, %v1799
      %1801 = vmatmul.bf16.gmra.mxu0 %v1773
      %v1802 = vpop.f32.mrf.mxu0
      %v1803 = vadd.f32 %v1759, %v1802
      %v1804 = vpop.f32.mrf.mxu0
      %v1805 = vadd.f32 %v1761, %v1804
      %1806 = vdwg.mxu0
      %v1807 = vld [vmem:[#allocation2 + $0x7] sm:$0xff]
      %v1808 = vld [vmem:[#allocation2 + $0x1f] sm:$0xff]
      %v1809 = vld [vmem:[#allocation2 + $0x37] sm:$0xff]
      %v1810 = vld [vmem:[#allocation2 + $0x4f] sm:$0xff]
      %v1811 = vld [vmem:[#allocation2 + $0x67] sm:$0xff]
      %v1812 = vld [vmem:[#allocation2 + $0x7f] sm:$0xff]
      %v1813 = vld [vmem:[#allocation2 + $0x97] sm:$0xff]
      %v1814 = vld [vmem:[#allocation2 + $0xaf] sm:$0xff]
      %v1815 = vpack.c.bf16 %v1808, %v1807
      %v1816 = vpack.c.bf16 %v1810, %v1809
      %v1817 = vpack.c.bf16 %v1812, %v1811
      %v1818 = vpack.c.bf16 %v1814, %v1813
      %s1819 = scalar_lea.vmem %s15, 8
      %v1820 = vld [vmem:[%s1819] sm:$0xf]
      %v1822 = vsel %vm1658, %v1815, 0
      %v1825 = vsel %vm1658, %v1816, 0
      %v1828 = vsel %vm1658, %v1817, 0
      %v1831 = vsel %vm1658, %v1818, 0
      %v1834 = vsel %vm1730, %v1820, 0
      %1836 = vmatpush.bf16.msra.mxu0 0
      %1837 = vmatpush.bf16.msra.mxu0 0
      %1838 = vmatpush.bf16.msra.mxu0 0
      %1839 = vmatpush.bf16.msra.mxu0 0
      %1840 = vmatpush.bf16.msra.mxu0 0
      %1841 = vmatpush.bf16.msra.mxu0 0
      %1842 = vmatpush.bf16.msra.mxu0 0
      %1843 = vmatpush.bf16.msra.mxu0 %v1834
      %1844 = vmatmul.bf16.gmra.mxu0 %v1822
      %v1845 = vpop.f32.mrf.mxu0
      %v1846 = vadd.f32 0.0, %v1845
      %v1847 = vpop.f32.mrf.mxu0
      %v1848 = vadd.f32 0.0, %v1847
      %1849 = vmatmul.bf16.gmra.mxu0 %v1825
      %v1850 = vpop.f32.mrf.mxu0
      %v1851 = vadd.f32 0.0, %v1850
      %v1852 = vpop.f32.mrf.mxu0
      %v1853 = vadd.f32 0.0, %v1852
      %1854 = vmatmul.bf16.gmra.mxu0 %v1828
      %v1855 = vpop.f32.mrf.mxu0
      %v1856 = vadd.f32 0.0, %v1855
      %v1857 = vpop.f32.mrf.mxu0
      %v1858 = vadd.f32 0.0, %v1857
      %1859 = vmatmul.bf16.gmra.mxu0 %v1831
      %v1860 = vpop.f32.mrf.mxu0
      %v1861 = vadd.f32 0.0, %v1860
      %v1862 = vpop.f32.mrf.mxu0
      %v1863 = vadd.f32 0.0, %v1862
      %1864 = vdwg.mxu0
      %v1865 = vadd.f32 %v1788, %v1846
      %v1866 = vadd.f32 %v1790, %v1848
      %v1867 = vadd.f32 %v1793, %v1851
      %v1868 = vadd.f32 %v1795, %v1853
      %v1869 = vadd.f32 %v1798, %v1856
      %v1870 = vadd.f32 %v1800, %v1858
      %v1871 = vadd.f32 %v1803, %v1861
      %v1872 = vadd.f32 %v1805, %v1863
      %v1873 = vld [vmem:[#allocation2 + $0x8] sm:$0xff]
      %v1874 = vld [vmem:[#allocation2 + $0x20] sm:$0xff]
      %v1875 = vld [vmem:[#allocation2 + $0x38] sm:$0xff]
      %v1876 = vld [vmem:[#allocation2 + $0x50] sm:$0xff]
      %v1877 = vld [vmem:[#allocation2 + $0x68] sm:$0xff]
      %v1878 = vld [vmem:[#allocation2 + $0x80] sm:$0xff]
      %v1879 = vld [vmem:[#allocation2 + $0x98] sm:$0xff]
      %v1880 = vld [vmem:[#allocation2 + $0xb0] sm:$0xff]
      %v1881 = vpack.c.bf16 %v1874, %v1873
      %v1882 = vpack.c.bf16 %v1876, %v1875
      %v1883 = vpack.c.bf16 %v1878, %v1877
      %v1884 = vpack.c.bf16 %v1880, %v1879
      %s1885 = scalar_lea.vmem %s15, 12
      %v1886 = vld [vmem:[%s1885] sm:$0xf]
      %v1888 = vsel %vm1658, %v1881, 0
      %v1891 = vsel %vm1658, %v1882, 0
      %v1894 = vsel %vm1658, %v1883, 0
      %v1897 = vsel %vm1658, %v1884, 0
      %v1900 = vsel %vm1730, %v1886, 0
      %1902 = vmatpush.bf16.msra.mxu0 0
      %1903 = vmatpush.bf16.msra.mxu0 0
      %1904 = vmatpush.bf16.msra.mxu0 0
      %1905 = vmatpush.bf16.msra.mxu0 0
      %1906 = vmatpush.bf16.msra.mxu0 0
      %1907 = vmatpush.bf16.msra.mxu0 0
      %1908 = vmatpush.bf16.msra.mxu0 0
      %1909 = vmatpush.bf16.msra.mxu0 %v1900
      %1910 = vmatmul.bf16.gmra.mxu0 %v1888
      %v1911 = vpop.f32.mrf.mxu0
      %v1912 = vadd.f32 0.0, %v1911
      %v1913 = vpop.f32.mrf.mxu0
      %v1914 = vadd.f32 0.0, %v1913
      %1915 = vmatmul.bf16.gmra.mxu0 %v1891
      %v1916 = vpop.f32.mrf.mxu0
      %v1917 = vadd.f32 0.0, %v1916
      %v1918 = vpop.f32.mrf.mxu0
      %v1919 = vadd.f32 0.0, %v1918
      %1920 = vmatmul.bf16.gmra.mxu0 %v1894
      %v1921 = vpop.f32.mrf.mxu0
      %v1922 = vadd.f32 0.0, %v1921
      %v1923 = vpop.f32.mrf.mxu0
      %v1924 = vadd.f32 0.0, %v1923
      %1925 = vmatmul.bf16.gmra.mxu0 %v1897
      %v1926 = vpop.f32.mrf.mxu0
      %v1927 = vadd.f32 0.0, %v1926
      %v1928 = vpop.f32.mrf.mxu0
      %v1929 = vadd.f32 0.0, %v1928
      %1930 = vdwg.mxu0
      %v1931 = vadd.f32 %v1865, %v1912
      %v1932 = vadd.f32 %v1866, %v1914
      %v1933 = vadd.f32 %v1867, %v1917
      %v1934 = vadd.f32 %v1868, %v1919
      %v1935 = vadd.f32 %v1869, %v1922
      %v1936 = vadd.f32 %v1870, %v1924
      %v1937 = vadd.f32 %v1871, %v1927
      %v1938 = vadd.f32 %v1872, %v1929
      %v1939 = vld [vmem:[#allocation2 + $0x9] sm:$0xff]
      %v1940 = vld [vmem:[#allocation2 + $0x21] sm:$0xff]
      %v1941 = vld [vmem:[#allocation2 + $0x39] sm:$0xff]
      %v1942 = vld [vmem:[#allocation2 + $0x51] sm:$0xff]
      %v1943 = vld [vmem:[#allocation2 + $0x69] sm:$0xff]
      %v1944 = vld [vmem:[#allocation2 + $0x81] sm:$0xff]
      %v1945 = vld [vmem:[#allocation2 + $0x99] sm:$0xff]
      %v1946 = vld [vmem:[#allocation2 + $0xb1] sm:$0xff]
      %v1947 = vpack.c.bf16 %v1940, %v1939
      %v1948 = vpack.c.bf16 %v1942, %v1941
      %v1949 = vpack.c.bf16 %v1944, %v1943
      %v1950 = vpack.c.bf16 %v1946, %v1945
      %s1951 = scalar_lea.vmem %s15, 16
      %v1952 = vld [vmem:[%s1951] sm:$0xf]
      %v1954 = vsel %vm1658, %v1947, 0
      %v1957 = vsel %vm1658, %v1948, 0
      %v1960 = vsel %vm1658, %v1949, 0
      %v1963 = vsel %vm1658, %v1950, 0
      %v1966 = vsel %vm1730, %v1952, 0
      %1968 = vmatpush.bf16.msra.mxu0 0
      %1969 = vmatpush.bf16.msra.mxu0 0
      %1970 = vmatpush.bf16.msra.mxu0 0
      %1971 = vmatpush.bf16.msra.mxu0 0
      %1972 = vmatpush.bf16.msra.mxu0 0
      %1973 = vmatpush.bf16.msra.mxu0 0
      %1974 = vmatpush.bf16.msra.mxu0 0
      %1975 = vmatpush.bf16.msra.mxu0 %v1966
      %1976 = vmatmul.bf16.gmra.mxu0 %v1954
      %v1977 = vpop.f32.mrf.mxu0
      %v1978 = vadd.f32 0.0, %v1977
      %v1979 = vpop.f32.mrf.mxu0
      %v1980 = vadd.f32 0.0, %v1979
      %1981 = vmatmul.bf16.gmra.mxu0 %v1957
      %v1982 = vpop.f32.mrf.mxu0
      %v1983 = vadd.f32 0.0, %v1982
      %v1984 = vpop.f32.mrf.mxu0
      %v1985 = vadd.f32 0.0, %v1984
      %1986 = vmatmul.bf16.gmra.mxu0 %v1960
      %v1987 = vpop.f32.mrf.mxu0
      %v1988 = vadd.f32 0.0, %v1987
      %v1989 = vpop.f32.mrf.mxu0
      %v1990 = vadd.f32 0.0, %v1989
      %1991 = vmatmul.bf16.gmra.mxu0 %v1963
      %v1992 = vpop.f32.mrf.mxu0
      %v1993 = vadd.f32 0.0, %v1992
      %v1994 = vpop.f32.mrf.mxu0
      %v1995 = vadd.f32 0.0, %v1994
      %1996 = vdwg.mxu0
      %v1997 = vadd.f32 %v1931, %v1978
      %v1998 = vadd.f32 %v1932, %v1980
      %v1999 = vadd.f32 %v1933, %v1983
      %v2000 = vadd.f32 %v1934, %v1985
      %v2001 = vadd.f32 %v1935, %v1988
      %v2002 = vadd.f32 %v1936, %v1990
      %v2003 = vadd.f32 %v1937, %v1993
      %v2004 = vadd.f32 %v1938, %v1995
      %v2005 = vld [vmem:[#allocation2 + $0xa] sm:$0xff]
      %v2006 = vld [vmem:[#allocation2 + $0x22] sm:$0xff]
      %v2007 = vld [vmem:[#allocation2 + $0x3a] sm:$0xff]
      %v2008 = vld [vmem:[#allocation2 + $0x52] sm:$0xff]
      %v2009 = vld [vmem:[#allocation2 + $0x6a] sm:$0xff]
      %v2010 = vld [vmem:[#allocation2 + $0x82] sm:$0xff]
      %v2011 = vld [vmem:[#allocation2 + $0x9a] sm:$0xff]
      %v2012 = vld [vmem:[#allocation2 + $0xb2] sm:$0xff]
      %v2013 = vpack.c.bf16 %v2006, %v2005
      %v2014 = vpack.c.bf16 %v2008, %v2007
      %v2015 = vpack.c.bf16 %v2010, %v2009
      %v2016 = vpack.c.bf16 %v2012, %v2011
      %s2017 = scalar_lea.vmem %s15, 20
      %v2018 = vld [vmem:[%s2017] sm:$0xf]
      %v2020 = vsel %vm1658, %v2013, 0
      %v2023 = vsel %vm1658, %v2014, 0
      %v2026 = vsel %vm1658, %v2015, 0
      %v2029 = vsel %vm1658, %v2016, 0
      %v2032 = vsel %vm1730, %v2018, 0
      %2034 = vmatpush.bf16.msra.mxu0 0
      %2035 = vmatpush.bf16.msra.mxu0 0
      %2036 = vmatpush.bf16.msra.mxu0 0
      %2037 = vmatpush.bf16.msra.mxu0 0
      %2038 = vmatpush.bf16.msra.mxu0 0
      %2039 = vmatpush.bf16.msra.mxu0 0
      %2040 = vmatpush.bf16.msra.mxu0 0
      %2041 = vmatpush.bf16.msra.mxu0 %v2032
      %2042 = vmatmul.bf16.gmra.mxu0 %v2020
      %v2043 = vpop.f32.mrf.mxu0
      %v2044 = vadd.f32 0.0, %v2043
      %v2045 = vpop.f32.mrf.mxu0
      %v2046 = vadd.f32 0.0, %v2045
      %2047 = vmatmul.bf16.gmra.mxu0 %v2023
      %v2048 = vpop.f32.mrf.mxu0
      %v2049 = vadd.f32 0.0, %v2048
      %v2050 = vpop.f32.mrf.mxu0
      %v2051 = vadd.f32 0.0, %v2050
      %2052 = vmatmul.bf16.gmra.mxu0 %v2026
      %v2053 = vpop.f32.mrf.mxu0
      %v2054 = vadd.f32 0.0, %v2053
      %v2055 = vpop.f32.mrf.mxu0
      %v2056 = vadd.f32 0.0, %v2055
      %2057 = vmatmul.bf16.gmra.mxu0 %v2029
      %v2058 = vpop.f32.mrf.mxu0
      %v2059 = vadd.f32 0.0, %v2058
      %v2060 = vpop.f32.mrf.mxu0
      %v2061 = vadd.f32 0.0, %v2060
      %2062 = vdwg.mxu0
      %v2063 = vadd.f32 %v1997, %v2044
      %v2064 = vadd.f32 %v1998, %v2046
      %v2065 = vadd.f32 %v1999, %v2049
      %v2066 = vadd.f32 %v2000, %v2051
      %v2067 = vadd.f32 %v2001, %v2054
      %v2068 = vadd.f32 %v2002, %v2056
      %v2069 = vadd.f32 %v2003, %v2059
      %v2070 = vadd.f32 %v2004, %v2061
      %v2071 = vld [vmem:[#allocation2 + $0xb] sm:$0xff]
      %v2072 = vld [vmem:[#allocation2 + $0x23] sm:$0xff]
      %v2073 = vld [vmem:[#allocation2 + $0x3b] sm:$0xff]
      %v2074 = vld [vmem:[#allocation2 + $0x53] sm:$0xff]
      %v2075 = vld [vmem:[#allocation2 + $0x6b] sm:$0xff]
      %v2076 = vld [vmem:[#allocation2 + $0x83] sm:$0xff]
      %v2077 = vld [vmem:[#allocation2 + $0x9b] sm:$0xff]
      %v2078 = vld [vmem:[#allocation2 + $0xb3] sm:$0xff]
      %v2079 = vpack.c.bf16 %v2072, %v2071
      %v2080 = vpack.c.bf16 %v2074, %v2073
      %v2081 = vpack.c.bf16 %v2076, %v2075
      %v2082 = vpack.c.bf16 %v2078, %v2077
      %s2083 = scalar_lea.vmem %s15, 24
      %v2084 = vld [vmem:[%s2083] sm:$0xf]
      %v2086 = vsel %vm1658, %v2079, 0
      %v2089 = vsel %vm1658, %v2080, 0
      %v2092 = vsel %vm1658, %v2081, 0
      %v2095 = vsel %vm1658, %v2082, 0
      %v2098 = vsel %vm1730, %v2084, 0
      %2100 = vmatpush.bf16.msra.mxu0 0
      %2101 = vmatpush.bf16.msra.mxu0 0
      %2102 = vmatpush.bf16.msra.mxu0 0
      %2103 = vmatpush.bf16.msra.mxu0 0
      %2104 = vmatpush.bf16.msra.mxu0 0
      %2105 = vmatpush.bf16.msra.mxu0 0
      %2106 = vmatpush.bf16.msra.mxu0 0
      %2107 = vmatpush.bf16.msra.mxu0 %v2098
      %2108 = vmatmul.bf16.gmra.mxu0 %v2086
      %v2109 = vpop.f32.mrf.mxu0
      %v2110 = vadd.f32 0.0, %v2109
      %v2111 = vpop.f32.mrf.mxu0
      %v2112 = vadd.f32 0.0, %v2111
      %2113 = vmatmul.bf16.gmra.mxu0 %v2089
      %v2114 = vpop.f32.mrf.mxu0
      %v2115 = vadd.f32 0.0, %v2114
      %v2116 = vpop.f32.mrf.mxu0
      %v2117 = vadd.f32 0.0, %v2116
      %2118 = vmatmul.bf16.gmra.mxu0 %v2092
      %v2119 = vpop.f32.mrf.mxu0
      %v2120 = vadd.f32 0.0, %v2119
      %v2121 = vpop.f32.mrf.mxu0
      %v2122 = vadd.f32 0.0, %v2121
      %2123 = vmatmul.bf16.gmra.mxu0 %v2095
      %v2124 = vpop.f32.mrf.mxu0
      %v2125 = vadd.f32 0.0, %v2124
      %v2126 = vpop.f32.mrf.mxu0
      %v2127 = vadd.f32 0.0, %v2126
      %2128 = vdwg.mxu0
      %v2129 = vadd.f32 %v2063, %v2110
      %v2130 = vadd.f32 %v2064, %v2112
      %v2131 = vadd.f32 %v2065, %v2115
      %v2132 = vadd.f32 %v2066, %v2117
      %v2133 = vadd.f32 %v2067, %v2120
      %v2134 = vadd.f32 %v2068, %v2122
      %v2135 = vadd.f32 %v2069, %v2125
      %v2136 = vadd.f32 %v2070, %v2127
      %v2137 = vld [vmem:[%s17] sm:$0x1]
      %v2139 = vperm.slane %v2137, 0
      %v2141 = vmul.f32 %v2129, %v2139
      %v2142 = vmul.f32 %v2130, %v2139
      %v2143 = vmul.f32 %v2131, %v2139
      %v2144 = vmul.f32 %v2132, %v2139
      %v2145 = vmul.f32 %v2133, %v2139
      %v2146 = vmul.f32 %v2134, %v2139
      %v2147 = vmul.f32 %v2135, %v2139
      %v2148 = vmul.f32 %v2136, %v2139
      %v2149 = vld [vmem:[%s19] sm:$0x1]
      %v2151 = vperm.slane %v2149, 0
      %v2153 = vadd.f32 %v2141, %v2151
      %v2154 = vadd.f32 %v2142, %v2151
      %v2155 = vadd.f32 %v2143, %v2151
      %v2156 = vadd.f32 %v2144, %v2151
      %v2157 = vadd.f32 %v2145, %v2151
      %v2158 = vadd.f32 %v2146, %v2151
      %v2159 = vadd.f32 %v2147, %v2151
      %v2160 = vadd.f32 %v2148, %v2151
      %v2161 = vmax.f32 %v2153, 0.0
      %v2162 = vmax.f32 %v2154, 0.0
      %v2163 = vmax.f32 %v2155, 0.0
      %v2164 = vmax.f32 %v2156, 0.0
      %v2165 = vmax.f32 %v2157, 0.0
      %v2166 = vmax.f32 %v2158, 0.0
      %v2167 = vmax.f32 %v2159, 0.0
      %v2168 = vmax.f32 %v2160, 0.0
      %2169 = vst.msk [vmem:[#allocation3] sm:$0xff] %vm1658, 0.0
      %2170 = vst.msk [vmem:[#allocation3 + $0x8] sm:$0xff] %vm1658, 0.0
      %2171 = vst.msk [vmem:[#allocation3 + $0x10] sm:$0xff] %vm1658, 0.0
      %2172 = vst.msk [vmem:[#allocation3 + $0x18] sm:$0xff] %vm1658, 0.0
      %2173 = vst.msk [vmem:[#allocation3 + $0x20] sm:$0xff] %vm1658, 0.0
      %2174 = vst.msk [vmem:[#allocation3 + $0x28] sm:$0xff] %vm1658, 0.0
      %2175 = vst.msk [vmem:[#allocation3 + $0x30] sm:$0xff] %vm1658, 0.0
      %2176 = vst.msk [vmem:[#allocation3 + $0x38] sm:$0xff] %vm1658, 0.0
      %2177 = vst.msk [vmem:[#allocation3 + $0x40] sm:$0xff] %vm1658, 0.0
      %2178 = vst.msk [vmem:[#allocation3 + $0x48] sm:$0xff] %vm1658, 0.0
      %2179 = vst.msk [vmem:[#allocation3 + $0x50] sm:$0xff] %vm1658, 0.0
      %2180 = vst.msk [vmem:[#allocation3 + $0x58] sm:$0xff] %vm1658, 0.0
      %2181 = vst.msk [vmem:[#allocation3 + $0x60] sm:$0xff] %vm1658, 0.0
      %2182 = vst.msk [vmem:[#allocation3 + $0x68] sm:$0xff] %vm1658, 0.0
      %s2183 = scalar_lea.vmem [#allocation3], 24
      %2184 = vst.msk [vmem:[%s2183] sm:$0xff] %vm1658, %v2161
      %2185 = vst.msk [vmem:[%s2183 + $0x8] sm:$0xff] %vm1658, %v2162
      %2186 = vst.msk [vmem:[%s2183 + $0x10] sm:$0xff] %vm1658, %v2163
      %2187 = vst.msk [vmem:[%s2183 + $0x18] sm:$0xff] %vm1658, %v2164
      %2188 = vst.msk [vmem:[%s2183 + $0x20] sm:$0xff] %vm1658, %v2165
      %2189 = vst.msk [vmem:[%s2183 + $0x28] sm:$0xff] %vm1658, %v2166
      %2190 = vst.msk [vmem:[%s2183 + $0x30] sm:$0xff] %vm1658, %v2167
      %2191 = vst.msk [vmem:[%s2183 + $0x38] sm:$0xff] %vm1658, %v2168
      %v2192 = vld [vmem:[#allocation3] sm:$0xff]
      %v2193 = vld [vmem:[#allocation3 + $0x8] sm:$0xff]
      %v2194 = vld [vmem:[#allocation3 + $0x10] sm:$0xff]
      %v2195 = vld [vmem:[#allocation3 + $0x18] sm:$0xff]
      %v2196 = vld [vmem:[#allocation3 + $0x20] sm:$0xff]
      %v2197 = vld [vmem:[#allocation3 + $0x28] sm:$0xff]
      %v2198 = vld [vmem:[#allocation3 + $0x30] sm:$0xff]
      %v2199 = vld [vmem:[#allocation3 + $0x38] sm:$0xff]
      %v2200 = vpack.c.bf16 %v2193, %v2192
      %v2201 = vpack.c.bf16 %v2195, %v2194
      %v2202 = vpack.c.bf16 %v2197, %v2196
      %v2203 = vpack.c.bf16 %v2199, %v2198
      %v2204 = vld [vmem:[%s21] sm:$0xff]
      %s2205 = scalar_lea.vmem [#allocation3], 8
      %v2206 = vld [vmem:[%s2205] sm:$0xff]
      %v2207 = vld [vmem:[%s2205 + $0x8] sm:$0xff]
      %v2208 = vld [vmem:[%s2205 + $0x10] sm:$0xff]
      %v2209 = vld [vmem:[%s2205 + $0x18] sm:$0xff]
      %v2210 = vld [vmem:[%s2205 + $0x20] sm:$0xff]
      %v2211 = vld [vmem:[%s2205 + $0x28] sm:$0xff]
      %v2212 = vld [vmem:[%s2205 + $0x30] sm:$0xff]
      %v2213 = vld [vmem:[%s2205 + $0x38] sm:$0xff]
      %v2214 = vpack.c.bf16 %v2207, %v2206
      %v2215 = vpack.c.bf16 %v2209, %v2208
      %v2216 = vpack.c.bf16 %v2211, %v2210
      %v2217 = vpack.c.bf16 %v2213, %v2212
      %s2218 = scalar_lea.vmem %s21, 8
      %v2219 = vld [vmem:[%s2218] sm:$0xff]
      %v2221 = vunpack.c.l.b16 %v2219
      %v2222 = vunpack.c.h.b16 %v2219
      %v2223 = vpack.c.b16 %v2221, %v2221
      %v2224 = vpack.c.b16 %v2222, %v2222
      %v2226 = vsel %vm1658, %v2214, 0
      %v2229 = vsel %vm1658, %v2215, 0
      %v2232 = vsel %vm1658, %v2216, 0
      %v2235 = vsel %vm1658, %v2217, 0
      %v2238 = vsel %vm1730, %v2223, 0
      %v2241 = vsel %vm1730, %v2224, 0
      %2243 = vmatpush.bf16.msra.mxu0 0
      %2244 = vmatpush.bf16.msra.mxu0 0
      %2245 = vmatpush.bf16.msra.mxu0 0
      %2246 = vmatpush.bf16.msra.mxu0 0
      %2247 = vmatpush.bf16.msra.mxu0 0
      %2248 = vmatpush.bf16.msra.mxu0 0
      %2249 = vmatpush.bf16.msra.mxu0 0
      %2250 = vmatpush.bf16.msra.mxu0 %v2238
      %2251 = vmatmul.bf16.gmra.mxu0 %v2226
      %v2252 = vpop.f32.mrf.mxu0
      %v2253 = vadd.f32 0.0, %v2252
      %v2254 = vpop.f32.mrf.mxu0
      %v2255 = vadd.f32 0.0, %v2254
      %2256 = vmatmul.bf16.gmra.mxu0 %v2229
      %v2257 = vpop.f32.mrf.mxu0
      %v2258 = vadd.f32 0.0, %v2257
      %v2259 = vpop.f32.mrf.mxu0
      %v2260 = vadd.f32 0.0, %v2259
      %2261 = vmatmul.bf16.gmra.mxu0 %v2232
      %v2262 = vpop.f32.mrf.mxu0
      %v2263 = vadd.f32 0.0, %v2262
      %v2264 = vpop.f32.mrf.mxu0
      %v2265 = vadd.f32 0.0, %v2264
      %2266 = vmatmul.bf16.gmra.mxu0 %v2235
      %v2267 = vpop.f32.mrf.mxu0
      %v2268 = vadd.f32 0.0, %v2267
      %v2269 = vpop.f32.mrf.mxu0
      %v2270 = vadd.f32 0.0, %v2269
      %2271 = vdwg.mxu0
      %2272 = vmatpush.bf16.msra.mxu0 0
      %2273 = vmatpush.bf16.msra.mxu0 0
      %2274 = vmatpush.bf16.msra.mxu0 0
      %2275 = vmatpush.bf16.msra.mxu0 0
      %2276 = vmatpush.bf16.msra.mxu0 0
      %2277 = vmatpush.bf16.msra.mxu0 0
      %2278 = vmatpush.bf16.msra.mxu0 0
      %2279 = vmatpush.bf16.msra.mxu0 %v2241
      %2280 = vmatmul.bf16.gmra.mxu0 %v2226
      %v2281 = vpop.f32.mrf.mxu0
      %v2282 = vadd.f32 0.0, %v2281
      %v2283 = vpop.f32.mrf.mxu0
      %v2284 = vadd.f32 0.0, %v2283
      %2285 = vmatmul.bf16.gmra.mxu0 %v2229
      %v2286 = vpop.f32.mrf.mxu0
      %v2287 = vadd.f32 0.0, %v2286
      %v2288 = vpop.f32.mrf.mxu0
      %v2289 = vadd.f32 0.0, %v2288
      %2290 = vmatmul.bf16.gmra.mxu0 %v2232
      %v2291 = vpop.f32.mrf.mxu0
      %v2292 = vadd.f32 0.0, %v2291
      %v2293 = vpop.f32.mrf.mxu0
      %v2294 = vadd.f32 0.0, %v2293
      %2295 = vmatmul.bf16.gmra.mxu0 %v2235
      %v2296 = vpop.f32.mrf.mxu0
      %v2297 = vadd.f32 0.0, %v2296
      %v2298 = vpop.f32.mrf.mxu0
      %v2299 = vadd.f32 0.0, %v2298
      %2300 = vdwg.mxu0
      %v2302 = vunpack.c.l.b16 %v2204
      %v2303 = vunpack.c.h.b16 %v2204
      %v2304 = vpack.c.b16 %v2302, %v2302
      %v2305 = vpack.c.b16 %v2303, %v2303
      %v2307 = vsel %vm1658, %v2200, 0
      %v2310 = vsel %vm1658, %v2201, 0
      %v2313 = vsel %vm1658, %v2202, 0
      %v2316 = vsel %vm1658, %v2203, 0
      %v2319 = vsel %vm1730, %v2304, 0
      %v2322 = vsel %vm1730, %v2305, 0
      %2324 = vmatpush.bf16.msra.mxu0 0
      %2325 = vmatpush.bf16.msra.mxu0 0
      %2326 = vmatpush.bf16.msra.mxu0 0
      %2327 = vmatpush.bf16.msra.mxu0 0
      %2328 = vmatpush.bf16.msra.mxu0 0
      %2329 = vmatpush.bf16.msra.mxu0 0
      %2330 = vmatpush.bf16.msra.mxu0 0
      %2331 = vmatpush.bf16.msra.mxu0 %v2319
      %2332 = vmatmul.bf16.gmra.mxu0 %v2307
      %v2333 = vpop.f32.mrf.mxu0
      %v2334 = vadd.f32 %v2253, %v2333
      %v2335 = vpop.f32.mrf.mxu0
      %v2336 = vadd.f32 %v2255, %v2335
      %2337 = vmatmul.bf16.gmra.mxu0 %v2310
      %v2338 = vpop.f32.mrf.mxu0
      %v2339 = vadd.f32 %v2258, %v2338
      %v2340 = vpop.f32.mrf.mxu0
      %v2341 = vadd.f32 %v2260, %v2340
      %2342 = vmatmul.bf16.gmra.mxu0 %v2313
      %v2343 = vpop.f32.mrf.mxu0
      %v2344 = vadd.f32 %v2263, %v2343
      %v2345 = vpop.f32.mrf.mxu0
      %v2346 = vadd.f32 %v2265, %v2345
      %2347 = vmatmul.bf16.gmra.mxu0 %v2316
      %v2348 = vpop.f32.mrf.mxu0
      %v2349 = vadd.f32 %v2268, %v2348
      %v2350 = vpop.f32.mrf.mxu0
      %v2351 = vadd.f32 %v2270, %v2350
      %2352 = vdwg.mxu0
      %2353 = vmatpush.bf16.msra.mxu0 0
      %2354 = vmatpush.bf16.msra.mxu0 0
      %2355 = vmatpush.bf16.msra.mxu0 0
      %2356 = vmatpush.bf16.msra.mxu0 0
      %2357 = vmatpush.bf16.msra.mxu0 0
      %2358 = vmatpush.bf16.msra.mxu0 0
      %2359 = vmatpush.bf16.msra.mxu0 0
      %2360 = vmatpush.bf16.msra.mxu0 %v2322
      %2361 = vmatmul.bf16.gmra.mxu0 %v2307
      %v2362 = vpop.f32.mrf.mxu0
      %v2363 = vadd.f32 %v2282, %v2362
      %v2364 = vpop.f32.mrf.mxu0
      %v2365 = vadd.f32 %v2284, %v2364
      %2366 = vmatmul.bf16.gmra.mxu0 %v2310
      %v2367 = vpop.f32.mrf.mxu0
      %v2368 = vadd.f32 %v2287, %v2367
      %v2369 = vpop.f32.mrf.mxu0
      %v2370 = vadd.f32 %v2289, %v2369
      %2371 = vmatmul.bf16.gmra.mxu0 %v2313
      %v2372 = vpop.f32.mrf.mxu0
      %v2373 = vadd.f32 %v2292, %v2372
      %v2374 = vpop.f32.mrf.mxu0
      %v2375 = vadd.f32 %v2294, %v2374
      %2376 = vmatmul.bf16.gmra.mxu0 %v2316
      %v2377 = vpop.f32.mrf.mxu0
      %v2378 = vadd.f32 %v2297, %v2377
      %v2379 = vpop.f32.mrf.mxu0
      %v2380 = vadd.f32 %v2299, %v2379
      %2381 = vdwg.mxu0
      %s2382 = scalar_lea.vmem [#allocation3], 16
      %v2383 = vld [vmem:[%s2382] sm:$0xff]
      %v2384 = vld [vmem:[%s2382 + $0x8] sm:$0xff]
      %v2385 = vld [vmem:[%s2382 + $0x10] sm:$0xff]
      %v2386 = vld [vmem:[%s2382 + $0x18] sm:$0xff]
      %v2387 = vld [vmem:[%s2382 + $0x20] sm:$0xff]
      %v2388 = vld [vmem:[%s2382 + $0x28] sm:$0xff]
      %v2389 = vld [vmem:[%s2382 + $0x30] sm:$0xff]
      %v2390 = vld [vmem:[%s2382 + $0x38] sm:$0xff]
      %v2391 = vpack.c.bf16 %v2384, %v2383
      %v2392 = vpack.c.bf16 %v2386, %v2385
      %v2393 = vpack.c.bf16 %v2388, %v2387
      %v2394 = vpack.c.bf16 %v2390, %v2389
      %s2395 = scalar_lea.vmem %s21, 16
      %v2396 = vld [vmem:[%s2395] sm:$0xff]
      %v2398 = vunpack.c.l.b16 %v2396
      %v2399 = vunpack.c.h.b16 %v2396
      %v2400 = vpack.c.b16 %v2398, %v2398
      %v2401 = vpack.c.b16 %v2399, %v2399
      %v2403 = vsel %vm1658, %v2391, 0
      %v2406 = vsel %vm1658, %v2392, 0
      %v2409 = vsel %vm1658, %v2393, 0
      %v2412 = vsel %vm1658, %v2394, 0
      %v2415 = vsel %vm1730, %v2400, 0
      %v2418 = vsel %vm1730, %v2401, 0
      %2420 = vmatpush.bf16.msra.mxu0 0
      %2421 = vmatpush.bf16.msra.mxu0 0
      %2422 = vmatpush.bf16.msra.mxu0 0
      %2423 = vmatpush.bf16.msra.mxu0 0
      %2424 = vmatpush.bf16.msra.mxu0 0
      %2425 = vmatpush.bf16.msra.mxu0 0
      %2426 = vmatpush.bf16.msra.mxu0 0
      %2427 = vmatpush.bf16.msra.mxu0 %v2415
      %2428 = vmatmul.bf16.gmra.mxu0 %v2403
      %v2429 = vpop.f32.mrf.mxu0
      %v2430 = vadd.f32 0.0, %v2429
      %v2431 = vpop.f32.mrf.mxu0
      %v2432 = vadd.f32 0.0, %v2431
      %2433 = vmatmul.bf16.gmra.mxu0 %v2406
      %v2434 = vpop.f32.mrf.mxu0
      %v2435 = vadd.f32 0.0, %v2434
      %v2436 = vpop.f32.mrf.mxu0
      %v2437 = vadd.f32 0.0, %v2436
      %2438 = vmatmul.bf16.gmra.mxu0 %v2409
      %v2439 = vpop.f32.mrf.mxu0
      %v2440 = vadd.f32 0.0, %v2439
      %v2441 = vpop.f32.mrf.mxu0
      %v2442 = vadd.f32 0.0, %v2441
      %2443 = vmatmul.bf16.gmra.mxu0 %v2412
      %v2444 = vpop.f32.mrf.mxu0
      %v2445 = vadd.f32 0.0, %v2444
      %v2446 = vpop.f32.mrf.mxu0
      %v2447 = vadd.f32 0.0, %v2446
      %2448 = vdwg.mxu0
      %2449 = vmatpush.bf16.msra.mxu0 0
      %2450 = vmatpush.bf16.msra.mxu0 0
      %2451 = vmatpush.bf16.msra.mxu0 0
      %2452 = vmatpush.bf16.msra.mxu0 0
      %2453 = vmatpush.bf16.msra.mxu0 0
      %2454 = vmatpush.bf16.msra.mxu0 0
      %2455 = vmatpush.bf16.msra.mxu0 0
      %2456 = vmatpush.bf16.msra.mxu0 %v2418
      %2457 = vmatmul.bf16.gmra.mxu0 %v2403
      %v2458 = vpop.f32.mrf.mxu0
      %v2459 = vadd.f32 0.0, %v2458
      %v2460 = vpop.f32.mrf.mxu0
      %v2461 = vadd.f32 0.0, %v2460
      %2462 = vmatmul.bf16.gmra.mxu0 %v2406
      %v2463 = vpop.f32.mrf.mxu0
      %v2464 = vadd.f32 0.0, %v2463
      %v2465 = vpop.f32.mrf.mxu0
      %v2466 = vadd.f32 0.0, %v2465
      %2467 = vmatmul.bf16.gmra.mxu0 %v2409
      %v2468 = vpop.f32.mrf.mxu0
      %v2469 = vadd.f32 0.0, %v2468
      %v2470 = vpop.f32.mrf.mxu0
      %v2471 = vadd.f32 0.0, %v2470
      %2472 = vmatmul.bf16.gmra.mxu0 %v2412
      %v2473 = vpop.f32.mrf.mxu0
      %v2474 = vadd.f32 0.0, %v2473
      %v2475 = vpop.f32.mrf.mxu0
      %v2476 = vadd.f32 0.0, %v2475
      %2477 = vdwg.mxu0
      %v2478 = vadd.f32 %v2334, %v2430
      %v2479 = vadd.f32 %v2363, %v2459
      %v2480 = vadd.f32 %v2336, %v2432
      %v2481 = vadd.f32 %v2365, %v2461
      %v2482 = vadd.f32 %v2339, %v2435
      %v2483 = vadd.f32 %v2368, %v2464
      %v2484 = vadd.f32 %v2341, %v2437
      %v2485 = vadd.f32 %v2370, %v2466
      %v2486 = vadd.f32 %v2344, %v2440
      %v2487 = vadd.f32 %v2373, %v2469
      %v2488 = vadd.f32 %v2346, %v2442
      %v2489 = vadd.f32 %v2375, %v2471
      %v2490 = vadd.f32 %v2349, %v2445
      %v2491 = vadd.f32 %v2378, %v2474
      %v2492 = vadd.f32 %v2351, %v2447
      %v2493 = vadd.f32 %v2380, %v2476
      %v2494 = vld [vmem:[%s2183] sm:$0xff]
      %v2495 = vld [vmem:[%s2183 + $0x8] sm:$0xff]
      %v2496 = vld [vmem:[%s2183 + $0x10] sm:$0xff]
      %v2497 = vld [vmem:[%s2183 + $0x18] sm:$0xff]
      %v2498 = vld [vmem:[%s2183 + $0x20] sm:$0xff]
      %v2499 = vld [vmem:[%s2183 + $0x28] sm:$0xff]
      %v2500 = vld [vmem:[%s2183 + $0x30] sm:$0xff]
      %v2501 = vld [vmem:[%s2183 + $0x38] sm:$0xff]
      %v2502 = vpack.c.bf16 %v2495, %v2494
      %v2503 = vpack.c.bf16 %v2497, %v2496
      %v2504 = vpack.c.bf16 %v2499, %v2498
      %v2505 = vpack.c.bf16 %v2501, %v2500
      %s2506 = scalar_lea.vmem %s21, 24
      %v2507 = vld [vmem:[%s2506] sm:$0xff]
      %v2509 = vunpack.c.l.b16 %v2507
      %v2510 = vunpack.c.h.b16 %v2507
      %v2511 = vpack.c.b16 %v2509, %v2509
      %v2512 = vpack.c.b16 %v2510, %v2510
      %v2514 = vsel %vm1658, %v2502, 0
      %v2517 = vsel %vm1658, %v2503, 0
      %v2520 = vsel %vm1658, %v2504, 0
      %v2523 = vsel %vm1658, %v2505, 0
      %v2526 = vsel %vm1730, %v2511, 0
      %v2529 = vsel %vm1730, %v2512, 0
      %2531 = vmatpush.bf16.msra.mxu0 0
      %2532 = vmatpush.bf16.msra.mxu0 0
      %2533 = vmatpush.bf16.msra.mxu0 0
      %2534 = vmatpush.bf16.msra.mxu0 0
      %2535 = vmatpush.bf16.msra.mxu0 0
      %2536 = vmatpush.bf16.msra.mxu0 0
      %2537 = vmatpush.bf16.msra.mxu0 0
      %2538 = vmatpush.bf16.msra.mxu0 %v2526
      %2539 = vmatmul.bf16.gmra.mxu0 %v2514
      %v2540 = vpop.f32.mrf.mxu0
      %v2541 = vadd.f32 0.0, %v2540
      %v2542 = vpop.f32.mrf.mxu0
      %v2543 = vadd.f32 0.0, %v2542
      %2544 = vmatmul.bf16.gmra.mxu0 %v2517
      %v2545 = vpop.f32.mrf.mxu0
      %v2546 = vadd.f32 0.0, %v2545
      %v2547 = vpop.f32.mrf.mxu0
      %v2548 = vadd.f32 0.0, %v2547
      %2549 = vmatmul.bf16.gmra.mxu0 %v2520
      %v2550 = vpop.f32.mrf.mxu0
      %v2551 = vadd.f32 0.0, %v2550
      %v2552 = vpop.f32.mrf.mxu0
      %v2553 = vadd.f32 0.0, %v2552
      %2554 = vmatmul.bf16.gmra.mxu0 %v2523
      %v2555 = vpop.f32.mrf.mxu0
      %v2556 = vadd.f32 0.0, %v2555
      %v2557 = vpop.f32.mrf.mxu0
      %v2558 = vadd.f32 0.0, %v2557
      %2559 = vdwg.mxu0
      %2560 = vmatpush.bf16.msra.mxu0 0
      %2561 = vmatpush.bf16.msra.mxu0 0
      %2562 = vmatpush.bf16.msra.mxu0 0
      %2563 = vmatpush.bf16.msra.mxu0 0
      %2564 = vmatpush.bf16.msra.mxu0 0
      %2565 = vmatpush.bf16.msra.mxu0 0
      %2566 = vmatpush.bf16.msra.mxu0 0
      %2567 = vmatpush.bf16.msra.mxu0 %v2529
      %2568 = vmatmul.bf16.gmra.mxu0 %v2514
      %v2569 = vpop.f32.mrf.mxu0
      %v2570 = vadd.f32 0.0, %v2569
      %v2571 = vpop.f32.mrf.mxu0
      %v2572 = vadd.f32 0.0, %v2571
      %2573 = vmatmul.bf16.gmra.mxu0 %v2517
      %v2574 = vpop.f32.mrf.mxu0
      %v2575 = vadd.f32 0.0, %v2574
      %v2576 = vpop.f32.mrf.mxu0
      %v2577 = vadd.f32 0.0, %v2576
      %2578 = vmatmul.bf16.gmra.mxu0 %v2520
      %v2579 = vpop.f32.mrf.mxu0
      %v2580 = vadd.f32 0.0, %v2579
      %v2581 = vpop.f32.mrf.mxu0
      %v2582 = vadd.f32 0.0, %v2581
      %2583 = vmatmul.bf16.gmra.mxu0 %v2523
      %v2584 = vpop.f32.mrf.mxu0
      %v2585 = vadd.f32 0.0, %v2584
      %v2586 = vpop.f32.mrf.mxu0
      %v2587 = vadd.f32 0.0, %v2586
      %2588 = vdwg.mxu0
      %v2589 = vadd.f32 %v2478, %v2541
      %v2590 = vadd.f32 %v2479, %v2570
      %v2591 = vadd.f32 %v2480, %v2543
      %v2592 = vadd.f32 %v2481, %v2572
      %v2593 = vadd.f32 %v2482, %v2546
      %v2594 = vadd.f32 %v2483, %v2575
      %v2595 = vadd.f32 %v2484, %v2548
      %v2596 = vadd.f32 %v2485, %v2577
      %v2597 = vadd.f32 %v2486, %v2551
      %v2598 = vadd.f32 %v2487, %v2580
      %v2599 = vadd.f32 %v2488, %v2553
      %v2600 = vadd.f32 %v2489, %v2582
      %v2601 = vadd.f32 %v2490, %v2556
      %v2602 = vadd.f32 %v2491, %v2585
      %v2603 = vadd.f32 %v2492, %v2558
      %v2604 = vadd.f32 %v2493, %v2587
      %s2605 = scalar_lea.vmem [#allocation3], 32
      %v2606 = vld [vmem:[%s2605] sm:$0xff]
      %v2607 = vld [vmem:[%s2605 + $0x8] sm:$0xff]
      %v2608 = vld [vmem:[%s2605 + $0x10] sm:$0xff]
      %v2609 = vld [vmem:[%s2605 + $0x18] sm:$0xff]
      %v2610 = vld [vmem:[%s2605 + $0x20] sm:$0xff]
      %v2611 = vld [vmem:[%s2605 + $0x28] sm:$0xff]
      %v2612 = vld [vmem:[%s2605 + $0x30] sm:$0xff]
      %v2613 = vld [vmem:[%s2605 + $0x38] sm:$0xff]
      %v2614 = vpack.c.bf16 %v2607, %v2606
      %v2615 = vpack.c.bf16 %v2609, %v2608
      %v2616 = vpack.c.bf16 %v2611, %v2610
      %v2617 = vpack.c.bf16 %v2613, %v2612
      %s2618 = scalar_lea.vmem %s21, 32
      %v2619 = vld [vmem:[%s2618] sm:$0xff]
      %v2621 = vunpack.c.l.b16 %v2619
      %v2622 = vunpack.c.h.b16 %v2619
      %v2623 = vpack.c.b16 %v2621, %v2621
      %v2624 = vpack.c.b16 %v2622, %v2622
      %v2626 = vsel %vm1658, %v2614, 0
      %v2629 = vsel %vm1658, %v2615, 0
      %v2632 = vsel %vm1658, %v2616, 0
      %v2635 = vsel %vm1658, %v2617, 0
      %v2638 = vsel %vm1730, %v2623, 0
      %v2641 = vsel %vm1730, %v2624, 0
      %2643 = vmatpush.bf16.msra.mxu0 0
      %2644 = vmatpush.bf16.msra.mxu0 0
      %2645 = vmatpush.bf16.msra.mxu0 0
      %2646 = vmatpush.bf16.msra.mxu0 0
      %2647 = vmatpush.bf16.msra.mxu0 0
      %2648 = vmatpush.bf16.msra.mxu0 0
      %2649 = vmatpush.bf16.msra.mxu0 0
      %2650 = vmatpush.bf16.msra.mxu0 %v2638
      %2651 = vmatmul.bf16.gmra.mxu0 %v2626
      %v2652 = vpop.f32.mrf.mxu0
      %v2653 = vadd.f32 0.0, %v2652
      %v2654 = vpop.f32.mrf.mxu0
      %v2655 = vadd.f32 0.0, %v2654
      %2656 = vmatmul.bf16.gmra.mxu0 %v2629
      %v2657 = vpop.f32.mrf.mxu0
      %v2658 = vadd.f32 0.0, %v2657
      %v2659 = vpop.f32.mrf.mxu0
      %v2660 = vadd.f32 0.0, %v2659
      %2661 = vmatmul.bf16.gmra.mxu0 %v2632
      %v2662 = vpop.f32.mrf.mxu0
      %v2663 = vadd.f32 0.0, %v2662
      %v2664 = vpop.f32.mrf.mxu0
      %v2665 = vadd.f32 0.0, %v2664
      %2666 = vmatmul.bf16.gmra.mxu0 %v2635
      %v2667 = vpop.f32.mrf.mxu0
      %v2668 = vadd.f32 0.0, %v2667
      %v2669 = vpop.f32.mrf.mxu0
      %v2670 = vadd.f32 0.0, %v2669
      %2671 = vdwg.mxu0
      %2672 = vmatpush.bf16.msra.mxu0 0
      %2673 = vmatpush.bf16.msra.mxu0 0
      %2674 = vmatpush.bf16.msra.mxu0 0
      %2675 = vmatpush.bf16.msra.mxu0 0
      %2676 = vmatpush.bf16.msra.mxu0 0
      %2677 = vmatpush.bf16.msra.mxu0 0
      %2678 = vmatpush.bf16.msra.mxu0 0
      %2679 = vmatpush.bf16.msra.mxu0 %v2641
      %2680 = vmatmul.bf16.gmra.mxu0 %v2626
      %v2681 = vpop.f32.mrf.mxu0
      %v2682 = vadd.f32 0.0, %v2681
      %v2683 = vpop.f32.mrf.mxu0
      %v2684 = vadd.f32 0.0, %v2683
      %2685 = vmatmul.bf16.gmra.mxu0 %v2629
      %v2686 = vpop.f32.mrf.mxu0
      %v2687 = vadd.f32 0.0, %v2686
      %v2688 = vpop.f32.mrf.mxu0
      %v2689 = vadd.f32 0.0, %v2688
      %2690 = vmatmul.bf16.gmra.mxu0 %v2632
      %v2691 = vpop.f32.mrf.mxu0
      %v2692 = vadd.f32 0.0, %v2691
      %v2693 = vpop.f32.mrf.mxu0
      %v2694 = vadd.f32 0.0, %v2693
      %2695 = vmatmul.bf16.gmra.mxu0 %v2635
      %v2696 = vpop.f32.mrf.mxu0
      %v2697 = vadd.f32 0.0, %v2696
      %v2698 = vpop.f32.mrf.mxu0
      %v2699 = vadd.f32 0.0, %v2698
      %2700 = vdwg.mxu0
      %v2701 = vadd.f32 %v2589, %v2653
      %v2702 = vadd.f32 %v2590, %v2682
      %v2703 = vadd.f32 %v2591, %v2655
      %v2704 = vadd.f32 %v2592, %v2684
      %v2705 = vadd.f32 %v2593, %v2658
      %v2706 = vadd.f32 %v2594, %v2687
      %v2707 = vadd.f32 %v2595, %v2660
      %v2708 = vadd.f32 %v2596, %v2689
      %v2709 = vadd.f32 %v2597, %v2663
      %v2710 = vadd.f32 %v2598, %v2692
      %v2711 = vadd.f32 %v2599, %v2665
      %v2712 = vadd.f32 %v2600, %v2694
      %v2713 = vadd.f32 %v2601, %v2668
      %v2714 = vadd.f32 %v2602, %v2697
      %v2715 = vadd.f32 %v2603, %v2670
      %v2716 = vadd.f32 %v2604, %v2699
      %s2717 = scalar_lea.vmem [#allocation3], 40
      %v2718 = vld [vmem:[%s2717] sm:$0xff]
      %v2719 = vld [vmem:[%s2717 + $0x8] sm:$0xff]
      %v2720 = vld [vmem:[%s2717 + $0x10] sm:$0xff]
      %v2721 = vld [vmem:[%s2717 + $0x18] sm:$0xff]
      %v2722 = vld [vmem:[%s2717 + $0x20] sm:$0xff]
      %v2723 = vld [vmem:[%s2717 + $0x28] sm:$0xff]
      %v2724 = vld [vmem:[%s2717 + $0x30] sm:$0xff]
      %v2725 = vld [vmem:[%s2717 + $0x38] sm:$0xff]
      %v2726 = vpack.c.bf16 %v2719, %v2718
      %v2727 = vpack.c.bf16 %v2721, %v2720
      %v2728 = vpack.c.bf16 %v2723, %v2722
      %v2729 = vpack.c.bf16 %v2725, %v2724
      %s2730 = scalar_lea.vmem %s21, 40
      %v2731 = vld [vmem:[%s2730] sm:$0xff]
      %v2733 = vunpack.c.l.b16 %v2731
      %v2734 = vunpack.c.h.b16 %v2731
      %v2735 = vpack.c.b16 %v2733, %v2733
      %v2736 = vpack.c.b16 %v2734, %v2734
      %v2738 = vsel %vm1658, %v2726, 0
      %v2741 = vsel %vm1658, %v2727, 0
      %v2744 = vsel %vm1658, %v2728, 0
      %v2747 = vsel %vm1658, %v2729, 0
      %v2750 = vsel %vm1730, %v2735, 0
      %v2753 = vsel %vm1730, %v2736, 0
      %2755 = vmatpush.bf16.msra.mxu0 0
      %2756 = vmatpush.bf16.msra.mxu0 0
      %2757 = vmatpush.bf16.msra.mxu0 0
      %2758 = vmatpush.bf16.msra.mxu0 0
      %2759 = vmatpush.bf16.msra.mxu0 0
      %2760 = vmatpush.bf16.msra.mxu0 0
      %2761 = vmatpush.bf16.msra.mxu0 0
      %2762 = vmatpush.bf16.msra.mxu0 %v2750
      %2763 = vmatmul.bf16.gmra.mxu0 %v2738
      %v2764 = vpop.f32.mrf.mxu0
      %v2765 = vadd.f32 0.0, %v2764
      %v2766 = vpop.f32.mrf.mxu0
      %v2767 = vadd.f32 0.0, %v2766
      %2768 = vmatmul.bf16.gmra.mxu0 %v2741
      %v2769 = vpop.f32.mrf.mxu0
      %v2770 = vadd.f32 0.0, %v2769
      %v2771 = vpop.f32.mrf.mxu0
      %v2772 = vadd.f32 0.0, %v2771
      %2773 = vmatmul.bf16.gmra.mxu0 %v2744
      %v2774 = vpop.f32.mrf.mxu0
      %v2775 = vadd.f32 0.0, %v2774
      %v2776 = vpop.f32.mrf.mxu0
      %v2777 = vadd.f32 0.0, %v2776
      %2778 = vmatmul.bf16.gmra.mxu0 %v2747
      %v2779 = vpop.f32.mrf.mxu0
      %v2780 = vadd.f32 0.0, %v2779
      %v2781 = vpop.f32.mrf.mxu0
      %v2782 = vadd.f32 0.0, %v2781
      %2783 = vdwg.mxu0
      %2784 = vmatpush.bf16.msra.mxu0 0
      %2785 = vmatpush.bf16.msra.mxu0 0
      %2786 = vmatpush.bf16.msra.mxu0 0
      %2787 = vmatpush.bf16.msra.mxu0 0
      %2788 = vmatpush.bf16.msra.mxu0 0
      %2789 = vmatpush.bf16.msra.mxu0 0
      %2790 = vmatpush.bf16.msra.mxu0 0
      %2791 = vmatpush.bf16.msra.mxu0 %v2753
      %2792 = vmatmul.bf16.gmra.mxu0 %v2738
      %v2793 = vpop.f32.mrf.mxu0
      %v2794 = vadd.f32 0.0, %v2793
      %v2795 = vpop.f32.mrf.mxu0
      %v2796 = vadd.f32 0.0, %v2795
      %2797 = vmatmul.bf16.gmra.mxu0 %v2741
      %v2798 = vpop.f32.mrf.mxu0
      %v2799 = vadd.f32 0.0, %v2798
      %v2800 = vpop.f32.mrf.mxu0
      %v2801 = vadd.f32 0.0, %v2800
      %2802 = vmatmul.bf16.gmra.mxu0 %v2744
      %v2803 = vpop.f32.mrf.mxu0
      %v2804 = vadd.f32 0.0, %v2803
      %v2805 = vpop.f32.mrf.mxu0
      %v2806 = vadd.f32 0.0, %v2805
      %2807 = vmatmul.bf16.gmra.mxu0 %v2747
      %v2808 = vpop.f32.mrf.mxu0
      %v2809 = vadd.f32 0.0, %v2808
      %v2810 = vpop.f32.mrf.mxu0
      %v2811 = vadd.f32 0.0, %v2810
      %2812 = vdwg.mxu0
      %v2813 = vadd.f32 %v2701, %v2765
      %v2814 = vadd.f32 %v2702, %v2794
      %v2815 = vadd.f32 %v2703, %v2767
      %v2816 = vadd.f32 %v2704, %v2796
      %v2817 = vadd.f32 %v2705, %v2770
      %v2818 = vadd.f32 %v2706, %v2799
      %v2819 = vadd.f32 %v2707, %v2772
      %v2820 = vadd.f32 %v2708, %v2801
      %v2821 = vadd.f32 %v2709, %v2775
      %v2822 = vadd.f32 %v2710, %v2804
      %v2823 = vadd.f32 %v2711, %v2777
      %v2824 = vadd.f32 %v2712, %v2806
      %v2825 = vadd.f32 %v2713, %v2780
      %v2826 = vadd.f32 %v2714, %v2809
      %v2827 = vadd.f32 %v2715, %v2782
      %v2828 = vadd.f32 %v2716, %v2811
      %s2829 = scalar_lea.vmem [#allocation3], 48
      %v2830 = vld [vmem:[%s2829] sm:$0xff]
      %v2831 = vld [vmem:[%s2829 + $0x8] sm:$0xff]
      %v2832 = vld [vmem:[%s2829 + $0x10] sm:$0xff]
      %v2833 = vld [vmem:[%s2829 + $0x18] sm:$0xff]
      %v2834 = vld [vmem:[%s2829 + $0x20] sm:$0xff]
      %v2835 = vld [vmem:[%s2829 + $0x28] sm:$0xff]
      %v2836 = vld [vmem:[%s2829 + $0x30] sm:$0xff]
      %v2837 = vld [vmem:[%s2829 + $0x38] sm:$0xff]
      %v2838 = vpack.c.bf16 %v2831, %v2830
      %v2839 = vpack.c.bf16 %v2833, %v2832
      %v2840 = vpack.c.bf16 %v2835, %v2834
      %v2841 = vpack.c.bf16 %v2837, %v2836
      %s2842 = scalar_lea.vmem %s21, 48
      %v2843 = vld [vmem:[%s2842] sm:$0xff]
      %v2845 = vunpack.c.l.b16 %v2843
      %v2846 = vunpack.c.h.b16 %v2843
      %v2847 = vpack.c.b16 %v2845, %v2845
      %v2848 = vpack.c.b16 %v2846, %v2846
      %v2850 = vsel %vm1658, %v2838, 0
      %v2853 = vsel %vm1658, %v2839, 0
      %v2856 = vsel %vm1658, %v2840, 0
      %v2859 = vsel %vm1658, %v2841, 0
      %v2862 = vsel %vm1730, %v2847, 0
      %v2865 = vsel %vm1730, %v2848, 0
      %2867 = vmatpush.bf16.msra.mxu0 0
      %2868 = vmatpush.bf16.msra.mxu0 0
      %2869 = vmatpush.bf16.msra.mxu0 0
      %2870 = vmatpush.bf16.msra.mxu0 0
      %2871 = vmatpush.bf16.msra.mxu0 0
      %2872 = vmatpush.bf16.msra.mxu0 0
      %2873 = vmatpush.bf16.msra.mxu0 0
      %2874 = vmatpush.bf16.msra.mxu0 %v2862
      %2875 = vmatmul.bf16.gmra.mxu0 %v2850
      %v2876 = vpop.f32.mrf.mxu0
      %v2877 = vadd.f32 0.0, %v2876
      %v2878 = vpop.f32.mrf.mxu0
      %v2879 = vadd.f32 0.0, %v2878
      %2880 = vmatmul.bf16.gmra.mxu0 %v2853
      %v2881 = vpop.f32.mrf.mxu0
      %v2882 = vadd.f32 0.0, %v2881
      %v2883 = vpop.f32.mrf.mxu0
      %v2884 = vadd.f32 0.0, %v2883
      %2885 = vmatmul.bf16.gmra.mxu0 %v2856
      %v2886 = vpop.f32.mrf.mxu0
      %v2887 = vadd.f32 0.0, %v2886
      %v2888 = vpop.f32.mrf.mxu0
      %v2889 = vadd.f32 0.0, %v2888
      %2890 = vmatmul.bf16.gmra.mxu0 %v2859
      %v2891 = vpop.f32.mrf.mxu0
      %v2892 = vadd.f32 0.0, %v2891
      %v2893 = vpop.f32.mrf.mxu0
      %v2894 = vadd.f32 0.0, %v2893
      %2895 = vdwg.mxu0
      %2896 = vmatpush.bf16.msra.mxu0 0
      %2897 = vmatpush.bf16.msra.mxu0 0
      %2898 = vmatpush.bf16.msra.mxu0 0
      %2899 = vmatpush.bf16.msra.mxu0 0
      %2900 = vmatpush.bf16.msra.mxu0 0
      %2901 = vmatpush.bf16.msra.mxu0 0
      %2902 = vmatpush.bf16.msra.mxu0 0
      %2903 = vmatpush.bf16.msra.mxu0 %v2865
      %2904 = vmatmul.bf16.gmra.mxu0 %v2850
      %v2905 = vpop.f32.mrf.mxu0
      %v2906 = vadd.f32 0.0, %v2905
      %v2907 = vpop.f32.mrf.mxu0
      %v2908 = vadd.f32 0.0, %v2907
      %2909 = vmatmul.bf16.gmra.mxu0 %v2853
      %v2910 = vpop.f32.mrf.mxu0
      %v2911 = vadd.f32 0.0, %v2910
      %v2912 = vpop.f32.mrf.mxu0
      %v2913 = vadd.f32 0.0, %v2912
      %2914 = vmatmul.bf16.gmra.mxu0 %v2856
      %v2915 = vpop.f32.mrf.mxu0
      %v2916 = vadd.f32 0.0, %v2915
      %v2917 = vpop.f32.mrf.mxu0
      %v2918 = vadd.f32 0.0, %v2917
      %2919 = vmatmul.bf16.gmra.mxu0 %v2859
      %v2920 = vpop.f32.mrf.mxu0
      %v2921 = vadd.f32 0.0, %v2920
      %v2922 = vpop.f32.mrf.mxu0
      %v2923 = vadd.f32 0.0, %v2922
      %2924 = vdwg.mxu0
      %v2925 = vadd.f32 %v2813, %v2877
      %v2926 = vadd.f32 %v2814, %v2906
      %v2927 = vadd.f32 %v2815, %v2879
      %v2928 = vadd.f32 %v2816, %v2908
      %v2929 = vadd.f32 %v2817, %v2882
      %v2930 = vadd.f32 %v2818, %v2911
      %v2931 = vadd.f32 %v2819, %v2884
      %v2932 = vadd.f32 %v2820, %v2913
      %v2933 = vadd.f32 %v2821, %v2887
      %v2934 = vadd.f32 %v2822, %v2916
      %v2935 = vadd.f32 %v2823, %v2889
      %v2936 = vadd.f32 %v2824, %v2918
      %v2937 = vadd.f32 %v2825, %v2892
      %v2938 = vadd.f32 %v2826, %v2921
      %v2939 = vadd.f32 %v2827, %v2894
      %v2940 = vadd.f32 %v2828, %v2923
      %v2941 = vld [vmem:[%s23] sm:$0x3]
      %v2943 = vperm.slane %v2941, 0
      %v2944 = vperm.slane %v2941, 1
      %v2947 = vmul.f32 %v2925, %v2943
      %v2948 = vmul.f32 %v2926, %v2944
      %v2949 = vmul.f32 %v2927, %v2943
      %v2950 = vmul.f32 %v2928, %v2944
      %v2951 = vmul.f32 %v2929, %v2943
      %v2952 = vmul.f32 %v2930, %v2944
      %v2953 = vmul.f32 %v2931, %v2943
      %v2954 = vmul.f32 %v2932, %v2944
      %v2955 = vmul.f32 %v2933, %v2943
      %v2956 = vmul.f32 %v2934, %v2944
      %v2957 = vmul.f32 %v2935, %v2943
      %v2958 = vmul.f32 %v2936, %v2944
      %v2959 = vmul.f32 %v2937, %v2943
      %v2960 = vmul.f32 %v2938, %v2944
      %v2961 = vmul.f32 %v2939, %v2943
      %v2962 = vmul.f32 %v2940, %v2944
      %v2963 = vld [vmem:[%s25] sm:$0x3]
      %v2965 = vperm.slane %v2963, 0
      %v2966 = vperm.slane %v2963, 1
      %v2969 = vadd.f32 %v2947, %v2965
      %v2970 = vadd.f32 %v2948, %v2966
      %v2971 = vadd.f32 %v2949, %v2965
      %v2972 = vadd.f32 %v2950, %v2966
      %v2973 = vadd.f32 %v2951, %v2965
      %v2974 = vadd.f32 %v2952, %v2966
      %v2975 = vadd.f32 %v2953, %v2965
      %v2976 = vadd.f32 %v2954, %v2966
      %v2977 = vadd.f32 %v2955, %v2965
      %v2978 = vadd.f32 %v2956, %v2966
      %v2979 = vadd.f32 %v2957, %v2965
      %v2980 = vadd.f32 %v2958, %v2966
      %v2981 = vadd.f32 %v2959, %v2965
      %v2982 = vadd.f32 %v2960, %v2966
      %v2983 = vadd.f32 %v2961, %v2965
      %v2984 = vadd.f32 %v2962, %v2966
      %v2985 = vmax.f32 %v2969, 0.0
      %v2986 = vmax.f32 %v2970, 0.0
      %v2987 = vmax.f32 %v2971, 0.0
      %v2988 = vmax.f32 %v2972, 0.0
      %v2989 = vmax.f32 %v2973, 0.0
      %v2990 = vmax.f32 %v2974, 0.0
      %v2991 = vmax.f32 %v2975, 0.0
      %v2992 = vmax.f32 %v2976, 0.0
      %v2993 = vmax.f32 %v2977, 0.0
      %v2994 = vmax.f32 %v2978, 0.0
      %v2995 = vmax.f32 %v2979, 0.0
      %v2996 = vmax.f32 %v2980, 0.0
      %v2997 = vmax.f32 %v2981, 0.0
      %v2998 = vmax.f32 %v2982, 0.0
      %v2999 = vmax.f32 %v2983, 0.0
      %v3000 = vmax.f32 %v2984, 0.0
      %3001 = vst.msk [vmem:[#allocation3] sm:$0xff] %vm1658, 0.0
      %3002 = vst.msk [vmem:[#allocation3 + $0x8] sm:$0xff] %vm1658, 0.0
      %3003 = vst.msk [vmem:[#allocation3 + $0x10] sm:$0xff] %vm1658, 0.0
      %3004 = vst.msk [vmem:[#allocation3 + $0x18] sm:$0xff] %vm1658, 0.0
      %3005 = vst.msk [vmem:[#allocation3 + $0x20] sm:$0xff] %vm1658, 0.0
      %3006 = vst.msk [vmem:[#allocation3 + $0x28] sm:$0xff] %vm1658, 0.0
      %3007 = vst.msk [vmem:[#allocation3 + $0x30] sm:$0xff] %vm1658, 0.0
      %3008 = vst.msk [vmem:[#allocation3 + $0x38] sm:$0xff] %vm1658, 0.0
      %3009 = vst.msk [vmem:[#allocation3 + $0x40] sm:$0xff] %vm1658, 0.0
      %3010 = vst.msk [vmem:[#allocation3 + $0x48] sm:$0xff] %vm1658, 0.0
      %3011 = vst.msk [vmem:[#allocation3 + $0x50] sm:$0xff] %vm1658, 0.0
      %3012 = vst.msk [vmem:[#allocation3 + $0x58] sm:$0xff] %vm1658, 0.0
      %3013 = vst.msk [vmem:[#allocation3 + $0x60] sm:$0xff] %vm1658, 0.0
      %3014 = vst.msk [vmem:[#allocation3 + $0x68] sm:$0xff] %vm1658, 0.0
      %3015 = vst.msk [vmem:[%s2183] sm:$0xff] %vm1658, %v1367
      %3016 = vst.msk [vmem:[%s2183 + $0x8] sm:$0xff] %vm1658, %v1368
      %3017 = vst.msk [vmem:[%s2183 + $0x10] sm:$0xff] %vm1658, %v1369
      %3018 = vst.msk [vmem:[%s2183 + $0x18] sm:$0xff] %vm1658, %v1370
      %3019 = vst.msk [vmem:[%s2183 + $0x20] sm:$0xff] %vm1658, %v1371
      %3020 = vst.msk [vmem:[%s2183 + $0x28] sm:$0xff] %vm1658, %v1372
      %3021 = vst.msk [vmem:[%s2183 + $0x30] sm:$0xff] %vm1658, %v1373
      %3022 = vst.msk [vmem:[%s2183 + $0x38] sm:$0xff] %vm1658, %v1374
      %v3023 = vld [vmem:[#allocation3] sm:$0xff]
      %v3024 = vld [vmem:[#allocation3 + $0x8] sm:$0xff]
      %v3025 = vld [vmem:[#allocation3 + $0x10] sm:$0xff]
      %v3026 = vld [vmem:[#allocation3 + $0x18] sm:$0xff]
      %v3027 = vld [vmem:[#allocation3 + $0x20] sm:$0xff]
      %v3028 = vld [vmem:[#allocation3 + $0x28] sm:$0xff]
      %v3029 = vld [vmem:[#allocation3 + $0x30] sm:$0xff]
      %v3030 = vld [vmem:[#allocation3 + $0x38] sm:$0xff]
      %v3031 = vpack.c.bf16 %v3024, %v3023
      %v3032 = vpack.c.bf16 %v3026, %v3025
      %v3033 = vpack.c.bf16 %v3028, %v3027
      %v3034 = vpack.c.bf16 %v3030, %v3029
      %v3035 = vld [vmem:[%s33] sm:$0xf]
      %v3036 = vld [vmem:[%s2205] sm:$0xff]
      %v3037 = vld [vmem:[%s2205 + $0x8] sm:$0xff]
      %v3038 = vld [vmem:[%s2205 + $0x10] sm:$0xff]
      %v3039 = vld [vmem:[%s2205 + $0x18] sm:$0xff]
      %v3040 = vld [vmem:[%s2205 + $0x20] sm:$0xff]
      %v3041 = vld [vmem:[%s2205 + $0x28] sm:$0xff]
      %v3042 = vld [vmem:[%s2205 + $0x30] sm:$0xff]
      %v3043 = vld [vmem:[%s2205 + $0x38] sm:$0xff]
      %v3044 = vpack.c.bf16 %v3037, %v3036
      %v3045 = vpack.c.bf16 %v3039, %v3038
      %v3046 = vpack.c.bf16 %v3041, %v3040
      %v3047 = vpack.c.bf16 %v3043, %v3042
      %s3048 = scalar_lea.vmem %s33, 4
      %v3049 = vld [vmem:[%s3048] sm:$0xf]
      %v3051 = vsel %vm1658, %v3044, 0
      %v3054 = vsel %vm1658, %v3045, 0
      %v3057 = vsel %vm1658, %v3046, 0
      %v3060 = vsel %vm1658, %v3047, 0
      %v3063 = vsel %vm1730, %v3049, 0
      %3065 = vmatpush.bf16.msra.mxu0 0
      %3066 = vmatpush.bf16.msra.mxu0 0
      %3067 = vmatpush.bf16.msra.mxu0 0
      %3068 = vmatpush.bf16.msra.mxu0 0
      %3069 = vmatpush.bf16.msra.mxu0 0
      %3070 = vmatpush.bf16.msra.mxu0 0
      %3071 = vmatpush.bf16.msra.mxu0 0
      %3072 = vmatpush.bf16.msra.mxu0 %v3063
      %3073 = vmatmul.bf16.gmra.mxu0 %v3051
      %v3074 = vpop.f32.mrf.mxu0
      %v3075 = vadd.f32 0.0, %v3074
      %v3076 = vpop.f32.mrf.mxu0
      %v3077 = vadd.f32 0.0, %v3076
      %3078 = vmatmul.bf16.gmra.mxu0 %v3054
      %v3079 = vpop.f32.mrf.mxu0
      %v3080 = vadd.f32 0.0, %v3079
      %v3081 = vpop.f32.mrf.mxu0
      %v3082 = vadd.f32 0.0, %v3081
      %3083 = vmatmul.bf16.gmra.mxu0 %v3057
      %v3084 = vpop.f32.mrf.mxu0
      %v3085 = vadd.f32 0.0, %v3084
      %v3086 = vpop.f32.mrf.mxu0
      %v3087 = vadd.f32 0.0, %v3086
      %3088 = vmatmul.bf16.gmra.mxu0 %v3060
      %v3089 = vpop.f32.mrf.mxu0
      %v3090 = vadd.f32 0.0, %v3089
      %v3091 = vpop.f32.mrf.mxu0
      %v3092 = vadd.f32 0.0, %v3091
      %3093 = vdwg.mxu0
      %v3095 = vsel %vm1658, %v3031, 0
      %v3098 = vsel %vm1658, %v3032, 0
      %v3101 = vsel %vm1658, %v3033, 0
      %v3104 = vsel %vm1658, %v3034, 0
      %v3107 = vsel %vm1730, %v3035, 0
      %3109 = vmatpush.bf16.msra.mxu0 0
      %3110 = vmatpush.bf16.msra.mxu0 0
      %3111 = vmatpush.bf16.msra.mxu0 0
      %3112 = vmatpush.bf16.msra.mxu0 0
      %3113 = vmatpush.bf16.msra.mxu0 0
      %3114 = vmatpush.bf16.msra.mxu0 0
      %3115 = vmatpush.bf16.msra.mxu0 0
      %3116 = vmatpush.bf16.msra.mxu0 %v3107
      %3117 = vmatmul.bf16.gmra.mxu0 %v3095
      %v3118 = vpop.f32.mrf.mxu0
      %v3119 = vadd.f32 %v3075, %v3118
      %v3120 = vpop.f32.mrf.mxu0
      %v3121 = vadd.f32 %v3077, %v3120
      %3122 = vmatmul.bf16.gmra.mxu0 %v3098
      %v3123 = vpop.f32.mrf.mxu0
      %v3124 = vadd.f32 %v3080, %v3123
      %v3125 = vpop.f32.mrf.mxu0
      %v3126 = vadd.f32 %v3082, %v3125
      %3127 = vmatmul.bf16.gmra.mxu0 %v3101
      %v3128 = vpop.f32.mrf.mxu0
      %v3129 = vadd.f32 %v3085, %v3128
      %v3130 = vpop.f32.mrf.mxu0
      %v3131 = vadd.f32 %v3087, %v3130
      %3132 = vmatmul.bf16.gmra.mxu0 %v3104
      %v3133 = vpop.f32.mrf.mxu0
      %v3134 = vadd.f32 %v3090, %v3133
      %v3135 = vpop.f32.mrf.mxu0
      %v3136 = vadd.f32 %v3092, %v3135
      %3137 = vdwg.mxu0
      %v3138 = vld [vmem:[%s2382] sm:$0xff]
      %v3139 = vld [vmem:[%s2382 + $0x8] sm:$0xff]
      %v3140 = vld [vmem:[%s2382 + $0x10] sm:$0xff]
      %v3141 = vld [vmem:[%s2382 + $0x18] sm:$0xff]
      %v3142 = vld [vmem:[%s2382 + $0x20] sm:$0xff]
      %v3143 = vld [vmem:[%s2382 + $0x28] sm:$0xff]
      %v3144 = vld [vmem:[%s2382 + $0x30] sm:$0xff]
      %v3145 = vld [vmem:[%s2382 + $0x38] sm:$0xff]
      %v3146 = vpack.c.bf16 %v3139, %v3138
      %v3147 = vpack.c.bf16 %v3141, %v3140
      %v3148 = vpack.c.bf16 %v3143, %v3142
      %v3149 = vpack.c.bf16 %v3145, %v3144
      %s3150 = scalar_lea.vmem %s33, 8
      %v3151 = vld [vmem:[%s3150] sm:$0xf]
      %v3153 = vsel %vm1658, %v3146, 0
      %v3156 = vsel %vm1658, %v3147, 0
      %v3159 = vsel %vm1658, %v3148, 0
      %v3162 = vsel %vm1658, %v3149, 0
      %v3165 = vsel %vm1730, %v3151, 0
      %3167 = vmatpush.bf16.msra.mxu0 0
      %3168 = vmatpush.bf16.msra.mxu0 0
      %3169 = vmatpush.bf16.msra.mxu0 0
      %3170 = vmatpush.bf16.msra.mxu0 0
      %3171 = vmatpush.bf16.msra.mxu0 0
      %3172 = vmatpush.bf16.msra.mxu0 0
      %3173 = vmatpush.bf16.msra.mxu0 0
      %3174 = vmatpush.bf16.msra.mxu0 %v3165
      %3175 = vmatmul.bf16.gmra.mxu0 %v3153
      %v3176 = vpop.f32.mrf.mxu0
      %v3177 = vadd.f32 0.0, %v3176
      %v3178 = vpop.f32.mrf.mxu0
      %v3179 = vadd.f32 0.0, %v3178
      %3180 = vmatmul.bf16.gmra.mxu0 %v3156
      %v3181 = vpop.f32.mrf.mxu0
      %v3182 = vadd.f32 0.0, %v3181
      %v3183 = vpop.f32.mrf.mxu0
      %v3184 = vadd.f32 0.0, %v3183
      %3185 = vmatmul.bf16.gmra.mxu0 %v3159
      %v3186 = vpop.f32.mrf.mxu0
      %v3187 = vadd.f32 0.0, %v3186
      %v3188 = vpop.f32.mrf.mxu0
      %v3189 = vadd.f32 0.0, %v3188
      %3190 = vmatmul.bf16.gmra.mxu0 %v3162
      %v3191 = vpop.f32.mrf.mxu0
      %v3192 = vadd.f32 0.0, %v3191
      %v3193 = vpop.f32.mrf.mxu0
      %v3194 = vadd.f32 0.0, %v3193
      %3195 = vdwg.mxu0
      %v3196 = vadd.f32 %v3119, %v3177
      %v3197 = vadd.f32 %v3121, %v3179
      %v3198 = vadd.f32 %v3124, %v3182
      %v3199 = vadd.f32 %v3126, %v3184
      %v3200 = vadd.f32 %v3129, %v3187
      %v3201 = vadd.f32 %v3131, %v3189
      %v3202 = vadd.f32 %v3134, %v3192
      %v3203 = vadd.f32 %v3136, %v3194
      %v3204 = vld [vmem:[%s2183] sm:$0xff]
      %v3205 = vld [vmem:[%s2183 + $0x8] sm:$0xff]
      %v3206 = vld [vmem:[%s2183 + $0x10] sm:$0xff]
      %v3207 = vld [vmem:[%s2183 + $0x18] sm:$0xff]
      %v3208 = vld [vmem:[%s2183 + $0x20] sm:$0xff]
      %v3209 = vld [vmem:[%s2183 + $0x28] sm:$0xff]
      %v3210 = vld [vmem:[%s2183 + $0x30] sm:$0xff]
      %v3211 = vld [vmem:[%s2183 + $0x38] sm:$0xff]
      %v3212 = vpack.c.bf16 %v3205, %v3204
      %v3213 = vpack.c.bf16 %v3207, %v3206
      %v3214 = vpack.c.bf16 %v3209, %v3208
      %v3215 = vpack.c.bf16 %v3211, %v3210
      %s3216 = scalar_lea.vmem %s33, 12
      %v3217 = vld [vmem:[%s3216] sm:$0xf]
      %v3219 = vsel %vm1658, %v3212, 0
      %v3222 = vsel %vm1658, %v3213, 0
      %v3225 = vsel %vm1658, %v3214, 0
      %v3228 = vsel %vm1658, %v3215, 0
      %v3231 = vsel %vm1730, %v3217, 0
      %3233 = vmatpush.bf16.msra.mxu0 0
      %3234 = vmatpush.bf16.msra.mxu0 0
      %3235 = vmatpush.bf16.msra.mxu0 0
      %3236 = vmatpush.bf16.msra.mxu0 0
      %3237 = vmatpush.bf16.msra.mxu0 0
      %3238 = vmatpush.bf16.msra.mxu0 0
      %3239 = vmatpush.bf16.msra.mxu0 0
      %3240 = vmatpush.bf16.msra.mxu0 %v3231
      %3241 = vmatmul.bf16.gmra.mxu0 %v3219
      %v3242 = vpop.f32.mrf.mxu0
      %v3243 = vadd.f32 0.0, %v3242
      %v3244 = vpop.f32.mrf.mxu0
      %v3245 = vadd.f32 0.0, %v3244
      %3246 = vmatmul.bf16.gmra.mxu0 %v3222
      %v3247 = vpop.f32.mrf.mxu0
      %v3248 = vadd.f32 0.0, %v3247
      %v3249 = vpop.f32.mrf.mxu0
      %v3250 = vadd.f32 0.0, %v3249
      %3251 = vmatmul.bf16.gmra.mxu0 %v3225
      %v3252 = vpop.f32.mrf.mxu0
      %v3253 = vadd.f32 0.0, %v3252
      %v3254 = vpop.f32.mrf.mxu0
      %v3255 = vadd.f32 0.0, %v3254
      %3256 = vmatmul.bf16.gmra.mxu0 %v3228
      %v3257 = vpop.f32.mrf.mxu0
      %v3258 = vadd.f32 0.0, %v3257
      %v3259 = vpop.f32.mrf.mxu0
      %v3260 = vadd.f32 0.0, %v3259
      %3261 = vdwg.mxu0
      %v3262 = vadd.f32 %v3196, %v3243
      %v3263 = vadd.f32 %v3197, %v3245
      %v3264 = vadd.f32 %v3198, %v3248
      %v3265 = vadd.f32 %v3199, %v3250
      %v3266 = vadd.f32 %v3200, %v3253
      %v3267 = vadd.f32 %v3201, %v3255
      %v3268 = vadd.f32 %v3202, %v3258
      %v3269 = vadd.f32 %v3203, %v3260
      %v3270 = vld [vmem:[%s2605] sm:$0xff]
      %v3271 = vld [vmem:[%s2605 + $0x8] sm:$0xff]
      %v3272 = vld [vmem:[%s2605 + $0x10] sm:$0xff]
      %v3273 = vld [vmem:[%s2605 + $0x18] sm:$0xff]
      %v3274 = vld [vmem:[%s2605 + $0x20] sm:$0xff]
      %v3275 = vld [vmem:[%s2605 + $0x28] sm:$0xff]
      %v3276 = vld [vmem:[%s2605 + $0x30] sm:$0xff]
      %v3277 = vld [vmem:[%s2605 + $0x38] sm:$0xff]
      %v3278 = vpack.c.bf16 %v3271, %v3270
      %v3279 = vpack.c.bf16 %v3273, %v3272
      %v3280 = vpack.c.bf16 %v3275, %v3274
      %v3281 = vpack.c.bf16 %v3277, %v3276
      %s3282 = scalar_lea.vmem %s33, 16
      %v3283 = vld [vmem:[%s3282] sm:$0xf]
      %v3285 = vsel %vm1658, %v3278, 0
      %v3288 = vsel %vm1658, %v3279, 0
      %v3291 = vsel %vm1658, %v3280, 0
      %v3294 = vsel %vm1658, %v3281, 0
      %v3297 = vsel %vm1730, %v3283, 0
      %3299 = vmatpush.bf16.msra.mxu0 0
      %3300 = vmatpush.bf16.msra.mxu0 0
      %3301 = vmatpush.bf16.msra.mxu0 0
      %3302 = vmatpush.bf16.msra.mxu0 0
      %3303 = vmatpush.bf16.msra.mxu0 0
      %3304 = vmatpush.bf16.msra.mxu0 0
      %3305 = vmatpush.bf16.msra.mxu0 0
      %3306 = vmatpush.bf16.msra.mxu0 %v3297
      %3307 = vmatmul.bf16.gmra.mxu0 %v3285
      %v3308 = vpop.f32.mrf.mxu0
      %v3309 = vadd.f32 0.0, %v3308
      %v3310 = vpop.f32.mrf.mxu0
      %v3311 = vadd.f32 0.0, %v3310
      %3312 = vmatmul.bf16.gmra.mxu0 %v3288
      %v3313 = vpop.f32.mrf.mxu0
      %v3314 = vadd.f32 0.0, %v3313
      %v3315 = vpop.f32.mrf.mxu0
      %v3316 = vadd.f32 0.0, %v3315
      %3317 = vmatmul.bf16.gmra.mxu0 %v3291
      %v3318 = vpop.f32.mrf.mxu0
      %v3319 = vadd.f32 0.0, %v3318
      %v3320 = vpop.f32.mrf.mxu0
      %v3321 = vadd.f32 0.0, %v3320
      %3322 = vmatmul.bf16.gmra.mxu0 %v3294
      %v3323 = vpop.f32.mrf.mxu0
      %v3324 = vadd.f32 0.0, %v3323
      %v3325 = vpop.f32.mrf.mxu0
      %v3326 = vadd.f32 0.0, %v3325
      %3327 = vdwg.mxu0
      %v3328 = vadd.f32 %v3262, %v3309
      %v3329 = vadd.f32 %v3263, %v3311
      %v3330 = vadd.f32 %v3264, %v3314
      %v3331 = vadd.f32 %v3265, %v3316
      %v3332 = vadd.f32 %v3266, %v3319
      %v3333 = vadd.f32 %v3267, %v3321
      %v3334 = vadd.f32 %v3268, %v3324
      %v3335 = vadd.f32 %v3269, %v3326
      %v3336 = vld [vmem:[%s2717] sm:$0xff]
      %v3337 = vld [vmem:[%s2717 + $0x8] sm:$0xff]
      %v3338 = vld [vmem:[%s2717 + $0x10] sm:$0xff]
      %v3339 = vld [vmem:[%s2717 + $0x18] sm:$0xff]
      %v3340 = vld [vmem:[%s2717 + $0x20] sm:$0xff]
      %v3341 = vld [vmem:[%s2717 + $0x28] sm:$0xff]
      %v3342 = vld [vmem:[%s2717 + $0x30] sm:$0xff]
      %v3343 = vld [vmem:[%s2717 + $0x38] sm:$0xff]
      %v3344 = vpack.c.bf16 %v3337, %v3336
      %v3345 = vpack.c.bf16 %v3339, %v3338
      %v3346 = vpack.c.bf16 %v3341, %v3340
      %v3347 = vpack.c.bf16 %v3343, %v3342
      %s3348 = scalar_lea.vmem %s33, 20
      %v3349 = vld [vmem:[%s3348] sm:$0xf]
      %v3351 = vsel %vm1658, %v3344, 0
      %v3354 = vsel %vm1658, %v3345, 0
      %v3357 = vsel %vm1658, %v3346, 0
      %v3360 = vsel %vm1658, %v3347, 0
      %v3363 = vsel %vm1730, %v3349, 0
      %3365 = vmatpush.bf16.msra.mxu0 0
      %3366 = vmatpush.bf16.msra.mxu0 0
      %3367 = vmatpush.bf16.msra.mxu0 0
      %3368 = vmatpush.bf16.msra.mxu0 0
      %3369 = vmatpush.bf16.msra.mxu0 0
      %3370 = vmatpush.bf16.msra.mxu0 0
      %3371 = vmatpush.bf16.msra.mxu0 0
      %3372 = vmatpush.bf16.msra.mxu0 %v3363
      %3373 = vmatmul.bf16.gmra.mxu0 %v3351
      %v3374 = vpop.f32.mrf.mxu0
      %v3375 = vadd.f32 0.0, %v3374
      %v3376 = vpop.f32.mrf.mxu0
      %v3377 = vadd.f32 0.0, %v3376
      %3378 = vmatmul.bf16.gmra.mxu0 %v3354
      %v3379 = vpop.f32.mrf.mxu0
      %v3380 = vadd.f32 0.0, %v3379
      %v3381 = vpop.f32.mrf.mxu0
      %v3382 = vadd.f32 0.0, %v3381
      %3383 = vmatmul.bf16.gmra.mxu0 %v3357
      %v3384 = vpop.f32.mrf.mxu0
      %v3385 = vadd.f32 0.0, %v3384
      %v3386 = vpop.f32.mrf.mxu0
      %v3387 = vadd.f32 0.0, %v3386
      %3388 = vmatmul.bf16.gmra.mxu0 %v3360
      %v3389 = vpop.f32.mrf.mxu0
      %v3390 = vadd.f32 0.0, %v3389
      %v3391 = vpop.f32.mrf.mxu0
      %v3392 = vadd.f32 0.0, %v3391
      %3393 = vdwg.mxu0
      %v3394 = vadd.f32 %v3328, %v3375
      %v3395 = vadd.f32 %v3329, %v3377
      %v3396 = vadd.f32 %v3330, %v3380
      %v3397 = vadd.f32 %v3331, %v3382
      %v3398 = vadd.f32 %v3332, %v3385
      %v3399 = vadd.f32 %v3333, %v3387
      %v3400 = vadd.f32 %v3334, %v3390
      %v3401 = vadd.f32 %v3335, %v3392
      %v3402 = vld [vmem:[%s2829] sm:$0xff]
      %v3403 = vld [vmem:[%s2829 + $0x8] sm:$0xff]
      %v3404 = vld [vmem:[%s2829 + $0x10] sm:$0xff]
      %v3405 = vld [vmem:[%s2829 + $0x18] sm:$0xff]
      %v3406 = vld [vmem:[%s2829 + $0x20] sm:$0xff]
      %v3407 = vld [vmem:[%s2829 + $0x28] sm:$0xff]
      %v3408 = vld [vmem:[%s2829 + $0x30] sm:$0xff]
      %v3409 = vld [vmem:[%s2829 + $0x38] sm:$0xff]
      %v3410 = vpack.c.bf16 %v3403, %v3402
      %v3411 = vpack.c.bf16 %v3405, %v3404
      %v3412 = vpack.c.bf16 %v3407, %v3406
      %v3413 = vpack.c.bf16 %v3409, %v3408
      %s3414 = scalar_lea.vmem %s33, 24
      %v3415 = vld [vmem:[%s3414] sm:$0xf]
      %v3417 = vsel %vm1658, %v3410, 0
      %v3420 = vsel %vm1658, %v3411, 0
      %v3423 = vsel %vm1658, %v3412, 0
      %v3426 = vsel %vm1658, %v3413, 0
      %v3429 = vsel %vm1730, %v3415, 0
      %3431 = vmatpush.bf16.msra.mxu0 0
      %3432 = vmatpush.bf16.msra.mxu0 0
      %3433 = vmatpush.bf16.msra.mxu0 0
      %3434 = vmatpush.bf16.msra.mxu0 0
      %3435 = vmatpush.bf16.msra.mxu0 0
      %3436 = vmatpush.bf16.msra.mxu0 0
      %3437 = vmatpush.bf16.msra.mxu0 0
      %3438 = vmatpush.bf16.msra.mxu0 %v3429
      %3439 = vmatmul.bf16.gmra.mxu0 %v3417
      %v3440 = vpop.f32.mrf.mxu0
      %v3441 = vadd.f32 0.0, %v3440
      %v3442 = vpop.f32.mrf.mxu0
      %v3443 = vadd.f32 0.0, %v3442
      %3444 = vmatmul.bf16.gmra.mxu0 %v3420
      %v3445 = vpop.f32.mrf.mxu0
      %v3446 = vadd.f32 0.0, %v3445
      %v3447 = vpop.f32.mrf.mxu0
      %v3448 = vadd.f32 0.0, %v3447
      %3449 = vmatmul.bf16.gmra.mxu0 %v3423
      %v3450 = vpop.f32.mrf.mxu0
      %v3451 = vadd.f32 0.0, %v3450
      %v3452 = vpop.f32.mrf.mxu0
      %v3453 = vadd.f32 0.0, %v3452
      %3454 = vmatmul.bf16.gmra.mxu0 %v3426
      %v3455 = vpop.f32.mrf.mxu0
      %v3456 = vadd.f32 0.0, %v3455
      %v3457 = vpop.f32.mrf.mxu0
      %v3458 = vadd.f32 0.0, %v3457
      %3459 = vdwg.mxu0
      %v3460 = vadd.f32 %v3394, %v3441
      %v3461 = vadd.f32 %v3395, %v3443
      %v3462 = vadd.f32 %v3396, %v3446
      %v3463 = vadd.f32 %v3397, %v3448
      %v3464 = vadd.f32 %v3398, %v3451
      %v3465 = vadd.f32 %v3399, %v3453
      %v3466 = vadd.f32 %v3400, %v3456
      %v3467 = vadd.f32 %v3401, %v3458
      %v3468 = vld [vmem:[%s35] sm:$0x1]
      %v3470 = vperm.slane %v3468, 0
      %v3472 = vmul.f32 %v3460, %v3470
      %v3473 = vmul.f32 %v3461, %v3470
      %v3474 = vmul.f32 %v3462, %v3470
      %v3475 = vmul.f32 %v3463, %v3470
      %v3476 = vmul.f32 %v3464, %v3470
      %v3477 = vmul.f32 %v3465, %v3470
      %v3478 = vmul.f32 %v3466, %v3470
      %v3479 = vmul.f32 %v3467, %v3470
      %v3480 = vld [vmem:[%s37] sm:$0x1]
      %v3482 = vperm.slane %v3480, 0
      %v3484 = vadd.f32 %v3472, %v3482
      %v3485 = vadd.f32 %v3473, %v3482
      %v3486 = vadd.f32 %v3474, %v3482
      %v3487 = vadd.f32 %v3475, %v3482
      %v3488 = vadd.f32 %v3476, %v3482
      %v3489 = vadd.f32 %v3477, %v3482
      %v3490 = vadd.f32 %v3478, %v3482
      %v3491 = vadd.f32 %v3479, %v3482
      %v3492 = vmax.f32 %v3484, 0.0
      %v3493 = vmax.f32 %v3485, 0.0
      %v3494 = vmax.f32 %v3486, 0.0
      %v3495 = vmax.f32 %v3487, 0.0
      %v3496 = vmax.f32 %v3488, 0.0
      %v3497 = vmax.f32 %v3489, 0.0
      %v3498 = vmax.f32 %v3490, 0.0
      %v3499 = vmax.f32 %v3491, 0.0
      %3500 = vst.msk [vmem:[#allocation2] sm:$0xff] %vm1658, 0.0
      %3501 = vst.msk [vmem:[#allocation2 + $0x8] sm:$0xff] %vm1658, 0.0
      %3502 = vst.msk [vmem:[#allocation2 + $0x10] sm:$0xff] %vm1658, 0.0
      %3503 = vst.msk [vmem:[#allocation2 + $0x18] sm:$0xff] %vm1658, 0.0
      %3504 = vst.msk [vmem:[#allocation2 + $0x20] sm:$0xff] %vm1658, 0.0
      %3505 = vst.msk [vmem:[#allocation2 + $0x28] sm:$0xff] %vm1658, 0.0
      %3506 = vst.msk [vmem:[#allocation2 + $0x30] sm:$0xff] %vm1658, 0.0
      %3507 = vst.msk [vmem:[#allocation2 + $0x38] sm:$0xff] %vm1658, 0.0
      %3508 = vst.msk [vmem:[#allocation2 + $0x40] sm:$0xff] %vm1658, 0.0
      %3509 = vst.msk [vmem:[#allocation2 + $0x48] sm:$0xff] %vm1658, 0.0
      %3510 = vst.msk [vmem:[#allocation2 + $0x50] sm:$0xff] %vm1658, 0.0
      %3511 = vst.msk [vmem:[#allocation2 + $0x58] sm:$0xff] %vm1658, 0.0
      %3512 = vst.msk [vmem:[#allocation2 + $0x60] sm:$0xff] %vm1658, 0.0
      %3513 = vst.msk [vmem:[#allocation2 + $0x68] sm:$0xff] %vm1658, 0.0
      %3514 = vst.msk [vmem:[#allocation2 + $0x70] sm:$0xff] %vm1658, 0.0
      %3515 = vst.msk [vmem:[#allocation2 + $0x78] sm:$0xff] %vm1658, 0.0
      %3516 = vst.msk [vmem:[#allocation2 + $0x80] sm:$0xff] %vm1658, 0.0
      %3517 = vst.msk [vmem:[#allocation2 + $0x88] sm:$0xff] %vm1658, 0.0
      %3518 = vst.msk [vmem:[#allocation2 + $0x90] sm:$0xff] %vm1658, 0.0
      %3519 = vst.msk [vmem:[#allocation2 + $0x98] sm:$0xff] %vm1658, 0.0
      %3520 = vst.msk [vmem:[#allocation2 + $0xa0] sm:$0xff] %vm1658, 0.0
      %3521 = vst.msk [vmem:[#allocation2 + $0xa8] sm:$0xff] %vm1658, 0.0
      %3522 = vst.msk [vmem:[#allocation2 + $0xb0] sm:$0xff] %vm1658, 0.0
      %3523 = vst.msk [vmem:[#allocation2 + $0xb8] sm:$0xff] %vm1658, 0.0
      %3524 = vst.msk [vmem:[#allocation2 + $0x8] sm:$0xff] %vm1658, %v3492
      %3525 = vst.msk [vmem:[#allocation2 + $0x20] sm:$0xff] %vm1658, %v3493
      %3526 = vst.msk [vmem:[#allocation2 + $0x38] sm:$0xff] %vm1658, %v3494
      %3527 = vst.msk [vmem:[#allocation2 + $0x50] sm:$0xff] %vm1658, %v3495
      %3528 = vst.msk [vmem:[#allocation2 + $0x68] sm:$0xff] %vm1658, %v3496
      %3529 = vst.msk [vmem:[#allocation2 + $0x80] sm:$0xff] %vm1658, %v3497
      %3530 = vst.msk [vmem:[#allocation2 + $0x98] sm:$0xff] %vm1658, %v3498
      %3531 = vst.msk [vmem:[#allocation2 + $0xb0] sm:$0xff] %vm1658, %v3499
      %v3532 = vld [vmem:[#allocation2 + $0x5] sm:$0xff]
      %v3533 = vld [vmem:[#allocation2 + $0x1d] sm:$0xff]
      %v3534 = vld [vmem:[#allocation2 + $0x35] sm:$0xff]
      %v3535 = vld [vmem:[#allocation2 + $0x4d] sm:$0xff]
      %v3536 = vld [vmem:[#allocation2 + $0x65] sm:$0xff]
      %v3537 = vld [vmem:[#allocation2 + $0x7d] sm:$0xff]
      %v3538 = vld [vmem:[#allocation2 + $0x95] sm:$0xff]
      %v3539 = vld [vmem:[#allocation2 + $0xad] sm:$0xff]
      %v3540 = vpack.c.bf16 %v3533, %v3532
      %v3541 = vpack.c.bf16 %v3535, %v3534
      %v3542 = vpack.c.bf16 %v3537, %v3536
      %v3543 = vpack.c.bf16 %v3539, %v3538
      %v3544 = vld [vmem:[%s39] sm:$0xf]
      %v3545 = vld [vmem:[#allocation2 + $0x6] sm:$0xff]
      %v3546 = vld [vmem:[#allocation2 + $0x1e] sm:$0xff]
      %v3547 = vld [vmem:[#allocation2 + $0x36] sm:$0xff]
      %v3548 = vld [vmem:[#allocation2 + $0x4e] sm:$0xff]
      %v3549 = vld [vmem:[#allocation2 + $0x66] sm:$0xff]
      %v3550 = vld [vmem:[#allocation2 + $0x7e] sm:$0xff]
      %v3551 = vld [vmem:[#allocation2 + $0x96] sm:$0xff]
      %v3552 = vld [vmem:[#allocation2 + $0xae] sm:$0xff]
      %v3553 = vpack.c.bf16 %v3546, %v3545
      %v3554 = vpack.c.bf16 %v3548, %v3547
      %v3555 = vpack.c.bf16 %v3550, %v3549
      %v3556 = vpack.c.bf16 %v3552, %v3551
      %s3557 = scalar_lea.vmem %s39, 4
      %v3558 = vld [vmem:[%s3557] sm:$0xf]
      %v3560 = vsel %vm1658, %v3553, 0
      %v3563 = vsel %vm1658, %v3554, 0
      %v3566 = vsel %vm1658, %v3555, 0
      %v3569 = vsel %vm1658, %v3556, 0
      %v3572 = vsel %vm1730, %v3558, 0
      %3574 = vmatpush.bf16.msra.mxu0 0
      %3575 = vmatpush.bf16.msra.mxu0 0
      %3576 = vmatpush.bf16.msra.mxu0 0
      %3577 = vmatpush.bf16.msra.mxu0 0
      %3578 = vmatpush.bf16.msra.mxu0 0
      %3579 = vmatpush.bf16.msra.mxu0 0
      %3580 = vmatpush.bf16.msra.mxu0 0
      %3581 = vmatpush.bf16.msra.mxu0 %v3572
      %3582 = vmatmul.bf16.gmra.mxu0 %v3560
      %v3583 = vpop.f32.mrf.mxu0
      %v3584 = vadd.f32 0.0, %v3583
      %v3585 = vpop.f32.mrf.mxu0
      %v3586 = vadd.f32 0.0, %v3585
      %3587 = vmatmul.bf16.gmra.mxu0 %v3563
      %v3588 = vpop.f32.mrf.mxu0
      %v3589 = vadd.f32 0.0, %v3588
      %v3590 = vpop.f32.mrf.mxu0
      %v3591 = vadd.f32 0.0, %v3590
      %3592 = vmatmul.bf16.gmra.mxu0 %v3566
      %v3593 = vpop.f32.mrf.mxu0
      %v3594 = vadd.f32 0.0, %v3593
      %v3595 = vpop.f32.mrf.mxu0
      %v3596 = vadd.f32 0.0, %v3595
      %3597 = vmatmul.bf16.gmra.mxu0 %v3569
      %v3598 = vpop.f32.mrf.mxu0
      %v3599 = vadd.f32 0.0, %v3598
      %v3600 = vpop.f32.mrf.mxu0
      %v3601 = vadd.f32 0.0, %v3600
      %3602 = vdwg.mxu0
      %v3604 = vsel %vm1658, %v3540, 0
      %v3607 = vsel %vm1658, %v3541, 0
      %v3610 = vsel %vm1658, %v3542, 0
      %v3613 = vsel %vm1658, %v3543, 0
      %v3616 = vsel %vm1730, %v3544, 0
      %3618 = vmatpush.bf16.msra.mxu0 0
      %3619 = vmatpush.bf16.msra.mxu0 0
      %3620 = vmatpush.bf16.msra.mxu0 0
      %3621 = vmatpush.bf16.msra.mxu0 0
      %3622 = vmatpush.bf16.msra.mxu0 0
      %3623 = vmatpush.bf16.msra.mxu0 0
      %3624 = vmatpush.bf16.msra.mxu0 0
      %3625 = vmatpush.bf16.msra.mxu0 %v3616
      %3626 = vmatmul.bf16.gmra.mxu0 %v3604
      %v3627 = vpop.f32.mrf.mxu0
      %v3628 = vadd.f32 %v3584, %v3627
      %v3629 = vpop.f32.mrf.mxu0
      %v3630 = vadd.f32 %v3586, %v3629
      %3631 = vmatmul.bf16.gmra.mxu0 %v3607
      %v3632 = vpop.f32.mrf.mxu0
      %v3633 = vadd.f32 %v3589, %v3632
      %v3634 = vpop.f32.mrf.mxu0
      %v3635 = vadd.f32 %v3591, %v3634
      %3636 = vmatmul.bf16.gmra.mxu0 %v3610
      %v3637 = vpop.f32.mrf.mxu0
      %v3638 = vadd.f32 %v3594, %v3637
      %v3639 = vpop.f32.mrf.mxu0
      %v3640 = vadd.f32 %v3596, %v3639
      %3641 = vmatmul.bf16.gmra.mxu0 %v3613
      %v3642 = vpop.f32.mrf.mxu0
      %v3643 = vadd.f32 %v3599, %v3642
      %v3644 = vpop.f32.mrf.mxu0
      %v3645 = vadd.f32 %v3601, %v3644
      %3646 = vdwg.mxu0
      %v3647 = vld [vmem:[#allocation2 + $0x7] sm:$0xff]
      %v3648 = vld [vmem:[#allocation2 + $0x1f] sm:$0xff]
      %v3649 = vld [vmem:[#allocation2 + $0x37] sm:$0xff]
      %v3650 = vld [vmem:[#allocation2 + $0x4f] sm:$0xff]
      %v3651 = vld [vmem:[#allocation2 + $0x67] sm:$0xff]
      %v3652 = vld [vmem:[#allocation2 + $0x7f] sm:$0xff]
      %v3653 = vld [vmem:[#allocation2 + $0x97] sm:$0xff]
      %v3654 = vld [vmem:[#allocation2 + $0xaf] sm:$0xff]
      %v3655 = vpack.c.bf16 %v3648, %v3647
      %v3656 = vpack.c.bf16 %v3650, %v3649
      %v3657 = vpack.c.bf16 %v3652, %v3651
      %v3658 = vpack.c.bf16 %v3654, %v3653
      %s3659 = scalar_lea.vmem %s39, 8
      %v3660 = vld [vmem:[%s3659] sm:$0xf]
      %v3662 = vsel %vm1658, %v3655, 0
      %v3665 = vsel %vm1658, %v3656, 0
      %v3668 = vsel %vm1658, %v3657, 0
      %v3671 = vsel %vm1658, %v3658, 0
      %v3674 = vsel %vm1730, %v3660, 0
      %3676 = vmatpush.bf16.msra.mxu0 0
      %3677 = vmatpush.bf16.msra.mxu0 0
      %3678 = vmatpush.bf16.msra.mxu0 0
      %3679 = vmatpush.bf16.msra.mxu0 0
      %3680 = vmatpush.bf16.msra.mxu0 0
      %3681 = vmatpush.bf16.msra.mxu0 0
      %3682 = vmatpush.bf16.msra.mxu0 0
      %3683 = vmatpush.bf16.msra.mxu0 %v3674
      %3684 = vmatmul.bf16.gmra.mxu0 %v3662
      %v3685 = vpop.f32.mrf.mxu0
      %v3686 = vadd.f32 0.0, %v3685
      %v3687 = vpop.f32.mrf.mxu0
      %v3688 = vadd.f32 0.0, %v3687
      %3689 = vmatmul.bf16.gmra.mxu0 %v3665
      %v3690 = vpop.f32.mrf.mxu0
      %v3691 = vadd.f32 0.0, %v3690
      %v3692 = vpop.f32.mrf.mxu0
      %v3693 = vadd.f32 0.0, %v3692
      %3694 = vmatmul.bf16.gmra.mxu0 %v3668
      %v3695 = vpop.f32.mrf.mxu0
      %v3696 = vadd.f32 0.0, %v3695
      %v3697 = vpop.f32.mrf.mxu0
      %v3698 = vadd.f32 0.0, %v3697
      %3699 = vmatmul.bf16.gmra.mxu0 %v3671
      %v3700 = vpop.f32.mrf.mxu0
      %v3701 = vadd.f32 0.0, %v3700
      %v3702 = vpop.f32.mrf.mxu0
      %v3703 = vadd.f32 0.0, %v3702
      %3704 = vdwg.mxu0
      %v3705 = vadd.f32 %v3628, %v3686
      %v3706 = vadd.f32 %v3630, %v3688
      %v3707 = vadd.f32 %v3633, %v3691
      %v3708 = vadd.f32 %v3635, %v3693
      %v3709 = vadd.f32 %v3638, %v3696
      %v3710 = vadd.f32 %v3640, %v3698
      %v3711 = vadd.f32 %v3643, %v3701
      %v3712 = vadd.f32 %v3645, %v3703
      %v3713 = vld [vmem:[#allocation2 + $0x8] sm:$0xff]
      %v3714 = vld [vmem:[#allocation2 + $0x20] sm:$0xff]
      %v3715 = vld [vmem:[#allocation2 + $0x38] sm:$0xff]
      %v3716 = vld [vmem:[#allocation2 + $0x50] sm:$0xff]
      %v3717 = vld [vmem:[#allocation2 + $0x68] sm:$0xff]
      %v3718 = vld [vmem:[#allocation2 + $0x80] sm:$0xff]
      %v3719 = vld [vmem:[#allocation2 + $0x98] sm:$0xff]
      %v3720 = vld [vmem:[#allocation2 + $0xb0] sm:$0xff]
      %v3721 = vpack.c.bf16 %v3714, %v3713
      %v3722 = vpack.c.bf16 %v3716, %v3715
      %v3723 = vpack.c.bf16 %v3718, %v3717
      %v3724 = vpack.c.bf16 %v3720, %v3719
      %s3725 = scalar_lea.vmem %s39, 12
      %v3726 = vld [vmem:[%s3725] sm:$0xf]
      %v3728 = vsel %vm1658, %v3721, 0
      %v3731 = vsel %vm1658, %v3722, 0
      %v3734 = vsel %vm1658, %v3723, 0
      %v3737 = vsel %vm1658, %v3724, 0
      %v3740 = vsel %vm1730, %v3726, 0
      %3742 = vmatpush.bf16.msra.mxu0 0
      %3743 = vmatpush.bf16.msra.mxu0 0
      %3744 = vmatpush.bf16.msra.mxu0 0
      %3745 = vmatpush.bf16.msra.mxu0 0
      %3746 = vmatpush.bf16.msra.mxu0 0
      %3747 = vmatpush.bf16.msra.mxu0 0
      %3748 = vmatpush.bf16.msra.mxu0 0
      %3749 = vmatpush.bf16.msra.mxu0 %v3740
      %3750 = vmatmul.bf16.gmra.mxu0 %v3728
      %v3751 = vpop.f32.mrf.mxu0
      %v3752 = vadd.f32 0.0, %v3751
      %v3753 = vpop.f32.mrf.mxu0
      %v3754 = vadd.f32 0.0, %v3753
      %3755 = vmatmul.bf16.gmra.mxu0 %v3731
      %v3756 = vpop.f32.mrf.mxu0
      %v3757 = vadd.f32 0.0, %v3756
      %v3758 = vpop.f32.mrf.mxu0
      %v3759 = vadd.f32 0.0, %v3758
      %3760 = vmatmul.bf16.gmra.mxu0 %v3734
      %v3761 = vpop.f32.mrf.mxu0
      %v3762 = vadd.f32 0.0, %v3761
      %v3763 = vpop.f32.mrf.mxu0
      %v3764 = vadd.f32 0.0, %v3763
      %3765 = vmatmul.bf16.gmra.mxu0 %v3737
      %v3766 = vpop.f32.mrf.mxu0
      %v3767 = vadd.f32 0.0, %v3766
      %v3768 = vpop.f32.mrf.mxu0
      %v3769 = vadd.f32 0.0, %v3768
      %3770 = vdwg.mxu0
      %v3771 = vadd.f32 %v3705, %v3752
      %v3772 = vadd.f32 %v3706, %v3754
      %v3773 = vadd.f32 %v3707, %v3757
      %v3774 = vadd.f32 %v3708, %v3759
      %v3775 = vadd.f32 %v3709, %v3762
      %v3776 = vadd.f32 %v3710, %v3764
      %v3777 = vadd.f32 %v3711, %v3767
      %v3778 = vadd.f32 %v3712, %v3769
      %v3779 = vld [vmem:[#allocation2 + $0x9] sm:$0xff]
      %v3780 = vld [vmem:[#allocation2 + $0x21] sm:$0xff]
      %v3781 = vld [vmem:[#allocation2 + $0x39] sm:$0xff]
      %v3782 = vld [vmem:[#allocation2 + $0x51] sm:$0xff]
      %v3783 = vld [vmem:[#allocation2 + $0x69] sm:$0xff]
      %v3784 = vld [vmem:[#allocation2 + $0x81] sm:$0xff]
      %v3785 = vld [vmem:[#allocation2 + $0x99] sm:$0xff]
      %v3786 = vld [vmem:[#allocation2 + $0xb1] sm:$0xff]
      %v3787 = vpack.c.bf16 %v3780, %v3779
      %v3788 = vpack.c.bf16 %v3782, %v3781
      %v3789 = vpack.c.bf16 %v3784, %v3783
      %v3790 = vpack.c.bf16 %v3786, %v3785
      %s3791 = scalar_lea.vmem %s39, 16
      %v3792 = vld [vmem:[%s3791] sm:$0xf]
      %v3794 = vsel %vm1658, %v3787, 0
      %v3797 = vsel %vm1658, %v3788, 0
      %v3800 = vsel %vm1658, %v3789, 0
      %v3803 = vsel %vm1658, %v3790, 0
      %v3806 = vsel %vm1730, %v3792, 0
      %3808 = vmatpush.bf16.msra.mxu0 0
      %3809 = vmatpush.bf16.msra.mxu0 0
      %3810 = vmatpush.bf16.msra.mxu0 0
      %3811 = vmatpush.bf16.msra.mxu0 0
      %3812 = vmatpush.bf16.msra.mxu0 0
      %3813 = vmatpush.bf16.msra.mxu0 0
      %3814 = vmatpush.bf16.msra.mxu0 0
      %3815 = vmatpush.bf16.msra.mxu0 %v3806
      %3816 = vmatmul.bf16.gmra.mxu0 %v3794
      %v3817 = vpop.f32.mrf.mxu0
      %v3818 = vadd.f32 0.0, %v3817
      %v3819 = vpop.f32.mrf.mxu0
      %v3820 = vadd.f32 0.0, %v3819
      %3821 = vmatmul.bf16.gmra.mxu0 %v3797
      %v3822 = vpop.f32.mrf.mxu0
      %v3823 = vadd.f32 0.0, %v3822
      %v3824 = vpop.f32.mrf.mxu0
      %v3825 = vadd.f32 0.0, %v3824
      %3826 = vmatmul.bf16.gmra.mxu0 %v3800
      %v3827 = vpop.f32.mrf.mxu0
      %v3828 = vadd.f32 0.0, %v3827
      %v3829 = vpop.f32.mrf.mxu0
      %v3830 = vadd.f32 0.0, %v3829
      %3831 = vmatmul.bf16.gmra.mxu0 %v3803
      %v3832 = vpop.f32.mrf.mxu0
      %v3833 = vadd.f32 0.0, %v3832
      %v3834 = vpop.f32.mrf.mxu0
      %v3835 = vadd.f32 0.0, %v3834
      %3836 = vdwg.mxu0
      %v3837 = vadd.f32 %v3771, %v3818
      %v3838 = vadd.f32 %v3772, %v3820
      %v3839 = vadd.f32 %v3773, %v3823
      %v3840 = vadd.f32 %v3774, %v3825
      %v3841 = vadd.f32 %v3775, %v3828
      %v3842 = vadd.f32 %v3776, %v3830
      %v3843 = vadd.f32 %v3777, %v3833
      %v3844 = vadd.f32 %v3778, %v3835
      %v3845 = vld [vmem:[#allocation2 + $0xa] sm:$0xff]
      %v3846 = vld [vmem:[#allocation2 + $0x22] sm:$0xff]
      %v3847 = vld [vmem:[#allocation2 + $0x3a] sm:$0xff]
      %v3848 = vld [vmem:[#allocation2 + $0x52] sm:$0xff]
      %v3849 = vld [vmem:[#allocation2 + $0x6a] sm:$0xff]
      %v3850 = vld [vmem:[#allocation2 + $0x82] sm:$0xff]
      %v3851 = vld [vmem:[#allocation2 + $0x9a] sm:$0xff]
      %v3852 = vld [vmem:[#allocation2 + $0xb2] sm:$0xff]
      %v3853 = vpack.c.bf16 %v3846, %v3845
      %v3854 = vpack.c.bf16 %v3848, %v3847
      %v3855 = vpack.c.bf16 %v3850, %v3849
      %v3856 = vpack.c.bf16 %v3852, %v3851
      %s3857 = scalar_lea.vmem %s39, 20
      %v3858 = vld [vmem:[%s3857] sm:$0xf]
      %v3860 = vsel %vm1658, %v3853, 0
      %v3863 = vsel %vm1658, %v3854, 0
      %v3866 = vsel %vm1658, %v3855, 0
      %v3869 = vsel %vm1658, %v3856, 0
      %v3872 = vsel %vm1730, %v3858, 0
      %3874 = vmatpush.bf16.msra.mxu0 0
      %3875 = vmatpush.bf16.msra.mxu0 0
      %3876 = vmatpush.bf16.msra.mxu0 0
      %3877 = vmatpush.bf16.msra.mxu0 0
      %3878 = vmatpush.bf16.msra.mxu0 0
      %3879 = vmatpush.bf16.msra.mxu0 0
      %3880 = vmatpush.bf16.msra.mxu0 0
      %3881 = vmatpush.bf16.msra.mxu0 %v3872
      %3882 = vmatmul.bf16.gmra.mxu0 %v3860
      %v3883 = vpop.f32.mrf.mxu0
      %v3884 = vadd.f32 0.0, %v3883
      %v3885 = vpop.f32.mrf.mxu0
      %v3886 = vadd.f32 0.0, %v3885
      %3887 = vmatmul.bf16.gmra.mxu0 %v3863
      %v3888 = vpop.f32.mrf.mxu0
      %v3889 = vadd.f32 0.0, %v3888
      %v3890 = vpop.f32.mrf.mxu0
      %v3891 = vadd.f32 0.0, %v3890
      %3892 = vmatmul.bf16.gmra.mxu0 %v3866
      %v3893 = vpop.f32.mrf.mxu0
      %v3894 = vadd.f32 0.0, %v3893
      %v3895 = vpop.f32.mrf.mxu0
      %v3896 = vadd.f32 0.0, %v3895
      %3897 = vmatmul.bf16.gmra.mxu0 %v3869
      %v3898 = vpop.f32.mrf.mxu0
      %v3899 = vadd.f32 0.0, %v3898
      %v3900 = vpop.f32.mrf.mxu0
      %v3901 = vadd.f32 0.0, %v3900
      %3902 = vdwg.mxu0
      %v3903 = vadd.f32 %v3837, %v3884
      %v3904 = vadd.f32 %v3838, %v3886
      %v3905 = vadd.f32 %v3839, %v3889
      %v3906 = vadd.f32 %v3840, %v3891
      %v3907 = vadd.f32 %v3841, %v3894
      %v3908 = vadd.f32 %v3842, %v3896
      %v3909 = vadd.f32 %v3843, %v3899
      %v3910 = vadd.f32 %v3844, %v3901
      %v3911 = vld [vmem:[#allocation2 + $0xb] sm:$0xff]
      %v3912 = vld [vmem:[#allocation2 + $0x23] sm:$0xff]
      %v3913 = vld [vmem:[#allocation2 + $0x3b] sm:$0xff]
      %v3914 = vld [vmem:[#allocation2 + $0x53] sm:$0xff]
      %v3915 = vld [vmem:[#allocation2 + $0x6b] sm:$0xff]
      %v3916 = vld [vmem:[#allocation2 + $0x83] sm:$0xff]
      %v3917 = vld [vmem:[#allocation2 + $0x9b] sm:$0xff]
      %v3918 = vld [vmem:[#allocation2 + $0xb3] sm:$0xff]
      %v3919 = vpack.c.bf16 %v3912, %v3911
      %v3920 = vpack.c.bf16 %v3914, %v3913
      %v3921 = vpack.c.bf16 %v3916, %v3915
      %v3922 = vpack.c.bf16 %v3918, %v3917
      %s3923 = scalar_lea.vmem %s39, 24
      %v3924 = vld [vmem:[%s3923] sm:$0xf]
      %v3926 = vsel %vm1658, %v3919, 0
      %v3929 = vsel %vm1658, %v3920, 0
      %v3932 = vsel %vm1658, %v3921, 0
      %v3935 = vsel %vm1658, %v3922, 0
      %v3938 = vsel %vm1730, %v3924, 0
      %3940 = vmatpush.bf16.msra.mxu0 0
      %3941 = vmatpush.bf16.msra.mxu0 0
      %3942 = vmatpush.bf16.msra.mxu0 0
      %3943 = vmatpush.bf16.msra.mxu0 0
      %3944 = vmatpush.bf16.msra.mxu0 0
      %3945 = vmatpush.bf16.msra.mxu0 0
      %3946 = vmatpush.bf16.msra.mxu0 0
      %3947 = vmatpush.bf16.msra.mxu0 %v3938
      %3948 = vmatmul.bf16.gmra.mxu0 %v3926
      %v3949 = vpop.f32.mrf.mxu0
      %v3950 = vadd.f32 0.0, %v3949
      %v3951 = vpop.f32.mrf.mxu0
      %v3952 = vadd.f32 0.0, %v3951
      %3953 = vmatmul.bf16.gmra.mxu0 %v3929
      %v3954 = vpop.f32.mrf.mxu0
      %v3955 = vadd.f32 0.0, %v3954
      %v3956 = vpop.f32.mrf.mxu0
      %v3957 = vadd.f32 0.0, %v3956
      %3958 = vmatmul.bf16.gmra.mxu0 %v3932
      %v3959 = vpop.f32.mrf.mxu0
      %v3960 = vadd.f32 0.0, %v3959
      %v3961 = vpop.f32.mrf.mxu0
      %v3962 = vadd.f32 0.0, %v3961
      %3963 = vmatmul.bf16.gmra.mxu0 %v3935
      %v3964 = vpop.f32.mrf.mxu0
      %v3965 = vadd.f32 0.0, %v3964
      %v3966 = vpop.f32.mrf.mxu0
      %v3967 = vadd.f32 0.0, %v3966
      %3968 = vdwg.mxu0
      %v3969 = vadd.f32 %v3903, %v3950
      %v3970 = vadd.f32 %v3904, %v3952
      %v3971 = vadd.f32 %v3905, %v3955
      %v3972 = vadd.f32 %v3906, %v3957
      %v3973 = vadd.f32 %v3907, %v3960
      %v3974 = vadd.f32 %v3908, %v3962
      %v3975 = vadd.f32 %v3909, %v3965
      %v3976 = vadd.f32 %v3910, %v3967
      %v3977 = vld [vmem:[%s41] sm:$0x1]
      %v3979 = vperm.slane %v3977, 0
      %v3981 = vmul.f32 %v3969, %v3979
      %v3982 = vmul.f32 %v3970, %v3979
      %v3983 = vmul.f32 %v3971, %v3979
      %v3984 = vmul.f32 %v3972, %v3979
      %v3985 = vmul.f32 %v3973, %v3979
      %v3986 = vmul.f32 %v3974, %v3979
      %v3987 = vmul.f32 %v3975, %v3979
      %v3988 = vmul.f32 %v3976, %v3979
      %v3989 = vld [vmem:[%s43] sm:$0x1]
      %v3991 = vperm.slane %v3989, 0
      %v3993 = vadd.f32 %v3981, %v3991
      %v3994 = vadd.f32 %v3982, %v3991
      %v3995 = vadd.f32 %v3983, %v3991
      %v3996 = vadd.f32 %v3984, %v3991
      %v3997 = vadd.f32 %v3985, %v3991
      %v3998 = vadd.f32 %v3986, %v3991
      %v3999 = vadd.f32 %v3987, %v3991
      %v4000 = vadd.f32 %v3988, %v3991
      %v4001 = vmax.f32 %v3993, 0.0
      %v4002 = vmax.f32 %v3994, 0.0
      %v4003 = vmax.f32 %v3995, 0.0
      %v4004 = vmax.f32 %v3996, 0.0
      %v4005 = vmax.f32 %v3997, 0.0
      %v4006 = vmax.f32 %v3998, 0.0
      %v4007 = vmax.f32 %v3999, 0.0
      %v4008 = vmax.f32 %v4000, 0.0
      %4009 = vst.msk [vmem:[#allocation3] sm:$0xff] %vm1658, 0.0
      %4010 = vst.msk [vmem:[#allocation3 + $0x8] sm:$0xff] %vm1658, 0.0
      %4011 = vst.msk [vmem:[#allocation3 + $0x10] sm:$0xff] %vm1658, 0.0
      %4012 = vst.msk [vmem:[#allocation3 + $0x18] sm:$0xff] %vm1658, 0.0
      %4013 = vst.msk [vmem:[#allocation3 + $0x20] sm:$0xff] %vm1658, 0.0
      %4014 = vst.msk [vmem:[#allocation3 + $0x28] sm:$0xff] %vm1658, 0.0
      %4015 = vst.msk [vmem:[#allocation3 + $0x30] sm:$0xff] %vm1658, 0.0
      %4016 = vst.msk [vmem:[#allocation3 + $0x38] sm:$0xff] %vm1658, 0.0
      %4017 = vst.msk [vmem:[#allocation3 + $0x40] sm:$0xff] %vm1658, 0.0
      %4018 = vst.msk [vmem:[#allocation3 + $0x48] sm:$0xff] %vm1658, 0.0
      %4019 = vst.msk [vmem:[#allocation3 + $0x50] sm:$0xff] %vm1658, 0.0
      %4020 = vst.msk [vmem:[#allocation3 + $0x58] sm:$0xff] %vm1658, 0.0
      %4021 = vst.msk [vmem:[#allocation3 + $0x60] sm:$0xff] %vm1658, 0.0
      %4022 = vst.msk [vmem:[#allocation3 + $0x68] sm:$0xff] %vm1658, 0.0
      %4023 = vst.msk [vmem:[%s2183] sm:$0xff] %vm1658, %v4001
      %4024 = vst.msk [vmem:[%s2183 + $0x8] sm:$0xff] %vm1658, %v4002
      %4025 = vst.msk [vmem:[%s2183 + $0x10] sm:$0xff] %vm1658, %v4003
      %4026 = vst.msk [vmem:[%s2183 + $0x18] sm:$0xff] %vm1658, %v4004
      %4027 = vst.msk [vmem:[%s2183 + $0x20] sm:$0xff] %vm1658, %v4005
      %4028 = vst.msk [vmem:[%s2183 + $0x28] sm:$0xff] %vm1658, %v4006
      %4029 = vst.msk [vmem:[%s2183 + $0x30] sm:$0xff] %vm1658, %v4007
      %4030 = vst.msk [vmem:[%s2183 + $0x38] sm:$0xff] %vm1658, %v4008
      %v4031 = vld [vmem:[#allocation3] sm:$0xff]
      %v4032 = vld [vmem:[#allocation3 + $0x8] sm:$0xff]
      %v4033 = vld [vmem:[#allocation3 + $0x10] sm:$0xff]
      %v4034 = vld [vmem:[#allocation3 + $0x18] sm:$0xff]
      %v4035 = vld [vmem:[#allocation3 + $0x20] sm:$0xff]
      %v4036 = vld [vmem:[#allocation3 + $0x28] sm:$0xff]
      %v4037 = vld [vmem:[#allocation3 + $0x30] sm:$0xff]
      %v4038 = vld [vmem:[#allocation3 + $0x38] sm:$0xff]
      %v4039 = vpack.c.bf16 %v4032, %v4031
      %v4040 = vpack.c.bf16 %v4034, %v4033
      %v4041 = vpack.c.bf16 %v4036, %v4035
      %v4042 = vpack.c.bf16 %v4038, %v4037
      %v4043 = vld [vmem:[%s45] sm:$0xf]
      %v4044 = vld [vmem:[%s2205] sm:$0xff]
      %v4045 = vld [vmem:[%s2205 + $0x8] sm:$0xff]
      %v4046 = vld [vmem:[%s2205 + $0x10] sm:$0xff]
      %v4047 = vld [vmem:[%s2205 + $0x18] sm:$0xff]
      %v4048 = vld [vmem:[%s2205 + $0x20] sm:$0xff]
      %v4049 = vld [vmem:[%s2205 + $0x28] sm:$0xff]
      %v4050 = vld [vmem:[%s2205 + $0x30] sm:$0xff]
      %v4051 = vld [vmem:[%s2205 + $0x38] sm:$0xff]
      %v4052 = vpack.c.bf16 %v4045, %v4044
      %v4053 = vpack.c.bf16 %v4047, %v4046
      %v4054 = vpack.c.bf16 %v4049, %v4048
      %v4055 = vpack.c.bf16 %v4051, %v4050
      %s4056 = scalar_lea.vmem %s45, 4
      %v4057 = vld [vmem:[%s4056] sm:$0xf]
      %v4059 = vsel %vm1658, %v4052, 0
      %v4062 = vsel %vm1658, %v4053, 0
      %v4065 = vsel %vm1658, %v4054, 0
      %v4068 = vsel %vm1658, %v4055, 0
      %v4071 = vsel %vm1730, %v4057, 0
      %4073 = vmatpush.bf16.msra.mxu0 0
      %4074 = vmatpush.bf16.msra.mxu0 0
      %4075 = vmatpush.bf16.msra.mxu0 0
      %4076 = vmatpush.bf16.msra.mxu0 0
      %4077 = vmatpush.bf16.msra.mxu0 0
      %4078 = vmatpush.bf16.msra.mxu0 0
      %4079 = vmatpush.bf16.msra.mxu0 0
      %4080 = vmatpush.bf16.msra.mxu0 %v4071
      %4081 = vmatmul.bf16.gmra.mxu0 %v4059
      %v4082 = vpop.f32.mrf.mxu0
      %v4083 = vadd.f32 0.0, %v4082
      %v4084 = vpop.f32.mrf.mxu0
      %v4085 = vadd.f32 0.0, %v4084
      %4086 = vmatmul.bf16.gmra.mxu0 %v4062
      %v4087 = vpop.f32.mrf.mxu0
      %v4088 = vadd.f32 0.0, %v4087
      %v4089 = vpop.f32.mrf.mxu0
      %v4090 = vadd.f32 0.0, %v4089
      %4091 = vmatmul.bf16.gmra.mxu0 %v4065
      %v4092 = vpop.f32.mrf.mxu0
      %v4093 = vadd.f32 0.0, %v4092
      %v4094 = vpop.f32.mrf.mxu0
      %v4095 = vadd.f32 0.0, %v4094
      %4096 = vmatmul.bf16.gmra.mxu0 %v4068
      %v4097 = vpop.f32.mrf.mxu0
      %v4098 = vadd.f32 0.0, %v4097
      %v4099 = vpop.f32.mrf.mxu0
      %v4100 = vadd.f32 0.0, %v4099
      %4101 = vdwg.mxu0
      %v4103 = vsel %vm1658, %v4039, 0
      %v4106 = vsel %vm1658, %v4040, 0
      %v4109 = vsel %vm1658, %v4041, 0
      %v4112 = vsel %vm1658, %v4042, 0
      %v4115 = vsel %vm1730, %v4043, 0
      %4117 = vmatpush.bf16.msra.mxu0 0
      %4118 = vmatpush.bf16.msra.mxu0 0
      %4119 = vmatpush.bf16.msra.mxu0 0
      %4120 = vmatpush.bf16.msra.mxu0 0
      %4121 = vmatpush.bf16.msra.mxu0 0
      %4122 = vmatpush.bf16.msra.mxu0 0
      %4123 = vmatpush.bf16.msra.mxu0 0
      %4124 = vmatpush.bf16.msra.mxu0 %v4115
      %4125 = vmatmul.bf16.gmra.mxu0 %v4103
      %v4126 = vpop.f32.mrf.mxu0
      %v4127 = vadd.f32 %v4083, %v4126
      %v4128 = vpop.f32.mrf.mxu0
      %v4129 = vadd.f32 %v4085, %v4128
      %4130 = vmatmul.bf16.gmra.mxu0 %v4106
      %v4131 = vpop.f32.mrf.mxu0
      %v4132 = vadd.f32 %v4088, %v4131
      %v4133 = vpop.f32.mrf.mxu0
      %v4134 = vadd.f32 %v4090, %v4133
      %4135 = vmatmul.bf16.gmra.mxu0 %v4109
      %v4136 = vpop.f32.mrf.mxu0
      %v4137 = vadd.f32 %v4093, %v4136
      %v4138 = vpop.f32.mrf.mxu0
      %v4139 = vadd.f32 %v4095, %v4138
      %4140 = vmatmul.bf16.gmra.mxu0 %v4112
      %v4141 = vpop.f32.mrf.mxu0
      %v4142 = vadd.f32 %v4098, %v4141
      %v4143 = vpop.f32.mrf.mxu0
      %v4144 = vadd.f32 %v4100, %v4143
      %4145 = vdwg.mxu0
      %v4146 = vld [vmem:[%s2382] sm:$0xff]
      %v4147 = vld [vmem:[%s2382 + $0x8] sm:$0xff]
      %v4148 = vld [vmem:[%s2382 + $0x10] sm:$0xff]
      %v4149 = vld [vmem:[%s2382 + $0x18] sm:$0xff]
      %v4150 = vld [vmem:[%s2382 + $0x20] sm:$0xff]
      %v4151 = vld [vmem:[%s2382 + $0x28] sm:$0xff]
      %v4152 = vld [vmem:[%s2382 + $0x30] sm:$0xff]
      %v4153 = vld [vmem:[%s2382 + $0x38] sm:$0xff]
      %v4154 = vpack.c.bf16 %v4147, %v4146
      %v4155 = vpack.c.bf16 %v4149, %v4148
      %v4156 = vpack.c.bf16 %v4151, %v4150
      %v4157 = vpack.c.bf16 %v4153, %v4152
      %s4158 = scalar_lea.vmem %s45, 8
      %v4159 = vld [vmem:[%s4158] sm:$0xf]
      %v4161 = vsel %vm1658, %v4154, 0
      %v4164 = vsel %vm1658, %v4155, 0
      %v4167 = vsel %vm1658, %v4156, 0
      %v4170 = vsel %vm1658, %v4157, 0
      %v4173 = vsel %vm1730, %v4159, 0
      %4175 = vmatpush.bf16.msra.mxu0 0
      %4176 = vmatpush.bf16.msra.mxu0 0
      %4177 = vmatpush.bf16.msra.mxu0 0
      %4178 = vmatpush.bf16.msra.mxu0 0
      %4179 = vmatpush.bf16.msra.mxu0 0
      %4180 = vmatpush.bf16.msra.mxu0 0
      %4181 = vmatpush.bf16.msra.mxu0 0
      %4182 = vmatpush.bf16.msra.mxu0 %v4173
      %4183 = vmatmul.bf16.gmra.mxu0 %v4161
      %v4184 = vpop.f32.mrf.mxu0
      %v4185 = vadd.f32 0.0, %v4184
      %v4186 = vpop.f32.mrf.mxu0
      %v4187 = vadd.f32 0.0, %v4186
      %4188 = vmatmul.bf16.gmra.mxu0 %v4164
      %v4189 = vpop.f32.mrf.mxu0
      %v4190 = vadd.f32 0.0, %v4189
      %v4191 = vpop.f32.mrf.mxu0
      %v4192 = vadd.f32 0.0, %v4191
      %4193 = vmatmul.bf16.gmra.mxu0 %v4167
      %v4194 = vpop.f32.mrf.mxu0
      %v4195 = vadd.f32 0.0, %v4194
      %v4196 = vpop.f32.mrf.mxu0
      %v4197 = vadd.f32 0.0, %v4196
      %4198 = vmatmul.bf16.gmra.mxu0 %v4170
      %v4199 = vpop.f32.mrf.mxu0
      %v4200 = vadd.f32 0.0, %v4199
      %v4201 = vpop.f32.mrf.mxu0
      %v4202 = vadd.f32 0.0, %v4201
      %4203 = vdwg.mxu0
      %v4204 = vadd.f32 %v4127, %v4185
      %v4205 = vadd.f32 %v4129, %v4187
      %v4206 = vadd.f32 %v4132, %v4190
      %v4207 = vadd.f32 %v4134, %v4192
      %v4208 = vadd.f32 %v4137, %v4195
      %v4209 = vadd.f32 %v4139, %v4197
      %v4210 = vadd.f32 %v4142, %v4200
      %v4211 = vadd.f32 %v4144, %v4202
      %v4212 = vld [vmem:[%s2183] sm:$0xff]
      %v4213 = vld [vmem:[%s2183 + $0x8] sm:$0xff]
      %v4214 = vld [vmem:[%s2183 + $0x10] sm:$0xff]
      %v4215 = vld [vmem:[%s2183 + $0x18] sm:$0xff]
      %v4216 = vld [vmem:[%s2183 + $0x20] sm:$0xff]
      %v4217 = vld [vmem:[%s2183 + $0x28] sm:$0xff]
      %v4218 = vld [vmem:[%s2183 + $0x30] sm:$0xff]
      %v4219 = vld [vmem:[%s2183 + $0x38] sm:$0xff]
      %v4220 = vpack.c.bf16 %v4213, %v4212
      %v4221 = vpack.c.bf16 %v4215, %v4214
      %v4222 = vpack.c.bf16 %v4217, %v4216
      %v4223 = vpack.c.bf16 %v4219, %v4218
      %s4224 = scalar_lea.vmem %s45, 12
      %v4225 = vld [vmem:[%s4224] sm:$0xf]
      %v4227 = vsel %vm1658, %v4220, 0
      %v4230 = vsel %vm1658, %v4221, 0
      %v4233 = vsel %vm1658, %v4222, 0
      %v4236 = vsel %vm1658, %v4223, 0
      %v4239 = vsel %vm1730, %v4225, 0
      %4241 = vmatpush.bf16.msra.mxu0 0
      %4242 = vmatpush.bf16.msra.mxu0 0
      %4243 = vmatpush.bf16.msra.mxu0 0
      %4244 = vmatpush.bf16.msra.mxu0 0
      %4245 = vmatpush.bf16.msra.mxu0 0
      %4246 = vmatpush.bf16.msra.mxu0 0
      %4247 = vmatpush.bf16.msra.mxu0 0
      %4248 = vmatpush.bf16.msra.mxu0 %v4239
      %4249 = vmatmul.bf16.gmra.mxu0 %v4227
      %v4250 = vpop.f32.mrf.mxu0
      %v4251 = vadd.f32 0.0, %v4250
      %v4252 = vpop.f32.mrf.mxu0
      %v4253 = vadd.f32 0.0, %v4252
      %4254 = vmatmul.bf16.gmra.mxu0 %v4230
      %v4255 = vpop.f32.mrf.mxu0
      %v4256 = vadd.f32 0.0, %v4255
      %v4257 = vpop.f32.mrf.mxu0
      %v4258 = vadd.f32 0.0, %v4257
      %4259 = vmatmul.bf16.gmra.mxu0 %v4233
      %v4260 = vpop.f32.mrf.mxu0
      %v4261 = vadd.f32 0.0, %v4260
      %v4262 = vpop.f32.mrf.mxu0
      %v4263 = vadd.f32 0.0, %v4262
      %4264 = vmatmul.bf16.gmra.mxu0 %v4236
      %v4265 = vpop.f32.mrf.mxu0
      %v4266 = vadd.f32 0.0, %v4265
      %v4267 = vpop.f32.mrf.mxu0
      %v4268 = vadd.f32 0.0, %v4267
      %4269 = vdwg.mxu0
      %v4270 = vadd.f32 %v4204, %v4251
      %v4271 = vadd.f32 %v4205, %v4253
      %v4272 = vadd.f32 %v4206, %v4256
      %v4273 = vadd.f32 %v4207, %v4258
      %v4274 = vadd.f32 %v4208, %v4261
      %v4275 = vadd.f32 %v4209, %v4263
      %v4276 = vadd.f32 %v4210, %v4266
      %v4277 = vadd.f32 %v4211, %v4268
      %v4278 = vld [vmem:[%s2605] sm:$0xff]
      %v4279 = vld [vmem:[%s2605 + $0x8] sm:$0xff]
      %v4280 = vld [vmem:[%s2605 + $0x10] sm:$0xff]
      %v4281 = vld [vmem:[%s2605 + $0x18] sm:$0xff]
      %v4282 = vld [vmem:[%s2605 + $0x20] sm:$0xff]
      %v4283 = vld [vmem:[%s2605 + $0x28] sm:$0xff]
      %v4284 = vld [vmem:[%s2605 + $0x30] sm:$0xff]
      %v4285 = vld [vmem:[%s2605 + $0x38] sm:$0xff]
      %v4286 = vpack.c.bf16 %v4279, %v4278
      %v4287 = vpack.c.bf16 %v4281, %v4280
      %v4288 = vpack.c.bf16 %v4283, %v4282
      %v4289 = vpack.c.bf16 %v4285, %v4284
      %s4290 = scalar_lea.vmem %s45, 16
      %v4291 = vld [vmem:[%s4290] sm:$0xf]
      %v4293 = vsel %vm1658, %v4286, 0
      %v4296 = vsel %vm1658, %v4287, 0
      %v4299 = vsel %vm1658, %v4288, 0
      %v4302 = vsel %vm1658, %v4289, 0
      %v4305 = vsel %vm1730, %v4291, 0
      %4307 = vmatpush.bf16.msra.mxu0 0
      %4308 = vmatpush.bf16.msra.mxu0 0
      %4309 = vmatpush.bf16.msra.mxu0 0
      %4310 = vmatpush.bf16.msra.mxu0 0
      %4311 = vmatpush.bf16.msra.mxu0 0
      %4312 = vmatpush.bf16.msra.mxu0 0
      %4313 = vmatpush.bf16.msra.mxu0 0
      %4314 = vmatpush.bf16.msra.mxu0 %v4305
      %4315 = vmatmul.bf16.gmra.mxu0 %v4293
      %v4316 = vpop.f32.mrf.mxu0
      %v4317 = vadd.f32 0.0, %v4316
      %v4318 = vpop.f32.mrf.mxu0
      %v4319 = vadd.f32 0.0, %v4318
      %4320 = vmatmul.bf16.gmra.mxu0 %v4296
      %v4321 = vpop.f32.mrf.mxu0
      %v4322 = vadd.f32 0.0, %v4321
      %v4323 = vpop.f32.mrf.mxu0
      %v4324 = vadd.f32 0.0, %v4323
      %4325 = vmatmul.bf16.gmra.mxu0 %v4299
      %v4326 = vpop.f32.mrf.mxu0
      %v4327 = vadd.f32 0.0, %v4326
      %v4328 = vpop.f32.mrf.mxu0
      %v4329 = vadd.f32 0.0, %v4328
      %4330 = vmatmul.bf16.gmra.mxu0 %v4302
      %v4331 = vpop.f32.mrf.mxu0
      %v4332 = vadd.f32 0.0, %v4331
      %v4333 = vpop.f32.mrf.mxu0
      %v4334 = vadd.f32 0.0, %v4333
      %4335 = vdwg.mxu0
      %v4336 = vadd.f32 %v4270, %v4317
      %v4337 = vadd.f32 %v4271, %v4319
      %v4338 = vadd.f32 %v4272, %v4322
      %v4339 = vadd.f32 %v4273, %v4324
      %v4340 = vadd.f32 %v4274, %v4327
      %v4341 = vadd.f32 %v4275, %v4329
      %v4342 = vadd.f32 %v4276, %v4332
      %v4343 = vadd.f32 %v4277, %v4334
      %v4344 = vld [vmem:[%s2717] sm:$0xff]
      %v4345 = vld [vmem:[%s2717 + $0x8] sm:$0xff]
      %v4346 = vld [vmem:[%s2717 + $0x10] sm:$0xff]
      %v4347 = vld [vmem:[%s2717 + $0x18] sm:$0xff]
      %v4348 = vld [vmem:[%s2717 + $0x20] sm:$0xff]
      %v4349 = vld [vmem:[%s2717 + $0x28] sm:$0xff]
      %v4350 = vld [vmem:[%s2717 + $0x30] sm:$0xff]
      %v4351 = vld [vmem:[%s2717 + $0x38] sm:$0xff]
      %v4352 = vpack.c.bf16 %v4345, %v4344
      %v4353 = vpack.c.bf16 %v4347, %v4346
      %v4354 = vpack.c.bf16 %v4349, %v4348
      %v4355 = vpack.c.bf16 %v4351, %v4350
      %s4356 = scalar_lea.vmem %s45, 20
      %v4357 = vld [vmem:[%s4356] sm:$0xf]
      %v4359 = vsel %vm1658, %v4352, 0
      %v4362 = vsel %vm1658, %v4353, 0
      %v4365 = vsel %vm1658, %v4354, 0
      %v4368 = vsel %vm1658, %v4355, 0
      %v4371 = vsel %vm1730, %v4357, 0
      %4373 = vmatpush.bf16.msra.mxu0 0
      %4374 = vmatpush.bf16.msra.mxu0 0
      %4375 = vmatpush.bf16.msra.mxu0 0
      %4376 = vmatpush.bf16.msra.mxu0 0
      %4377 = vmatpush.bf16.msra.mxu0 0
      %4378 = vmatpush.bf16.msra.mxu0 0
      %4379 = vmatpush.bf16.msra.mxu0 0
      %4380 = vmatpush.bf16.msra.mxu0 %v4371
      %4381 = vmatmul.bf16.gmra.mxu0 %v4359
      %v4382 = vpop.f32.mrf.mxu0
      %v4383 = vadd.f32 0.0, %v4382
      %v4384 = vpop.f32.mrf.mxu0
      %v4385 = vadd.f32 0.0, %v4384
      %4386 = vmatmul.bf16.gmra.mxu0 %v4362
      %v4387 = vpop.f32.mrf.mxu0
      %v4388 = vadd.f32 0.0, %v4387
      %v4389 = vpop.f32.mrf.mxu0
      %v4390 = vadd.f32 0.0, %v4389
      %4391 = vmatmul.bf16.gmra.mxu0 %v4365
      %v4392 = vpop.f32.mrf.mxu0
      %v4393 = vadd.f32 0.0, %v4392
      %v4394 = vpop.f32.mrf.mxu0
      %v4395 = vadd.f32 0.0, %v4394
      %4396 = vmatmul.bf16.gmra.mxu0 %v4368
      %v4397 = vpop.f32.mrf.mxu0
      %v4398 = vadd.f32 0.0, %v4397
      %v4399 = vpop.f32.mrf.mxu0
      %v4400 = vadd.f32 0.0, %v4399
      %4401 = vdwg.mxu0
      %v4402 = vadd.f32 %v4336, %v4383
      %v4403 = vadd.f32 %v4337, %v4385
      %v4404 = vadd.f32 %v4338, %v4388
      %v4405 = vadd.f32 %v4339, %v4390
      %v4406 = vadd.f32 %v4340, %v4393
      %v4407 = vadd.f32 %v4341, %v4395
      %v4408 = vadd.f32 %v4342, %v4398
      %v4409 = vadd.f32 %v4343, %v4400
      %v4410 = vld [vmem:[%s2829] sm:$0xff]
      %v4411 = vld [vmem:[%s2829 + $0x8] sm:$0xff]
      %v4412 = vld [vmem:[%s2829 + $0x10] sm:$0xff]
      %v4413 = vld [vmem:[%s2829 + $0x18] sm:$0xff]
      %v4414 = vld [vmem:[%s2829 + $0x20] sm:$0xff]
      %v4415 = vld [vmem:[%s2829 + $0x28] sm:$0xff]
      %v4416 = vld [vmem:[%s2829 + $0x30] sm:$0xff]
      %v4417 = vld [vmem:[%s2829 + $0x38] sm:$0xff]
      %v4418 = vpack.c.bf16 %v4411, %v4410
      %v4419 = vpack.c.bf16 %v4413, %v4412
      %v4420 = vpack.c.bf16 %v4415, %v4414
      %v4421 = vpack.c.bf16 %v4417, %v4416
      %s4422 = scalar_lea.vmem %s45, 24
      %v4423 = vld [vmem:[%s4422] sm:$0xf]
      %v4425 = vsel %vm1658, %v4418, 0
      %v4428 = vsel %vm1658, %v4419, 0
      %v4431 = vsel %vm1658, %v4420, 0
      %v4434 = vsel %vm1658, %v4421, 0
      %v4437 = vsel %vm1730, %v4423, 0
      %4439 = vmatpush.bf16.msra.mxu0 0
      %4440 = vmatpush.bf16.msra.mxu0 0
      %4441 = vmatpush.bf16.msra.mxu0 0
      %4442 = vmatpush.bf16.msra.mxu0 0
      %4443 = vmatpush.bf16.msra.mxu0 0
      %4444 = vmatpush.bf16.msra.mxu0 0
      %4445 = vmatpush.bf16.msra.mxu0 0
      %4446 = vmatpush.bf16.msra.mxu0 %v4437
      %4447 = vmatmul.bf16.gmra.mxu0 %v4425
      %v4448 = vpop.f32.mrf.mxu0
      %v4449 = vadd.f32 0.0, %v4448
      %v4450 = vpop.f32.mrf.mxu0
      %v4451 = vadd.f32 0.0, %v4450
      %4452 = vmatmul.bf16.gmra.mxu0 %v4428
      %v4453 = vpop.f32.mrf.mxu0
      %v4454 = vadd.f32 0.0, %v4453
      %v4455 = vpop.f32.mrf.mxu0
      %v4456 = vadd.f32 0.0, %v4455
      %4457 = vmatmul.bf16.gmra.mxu0 %v4431
      %v4458 = vpop.f32.mrf.mxu0
      %v4459 = vadd.f32 0.0, %v4458
      %v4460 = vpop.f32.mrf.mxu0
      %v4461 = vadd.f32 0.0, %v4460
      %4462 = vmatmul.bf16.gmra.mxu0 %v4434
      %v4463 = vpop.f32.mrf.mxu0
      %v4464 = vadd.f32 0.0, %v4463
      %v4465 = vpop.f32.mrf.mxu0
      %v4466 = vadd.f32 0.0, %v4465
      %4467 = vdwg.mxu0
      %v4468 = vadd.f32 %v4402, %v4449
      %v4469 = vadd.f32 %v4403, %v4451
      %v4470 = vadd.f32 %v4404, %v4454
      %v4471 = vadd.f32 %v4405, %v4456
      %v4472 = vadd.f32 %v4406, %v4459
      %v4473 = vadd.f32 %v4407, %v4461
      %v4474 = vadd.f32 %v4408, %v4464
      %v4475 = vadd.f32 %v4409, %v4466
      %v4476 = vld [vmem:[%s47] sm:$0x1]
      %v4478 = vperm.slane %v4476, 0
      %v4480 = vmul.f32 %v4468, %v4478
      %v4481 = vmul.f32 %v4469, %v4478
      %v4482 = vmul.f32 %v4470, %v4478
      %v4483 = vmul.f32 %v4471, %v4478
      %v4484 = vmul.f32 %v4472, %v4478
      %v4485 = vmul.f32 %v4473, %v4478
      %v4486 = vmul.f32 %v4474, %v4478
      %v4487 = vmul.f32 %v4475, %v4478
      %v4488 = vld [vmem:[%s49] sm:$0x1]
      %v4490 = vperm.slane %v4488, 0
      %v4492 = vadd.f32 %v4480, %v4490
      %v4493 = vadd.f32 %v4481, %v4490
      %v4494 = vadd.f32 %v4482, %v4490
      %v4495 = vadd.f32 %v4483, %v4490
      %v4496 = vadd.f32 %v4484, %v4490
      %v4497 = vadd.f32 %v4485, %v4490
      %v4498 = vadd.f32 %v4486, %v4490
      %v4499 = vadd.f32 %v4487, %v4490
      %v4500 = vmax.f32 %v4492, 0.0
      %v4501 = vmax.f32 %v4493, 0.0
      %v4502 = vmax.f32 %v4494, 0.0
      %v4503 = vmax.f32 %v4495, 0.0
      %v4504 = vmax.f32 %v4496, 0.0
      %v4505 = vmax.f32 %v4497, 0.0
      %v4506 = vmax.f32 %v4498, 0.0
      %v4507 = vmax.f32 %v4499, 0.0
      %4508 = vst.msk [vmem:[#allocation2] sm:$0xff] %vm1658, 0.0
      %4509 = vst.msk [vmem:[#allocation2 + $0x8] sm:$0xff] %vm1658, 0.0
      %4510 = vst.msk [vmem:[#allocation2 + $0x10] sm:$0xff] %vm1658, 0.0
      %4511 = vst.msk [vmem:[#allocation2 + $0x18] sm:$0xff] %vm1658, 0.0
      %4512 = vst.msk [vmem:[#allocation2 + $0x20] sm:$0xff] %vm1658, 0.0
      %4513 = vst.msk [vmem:[#allocation2 + $0x28] sm:$0xff] %vm1658, 0.0
      %4514 = vst.msk [vmem:[#allocation2 + $0x30] sm:$0xff] %vm1658, 0.0
      %4515 = vst.msk [vmem:[#allocation2 + $0x38] sm:$0xff] %vm1658, 0.0
      %4516 = vst.msk [vmem:[#allocation2 + $0x40] sm:$0xff] %vm1658, 0.0
      %4517 = vst.msk [vmem:[#allocation2 + $0x48] sm:$0xff] %vm1658, 0.0
      %4518 = vst.msk [vmem:[#allocation2 + $0x50] sm:$0xff] %vm1658, 0.0
      %4519 = vst.msk [vmem:[#allocation2 + $0x58] sm:$0xff] %vm1658, 0.0
      %4520 = vst.msk [vmem:[#allocation2 + $0x60] sm:$0xff] %vm1658, 0.0
      %4521 = vst.msk [vmem:[#allocation2 + $0x68] sm:$0xff] %vm1658, 0.0
      %4522 = vst.msk [vmem:[#allocation2 + $0x70] sm:$0xff] %vm1658, 0.0
      %4523 = vst.msk [vmem:[#allocation2 + $0x78] sm:$0xff] %vm1658, 0.0
      %4524 = vst.msk [vmem:[#allocation2 + $0x80] sm:$0xff] %vm1658, 0.0
      %4525 = vst.msk [vmem:[#allocation2 + $0x88] sm:$0xff] %vm1658, 0.0
      %4526 = vst.msk [vmem:[#allocation2 + $0x90] sm:$0xff] %vm1658, 0.0
      %4527 = vst.msk [vmem:[#allocation2 + $0x98] sm:$0xff] %vm1658, 0.0
      %4528 = vst.msk [vmem:[#allocation2 + $0xa0] sm:$0xff] %vm1658, 0.0
      %4529 = vst.msk [vmem:[#allocation2 + $0xa8] sm:$0xff] %vm1658, 0.0
      %4530 = vst.msk [vmem:[#allocation2 + $0xb0] sm:$0xff] %vm1658, 0.0
      %4531 = vst.msk [vmem:[#allocation2 + $0xb8] sm:$0xff] %vm1658, 0.0
      %4532 = vst.msk [vmem:[#allocation2 + $0x8] sm:$0xff] %vm1658, %v4500
      %4533 = vst.msk [vmem:[#allocation2 + $0x20] sm:$0xff] %vm1658, %v4501
      %4534 = vst.msk [vmem:[#allocation2 + $0x38] sm:$0xff] %vm1658, %v4502
      %4535 = vst.msk [vmem:[#allocation2 + $0x50] sm:$0xff] %vm1658, %v4503
      %4536 = vst.msk [vmem:[#allocation2 + $0x68] sm:$0xff] %vm1658, %v4504
      %4537 = vst.msk [vmem:[#allocation2 + $0x80] sm:$0xff] %vm1658, %v4505
      %4538 = vst.msk [vmem:[#allocation2 + $0x98] sm:$0xff] %vm1658, %v4506
      %4539 = vst.msk [vmem:[#allocation2 + $0xb0] sm:$0xff] %vm1658, %v4507
      %v4540 = vld [vmem:[#allocation2 + $0x5] sm:$0xff]
      %v4541 = vld [vmem:[#allocation2 + $0x1d] sm:$0xff]
      %v4542 = vld [vmem:[#allocation2 + $0x35] sm:$0xff]
      %v4543 = vld [vmem:[#allocation2 + $0x4d] sm:$0xff]
      %v4544 = vld [vmem:[#allocation2 + $0x65] sm:$0xff]
      %v4545 = vld [vmem:[#allocation2 + $0x7d] sm:$0xff]
      %v4546 = vld [vmem:[#allocation2 + $0x95] sm:$0xff]
      %v4547 = vld [vmem:[#allocation2 + $0xad] sm:$0xff]
      %v4548 = vpack.c.bf16 %v4541, %v4540
      %v4549 = vpack.c.bf16 %v4543, %v4542
      %v4550 = vpack.c.bf16 %v4545, %v4544
      %v4551 = vpack.c.bf16 %v4547, %v4546
      %v4552 = vld [vmem:[%s51] sm:$0xff]
      %v4553 = vld [vmem:[#allocation2 + $0x6] sm:$0xff]
      %v4554 = vld [vmem:[#allocation2 + $0x1e] sm:$0xff]
      %v4555 = vld [vmem:[#allocation2 + $0x36] sm:$0xff]
      %v4556 = vld [vmem:[#allocation2 + $0x4e] sm:$0xff]
      %v4557 = vld [vmem:[#allocation2 + $0x66] sm:$0xff]
      %v4558 = vld [vmem:[#allocation2 + $0x7e] sm:$0xff]
      %v4559 = vld [vmem:[#allocation2 + $0x96] sm:$0xff]
      %v4560 = vld [vmem:[#allocation2 + $0xae] sm:$0xff]
      %v4561 = vpack.c.bf16 %v4554, %v4553
      %v4562 = vpack.c.bf16 %v4556, %v4555
      %v4563 = vpack.c.bf16 %v4558, %v4557
      %v4564 = vpack.c.bf16 %v4560, %v4559
      %s4565 = scalar_lea.vmem %s51, 8
      %v4566 = vld [vmem:[%s4565] sm:$0xff]
      %v4568 = vunpack.c.l.b16 %v4566
      %v4569 = vunpack.c.h.b16 %v4566
      %v4570 = vpack.c.b16 %v4568, %v4568
      %v4571 = vpack.c.b16 %v4569, %v4569
      %v4573 = vsel %vm1658, %v4561, 0
      %v4576 = vsel %vm1658, %v4562, 0
      %v4579 = vsel %vm1658, %v4563, 0
      %v4582 = vsel %vm1658, %v4564, 0
      %v4585 = vsel %vm1730, %v4570, 0
      %v4588 = vsel %vm1730, %v4571, 0
      %4590 = vmatpush.bf16.msra.mxu0 0
      %4591 = vmatpush.bf16.msra.mxu0 0
      %4592 = vmatpush.bf16.msra.mxu0 0
      %4593 = vmatpush.bf16.msra.mxu0 0
      %4594 = vmatpush.bf16.msra.mxu0 0
      %4595 = vmatpush.bf16.msra.mxu0 0
      %4596 = vmatpush.bf16.msra.mxu0 0
      %4597 = vmatpush.bf16.msra.mxu0 %v4585
      %4598 = vmatmul.bf16.gmra.mxu0 %v4573
      %v4599 = vpop.f32.mrf.mxu0
      %v4600 = vadd.f32 0.0, %v4599
      %v4601 = vpop.f32.mrf.mxu0
      %v4602 = vadd.f32 0.0, %v4601
      %4603 = vmatmul.bf16.gmra.mxu0 %v4576
      %v4604 = vpop.f32.mrf.mxu0
      %v4605 = vadd.f32 0.0, %v4604
      %v4606 = vpop.f32.mrf.mxu0
      %v4607 = vadd.f32 0.0, %v4606
      %4608 = vmatmul.bf16.gmra.mxu0 %v4579
      %v4609 = vpop.f32.mrf.mxu0
      %v4610 = vadd.f32 0.0, %v4609
      %v4611 = vpop.f32.mrf.mxu0
      %v4612 = vadd.f32 0.0, %v4611
      %4613 = vmatmul.bf16.gmra.mxu0 %v4582
      %v4614 = vpop.f32.mrf.mxu0
      %v4615 = vadd.f32 0.0, %v4614
      %v4616 = vpop.f32.mrf.mxu0
      %v4617 = vadd.f32 0.0, %v4616
      %4618 = vdwg.mxu0
      %4619 = vmatpush.bf16.msra.mxu0 0
      %4620 = vmatpush.bf16.msra.mxu0 0
      %4621 = vmatpush.bf16.msra.mxu0 0
      %4622 = vmatpush.bf16.msra.mxu0 0
      %4623 = vmatpush.bf16.msra.mxu0 0
      %4624 = vmatpush.bf16.msra.mxu0 0
      %4625 = vmatpush.bf16.msra.mxu0 0
      %4626 = vmatpush.bf16.msra.mxu0 %v4588
      %4627 = vmatmul.bf16.gmra.mxu0 %v4573
      %v4628 = vpop.f32.mrf.mxu0
      %v4629 = vadd.f32 0.0, %v4628
      %v4630 = vpop.f32.mrf.mxu0
      %v4631 = vadd.f32 0.0, %v4630
      %4632 = vmatmul.bf16.gmra.mxu0 %v4576
      %v4633 = vpop.f32.mrf.mxu0
      %v4634 = vadd.f32 0.0, %v4633
      %v4635 = vpop.f32.mrf.mxu0
      %v4636 = vadd.f32 0.0, %v4635
      %4637 = vmatmul.bf16.gmra.mxu0 %v4579
      %v4638 = vpop.f32.mrf.mxu0
      %v4639 = vadd.f32 0.0, %v4638
      %v4640 = vpop.f32.mrf.mxu0
      %v4641 = vadd.f32 0.0, %v4640
      %4642 = vmatmul.bf16.gmra.mxu0 %v4582
      %v4643 = vpop.f32.mrf.mxu0
      %v4644 = vadd.f32 0.0, %v4643
      %v4645 = vpop.f32.mrf.mxu0
      %v4646 = vadd.f32 0.0, %v4645
      %4647 = vdwg.mxu0
      %v4649 = vunpack.c.l.b16 %v4552
      %v4650 = vunpack.c.h.b16 %v4552
      %v4651 = vpack.c.b16 %v4649, %v4649
      %v4652 = vpack.c.b16 %v4650, %v4650
      %v4654 = vsel %vm1658, %v4548, 0
      %v4657 = vsel %vm1658, %v4549, 0
      %v4660 = vsel %vm1658, %v4550, 0
      %v4663 = vsel %vm1658, %v4551, 0
      %v4666 = vsel %vm1730, %v4651, 0
      %v4669 = vsel %vm1730, %v4652, 0
      %4671 = vmatpush.bf16.msra.mxu0 0
      %4672 = vmatpush.bf16.msra.mxu0 0
      %4673 = vmatpush.bf16.msra.mxu0 0
      %4674 = vmatpush.bf16.msra.mxu0 0
      %4675 = vmatpush.bf16.msra.mxu0 0
      %4676 = vmatpush.bf16.msra.mxu0 0
      %4677 = vmatpush.bf16.msra.mxu0 0
      %4678 = vmatpush.bf16.msra.mxu0 %v4666
      %4679 = vmatmul.bf16.gmra.mxu0 %v4654
      %v4680 = vpop.f32.mrf.mxu0
      %v4681 = vadd.f32 %v4600, %v4680
      %v4682 = vpop.f32.mrf.mxu0
      %v4683 = vadd.f32 %v4602, %v4682
      %4684 = vmatmul.bf16.gmra.mxu0 %v4657
      %v4685 = vpop.f32.mrf.mxu0
      %v4686 = vadd.f32 %v4605, %v4685
      %v4687 = vpop.f32.mrf.mxu0
      %v4688 = vadd.f32 %v4607, %v4687
      %4689 = vmatmul.bf16.gmra.mxu0 %v4660
      %v4690 = vpop.f32.mrf.mxu0
      %v4691 = vadd.f32 %v4610, %v4690
      %v4692 = vpop.f32.mrf.mxu0
      %v4693 = vadd.f32 %v4612, %v4692
      %4694 = vmatmul.bf16.gmra.mxu0 %v4663
      %v4695 = vpop.f32.mrf.mxu0
      %v4696 = vadd.f32 %v4615, %v4695
      %v4697 = vpop.f32.mrf.mxu0
      %v4698 = vadd.f32 %v4617, %v4697
      %4699 = vdwg.mxu0
      %4700 = vmatpush.bf16.msra.mxu0 0
      %4701 = vmatpush.bf16.msra.mxu0 0
      %4702 = vmatpush.bf16.msra.mxu0 0
      %4703 = vmatpush.bf16.msra.mxu0 0
      %4704 = vmatpush.bf16.msra.mxu0 0
      %4705 = vmatpush.bf16.msra.mxu0 0
      %4706 = vmatpush.bf16.msra.mxu0 0
      %4707 = vmatpush.bf16.msra.mxu0 %v4669
      %4708 = vmatmul.bf16.gmra.mxu0 %v4654
      %v4709 = vpop.f32.mrf.mxu0
      %v4710 = vadd.f32 %v4629, %v4709
      %v4711 = vpop.f32.mrf.mxu0
      %v4712 = vadd.f32 %v4631, %v4711
      %4713 = vmatmul.bf16.gmra.mxu0 %v4657
      %v4714 = vpop.f32.mrf.mxu0
      %v4715 = vadd.f32 %v4634, %v4714
      %v4716 = vpop.f32.mrf.mxu0
      %v4717 = vadd.f32 %v4636, %v4716
      %4718 = vmatmul.bf16.gmra.mxu0 %v4660
      %v4719 = vpop.f32.mrf.mxu0
      %v4720 = vadd.f32 %v4639, %v4719
      %v4721 = vpop.f32.mrf.mxu0
      %v4722 = vadd.f32 %v4641, %v4721
      %4723 = vmatmul.bf16.gmra.mxu0 %v4663
      %v4724 = vpop.f32.mrf.mxu0
      %v4725 = vadd.f32 %v4644, %v4724
      %v4726 = vpop.f32.mrf.mxu0
      %v4727 = vadd.f32 %v4646, %v4726
      %4728 = vdwg.mxu0
      %v4729 = vld [vmem:[#allocation2 + $0x7] sm:$0xff]
      %v4730 = vld [vmem:[#allocation2 + $0x1f] sm:$0xff]
      %v4731 = vld [vmem:[#allocation2 + $0x37] sm:$0xff]
      %v4732 = vld [vmem:[#allocation2 + $0x4f] sm:$0xff]
      %v4733 = vld [vmem:[#allocation2 + $0x67] sm:$0xff]
      %v4734 = vld [vmem:[#allocation2 + $0x7f] sm:$0xff]
      %v4735 = vld [vmem:[#allocation2 + $0x97] sm:$0xff]
      %v4736 = vld [vmem:[#allocation2 + $0xaf] sm:$0xff]
      %v4737 = vpack.c.bf16 %v4730, %v4729
      %v4738 = vpack.c.bf16 %v4732, %v4731
      %v4739 = vpack.c.bf16 %v4734, %v4733
      %v4740 = vpack.c.bf16 %v4736, %v4735
      %s4741 = scalar_lea.vmem %s51, 16
      %v4742 = vld [vmem:[%s4741] sm:$0xff]
      %v4744 = vunpack.c.l.b16 %v4742
      %v4745 = vunpack.c.h.b16 %v4742
      %v4746 = vpack.c.b16 %v4744, %v4744
      %v4747 = vpack.c.b16 %v4745, %v4745
      %v4749 = vsel %vm1658, %v4737, 0
      %v4752 = vsel %vm1658, %v4738, 0
      %v4755 = vsel %vm1658, %v4739, 0
      %v4758 = vsel %vm1658, %v4740, 0
      %v4761 = vsel %vm1730, %v4746, 0
      %v4764 = vsel %vm1730, %v4747, 0
      %4766 = vmatpush.bf16.msra.mxu0 0
      %4767 = vmatpush.bf16.msra.mxu0 0
      %4768 = vmatpush.bf16.msra.mxu0 0
      %4769 = vmatpush.bf16.msra.mxu0 0
      %4770 = vmatpush.bf16.msra.mxu0 0
      %4771 = vmatpush.bf16.msra.mxu0 0
      %4772 = vmatpush.bf16.msra.mxu0 0
      %4773 = vmatpush.bf16.msra.mxu0 %v4761
      %4774 = vmatmul.bf16.gmra.mxu0 %v4749
      %v4775 = vpop.f32.mrf.mxu0
      %v4776 = vadd.f32 0.0, %v4775
      %v4777 = vpop.f32.mrf.mxu0
      %v4778 = vadd.f32 0.0, %v4777
      %4779 = vmatmul.bf16.gmra.mxu0 %v4752
      %v4780 = vpop.f32.mrf.mxu0
      %v4781 = vadd.f32 0.0, %v4780
      %v4782 = vpop.f32.mrf.mxu0
      %v4783 = vadd.f32 0.0, %v4782
      %4784 = vmatmul.bf16.gmra.mxu0 %v4755
      %v4785 = vpop.f32.mrf.mxu0
      %v4786 = vadd.f32 0.0, %v4785
      %v4787 = vpop.f32.mrf.mxu0
      %v4788 = vadd.f32 0.0, %v4787
      %4789 = vmatmul.bf16.gmra.mxu0 %v4758
      %v4790 = vpop.f32.mrf.mxu0
      %v4791 = vadd.f32 0.0, %v4790
      %v4792 = vpop.f32.mrf.mxu0
      %v4793 = vadd.f32 0.0, %v4792
      %4794 = vdwg.mxu0
      %4795 = vmatpush.bf16.msra.mxu0 0
      %4796 = vmatpush.bf16.msra.mxu0 0
      %4797 = vmatpush.bf16.msra.mxu0 0
      %4798 = vmatpush.bf16.msra.mxu0 0
      %4799 = vmatpush.bf16.msra.mxu0 0
      %4800 = vmatpush.bf16.msra.mxu0 0
      %4801 = vmatpush.bf16.msra.mxu0 0
      %4802 = vmatpush.bf16.msra.mxu0 %v4764
      %4803 = vmatmul.bf16.gmra.mxu0 %v4749
      %v4804 = vpop.f32.mrf.mxu0
      %v4805 = vadd.f32 0.0, %v4804
      %v4806 = vpop.f32.mrf.mxu0
      %v4807 = vadd.f32 0.0, %v4806
      %4808 = vmatmul.bf16.gmra.mxu0 %v4752
      %v4809 = vpop.f32.mrf.mxu0
      %v4810 = vadd.f32 0.0, %v4809
      %v4811 = vpop.f32.mrf.mxu0
      %v4812 = vadd.f32 0.0, %v4811
      %4813 = vmatmul.bf16.gmra.mxu0 %v4755
      %v4814 = vpop.f32.mrf.mxu0
      %v4815 = vadd.f32 0.0, %v4814
      %v4816 = vpop.f32.mrf.mxu0
      %v4817 = vadd.f32 0.0, %v4816
      %4818 = vmatmul.bf16.gmra.mxu0 %v4758
      %v4819 = vpop.f32.mrf.mxu0
      %v4820 = vadd.f32 0.0, %v4819
      %v4821 = vpop.f32.mrf.mxu0
      %v4822 = vadd.f32 0.0, %v4821
      %4823 = vdwg.mxu0
      %v4824 = vadd.f32 %v4681, %v4776
      %v4825 = vadd.f32 %v4710, %v4805
      %v4826 = vadd.f32 %v4683, %v4778
      %v4827 = vadd.f32 %v4712, %v4807
      %v4828 = vadd.f32 %v4686, %v4781
      %v4829 = vadd.f32 %v4715, %v4810
      %v4830 = vadd.f32 %v4688, %v4783
      %v4831 = vadd.f32 %v4717, %v4812
      %v4832 = vadd.f32 %v4691, %v4786
      %v4833 = vadd.f32 %v4720, %v4815
      %v4834 = vadd.f32 %v4693, %v4788
      %v4835 = vadd.f32 %v4722, %v4817
      %v4836 = vadd.f32 %v4696, %v4791
      %v4837 = vadd.f32 %v4725, %v4820
      %v4838 = vadd.f32 %v4698, %v4793
      %v4839 = vadd.f32 %v4727, %v4822
      %v4840 = vld [vmem:[#allocation2 + $0x8] sm:$0xff]
      %v4841 = vld [vmem:[#allocation2 + $0x20] sm:$0xff]
      %v4842 = vld [vmem:[#allocation2 + $0x38] sm:$0xff]
      %v4843 = vld [vmem:[#allocation2 + $0x50] sm:$0xff]
      %v4844 = vld [vmem:[#allocation2 + $0x68] sm:$0xff]
      %v4845 = vld [vmem:[#allocation2 + $0x80] sm:$0xff]
      %v4846 = vld [vmem:[#allocation2 + $0x98] sm:$0xff]
      %v4847 = vld [vmem:[#allocation2 + $0xb0] sm:$0xff]
      %v4848 = vpack.c.bf16 %v4841, %v4840
      %v4849 = vpack.c.bf16 %v4843, %v4842
      %v4850 = vpack.c.bf16 %v4845, %v4844
      %v4851 = vpack.c.bf16 %v4847, %v4846
      %s4852 = scalar_lea.vmem %s51, 24
      %v4853 = vld [vmem:[%s4852] sm:$0xff]
      %v4855 = vunpack.c.l.b16 %v4853
      %v4856 = vunpack.c.h.b16 %v4853
      %v4857 = vpack.c.b16 %v4855, %v4855
      %v4858 = vpack.c.b16 %v4856, %v4856
      %v4860 = vsel %vm1658, %v4848, 0
      %v4863 = vsel %vm1658, %v4849, 0
      %v4866 = vsel %vm1658, %v4850, 0
      %v4869 = vsel %vm1658, %v4851, 0
      %v4872 = vsel %vm1730, %v4857, 0
      %v4875 = vsel %vm1730, %v4858, 0
      %4877 = vmatpush.bf16.msra.mxu0 0
      %4878 = vmatpush.bf16.msra.mxu0 0
      %4879 = vmatpush.bf16.msra.mxu0 0
      %4880 = vmatpush.bf16.msra.mxu0 0
      %4881 = vmatpush.bf16.msra.mxu0 0
      %4882 = vmatpush.bf16.msra.mxu0 0
      %4883 = vmatpush.bf16.msra.mxu0 0
      %4884 = vmatpush.bf16.msra.mxu0 %v4872
      %4885 = vmatmul.bf16.gmra.mxu0 %v4860
      %v4886 = vpop.f32.mrf.mxu0
      %v4887 = vadd.f32 0.0, %v4886
      %v4888 = vpop.f32.mrf.mxu0
      %v4889 = vadd.f32 0.0, %v4888
      %4890 = vmatmul.bf16.gmra.mxu0 %v4863
      %v4891 = vpop.f32.mrf.mxu0
      %v4892 = vadd.f32 0.0, %v4891
      %v4893 = vpop.f32.mrf.mxu0
      %v4894 = vadd.f32 0.0, %v4893
      %4895 = vmatmul.bf16.gmra.mxu0 %v4866
      %v4896 = vpop.f32.mrf.mxu0
      %v4897 = vadd.f32 0.0, %v4896
      %v4898 = vpop.f32.mrf.mxu0
      %v4899 = vadd.f32 0.0, %v4898
      %4900 = vmatmul.bf16.gmra.mxu0 %v4869
      %v4901 = vpop.f32.mrf.mxu0
      %v4902 = vadd.f32 0.0, %v4901
      %v4903 = vpop.f32.mrf.mxu0
      %v4904 = vadd.f32 0.0, %v4903
      %4905 = vdwg.mxu0
      %4906 = vmatpush.bf16.msra.mxu0 0
      %4907 = vmatpush.bf16.msra.mxu0 0
      %4908 = vmatpush.bf16.msra.mxu0 0
      %4909 = vmatpush.bf16.msra.mxu0 0
      %4910 = vmatpush.bf16.msra.mxu0 0
      %4911 = vmatpush.bf16.msra.mxu0 0
      %4912 = vmatpush.bf16.msra.mxu0 0
      %4913 = vmatpush.bf16.msra.mxu0 %v4875
      %4914 = vmatmul.bf16.gmra.mxu0 %v4860
      %v4915 = vpop.f32.mrf.mxu0
      %v4916 = vadd.f32 0.0, %v4915
      %v4917 = vpop.f32.mrf.mxu0
      %v4918 = vadd.f32 0.0, %v4917
      %4919 = vmatmul.bf16.gmra.mxu0 %v4863
      %v4920 = vpop.f32.mrf.mxu0
      %v4921 = vadd.f32 0.0, %v4920
      %v4922 = vpop.f32.mrf.mxu0
      %v4923 = vadd.f32 0.0, %v4922
      %4924 = vmatmul.bf16.gmra.mxu0 %v4866
      %v4925 = vpop.f32.mrf.mxu0
      %v4926 = vadd.f32 0.0, %v4925
      %v4927 = vpop.f32.mrf.mxu0
      %v4928 = vadd.f32 0.0, %v4927
      %4929 = vmatmul.bf16.gmra.mxu0 %v4869
      %v4930 = vpop.f32.mrf.mxu0
      %v4931 = vadd.f32 0.0, %v4930
      %v4932 = vpop.f32.mrf.mxu0
      %v4933 = vadd.f32 0.0, %v4932
      %4934 = vdwg.mxu0
      %v4935 = vadd.f32 %v4824, %v4887
      %v4936 = vadd.f32 %v4825, %v4916
      %v4937 = vadd.f32 %v4826, %v4889
      %v4938 = vadd.f32 %v4827, %v4918
      %v4939 = vadd.f32 %v4828, %v4892
      %v4940 = vadd.f32 %v4829, %v4921
      %v4941 = vadd.f32 %v4830, %v4894
      %v4942 = vadd.f32 %v4831, %v4923
      %v4943 = vadd.f32 %v4832, %v4897
      %v4944 = vadd.f32 %v4833, %v4926
      %v4945 = vadd.f32 %v4834, %v4899
      %v4946 = vadd.f32 %v4835, %v4928
      %v4947 = vadd.f32 %v4836, %v4902
      %v4948 = vadd.f32 %v4837, %v4931
      %v4949 = vadd.f32 %v4838, %v4904
      %v4950 = vadd.f32 %v4839, %v4933
      %v4951 = vld [vmem:[#allocation2 + $0x9] sm:$0xff]
      %v4952 = vld [vmem:[#allocation2 + $0x21] sm:$0xff]
      %v4953 = vld [vmem:[#allocation2 + $0x39] sm:$0xff]
      %v4954 = vld [vmem:[#allocation2 + $0x51] sm:$0xff]
      %v4955 = vld [vmem:[#allocation2 + $0x69] sm:$0xff]
      %v4956 = vld [vmem:[#allocation2 + $0x81] sm:$0xff]
      %v4957 = vld [vmem:[#allocation2 + $0x99] sm:$0xff]
      %v4958 = vld [vmem:[#allocation2 + $0xb1] sm:$0xff]
      %v4959 = vpack.c.bf16 %v4952, %v4951
      %v4960 = vpack.c.bf16 %v4954, %v4953
      %v4961 = vpack.c.bf16 %v4956, %v4955
      %v4962 = vpack.c.bf16 %v4958, %v4957
      %s4963 = scalar_lea.vmem %s51, 32
      %v4964 = vld [vmem:[%s4963] sm:$0xff]
      %v4966 = vunpack.c.l.b16 %v4964
      %v4967 = vunpack.c.h.b16 %v4964
      %v4968 = vpack.c.b16 %v4966, %v4966
      %v4969 = vpack.c.b16 %v4967, %v4967
      %v4971 = vsel %vm1658, %v4959, 0
      %v4974 = vsel %vm1658, %v4960, 0
      %v4977 = vsel %vm1658, %v4961, 0
      %v4980 = vsel %vm1658, %v4962, 0
      %v4983 = vsel %vm1730, %v4968, 0
      %v4986 = vsel %vm1730, %v4969, 0
      %4988 = vmatpush.bf16.msra.mxu0 0
      %4989 = vmatpush.bf16.msra.mxu0 0
      %4990 = vmatpush.bf16.msra.mxu0 0
      %4991 = vmatpush.bf16.msra.mxu0 0
      %4992 = vmatpush.bf16.msra.mxu0 0
      %4993 = vmatpush.bf16.msra.mxu0 0
      %4994 = vmatpush.bf16.msra.mxu0 0
      %4995 = vmatpush.bf16.msra.mxu0 %v4983
      %4996 = vmatmul.bf16.gmra.mxu0 %v4971
      %v4997 = vpop.f32.mrf.mxu0
      %v4998 = vadd.f32 0.0, %v4997
      %v4999 = vpop.f32.mrf.mxu0
      %v5000 = vadd.f32 0.0, %v4999
      %5001 = vmatmul.bf16.gmra.mxu0 %v4974
      %v5002 = vpop.f32.mrf.mxu0
      %v5003 = vadd.f32 0.0, %v5002
      %v5004 = vpop.f32.mrf.mxu0
      %v5005 = vadd.f32 0.0, %v5004
      %5006 = vmatmul.bf16.gmra.mxu0 %v4977
      %v5007 = vpop.f32.mrf.mxu0
      %v5008 = vadd.f32 0.0, %v5007
      %v5009 = vpop.f32.mrf.mxu0
      %v5010 = vadd.f32 0.0, %v5009
      %5011 = vmatmul.bf16.gmra.mxu0 %v4980
      %v5012 = vpop.f32.mrf.mxu0
      %v5013 = vadd.f32 0.0, %v5012
      %v5014 = vpop.f32.mrf.mxu0
      %v5015 = vadd.f32 0.0, %v5014
      %5016 = vdwg.mxu0
      %5017 = vmatpush.bf16.msra.mxu0 0
      %5018 = vmatpush.bf16.msra.mxu0 0
      %5019 = vmatpush.bf16.msra.mxu0 0
      %5020 = vmatpush.bf16.msra.mxu0 0
      %5021 = vmatpush.bf16.msra.mxu0 0
      %5022 = vmatpush.bf16.msra.mxu0 0
      %5023 = vmatpush.bf16.msra.mxu0 0
      %5024 = vmatpush.bf16.msra.mxu0 %v4986
      %5025 = vmatmul.bf16.gmra.mxu0 %v4971
      %v5026 = vpop.f32.mrf.mxu0
      %v5027 = vadd.f32 0.0, %v5026
      %v5028 = vpop.f32.mrf.mxu0
      %v5029 = vadd.f32 0.0, %v5028
      %5030 = vmatmul.bf16.gmra.mxu0 %v4974
      %v5031 = vpop.f32.mrf.mxu0
      %v5032 = vadd.f32 0.0, %v5031
      %v5033 = vpop.f32.mrf.mxu0
      %v5034 = vadd.f32 0.0, %v5033
      %5035 = vmatmul.bf16.gmra.mxu0 %v4977
      %v5036 = vpop.f32.mrf.mxu0
      %v5037 = vadd.f32 0.0, %v5036
      %v5038 = vpop.f32.mrf.mxu0
      %v5039 = vadd.f32 0.0, %v5038
      %5040 = vmatmul.bf16.gmra.mxu0 %v4980
      %v5041 = vpop.f32.mrf.mxu0
      %v5042 = vadd.f32 0.0, %v5041
      %v5043 = vpop.f32.mrf.mxu0
      %v5044 = vadd.f32 0.0, %v5043
      %5045 = vdwg.mxu0
      %v5046 = vadd.f32 %v4935, %v4998
      %v5047 = vadd.f32 %v4936, %v5027
      %v5048 = vadd.f32 %v4937, %v5000
      %v5049 = vadd.f32 %v4938, %v5029
      %v5050 = vadd.f32 %v4939, %v5003
      %v5051 = vadd.f32 %v4940, %v5032
      %v5052 = vadd.f32 %v4941, %v5005
      %v5053 = vadd.f32 %v4942, %v5034
      %v5054 = vadd.f32 %v4943, %v5008
      %v5055 = vadd.f32 %v4944, %v5037
      %v5056 = vadd.f32 %v4945, %v5010
      %v5057 = vadd.f32 %v4946, %v5039
      %v5058 = vadd.f32 %v4947, %v5013
      %v5059 = vadd.f32 %v4948, %v5042
      %v5060 = vadd.f32 %v4949, %v5015
      %v5061 = vadd.f32 %v4950, %v5044
      %v5062 = vld [vmem:[#allocation2 + $0xa] sm:$0xff]
      %v5063 = vld [vmem:[#allocation2 + $0x22] sm:$0xff]
      %v5064 = vld [vmem:[#allocation2 + $0x3a] sm:$0xff]
      %v5065 = vld [vmem:[#allocation2 + $0x52] sm:$0xff]
      %v5066 = vld [vmem:[#allocation2 + $0x6a] sm:$0xff]
      %v5067 = vld [vmem:[#allocation2 + $0x82] sm:$0xff]
      %v5068 = vld [vmem:[#allocation2 + $0x9a] sm:$0xff]
      %v5069 = vld [vmem:[#allocation2 + $0xb2] sm:$0xff]
      %v5070 = vpack.c.bf16 %v5063, %v5062
      %v5071 = vpack.c.bf16 %v5065, %v5064
      %v5072 = vpack.c.bf16 %v5067, %v5066
      %v5073 = vpack.c.bf16 %v5069, %v5068
      %s5074 = scalar_lea.vmem %s51, 40
      %v5075 = vld [vmem:[%s5074] sm:$0xff]
      %v5077 = vunpack.c.l.b16 %v5075
      %v5078 = vunpack.c.h.b16 %v5075
      %v5079 = vpack.c.b16 %v5077, %v5077
      %v5080 = vpack.c.b16 %v5078, %v5078
      %v5082 = vsel %vm1658, %v5070, 0
      %v5085 = vsel %vm1658, %v5071, 0
      %v5088 = vsel %vm1658, %v5072, 0
      %v5091 = vsel %vm1658, %v5073, 0
      %v5094 = vsel %vm1730, %v5079, 0
      %v5097 = vsel %vm1730, %v5080, 0
      %5099 = vmatpush.bf16.msra.mxu0 0
      %5100 = vmatpush.bf16.msra.mxu0 0
      %5101 = vmatpush.bf16.msra.mxu0 0
      %5102 = vmatpush.bf16.msra.mxu0 0
      %5103 = vmatpush.bf16.msra.mxu0 0
      %5104 = vmatpush.bf16.msra.mxu0 0
      %5105 = vmatpush.bf16.msra.mxu0 0
      %5106 = vmatpush.bf16.msra.mxu0 %v5094
      %5107 = vmatmul.bf16.gmra.mxu0 %v5082
      %v5108 = vpop.f32.mrf.mxu0
      %v5109 = vadd.f32 0.0, %v5108
      %v5110 = vpop.f32.mrf.mxu0
      %v5111 = vadd.f32 0.0, %v5110
      %5112 = vmatmul.bf16.gmra.mxu0 %v5085
      %v5113 = vpop.f32.mrf.mxu0
      %v5114 = vadd.f32 0.0, %v5113
      %v5115 = vpop.f32.mrf.mxu0
      %v5116 = vadd.f32 0.0, %v5115
      %5117 = vmatmul.bf16.gmra.mxu0 %v5088
      %v5118 = vpop.f32.mrf.mxu0
      %v5119 = vadd.f32 0.0, %v5118
      %v5120 = vpop.f32.mrf.mxu0
      %v5121 = vadd.f32 0.0, %v5120
      %5122 = vmatmul.bf16.gmra.mxu0 %v5091
      %v5123 = vpop.f32.mrf.mxu0
      %v5124 = vadd.f32 0.0, %v5123
      %v5125 = vpop.f32.mrf.mxu0
      %v5126 = vadd.f32 0.0, %v5125
      %5127 = vdwg.mxu0
      %5128 = vmatpush.bf16.msra.mxu0 0
      %5129 = vmatpush.bf16.msra.mxu0 0
      %5130 = vmatpush.bf16.msra.mxu0 0
      %5131 = vmatpush.bf16.msra.mxu0 0
      %5132 = vmatpush.bf16.msra.mxu0 0
      %5133 = vmatpush.bf16.msra.mxu0 0
      %5134 = vmatpush.bf16.msra.mxu0 0
      %5135 = vmatpush.bf16.msra.mxu0 %v5097
      %5136 = vmatmul.bf16.gmra.mxu0 %v5082
      %v5137 = vpop.f32.mrf.mxu0
      %v5138 = vadd.f32 0.0, %v5137
      %v5139 = vpop.f32.mrf.mxu0
      %v5140 = vadd.f32 0.0, %v5139
      %5141 = vmatmul.bf16.gmra.mxu0 %v5085
      %v5142 = vpop.f32.mrf.mxu0
      %v5143 = vadd.f32 0.0, %v5142
      %v5144 = vpop.f32.mrf.mxu0
      %v5145 = vadd.f32 0.0, %v5144
      %5146 = vmatmul.bf16.gmra.mxu0 %v5088
      %v5147 = vpop.f32.mrf.mxu0
      %v5148 = vadd.f32 0.0, %v5147
      %v5149 = vpop.f32.mrf.mxu0
      %v5150 = vadd.f32 0.0, %v5149
      %5151 = vmatmul.bf16.gmra.mxu0 %v5091
      %v5152 = vpop.f32.mrf.mxu0
      %v5153 = vadd.f32 0.0, %v5152
      %v5154 = vpop.f32.mrf.mxu0
      %v5155 = vadd.f32 0.0, %v5154
      %5156 = vdwg.mxu0
      %v5157 = vadd.f32 %v5046, %v5109
      %v5158 = vadd.f32 %v5047, %v5138
      %v5159 = vadd.f32 %v5048, %v5111
      %v5160 = vadd.f32 %v5049, %v5140
      %v5161 = vadd.f32 %v5050, %v5114
      %v5162 = vadd.f32 %v5051, %v5143
      %v5163 = vadd.f32 %v5052, %v5116
      %v5164 = vadd.f32 %v5053, %v5145
      %v5165 = vadd.f32 %v5054, %v5119
      %v5166 = vadd.f32 %v5055, %v5148
      %v5167 = vadd.f32 %v5056, %v5121
      %v5168 = vadd.f32 %v5057, %v5150
      %v5169 = vadd.f32 %v5058, %v5124
      %v5170 = vadd.f32 %v5059, %v5153
      %v5171 = vadd.f32 %v5060, %v5126
      %v5172 = vadd.f32 %v5061, %v5155
      %v5173 = vld [vmem:[#allocation2 + $0xb] sm:$0xff]
      %v5174 = vld [vmem:[#allocation2 + $0x23] sm:$0xff]
      %v5175 = vld [vmem:[#allocation2 + $0x3b] sm:$0xff]
      %v5176 = vld [vmem:[#allocation2 + $0x53] sm:$0xff]
      %v5177 = vld [vmem:[#allocation2 + $0x6b] sm:$0xff]
      %v5178 = vld [vmem:[#allocation2 + $0x83] sm:$0xff]
      %v5179 = vld [vmem:[#allocation2 + $0x9b] sm:$0xff]
      %v5180 = vld [vmem:[#allocation2 + $0xb3] sm:$0xff]
      %v5181 = vpack.c.bf16 %v5174, %v5173
      %v5182 = vpack.c.bf16 %v5176, %v5175
      %v5183 = vpack.c.bf16 %v5178, %v5177
      %v5184 = vpack.c.bf16 %v5180, %v5179
      %s5185 = scalar_lea.vmem %s51, 48
      %v5186 = vld [vmem:[%s5185] sm:$0xff]
      %v5188 = vunpack.c.l.b16 %v5186
      %v5189 = vunpack.c.h.b16 %v5186
      %v5190 = vpack.c.b16 %v5188, %v5188
      %v5191 = vpack.c.b16 %v5189, %v5189
      %v5193 = vsel %vm1658, %v5181, 0
      %v5196 = vsel %vm1658, %v5182, 0
      %v5199 = vsel %vm1658, %v5183, 0
      %v5202 = vsel %vm1658, %v5184, 0
      %v5205 = vsel %vm1730, %v5190, 0
      %v5208 = vsel %vm1730, %v5191, 0
      %5210 = vmatpush.bf16.msra.mxu0 0
      %5211 = vmatpush.bf16.msra.mxu0 0
      %5212 = vmatpush.bf16.msra.mxu0 0
      %5213 = vmatpush.bf16.msra.mxu0 0
      %5214 = vmatpush.bf16.msra.mxu0 0
      %5215 = vmatpush.bf16.msra.mxu0 0
      %5216 = vmatpush.bf16.msra.mxu0 0
      %5217 = vmatpush.bf16.msra.mxu0 %v5205
      %5218 = vmatmul.bf16.gmra.mxu0 %v5193
      %v5219 = vpop.f32.mrf.mxu0
      %v5220 = vadd.f32 0.0, %v5219
      %v5221 = vpop.f32.mrf.mxu0
      %v5222 = vadd.f32 0.0, %v5221
      %5223 = vmatmul.bf16.gmra.mxu0 %v5196
      %v5224 = vpop.f32.mrf.mxu0
      %v5225 = vadd.f32 0.0, %v5224
      %v5226 = vpop.f32.mrf.mxu0
      %v5227 = vadd.f32 0.0, %v5226
      %5228 = vmatmul.bf16.gmra.mxu0 %v5199
      %v5229 = vpop.f32.mrf.mxu0
      %v5230 = vadd.f32 0.0, %v5229
      %v5231 = vpop.f32.mrf.mxu0
      %v5232 = vadd.f32 0.0, %v5231
      %5233 = vmatmul.bf16.gmra.mxu0 %v5202
      %v5234 = vpop.f32.mrf.mxu0
      %v5235 = vadd.f32 0.0, %v5234
      %v5236 = vpop.f32.mrf.mxu0
      %v5237 = vadd.f32 0.0, %v5236
      %5238 = vdwg.mxu0
      %5239 = vmatpush.bf16.msra.mxu0 0
      %5240 = vmatpush.bf16.msra.mxu0 0
      %5241 = vmatpush.bf16.msra.mxu0 0
      %5242 = vmatpush.bf16.msra.mxu0 0
      %5243 = vmatpush.bf16.msra.mxu0 0
      %5244 = vmatpush.bf16.msra.mxu0 0
      %5245 = vmatpush.bf16.msra.mxu0 0
      %5246 = vmatpush.bf16.msra.mxu0 %v5208
      %5247 = vmatmul.bf16.gmra.mxu0 %v5193
      %v5248 = vpop.f32.mrf.mxu0
      %v5249 = vadd.f32 0.0, %v5248
      %v5250 = vpop.f32.mrf.mxu0
      %v5251 = vadd.f32 0.0, %v5250
      %5252 = vmatmul.bf16.gmra.mxu0 %v5196
      %v5253 = vpop.f32.mrf.mxu0
      %v5254 = vadd.f32 0.0, %v5253
      %v5255 = vpop.f32.mrf.mxu0
      %v5256 = vadd.f32 0.0, %v5255
      %5257 = vmatmul.bf16.gmra.mxu0 %v5199
      %v5258 = vpop.f32.mrf.mxu0
      %v5259 = vadd.f32 0.0, %v5258
      %v5260 = vpop.f32.mrf.mxu0
      %v5261 = vadd.f32 0.0, %v5260
      %5262 = vmatmul.bf16.gmra.mxu0 %v5202
      %v5263 = vpop.f32.mrf.mxu0
      %v5264 = vadd.f32 0.0, %v5263
      %v5265 = vpop.f32.mrf.mxu0
      %v5266 = vadd.f32 0.0, %v5265
      %5267 = vdwg.mxu0
      %v5268 = vadd.f32 %v5157, %v5220
      %v5269 = vadd.f32 %v5158, %v5249
      %v5270 = vadd.f32 %v5159, %v5222
      %v5271 = vadd.f32 %v5160, %v5251
      %v5272 = vadd.f32 %v5161, %v5225
      %v5273 = vadd.f32 %v5162, %v5254
      %v5274 = vadd.f32 %v5163, %v5227
      %v5275 = vadd.f32 %v5164, %v5256
      %v5276 = vadd.f32 %v5165, %v5230
      %v5277 = vadd.f32 %v5166, %v5259
      %v5278 = vadd.f32 %v5167, %v5232
      %v5279 = vadd.f32 %v5168, %v5261
      %v5280 = vadd.f32 %v5169, %v5235
      %v5281 = vadd.f32 %v5170, %v5264
      %v5282 = vadd.f32 %v5171, %v5237
      %v5283 = vadd.f32 %v5172, %v5266
      %v5284 = vld [vmem:[%s53] sm:$0x3]
      %v5286 = vperm.slane %v5284, 0
      %v5287 = vperm.slane %v5284, 1
      %v5290 = vmul.f32 %v5268, %v5286
      %v5291 = vmul.f32 %v5269, %v5287
      %v5292 = vmul.f32 %v5270, %v5286
      %v5293 = vmul.f32 %v5271, %v5287
      %v5294 = vmul.f32 %v5272, %v5286
      %v5295 = vmul.f32 %v5273, %v5287
      %v5296 = vmul.f32 %v5274, %v5286
      %v5297 = vmul.f32 %v5275, %v5287
      %v5298 = vmul.f32 %v5276, %v5286
      %v5299 = vmul.f32 %v5277, %v5287
      %v5300 = vmul.f32 %v5278, %v5286
      %v5301 = vmul.f32 %v5279, %v5287
      %v5302 = vmul.f32 %v5280, %v5286
      %v5303 = vmul.f32 %v5281, %v5287
      %v5304 = vmul.f32 %v5282, %v5286
      %v5305 = vmul.f32 %v5283, %v5287
      %v5306 = vld [vmem:[%s55] sm:$0x3]
      %v5308 = vperm.slane %v5306, 0
      %v5309 = vperm.slane %v5306, 1
      %v5312 = vadd.f32 %v5290, %v5308
      %v5313 = vadd.f32 %v5291, %v5309
      %v5314 = vadd.f32 %v5292, %v5308
      %v5315 = vadd.f32 %v5293, %v5309
      %v5316 = vadd.f32 %v5294, %v5308
      %v5317 = vadd.f32 %v5295, %v5309
      %v5318 = vadd.f32 %v5296, %v5308
      %v5319 = vadd.f32 %v5297, %v5309
      %v5320 = vadd.f32 %v5298, %v5308
      %v5321 = vadd.f32 %v5299, %v5309
      %v5322 = vadd.f32 %v5300, %v5308
      %v5323 = vadd.f32 %v5301, %v5309
      %v5324 = vadd.f32 %v5302, %v5308
      %v5325 = vadd.f32 %v5303, %v5309
      %v5326 = vadd.f32 %v5304, %v5308
      %v5327 = vadd.f32 %v5305, %v5309
      %v5328 = vmax.f32 %v5312, 0.0
      %v5329 = vmax.f32 %v5313, 0.0
      %v5330 = vmax.f32 %v5314, 0.0
      %v5331 = vmax.f32 %v5315, 0.0
      %v5332 = vmax.f32 %v5316, 0.0
      %v5333 = vmax.f32 %v5317, 0.0
      %v5334 = vmax.f32 %v5318, 0.0
      %v5335 = vmax.f32 %v5319, 0.0
      %v5336 = vmax.f32 %v5320, 0.0
      %v5337 = vmax.f32 %v5321, 0.0
      %v5338 = vmax.f32 %v5322, 0.0
      %v5339 = vmax.f32 %v5323, 0.0
      %v5340 = vmax.f32 %v5324, 0.0
      %v5341 = vmax.f32 %v5325, 0.0
      %v5342 = vmax.f32 %v5326, 0.0
      %v5343 = vmax.f32 %v5327, 0.0
      %5344 = vst [vmem:[%s1064] sm:$0xff] %v1221
      %vm5345 = vcmask 523264
      %5346 = vst.msk [vmem:[%s1064 + $0x8] sm:$0xff] %vm5345, %v1222
      %5347 = vst [vmem:[%s1064 + $0x10] sm:$0xff] %v1223
      %5348 = vst.msk [vmem:[%s1064 + $0x18] sm:$0xff] %vm5345, %v1224
      %5349 = vst [vmem:[%s1064 + $0x20] sm:$0xff] %v1225
      %5350 = vst.msk [vmem:[%s1064 + $0x28] sm:$0xff] %vm5345, %v1226
      %5351 = vst [vmem:[%s1064 + $0x30] sm:$0xff] %v1227
      %5352 = vst.msk [vmem:[%s1064 + $0x38] sm:$0xff] %vm5345, %v1228
      %5353 = vst [vmem:[%s1064 + $0x40] sm:$0xff] %v1229
      %5354 = vst.msk [vmem:[%s1064 + $0x48] sm:$0xff] %vm5345, %v1230
      %5355 = vst [vmem:[%s1064 + $0x50] sm:$0xff] %v1231
      %5356 = vst.msk [vmem:[%s1064 + $0x58] sm:$0xff] %vm5345, %v1232
      %5357 = vst [vmem:[%s1064 + $0x60] sm:$0xff] %v1233
      %5358 = vst.msk [vmem:[%s1064 + $0x68] sm:$0xff] %vm5345, %v1234
      %5359 = vst [vmem:[%s1064 + $0x70] sm:$0xff] %v1235
      %5360 = vst.msk [vmem:[%s1064 + $0x78] sm:$0xff] %vm5345, %v1236
      %5361 = vst [vmem:[%s1069] sm:$0xff] %v2985
      %5362 = vst.msk [vmem:[%s1069 + $0x8] sm:$0xff] %vm5345, %v2986
      %5363 = vst [vmem:[%s1069 + $0x10] sm:$0xff] %v2987
      %5364 = vst.msk [vmem:[%s1069 + $0x18] sm:$0xff] %vm5345, %v2988
      %5365 = vst [vmem:[%s1069 + $0x20] sm:$0xff] %v2989
      %5366 = vst.msk [vmem:[%s1069 + $0x28] sm:$0xff] %vm5345, %v2990
      %5367 = vst [vmem:[%s1069 + $0x30] sm:$0xff] %v2991
      %5368 = vst.msk [vmem:[%s1069 + $0x38] sm:$0xff] %vm5345, %v2992
      %5369 = vst [vmem:[%s1069 + $0x40] sm:$0xff] %v2993
      %5370 = vst.msk [vmem:[%s1069 + $0x48] sm:$0xff] %vm5345, %v2994
      %5371 = vst [vmem:[%s1069 + $0x50] sm:$0xff] %v2995
      %5372 = vst.msk [vmem:[%s1069 + $0x58] sm:$0xff] %vm5345, %v2996
      %5373 = vst [vmem:[%s1069 + $0x60] sm:$0xff] %v2997
      %5374 = vst.msk [vmem:[%s1069 + $0x68] sm:$0xff] %vm5345, %v2998
      %5375 = vst [vmem:[%s1069 + $0x70] sm:$0xff] %v2999
      %5376 = vst.msk [vmem:[%s1069 + $0x78] sm:$0xff] %vm5345, %v3000
      %5377 = vst [vmem:[%s1074] sm:$0xff] %v5328
      %5378 = vst.msk [vmem:[%s1074 + $0x8] sm:$0xff] %vm5345, %v5329
      %5379 = vst [vmem:[%s1074 + $0x10] sm:$0xff] %v5330
      %5380 = vst.msk [vmem:[%s1074 + $0x18] sm:$0xff] %vm5345, %v5331
      %5381 = vst [vmem:[%s1074 + $0x20] sm:$0xff] %v5332
      %5382 = vst.msk [vmem:[%s1074 + $0x28] sm:$0xff] %vm5345, %v5333
      %5383 = vst [vmem:[%s1074 + $0x30] sm:$0xff] %v5334
      %5384 = vst.msk [vmem:[%s1074 + $0x38] sm:$0xff] %vm5345, %v5335
      %5385 = vst [vmem:[%s1074 + $0x40] sm:$0xff] %v5336
      %5386 = vst.msk [vmem:[%s1074 + $0x48] sm:$0xff] %vm5345, %v5337
      %5387 = vst [vmem:[%s1074 + $0x50] sm:$0xff] %v5338
      %5388 = vst.msk [vmem:[%s1074 + $0x58] sm:$0xff] %vm5345, %v5339
      %5389 = vst [vmem:[%s1074 + $0x60] sm:$0xff] %v5340
      %5390 = vst.msk [vmem:[%s1074 + $0x68] sm:$0xff] %vm5345, %v5341
      %5391 = vst [vmem:[%s1074 + $0x70] sm:$0xff] %v5342
      %5392 = vst.msk [vmem:[%s1074 + $0x78] sm:$0xff] %vm5345, %v5343
      %5393 = vst [vmem:[%s1079] sm:$0xff] %v1642
      %5394 = vst.msk [vmem:[%s1079 + $0x8] sm:$0xff] %vm5345, %v1643
      %5395 = vst [vmem:[%s1079 + $0x10] sm:$0xff] %v1644
      %5396 = vst.msk [vmem:[%s1079 + $0x18] sm:$0xff] %vm5345, %v1645
      %5397 = vst [vmem:[%s1079 + $0x20] sm:$0xff] %v1646
      %5398 = vst.msk [vmem:[%s1079 + $0x28] sm:$0xff] %vm5345, %v1647
      %5399 = vst [vmem:[%s1079 + $0x30] sm:$0xff] %v1648
      %5400 = vst.msk [vmem:[%s1079 + $0x38] sm:$0xff] %vm5345, %v1649
      %5401 = vst [vmem:[%s1079 + $0x40] sm:$0xff] %v1650
      %5402 = vst.msk [vmem:[%s1079 + $0x48] sm:$0xff] %vm5345, %v1651
      %5403 = vst [vmem:[%s1079 + $0x50] sm:$0xff] %v1652
      %5404 = vst.msk [vmem:[%s1079 + $0x58] sm:$0xff] %vm5345, %v1653
      %5405 = vst [vmem:[%s1079 + $0x60] sm:$0xff] %v1654
      %5406 = vst.msk [vmem:[%s1079 + $0x68] sm:$0xff] %vm5345, %v1655
      %5407 = vst [vmem:[%s1079 + $0x70] sm:$0xff] %v1656
      %5408 = vst.msk [vmem:[%s1079 + $0x78] sm:$0xff] %vm5345, %v1657
      %p5409 = scmp.lt.s32.totalorder %s81, 1
      %s5410 = scalar_select %p5409, %s81, 1
      %s5411 = smul.addr %s5410, 16
      %s5412 = smul.addr %s5411, 8
      %s5413 = scalar_lea.vmem %s63, %s5412
      %p5414 = scmp.lt.s32.totalorder %s81, 1
      %s5415 = scalar_select %p5414, %s81, 1
      %s5416 = smul.addr %s5415, 16
      %s5417 = smul.addr %s5416, 8
      %s5418 = scalar_lea.vmem %s65, %s5417
      %p5419 = scmp.lt.s32.totalorder %s81, 1
      %s5420 = scalar_select %p5419, %s81, 1
      %s5421 = smul.addr %s5420, 16
      %s5422 = smul.addr %s5421, 8
      %s5423 = scalar_lea.vmem %s67, %s5422
      %p5424 = scmp.lt.s32.totalorder %s81, 1
      %s5425 = scalar_select %p5424, %s81, 1
      %s5426 = smul.addr %s5425, 16
      %s5427 = smul.addr %s5426, 8
      %s5428 = scalar_lea.vmem %s69, %s5427
      // Predicated region
      $region145: #{inception_c_forward.1} parent=143 // pred_check
        %p5429 = pneg %p755
      $region146: #{inception_c_forward.1} parent=143 // pred_check_branch
        %5431 = sbr.rel (%p5429) target = $region148
      $region147: #{inception_c_forward.1} parent=143 // pred_region
        _
      $region148: #{inception_c_forward.1} parent=143 // pred_fallthru
        _
      // Predicated region
      $region149: #{inception_c_forward.1} parent=143 // pred_check
        %p5432 = pneg %p781
      $region150: #{inception_c_forward.1} parent=143 // pred_check_branch
        %5434 = sbr.rel (%p5432) target = $region152
      $region151: #{inception_c_forward.1} parent=143 // pred_region
        _
      $region152: #{inception_c_forward.1} parent=143 // pred_fallthru
        _
      // Predicated region
      $region153: #{inception_c_forward.1} parent=143 // pred_check
        %p5435 = pneg %p807
      $region154: #{inception_c_forward.1} parent=143 // pred_check_branch
        %5437 = sbr.rel (%p5435) target = $region156
      $region155: #{inception_c_forward.1} parent=143 // pred_region
        _
      $region156: #{inception_c_forward.1} parent=143 // pred_fallthru
        _
      // Predicated region
      $region157: #{inception_c_forward.1} parent=143 // pred_check
        %p5438 = pneg %p833
      $region158: #{inception_c_forward.1} parent=143 // pred_check_branch
        %5440 = sbr.rel (%p5438) target = $region160
      $region159: #{inception_c_forward.1} parent=143 // pred_region
        _
      $region160: #{inception_c_forward.1} parent=143 // pred_fallthru
        _
    $region144: #{inception_c_forward.1} parent=5 // pred_fallthru
      _
    %p5441 = scmp.le.s32.totalorder 2, %s76
    // Predicated region
    $region161: #{inception_c_forward.1} parent=5 // pred_check
      %p5442 = pneg %p5441
    $region162: #{inception_c_forward.1} parent=5 // pred_check_branch
      %5444 = sbr.rel (%p5442) target = $region164
    $region163: #{inception_c_forward.1} parent=5 // pred_region
      %s5445 = ssub.s32 %s76, 2
      // Predicated region
      $region165: #{inception_c_forward.1} parent=163 // pred_check
        %p5446 = pneg %p761
      $region166: #{inception_c_forward.1} parent=163 // pred_check_branch
        %5448 = sbr.rel (%p5446) target = $region168
      $region167: #{inception_c_forward.1} parent=163 // pred_region
        %p5449 = scmp.lt.s32.totalorder %s82, 1
        %s5450 = scalar_select %p5449, %s82, 1
        %s5451 = smul.addr %s5450, 16
        %s5452 = smul.addr %s5451, 8
        %s5453 = scalar_lea.vmem %s63, %s5452
      $region168: #{inception_c_forward.1} parent=163 // pred_fallthru
        _
      // Predicated region
      $region169: #{inception_c_forward.1} parent=163 // pred_check
        %p5454 = pneg %p787
      $region170: #{inception_c_forward.1} parent=163 // pred_check_branch
        %5456 = sbr.rel (%p5454) target = $region172
      $region171: #{inception_c_forward.1} parent=163 // pred_region
        %p5457 = scmp.lt.s32.totalorder %s82, 1
        %s5458 = scalar_select %p5457, %s82, 1
        %s5459 = smul.addr %s5458, 16
        %s5460 = smul.addr %s5459, 8
        %s5461 = scalar_lea.vmem %s65, %s5460
      $region172: #{inception_c_forward.1} parent=163 // pred_fallthru
        _
      // Predicated region
      $region173: #{inception_c_forward.1} parent=163 // pred_check
        %p5462 = pneg %p813
      $region174: #{inception_c_forward.1} parent=163 // pred_check_branch
        %5464 = sbr.rel (%p5462) target = $region176
      $region175: #{inception_c_forward.1} parent=163 // pred_region
        %p5465 = scmp.lt.s32.totalorder %s82, 1
        %s5466 = scalar_select %p5465, %s82, 1
        %s5467 = smul.addr %s5466, 16
        %s5468 = smul.addr %s5467, 8
        %s5469 = scalar_lea.vmem %s67, %s5468
      $region176: #{inception_c_forward.1} parent=163 // pred_fallthru
        _
      // Predicated region
      $region177: #{inception_c_forward.1} parent=163 // pred_check
        %p5470 = pneg %p839
      $region178: #{inception_c_forward.1} parent=163 // pred_check_branch
        %5472 = sbr.rel (%p5470) target = $region180
      $region179: #{inception_c_forward.1} parent=163 // pred_region
        %p5473 = scmp.lt.s32.totalorder %s82, 1
        %s5474 = scalar_select %p5473, %s82, 1
        %s5475 = smul.addr %s5474, 16
        %s5476 = smul.addr %s5475, 8
        %s5477 = scalar_lea.vmem %s69, %s5476
      $region180: #{inception_c_forward.1} parent=163 // pred_fallthru
        _
    $region164: #{inception_c_forward.1} parent=5 // pred_fallthru
      _
  $region6: #{inception_c_forward.1} parent=0 // loop_footer
    %s80 = sadd.s32 1, %s76
  $region7: #{inception_c_forward.1} parent=0 // loop_footer_branch
    %75 = sbr.rel target = $region3
  $region8: #{inception_c_forward.1} parent=0 // loop_exit
    _

</llo_original>
